<compile_context>
chip_gen: v6e
topology: v6e:2x2x1
jax: 0.10.0
libtpu: 0.0.40
codegen_flags: <defaults>
</compile_context>

<pallas_src>
import functools

import jax
import jax.numpy as jnp
from jax.experimental import pallas as pl
from jax.experimental.pallas import tpu as pltpu

VMEM_LIMIT = 32 * 1024 * 1024
_VMEM = pl.BlockSpec(memory_space=pltpu.MemorySpace.VMEM)


def _round_up(x, m):
    return ((x + m - 1) // m) * m


def _cparams(n_parallel):
    return pltpu.CompilerParams(
        dimension_semantics=("parallel",) * n_parallel,
        vmem_limit_bytes=VMEM_LIMIT)


# ----------------------------------------------------------------------------
# Pallas kernels
# ----------------------------------------------------------------------------
def _mm_bias_kernel(x_ref, w_ref, b_ref, o_ref, *, relu):
    # (TM, K) f32 -> bf16  @  (K, N) bf16 (BN scale pre-folded), f32 accumulate.
    y = jnp.dot(x_ref[...].astype(jnp.bfloat16), w_ref[...],
                preferred_element_type=jnp.float32)
    y = y + b_ref[...]
    if relu:
        y = jnp.maximum(y, 0.0)
    o_ref[...] = y


def _dw_s1_kernel(x_ref, w_ref, b_ref, o_ref, *, H, W):
    # Depthwise 3x3 stride 1: x block (1, H+2, W+2, C) is the padded image for
    # one batch element; the 9 taps are contiguous slices formed in VMEM.
    x = x_ref[0]
    w = w_ref[...]          # (9, 1, C), BN scale folded in
    b = b_ref[0]            # (1, C)
    acc = None
    for dh in range(3):
        for dw in range(3):
            t = x[dh:dh + H, dw:dw + W, :] * w[3 * dh + dw]
            acc = t if acc is None else acc + t
    o_ref[0] = acc + b


def _dw_s2_kernel(p_ref, w_ref, b_ref, o_ref, *, Ho, Wo, Hp2):
    # Depthwise 3x3 stride 2 on a phase-split tile p (1, 4*Hp2, Wp2, C).
    # Phase (r%2, c%2) holds padded-input element (r, c); tap (dh, dw) of
    # output (i, j) lives at phase (dh%2, dw%2), position (i + dh//2, j + dw//2).
    p = p_ref[0]
    w = w_ref[...]
    b = b_ref[0]
    acc = None
    for dh in range(3):
        for dw in range(3):
            r0 = (2 * (dh % 2) + (dw % 2)) * Hp2 + dh // 2
            t = p[r0:r0 + Ho, dw // 2:dw // 2 + Wo, :] * w[3 * dh + dw]
            acc = t if acc is None else acc + t
    o_ref[0] = acc + b


def _maxpool_s2_kernel(p_ref, o_ref, *, Ho, Wo, Hp2):
    p = p_ref[0]
    m = None
    for dh in range(3):
        for dw in range(3):
            r0 = (2 * (dh % 2) + (dw % 2)) * Hp2 + dh // 2
            t = p[r0:r0 + Ho, dw // 2:dw // 2 + Wo, :]
            m = t if m is None else jnp.maximum(m, t)
    o_ref[0] = m


def _gap_fc_kernel(x_ref, w_ref, b_ref, o_ref):
    # Fused global-average-pool (vector reduce over HW) + final fc.
    hw = x_ref.shape[1]
    feat = jnp.sum(x_ref[...], axis=1) * (1.0 / float(hw))
    o_ref[...] = jnp.dot(feat.astype(jnp.bfloat16), w_ref[...],
                         preferred_element_type=jnp.float32) + b_ref[...]


# ----------------------------------------------------------------------------
# Kernel wrappers (grid / BlockSpec tiling)
# ----------------------------------------------------------------------------
def pallas_matmul_bias(x, w, b, relu):
    # x (M, K) f32, w (K, N) bf16, b (N,) f32; tiled over M, "parallel" grid.
    M, K = x.shape
    N = w.shape[1]
    TM = 512 if M >= 512 else max(8, _round_up(M, 8))
    Mp = _round_up(M, TM)
    if Mp != M:
        x = jnp.pad(x, ((0, Mp - M), (0, 0)))
    out = pl.pallas_call(
        functools.partial(_mm_bias_kernel, relu=relu),
        grid=(Mp // TM,),
        in_specs=[pl.BlockSpec((TM, K), lambda i: (i, 0)),
                  pl.BlockSpec((K, N), lambda i: (0, 0)),
                  pl.BlockSpec((1, N), lambda i: (0, 0))],
        out_specs=pl.BlockSpec((TM, N), lambda i: (i, 0)),
        out_shape=jax.ShapeDtypeStruct((Mp, N), jnp.float32),
        compiler_params=_cparams(1),
    )(x.astype(jnp.float32), w.astype(jnp.bfloat16),
      b.reshape(1, N).astype(jnp.float32))
    return out[:M] if Mp != M else out


def _phase_split(x, pad_value):
    # Pad (3x3, stride 2, pad 1) and split the padded image into the four
    # (row%2, col%2) phases so the stride-2 kernels only need contiguous
    # in-VMEM slices.  Phase (ph, pw) row a sits at row (2*ph + pw)*Hp2 + a.
    N, H, W, C = x.shape
    Ho = (H - 1) // 2 + 1
    Wo = (W - 1) // 2 + 1
    Hp2, Wp2 = Ho + 1, Wo + 1
    xp = jnp.pad(x, ((0, 0), (1, 2 * Hp2 - H - 1), (1, 2 * Wp2 - W - 1), (0, 0)),
                 constant_values=pad_value)
    ph = xp.reshape(N, Hp2, 2, Wp2, 2, C)
    ph = jnp.transpose(ph, (0, 2, 4, 1, 3, 5))      # (N, 2, 2, Hp2, Wp2, C)
    return ph.reshape(N, 4 * Hp2, Wp2, C), Ho, Wo, Hp2, Wp2


def depthwise_conv_bn(x, w, b, stride):
    N, H, W, C = x.shape
    if stride == 1:
        xp = jnp.pad(x, ((0, 0), (1, 1), (1, 1), (0, 0)))
        return pl.pallas_call(
            functools.partial(_dw_s1_kernel, H=H, W=W),
            grid=(N,),
            in_specs=[pl.BlockSpec((1, H + 2, W + 2, C), lambda n: (n, 0, 0, 0)),
                      pl.BlockSpec((9, 1, C), lambda n: (0, 0, 0)),
                      pl.BlockSpec((1, 1, C), lambda n: (0, 0, 0))],
            out_specs=pl.BlockSpec((1, H, W, C), lambda n: (n, 0, 0, 0)),
            out_shape=jax.ShapeDtypeStruct((N, H, W, C), jnp.float32),
            compiler_params=_cparams(1),
        )(xp, w, b.reshape(1, 1, C))
    ph, Ho, Wo, Hp2, Wp2 = _phase_split(x, 0.0)
    return pl.pallas_call(
        functools.partial(_dw_s2_kernel, Ho=Ho, Wo=Wo, Hp2=Hp2),
        grid=(N,),
        in_specs=[pl.BlockSpec((1, 4 * Hp2, Wp2, C), lambda n: (n, 0, 0, 0)),
                  pl.BlockSpec((9, 1, C), lambda n: (0, 0, 0)),
                  pl.BlockSpec((1, 1, C), lambda n: (0, 0, 0))],
        out_specs=pl.BlockSpec((1, Ho, Wo, C), lambda n: (n, 0, 0, 0)),
        out_shape=jax.ShapeDtypeStruct((N, Ho, Wo, C), jnp.float32),
        compiler_params=_cparams(1),
    )(ph, w, b.reshape(1, 1, C))


def maxpool3x3_s2(x):
    N, H, W, C = x.shape
    neg = float(jnp.finfo(jnp.float32).min)
    ph, Ho, Wo, Hp2, Wp2 = _phase_split(x, neg)
    return pl.pallas_call(
        functools.partial(_maxpool_s2_kernel, Ho=Ho, Wo=Wo, Hp2=Hp2),
        grid=(N,),
        in_specs=[pl.BlockSpec((1, 4 * Hp2, Wp2, C), lambda n: (n, 0, 0, 0))],
        out_specs=pl.BlockSpec((1, Ho, Wo, C), lambda n: (n, 0, 0, 0)),
        out_shape=jax.ShapeDtypeStruct((N, Ho, Wo, C), jnp.float32),
        compiler_params=_cparams(1),
    )(ph)


def pointwise_conv_bn(x, w, b, relu):
    N, H, W, C = x.shape
    y = pallas_matmul_bias(x.reshape(N * H * W, C), w, b, relu)
    return y.reshape(N, H, W, -1)


def conv3x3_bn_relu_s2(x, w_flat, b):
    # Stem: 3x3/s2/p1 conv as im2col (Cin=3, cheap) + MXU matmul.
    # Weight rows are ordered (kh, kw, cin); real torchvision weights
    # (cout, cin, kh, kw) would need a transpose to (kh, kw, cin, cout) first.
    N, H, W, C = x.shape
    Ho = (H - 1) // 2 + 1
    Wo = (W - 1) // 2 + 1
    xp = jnp.pad(x, ((0, 0), (1, 1), (1, 1), (0, 0)))
    cols = [xp[:, dh:dh + 2 * Ho - 1:2, dw:dw + 2 * Wo - 1:2, :]
            for dh in range(3) for dw in range(3)]
    patches = jnp.concatenate(cols, axis=-1).reshape(N * Ho * Wo, 9 * C)
    y = pallas_matmul_bias(patches, w_flat, b, relu=True)
    return y.reshape(N, Ho, Wo, -1)


def pallas_gap_fc(x, w, b):
    # x (N, HW, C) f32, w (C, num_classes) bf16 — single small block.
    N, HW, C = x.shape
    nc = w.shape[1]
    return pl.pallas_call(
        _gap_fc_kernel,
        out_shape=jax.ShapeDtypeStruct((N, nc), jnp.float32),
        in_specs=[_VMEM, _VMEM, _VMEM],
        out_specs=_VMEM,
        compiler_params=pltpu.CompilerParams(vmem_limit_bytes=VMEM_LIMIT),
    )(x.astype(jnp.float32), w.astype(jnp.bfloat16),
      b.reshape(1, nc).astype(jnp.float32))


# ----------------------------------------------------------------------------
# Plain-JAX glue
# ----------------------------------------------------------------------------
def channel_shuffle(x, groups=2):
    # TODO(synk): could be folded into the next block's 1x1-conv weight-row
    # permutation (zero runtime cost); kept as cheap JAX glue for clarity.
    N, H, W, C = x.shape
    x = x.reshape(N, H, W, groups, C // groups)
    x = jnp.transpose(x, (0, 1, 2, 4, 3))
    return x.reshape(N, H, W, C)


def inverted_residual(x, p, stride):
    if stride == 1:
        c = x.shape[-1] // 2
        x1, x2 = x[..., :c], x[..., c:]
        b2 = pointwise_conv_bn(x2, *p['b2_pw1'], relu=True)
        b2 = depthwise_conv_bn(b2, *p['b2_dw'], stride=1)
        b2 = pointwise_conv_bn(b2, *p['b2_pw2'], relu=True)
        out = jnp.concatenate([x1, b2], axis=-1)
    else:
        b1 = depthwise_conv_bn(x, *p['b1_dw'], stride=2)
        b1 = pointwise_conv_bn(b1, *p['b1_pw'], relu=True)
        b2 = pointwise_conv_bn(x, *p['b2_pw1'], relu=True)
        b2 = depthwise_conv_bn(b2, *p['b2_dw'], stride=2)
        b2 = pointwise_conv_bn(b2, *p['b2_pw2'], relu=True)
        out = jnp.concatenate([b1, b2], axis=-1)
    return channel_shuffle(out, groups=2)


# ----------------------------------------------------------------------------
# Deterministic parameter construction (shufflenet_v2_x1_0 shapes, BN folded)
# ----------------------------------------------------------------------------
def _bn_fold(key, c):
    k1, k2, k3, k4 = jax.random.split(key, 4)
    gamma = jax.random.uniform(k1, (c,), minval=0.5, maxval=1.5)
    beta = 0.1 * jax.random.normal(k2, (c,))
    mean = 0.1 * jax.random.normal(k3, (c,))
    var = jax.random.uniform(k4, (c,), minval=0.5, maxval=1.5)
    scale = gamma / jnp.sqrt(var + 1e-5)
    shift = beta - mean * scale
    return scale.astype(jnp.float32), shift.astype(jnp.float32)


def conv_bn(key, kh, kw, cin, cout):
    # BN scale folded into the weight: (x @ w) * s + b == x @ (w * s) + b.
    kconv, kbn = jax.random.split(key)
    w = 0.05 * jax.random.normal(kconv, (kh * kw * cin, cout), jnp.float32)
    s, b = _bn_fold(kbn, cout)
    return (w * s[None, :]).astype(jnp.bfloat16), b


def dw_bn(key, c):
    kconv, kbn = jax.random.split(key)
    w = 0.1 * jax.random.normal(kconv, (9, 1, c), jnp.float32)
    s, b = _bn_fold(kbn, c)
    return (w * s[None, None, :]).astype(jnp.float32), b


def block_params(key, inp, oup, stride):
    bf = oup // 2
    ks = jax.random.split(key, 5)
    p = {}
    if stride > 1:
        p['b1_dw'] = dw_bn(ks[0], inp)
        p['b1_pw'] = conv_bn(ks[1], 1, 1, inp, bf)
    p['b2_pw1'] = conv_bn(ks[2], 1, 1, inp if stride > 1 else bf, bf)
    p['b2_dw'] = dw_bn(ks[3], bf)
    p['b2_pw2'] = conv_bn(ks[4], 1, 1, bf, bf)
    return p


def make_params(key, num_classes=39):
    # shufflenet_v2_x1_0: repeats [4, 8, 4], channels [24, 116, 232, 464, 1024]
    stages_repeats = [4, 8, 4]
    stages_out = [24, 116, 232, 464, 1024]
    ki = iter(list(jax.random.split(key, 64)))

    params = {'conv1': conv_bn(next(ki), 3, 3, 3, stages_out[0])}
    in_c = stages_out[0]
    for stage_idx, (reps, out_c) in enumerate(zip(stages_repeats, stages_out[1:4])):
        blocks = [block_params(next(ki), in_c, out_c, stride=2)]
        for _ in range(reps - 1):
            blocks.append(block_params(next(ki), out_c, out_c, stride=1))
        params['stage%d' % (stage_idx + 2)] = blocks
        in_c = out_c
    params['conv5'] = conv_bn(next(ki), 1, 1, in_c, stages_out[4])
    kf1, kf2 = jax.random.split(next(ki))
    params['fc'] = ((0.05 * jax.random.normal(kf1, (stages_out[4], num_classes),
                                              jnp.float32)).astype(jnp.bfloat16),
                    0.05 * jax.random.normal(kf2, (num_classes,), jnp.float32))
    # lasso_input: nn.Linear(100, 64) — present in the module but only used when
    # lasso_predictions_tensor is not None; that branch concatenates (N, 64)
    # onto a 4-D image along dim=1, which has no valid shape for the conv stem.
    kl1, kl2 = jax.random.split(next(ki))
    params['lasso_input'] = (0.05 * jax.random.normal(kl1, (100, 64), jnp.float32),
                             0.05 * jax.random.normal(kl2, (64,), jnp.float32))
    # TODO(synk): the `lasso_predictions_tensor is not None` concat path is not
    # exercised — default forward(x, None) path is implemented.
    return params


# ----------------------------------------------------------------------------
# Forward pass (== ShuffleNetV2.forward(x, lasso_predictions_tensor=None))
# ----------------------------------------------------------------------------
def forward(params, x_nchw):
    x = jnp.transpose(x_nchw, (0, 2, 3, 1)).astype(jnp.float32)  # NCHW -> NHWC
    x = conv3x3_bn_relu_s2(x, *params['conv1'])       # conv1: 3x3 s2 + BN + ReLU
    x = maxpool3x3_s2(x)                              # maxpool 3x3 s2 p1
    for stage in ('stage2', 'stage3', 'stage4'):
        for i, bp in enumerate(params[stage]):
            x = inverted_residual(x, bp, stride=2 if i == 0 else 1)
    x = pointwise_conv_bn(x, *params['conv5'], relu=True)   # conv5: 1x1 + BN + ReLU
    N, H, W, C = x.shape
    wf, bf = params['fc']
    return pallas_gap_fc(x.reshape(N, H * W, C), wf, bf)    # GAP + fc (fused)


if __name__ == "__main__":
    key = jax.random.PRNGKey(0)
    pkey, xkey = jax.random.split(key)
    params = make_params(pkey, num_classes=39)

    # Small but architecture-consistent input: batch=2, 3 channels, 32x32.
    x = jax.random.normal(xkey, (2, 3, 32, 32), jnp.float32)

    fwd = jax.jit(lambda inp: forward(params, inp))
    out = jax.block_until_ready(fwd(x))
    assert out.shape == (2, 39), out.shape
    assert bool(jnp.all(jnp.isfinite(out)))
    print("KERNEL_OK")
</pallas_src>

<mosaic_0001>
module attributes {stable_mosaic.version = 11 : i64} {
  func.func @_mm_bias_kernel(%arg0: i32, %arg1: memref<512x27xf32, #tpu.memory_space<vmem>>, %arg2: memref<27x24xbf16, #tpu.memory_space<vmem>>, %arg3: memref<1x24xf32, #tpu.memory_space<vmem>>, %arg4: memref<512x24xf32, #tpu.memory_space<vmem>>) attributes {dimension_semantics = [#tpu.dimension_semantics<parallel>], iteration_bounds = array<i64: 1>, scalar_prefetch = 0 : i64, scratch_operands = 0 : i64, tpu.core_type = #tpu.core_type<tc>, window_params = [{transform_indices = @transform_0, window_bounds = array<i64: 512, 27>}, {pipeline_mode = #tpu.pipeline_mode<synchronous>, transform_indices = @transform_1, window_bounds = array<i64: 27, 24>}, {pipeline_mode = #tpu.pipeline_mode<synchronous>, transform_indices = @transform_2, window_bounds = array<i64: 1, 24>}, {transform_indices = @transform_3, window_bounds = array<i64: 512, 24>}]} {
    %c0 = arith.constant 0 : index
    %c0_0 = arith.constant 0 : index
    %0 = vector.load %arg1[%c0, %c0_0] : memref<512x27xf32, #tpu.memory_space<vmem>>, vector<512x27xf32>
    %1 = arith.truncf %0 : vector<512x27xf32> to vector<512x27xbf16>
    %c0_1 = arith.constant 0 : index
    %c0_2 = arith.constant 0 : index
    %2 = vector.load %arg2[%c0_1, %c0_2] : memref<27x24xbf16, #tpu.memory_space<vmem>>, vector<27x24xbf16>
    %cst = arith.constant dense<0.000000e+00> : vector<512x24xf32>
    %3 = tpu.matmul %1, %2, %cst {dimension_numbers = #tpu.dot_dimension_numbers<[1], [0], [0], [1], [0, 0, 1, 1], [], []>} : vector<512x27xbf16>, vector<27x24xbf16>, vector<512x24xf32> -> vector<512x24xf32>
    %c0_3 = arith.constant 0 : index
    %c0_4 = arith.constant 0 : index
    %4 = vector.load %arg3[%c0_3, %c0_4] : memref<1x24xf32, #tpu.memory_space<vmem>>, vector<1x24xf32>
    %5 = vector.broadcast %4 : vector<1x24xf32> to vector<512x24xf32>
    %6 = arith.addf %3, %5 : vector<512x24xf32>
    %cst_5 = arith.constant 0.000000e+00 : f32
    %7 = vector.broadcast %cst_5 : f32 to vector<512x24xf32>
    %8 = arith.maximumf %6, %7 : vector<512x24xf32>
    %c0_6 = arith.constant 0 : index
    %c0_7 = arith.constant 0 : index
    %9 = vector.load %arg4[%c0_6, %c0_7] : memref<512x24xf32, #tpu.memory_space<vmem>>, vector<512x24xf32>
    tpu.vector_store %arg4[%c0_6, %c0_7], %8 {strides = array<i32>} : memref<512x24xf32, #tpu.memory_space<vmem>>, vector<512x24xf32>,
    return
  }
  func.func @transform_0(%arg0: i32) -> (i32, i32) {
    %c0_i32 = arith.constant 0 : i32
    %c0_i32_0 = arith.constant 0 : i32
    return %arg0, %c0_i32 : i32, i32
  }
  func.func @transform_1(%arg0: i32) -> (i32, i32) {
    %c0_i32 = arith.constant 0 : i32
    %c0_i32_0 = arith.constant 0 : i32
    %c0_i32_1 = arith.constant 0 : i32
    return %c0_i32, %c0_i32_0 : i32, i32
  }
  func.func @transform_2(%arg0: i32) -> (i32, i32) {
    %c0_i32 = arith.constant 0 : i32
    %c0_i32_0 = arith.constant 0 : i32
    %c0_i32_1 = arith.constant 0 : i32
    return %c0_i32, %c0_i32_0 : i32, i32
  }
  func.func @transform_3(%arg0: i32) -> (i32, i32) {
    %c0_i32 = arith.constant 0 : i32
    %c0_i32_0 = arith.constant 0 : i32
    return %arg0, %c0_i32 : i32, i32
  }
}

module attributes {stable_mosaic.version = 11 : i64} {
  func.func @_mm_bias_kernel(%arg0: i32, %arg1: memref<128x24xf32, #tpu.memory_space<vmem>>, %arg2: memref<24x58xbf16, #tpu.memory_space<vmem>>, %arg3: memref<1x58xf32, #tpu.memory_space<vmem>>, %arg4: memref<128x58xf32, #tpu.memory_space<vmem>>) attributes {dimension_semantics = [#tpu.dimension_semantics<parallel>], iteration_bounds = array<i64: 1>, scalar_prefetch = 0 : i64, scratch_operands = 0 : i64, tpu.core_type = #tpu.core_type<tc>, window_params = [{transform_indices = @transform_0, window_bounds = array<i64: 128, 24>}, {pipeline_mode = #tpu.pipeline_mode<synchronous>, transform_indices = @transform_1, window_bounds = array<i64: 24, 58>}, {pipeline_mode = #tpu.pipeline_mode<synchronous>, transform_indices = @transform_2, window_bounds = array<i64: 1, 58>}, {transform_indices = @transform_3, window_bounds = array<i64: 128, 58>}]} {
    %c0 = arith.constant 0 : index
    %c0_0 = arith.constant 0 : index
    %0 = vector.load %arg1[%c0, %c0_0] : memref<128x24xf32, #tpu.memory_space<vmem>>, vector<128x24xf32>
    %1 = arith.truncf %0 : vector<128x24xf32> to vector<128x24xbf16>
    %c0_1 = arith.constant 0 : index
    %c0_2 = arith.constant 0 : index
    %2 = vector.load %arg2[%c0_1, %c0_2] : memref<24x58xbf16, #tpu.memory_space<vmem>>, vector<24x58xbf16>
    %cst = arith.constant dense<0.000000e+00> : vector<128x58xf32>
    %3 = tpu.matmul %1, %2, %cst {dimension_numbers = #tpu.dot_dimension_numbers<[1], [0], [0], [1], [0, 0, 1, 1], [], []>} : vector<128x24xbf16>, vector<24x58xbf16>, vector<128x58xf32> -> vector<128x58xf32>
    %c0_3 = arith.constant 0 : index
    %c0_4 = arith.constant 0 : index
    %4 = vector.load %arg3[%c0_3, %c0_4] : memref<1x58xf32, #tpu.memory_space<vmem>>, vector<1x58xf32>
    %5 = vector.broadcast %4 : vector<1x58xf32> to vector<128x58xf32>
    %6 = arith.addf %3, %5 : vector<128x58xf32>
    %cst_5 = arith.constant 0.000000e+00 : f32
    %7 = vector.broadcast %cst_5 : f32 to vector<128x58xf32>
    %8 = arith.maximumf %6, %7 : vector<128x58xf32>
    %c0_6 = arith.constant 0 : index
    %c0_7 = arith.constant 0 : index
    %9 = vector.load %arg4[%c0_6, %c0_7] : memref<128x58xf32, #tpu.memory_space<vmem>>, vector<128x58xf32>
    tpu.vector_store %arg4[%c0_6, %c0_7], %8 {strides = array<i32>} : memref<128x58xf32, #tpu.memory_space<vmem>>, vector<128x58xf32>,
    return
  }
  func.func @transform_0(%arg0: i32) -> (i32, i32) {
    %c0_i32 = arith.constant 0 : i32
    %c0_i32_0 = arith.constant 0 : i32
    return %arg0, %c0_i32 : i32, i32
  }
  func.func @transform_1(%arg0: i32) -> (i32, i32) {
    %c0_i32 = arith.constant 0 : i32
    %c0_i32_0 = arith.constant 0 : i32
    %c0_i32_1 = arith.constant 0 : i32
    return %c0_i32, %c0_i32_0 : i32, i32
  }
  func.func @transform_2(%arg0: i32) -> (i32, i32) {
    %c0_i32 = arith.constant 0 : i32
    %c0_i32_0 = arith.constant 0 : i32
    %c0_i32_1 = arith.constant 0 : i32
    return %c0_i32, %c0_i32_0 : i32, i32
  }
  func.func @transform_3(%arg0: i32) -> (i32, i32) {
    %c0_i32 = arith.constant 0 : i32
    %c0_i32_0 = arith.constant 0 : i32
    return %arg0, %c0_i32 : i32, i32
  }
}

module attributes {stable_mosaic.version = 11 : i64} {
  func.func @_maxpool_s2_kernel(%arg0: i32, %arg1: memref<1x36x9x24xf32, #tpu.memory_space<vmem>>, %arg2: memref<1x8x8x24xf32, #tpu.memory_space<vmem>>) attributes {dimension_semantics = [#tpu.dimension_semantics<parallel>], iteration_bounds = array<i64: 2>, scalar_prefetch = 0 : i64, scratch_operands = 0 : i64, tpu.core_type = #tpu.core_type<tc>, window_params = [{transform_indices = @transform_0, window_bounds = array<i64: 1, 36, 9, 24>}, {transform_indices = @transform_1, window_bounds = array<i64: 1, 8, 8, 24>}]} {
    %c0 = arith.constant 0 : index
    %c0_0 = arith.constant 0 : index
    %c0_1 = arith.constant 0 : index
    %c0_2 = arith.constant 0 : index
    %0 = vector.load %arg1[%c0, %c0_0, %c0_1, %c0_2] : memref<1x36x9x24xf32, #tpu.memory_space<vmem>>, vector<1x36x9x24xf32>
    %1 = vector.shape_cast %0 : vector<1x36x9x24xf32> to vector<36x9x24xf32>
    %2 = vector.extract_strided_slice %1 {offsets = [0, 0, 0], sizes = [8, 8, 24], strides = [1, 1, 1]} : vector<36x9x24xf32> to vector<8x8x24xf32>
    %3 = vector.extract_strided_slice %1 {offsets = [9, 0, 0], sizes = [8, 8, 24], strides = [1, 1, 1]} : vector<36x9x24xf32> to vector<8x8x24xf32>
    %4 = arith.maximumf %2, %3 : vector<8x8x24xf32>
    %5 = vector.extract_strided_slice %1 {offsets = [0, 1, 0], sizes = [8, 8, 24], strides = [1, 1, 1]} : vector<36x9x24xf32> to vector<8x8x24xf32>
    %6 = arith.maximumf %4, %5 : vector<8x8x24xf32>
    %7 = vector.extract_strided_slice %1 {offsets = [18, 0, 0], sizes = [8, 8, 24], strides = [1, 1, 1]} : vector<36x9x24xf32> to vector<8x8x24xf32>
    %8 = arith.maximumf %6, %7 : vector<8x8x24xf32>
    %9 = vector.extract_strided_slice %1 {offsets = [27, 0, 0], sizes = [8, 8, 24], strides = [1, 1, 1]} : vector<36x9x24xf32> to vector<8x8x24xf32>
    %10 = arith.maximumf %8, %9 : vector<8x8x24xf32>
    %11 = vector.extract_strided_slice %1 {offsets = [18, 1, 0], sizes = [8, 8, 24], strides = [1, 1, 1]} : vector<36x9x24xf32> to vector<8x8x24xf32>
    %12 = arith.maximumf %10, %11 : vector<8x8x24xf32>
    %13 = vector.extract_strided_slice %1 {offsets = [1, 0, 0], sizes = [8, 8, 24], strides = [1, 1, 1]} : vector<36x9x24xf32> to vector<8x8x24xf32>
    %14 = arith.maximumf %12, %13 : vector<8x8x24xf32>
    %15 = vector.extract_strided_slice %1 {offsets = [10, 0, 0], sizes = [8, 8, 24], strides = [1, 1, 1]} : vector<36x9x24xf32> to vector<8x8x24xf32>
    %16 = arith.maximumf %14, %15 : vector<8x8x24xf32>
    %17 = vector.extract_strided_slice %1 {offsets = [1, 1, 0], sizes = [8, 8, 24], strides = [1, 1, 1]} : vector<36x9x24xf32> to vector<8x8x24xf32>
    %18 = arith.maximumf %16, %17 : vector<8x8x24xf32>
    %c0_3 = arith.constant 0 : index
    %c0_4 = arith.constant 0 : index
    %c0_5 = arith.constant 0 : index
    %c0_6 = arith.constant 0 : index
    %19 = vector.load %arg2[%c0_3, %c0_4, %c0_5, %c0_6] : memref<1x8x8x24xf32, #tpu.memory_space<vmem>>, vector<1x8x8x24xf32>
    %20 = vector.shape_cast %19 : vector<1x8x8x24xf32> to vector<8x8x24xf32>
    %21 = vector.shape_cast %18 : vector<8x8x24xf32> to vector<1x8x8x24xf32>
    tpu.vector_store %arg2[%c0_3, %c0_4, %c0_5, %c0_6], %21 {strides = array<i32>} : memref<1x8x8x24xf32, #tpu.memory_space<vmem>>, vector<1x8x8x24xf32>,
    return
  }
  func.func @transform_0(%arg0: i32) -> (i32, i32, i32, i32) {
    %c0_i32 = arith.constant 0 : i32
    %c0_i32_0 = arith.constant 0 : i32
    %c0_i32_1 = arith.constant 0 : i32
    %c0_i32_2 = arith.constant 0 : i32
    return %arg0, %c0_i32, %c0_i32_0, %c0_i32_1 : i32, i32, i32, i32
  }
  func.func @transform_1(%arg0: i32) -> (i32, i32, i32, i32) {
    %c0_i32 = arith.constant 0 : i32
    %c0_i32_0 = arith.constant 0 : i32
    %c0_i32_1 = arith.constant 0 : i32
    %c0_i32_2 = arith.constant 0 : i32
    return %arg0, %c0_i32, %c0_i32_0, %c0_i32_1 : i32, i32, i32, i32
  }
}

module attributes {stable_mosaic.version = 11 : i64} {
  func.func @_dw_s2_kernel(%arg0: i32, %arg1: memref<1x20x5x58xf32, #tpu.memory_space<vmem>>, %arg2: memref<9x1x58xf32, #tpu.memory_space<vmem>>, %arg3: memref<1x1x58xf32, #tpu.memory_space<vmem>>, %arg4: memref<1x4x4x58xf32, #tpu.memory_space<vmem>>) attributes {dimension_semantics = [#tpu.dimension_semantics<parallel>], iteration_bounds = array<i64: 2>, scalar_prefetch = 0 : i64, scratch_operands = 0 : i64, tpu.core_type = #tpu.core_type<tc>, window_params = [{transform_indices = @transform_0, window_bounds = array<i64: 1, 20, 5, 58>}, {pipeline_mode = #tpu.pipeline_mode<synchronous>, transform_indices = @transform_1, window_bounds = array<i64: 9, 1, 58>}, {pipeline_mode = #tpu.pipeline_mode<synchronous>, transform_indices = @transform_2, window_bounds = array<i64: 1, 1, 58>}, {transform_indices = @transform_3, window_bounds = array<i64: 1, 4, 4, 58>}]} {
    %c0 = arith.constant 0 : index
    %c0_0 = arith.constant 0 : index
    %c0_1 = arith.constant 0 : index
    %c0_2 = arith.constant 0 : index
    %0 = vector.load %arg1[%c0, %c0_0, %c0_1, %c0_2] : memref<1x20x5x58xf32, #tpu.memory_space<vmem>>, vector<1x20x5x58xf32>
    %1 = vector.shape_cast %0 : vector<1x20x5x58xf32> to vector<20x5x58xf32>
    %c0_3 = arith.constant 0 : index
    %c0_4 = arith.constant 0 : index
    %c0_5 = arith.constant 0 : index
    %2 = vector.load %arg2[%c0_3, %c0_4, %c0_5] : memref<9x1x58xf32, #tpu.memory_space<vmem>>, vector<9x1x58xf32>
    %c0_6 = arith.constant 0 : index
    %c0_7 = arith.constant 0 : index
    %c0_8 = arith.constant 0 : index
    %3 = vector.load %arg3[%c0_6, %c0_7, %c0_8] : memref<1x1x58xf32, #tpu.memory_space<vmem>>, vector<1x1x58xf32>
    %4 = vector.shape_cast %3 : vector<1x1x58xf32> to vector<1x58xf32>
    %5 = vector.extract_strided_slice %1 {offsets = [0, 0, 0], sizes = [4, 4, 58], strides = [1, 1, 1]} : vector<20x5x58xf32> to vector<4x4x58xf32>
    %6 = vector.extract_strided_slice %2 {offsets = [0, 0, 0], sizes = [1, 1, 58], strides = [1, 1, 1]} : vector<9x1x58xf32> to vector<1x1x58xf32>
    %7 = vector.shape_cast %6 : vector<1x1x58xf32> to vector<1x58xf32>
    %8 = vector.shape_cast %7 : vector<1x58xf32> to vector<1x1x58xf32>
    %9 = vector.broadcast %8 : vector<1x1x58xf32> to vector<4x4x58xf32>
    %10 = arith.mulf %5, %9 : vector<4x4x58xf32>
    %11 = vector.extract_strided_slice %1 {offsets = [5, 0, 0], sizes = [4, 4, 58], strides = [1, 1, 1]} : vector<20x5x58xf32> to vector<4x4x58xf32>
    %12 = vector.extract_strided_slice %2 {offsets = [1, 0, 0], sizes = [1, 1, 58], strides = [1, 1, 1]} : vector<9x1x58xf32> to vector<1x1x58xf32>
    %13 = vector.shape_cast %12 : vector<1x1x58xf32> to vector<1x58xf32>
    %14 = vector.shape_cast %13 : vector<1x58xf32> to vector<1x1x58xf32>
    %15 = vector.broadcast %14 : vector<1x1x58xf32> to vector<4x4x58xf32>
    %16 = arith.mulf %11, %15 : vector<4x4x58xf32>
    %17 = arith.addf %10, %16 : vector<4x4x58xf32>
    %18 = vector.extract_strided_slice %1 {offsets = [0, 1, 0], sizes = [4, 4, 58], strides = [1, 1, 1]} : vector<20x5x58xf32> to vector<4x4x58xf32>
    %19 = vector.extract_strided_slice %2 {offsets = [2, 0, 0], sizes = [1, 1, 58], strides = [1, 1, 1]} : vector<9x1x58xf32> to vector<1x1x58xf32>
    %20 = vector.shape_cast %19 : vector<1x1x58xf32> to vector<1x58xf32>
    %21 = vector.shape_cast %20 : vector<1x58xf32> to vector<1x1x58xf32>
    %22 = vector.broadcast %21 : vector<1x1x58xf32> to vector<4x4x58xf32>
    %23 = arith.mulf %18, %22 : vector<4x4x58xf32>
    %24 = arith.addf %17, %23 : vector<4x4x58xf32>
    %25 = vector.extract_strided_slice %1 {offsets = [10, 0, 0], sizes = [4, 4, 58], strides = [1, 1, 1]} : vector<20x5x58xf32> to vector<4x4x58xf32>
    %26 = vector.extract_strided_slice %2 {offsets = [3, 0, 0], sizes = [1, 1, 58], strides = [1, 1, 1]} : vector<9x1x58xf32> to vector<1x1x58xf32>
    %27 = vector.shape_cast %26 : vector<1x1x58xf32> to vector<1x58xf32>
    %28 = vector.shape_cast %27 : vector<1x58xf32> to vector<1x1x58xf32>
    %29 = vector.broadcast %28 : vector<1x1x58xf32> to vector<4x4x58xf32>
    %30 = arith.mulf %25, %29 : vector<4x4x58xf32>
    %31 = arith.addf %24, %30 : vector<4x4x58xf32>
    %32 = vector.extract_strided_slice %1 {offsets = [15, 0, 0], sizes = [4, 4, 58], strides = [1, 1, 1]} : vector<20x5x58xf32> to vector<4x4x58xf32>
    %33 = vector.extract_strided_slice %2 {offsets = [4, 0, 0], sizes = [1, 1, 58], strides = [1, 1, 1]} : vector<9x1x58xf32> to vector<1x1x58xf32>
    %34 = vector.shape_cast %33 : vector<1x1x58xf32> to vector<1x58xf32>
    %35 = vector.shape_cast %34 : vector<1x58xf32> to vector<1x1x58xf32>
    %36 = vector.broadcast %35 : vector<1x1x58xf32> to vector<4x4x58xf32>
    %37 = arith.mulf %32, %36 : vector<4x4x58xf32>
    %38 = arith.addf %31, %37 : vector<4x4x58xf32>
    %39 = vector.extract_strided_slice %1 {offsets = [10, 1, 0], sizes = [4, 4, 58], strides = [1, 1, 1]} : vector<20x5x58xf32> to vector<4x4x58xf32>
    %40 = vector.extract_strided_slice %2 {offsets = [5, 0, 0], sizes = [1, 1, 58], strides = [1, 1, 1]} : vector<9x1x58xf32> to vector<1x1x58xf32>
    %41 = vector.shape_cast %40 : vector<1x1x58xf32> to vector<1x58xf32>
    %42 = vector.shape_cast %41 : vector<1x58xf32> to vector<1x1x58xf32>
    %43 = vector.broadcast %42 : vector<1x1x58xf32> to vector<4x4x58xf32>
    %44 = arith.mulf %39, %43 : vector<4x4x58xf32>
    %45 = arith.addf %38, %44 : vector<4x4x58xf32>
    %46 = vector.extract_strided_slice %1 {offsets = [1, 0, 0], sizes = [4, 4, 58], strides = [1, 1, 1]} : vector<20x5x58xf32> to vector<4x4x58xf32>
    %47 = vector.extract_strided_slice %2 {offsets = [6, 0, 0], sizes = [1, 1, 58], strides = [1, 1, 1]} : vector<9x1x58xf32> to vector<1x1x58xf32>
    %48 = vector.shape_cast %47 : vector<1x1x58xf32> to vector<1x58xf32>
    %49 = vector.shape_cast %48 : vector<1x58xf32> to vector<1x1x58xf32>
    %50 = vector.broadcast %49 : vector<1x1x58xf32> to vector<4x4x58xf32>
    %51 = arith.mulf %46, %50 : vector<4x4x58xf32>
    %52 = arith.addf %45, %51 : vector<4x4x58xf32>
    %53 = vector.extract_strided_slice %1 {offsets = [6, 0, 0], sizes = [4, 4, 58], strides = [1, 1, 1]} : vector<20x5x58xf32> to vector<4x4x58xf32>
    %54 = vector.extract_strided_slice %2 {offsets = [7, 0, 0], sizes = [1, 1, 58], strides = [1, 1, 1]} : vector<9x1x58xf32> to vector<1x1x58xf32>
    %55 = vector.shape_cast %54 : vector<1x1x58xf32> to vector<1x58xf32>
    %56 = vector.shape_cast %55 : vector<1x58xf32> to vector<1x1x58xf32>
    %57 = vector.broadcast %56 : vector<1x1x58xf32> to vector<4x4x58xf32>
    %58 = arith.mulf %53, %57 : vector<4x4x58xf32>
    %59 = arith.addf %52, %58 : vector<4x4x58xf32>
    %60 = vector.extract_strided_slice %1 {offsets = [1, 1, 0], sizes = [4, 4, 58], strides = [1, 1, 1]} : vector<20x5x58xf32> to vector<4x4x58xf32>
    %61 = vector.extract_strided_slice %2 {offsets = [8, 0, 0], sizes = [1, 1, 58], strides = [1, 1, 1]} : vector<9x1x58xf32> to vector<1x1x58xf32>
    %62 = vector.shape_cast %61 : vector<1x1x58xf32> to vector<1x58xf32>
    %63 = vector.shape_cast %62 : vector<1x58xf32> to vector<1x1x58xf32>
    %64 = vector.broadcast %63 : vector<1x1x58xf32> to vector<4x4x58xf32>
    %65 = arith.mulf %60, %64 : vector<4x4x58xf32>
    %66 = arith.addf %59, %65 : vector<4x4x58xf32>
    %67 = vector.shape_cast %4 : vector<1x58xf32> to vector<1x1x58xf32>
    %68 = vector.broadcast %67 : vector<1x1x58xf32> to vector<4x4x58xf32>
    %69 = arith.addf %66, %68 : vector<4x4x58xf32>
    %c0_9 = arith.constant 0 : index
    %c0_10 = arith.constant 0 : index
    %c0_11 = arith.constant 0 : index
    %c0_12 = arith.constant 0 : index
    %70 = vector.load %arg4[%c0_9, %c0_10, %c0_11, %c0_12] : memref<1x4x4x58xf32, #tpu.memory_space<vmem>>, vector<1x4x4x58xf32>
    %71 = vector.shape_cast %70 : vector<1x4x4x58xf32> to vector<4x4x58xf32>
    %72 = vector.shape_cast %69 : vector<4x4x58xf32> to vector<1x4x4x58xf32>
    tpu.vector_store %arg4[%c0_9, %c0_10, %c0_11, %c0_12], %72 {strides = array<i32>} : memref<1x4x4x58xf32, #tpu.memory_space<vmem>>, vector<1x4x4x58xf32>,
    return
  }
  func.func @transform_0(%arg0: i32) -> (i32, i32, i32, i32) {
    %c0_i32 = arith.constant 0 : i32
    %c0_i32_0 = arith.constant 0 : i32
    %c0_i32_1 = arith.constant 0 : i32
    %c0_i32_2 = arith.constant 0 : i32
    return %arg0, %c0_i32, %c0_i32_0, %c0_i32_1 : i32, i32, i32, i32
  }
  func.func @transform_1(%arg0: i32) -> (i32, i32, i32) {
    %c0_i32 = arith.constant 0 : i32
    %c0_i32_0 = arith.constant 0 : i32
    %c0_i32_1 = arith.constant 0 : i32
    %c0_i32_2 = arith.constant 0 : i32
    return %c0_i32, %c0_i32_0, %c0_i32_1 : i32, i32, i32
  }
  func.func @transform_2(%arg0: i32) -> (i32, i32, i32) {
    %c0_i32 = arith.constant 0 : i32
    %c0_i32_0 = arith.constant 0 : i32
    %c0_i32_1 = arith.constant 0 : i32
    %c0_i32_2 = arith.constant 0 : i32
    return %c0_i32, %c0_i32_0, %c0_i32_1 : i32, i32, i32
  }
  func.func @transform_3(%arg0: i32) -> (i32, i32, i32, i32) {
    %c0_i32 = arith.constant 0 : i32
    %c0_i32_0 = arith.constant 0 : i32
    %c0_i32_1 = arith.constant 0 : i32
    %c0_i32_2 = arith.constant 0 : i32
    return %arg0, %c0_i32, %c0_i32_0, %c0_i32_1 : i32, i32, i32, i32
  }
}

module attributes {stable_mosaic.version = 11 : i64} {
  func.func @_mm_bias_kernel(%arg0: i32, %arg1: memref<32x58xf32, #tpu.memory_space<vmem>>, %arg2: memref<58x58xbf16, #tpu.memory_space<vmem>>, %arg3: memref<1x58xf32, #tpu.memory_space<vmem>>, %arg4: memref<32x58xf32, #tpu.memory_space<vmem>>) attributes {dimension_semantics = [#tpu.dimension_semantics<parallel>], iteration_bounds = array<i64: 1>, scalar_prefetch = 0 : i64, scratch_operands = 0 : i64, tpu.core_type = #tpu.core_type<tc>, window_params = [{transform_indices = @transform_0, window_bounds = array<i64: 32, 58>}, {pipeline_mode = #tpu.pipeline_mode<synchronous>, transform_indices = @transform_1, window_bounds = array<i64: 58, 58>}, {pipeline_mode = #tpu.pipeline_mode<synchronous>, transform_indices = @transform_2, window_bounds = array<i64: 1, 58>}, {transform_indices = @transform_3, window_bounds = array<i64: 32, 58>}]} {
    %c0 = arith.constant 0 : index
    %c0_0 = arith.constant 0 : index
    %0 = vector.load %arg1[%c0, %c0_0] : memref<32x58xf32, #tpu.memory_space<vmem>>, vector<32x58xf32>
    %1 = arith.truncf %0 : vector<32x58xf32> to vector<32x58xbf16>
    %c0_1 = arith.constant 0 : index
    %c0_2 = arith.constant 0 : index
    %2 = vector.load %arg2[%c0_1, %c0_2] : memref<58x58xbf16, #tpu.memory_space<vmem>>, vector<58x58xbf16>
    %cst = arith.constant dense<0.000000e+00> : vector<32x58xf32>
    %3 = tpu.matmul %1, %2, %cst {dimension_numbers = #tpu.dot_dimension_numbers<[1], [0], [0], [1], [0, 0, 1, 1], [], []>} : vector<32x58xbf16>, vector<58x58xbf16>, vector<32x58xf32> -> vector<32x58xf32>
    %c0_3 = arith.constant 0 : index
    %c0_4 = arith.constant 0 : index
    %4 = vector.load %arg3[%c0_3, %c0_4] : memref<1x58xf32, #tpu.memory_space<vmem>>, vector<1x58xf32>
    %5 = vector.broadcast %4 : vector<1x58xf32> to vector<32x58xf32>
    %6 = arith.addf %3, %5 : vector<32x58xf32>
    %cst_5 = arith.constant 0.000000e+00 : f32
    %7 = vector.broadcast %cst_5 : f32 to vector<32x58xf32>
    %8 = arith.maximumf %6, %7 : vector<32x58xf32>
    %c0_6 = arith.constant 0 : index
    %c0_7 = arith.constant 0 : index
    %9 = vector.load %arg4[%c0_6, %c0_7] : memref<32x58xf32, #tpu.memory_space<vmem>>, vector<32x58xf32>
    tpu.vector_store %arg4[%c0_6, %c0_7], %8 {strides = array<i32>} : memref<32x58xf32, #tpu.memory_space<vmem>>, vector<32x58xf32>,
    return
  }
  func.func @transform_0(%arg0: i32) -> (i32, i32) {
    %c0_i32 = arith.constant 0 : i32
    %c0_i32_0 = arith.constant 0 : i32
    return %arg0, %c0_i32 : i32, i32
  }
  func.func @transform_1(%arg0: i32) -> (i32, i32) {
    %c0_i32 = arith.constant 0 : i32
    %c0_i32_0 = arith.constant 0 : i32
    %c0_i32_1 = arith.constant 0 : i32
    return %c0_i32, %c0_i32_0 : i32, i32
  }
  func.func @transform_2(%arg0: i32) -> (i32, i32) {
    %c0_i32 = arith.constant 0 : i32
    %c0_i32_0 = arith.constant 0 : i32
    %c0_i32_1 = arith.constant 0 : i32
    return %c0_i32, %c0_i32_0 : i32, i32
  }
  func.func @transform_3(%arg0: i32) -> (i32, i32) {
    %c0_i32 = arith.constant 0 : i32
    %c0_i32_0 = arith.constant 0 : i32
    return %arg0, %c0_i32 : i32, i32
  }
}

module attributes {stable_mosaic.version = 11 : i64} {
  func.func @_mm_bias_kernel(%arg0: i32, %arg1: memref<32x24xf32, #tpu.memory_space<vmem>>, %arg2: memref<24x58xbf16, #tpu.memory_space<vmem>>, %arg3: memref<1x58xf32, #tpu.memory_space<vmem>>, %arg4: memref<32x58xf32, #tpu.memory_space<vmem>>) attributes {dimension_semantics = [#tpu.dimension_semantics<parallel>], iteration_bounds = array<i64: 1>, scalar_prefetch = 0 : i64, scratch_operands = 0 : i64, tpu.core_type = #tpu.core_type<tc>, window_params = [{transform_indices = @transform_0, window_bounds = array<i64: 32, 24>}, {pipeline_mode = #tpu.pipeline_mode<synchronous>, transform_indices = @transform_1, window_bounds = array<i64: 24, 58>}, {pipeline_mode = #tpu.pipeline_mode<synchronous>, transform_indices = @transform_2, window_bounds = array<i64: 1, 58>}, {transform_indices = @transform_3, window_bounds = array<i64: 32, 58>}]} {
    %c0 = arith.constant 0 : index
    %c0_0 = arith.constant 0 : index
    %0 = vector.load %arg1[%c0, %c0_0] : memref<32x24xf32, #tpu.memory_space<vmem>>, vector<32x24xf32>
    %1 = arith.truncf %0 : vector<32x24xf32> to vector<32x24xbf16>
    %c0_1 = arith.constant 0 : index
    %c0_2 = arith.constant 0 : index
    %2 = vector.load %arg2[%c0_1, %c0_2] : memref<24x58xbf16, #tpu.memory_space<vmem>>, vector<24x58xbf16>
    %cst = arith.constant dense<0.000000e+00> : vector<32x58xf32>
    %3 = tpu.matmul %1, %2, %cst {dimension_numbers = #tpu.dot_dimension_numbers<[1], [0], [0], [1], [0, 0, 1, 1], [], []>} : vector<32x24xbf16>, vector<24x58xbf16>, vector<32x58xf32> -> vector<32x58xf32>
    %c0_3 = arith.constant 0 : index
    %c0_4 = arith.constant 0 : index
    %4 = vector.load %arg3[%c0_3, %c0_4] : memref<1x58xf32, #tpu.memory_space<vmem>>, vector<1x58xf32>
    %5 = vector.broadcast %4 : vector<1x58xf32> to vector<32x58xf32>
    %6 = arith.addf %3, %5 : vector<32x58xf32>
    %cst_5 = arith.constant 0.000000e+00 : f32
    %7 = vector.broadcast %cst_5 : f32 to vector<32x58xf32>
    %8 = arith.maximumf %6, %7 : vector<32x58xf32>
    %c0_6 = arith.constant 0 : index
    %c0_7 = arith.constant 0 : index
    %9 = vector.load %arg4[%c0_6, %c0_7] : memref<32x58xf32, #tpu.memory_space<vmem>>, vector<32x58xf32>
    tpu.vector_store %arg4[%c0_6, %c0_7], %8 {strides = array<i32>} : memref<32x58xf32, #tpu.memory_space<vmem>>, vector<32x58xf32>,
    return
  }
  func.func @transform_0(%arg0: i32) -> (i32, i32) {
    %c0_i32 = arith.constant 0 : i32
    %c0_i32_0 = arith.constant 0 : i32
    return %arg0, %c0_i32 : i32, i32
  }
  func.func @transform_1(%arg0: i32) -> (i32, i32) {
    %c0_i32 = arith.constant 0 : i32
    %c0_i32_0 = arith.constant 0 : i32
    %c0_i32_1 = arith.constant 0 : i32
    return %c0_i32, %c0_i32_0 : i32, i32
  }
  func.func @transform_2(%arg0: i32) -> (i32, i32) {
    %c0_i32 = arith.constant 0 : i32
    %c0_i32_0 = arith.constant 0 : i32
    %c0_i32_1 = arith.constant 0 : i32
    return %c0_i32, %c0_i32_0 : i32, i32
  }
  func.func @transform_3(%arg0: i32) -> (i32, i32) {
    %c0_i32 = arith.constant 0 : i32
    %c0_i32_0 = arith.constant 0 : i32
    return %arg0, %c0_i32 : i32, i32
  }
}

module attributes {stable_mosaic.version = 11 : i64} {
  func.func @_dw_s2_kernel(%arg0: i32, %arg1: memref<1x20x5x24xf32, #tpu.memory_space<vmem>>, %arg2: memref<9x1x24xf32, #tpu.memory_space<vmem>>, %arg3: memref<1x1x24xf32, #tpu.memory_space<vmem>>, %arg4: memref<1x4x4x24xf32, #tpu.memory_space<vmem>>) attributes {dimension_semantics = [#tpu.dimension_semantics<parallel>], iteration_bounds = array<i64: 2>, scalar_prefetch = 0 : i64, scratch_operands = 0 : i64, tpu.core_type = #tpu.core_type<tc>, window_params = [{transform_indices = @transform_0, window_bounds = array<i64: 1, 20, 5, 24>}, {pipeline_mode = #tpu.pipeline_mode<synchronous>, transform_indices = @transform_1, window_bounds = array<i64: 9, 1, 24>}, {pipeline_mode = #tpu.pipeline_mode<synchronous>, transform_indices = @transform_2, window_bounds = array<i64: 1, 1, 24>}, {transform_indices = @transform_3, window_bounds = array<i64: 1, 4, 4, 24>}]} {
    %c0 = arith.constant 0 : index
    %c0_0 = arith.constant 0 : index
    %c0_1 = arith.constant 0 : index
    %c0_2 = arith.constant 0 : index
    %0 = vector.load %arg1[%c0, %c0_0, %c0_1, %c0_2] : memref<1x20x5x24xf32, #tpu.memory_space<vmem>>, vector<1x20x5x24xf32>
    %1 = vector.shape_cast %0 : vector<1x20x5x24xf32> to vector<20x5x24xf32>
    %c0_3 = arith.constant 0 : index
    %c0_4 = arith.constant 0 : index
    %c0_5 = arith.constant 0 : index
    %2 = vector.load %arg2[%c0_3, %c0_4, %c0_5] : memref<9x1x24xf32, #tpu.memory_space<vmem>>, vector<9x1x24xf32>
    %c0_6 = arith.constant 0 : index
    %c0_7 = arith.constant 0 : index
    %c0_8 = arith.constant 0 : index
    %3 = vector.load %arg3[%c0_6, %c0_7, %c0_8] : memref<1x1x24xf32, #tpu.memory_space<vmem>>, vector<1x1x24xf32>
    %4 = vector.shape_cast %3 : vector<1x1x24xf32> to vector<1x24xf32>
    %5 = vector.extract_strided_slice %1 {offsets = [0, 0, 0], sizes = [4, 4, 24], strides = [1, 1, 1]} : vector<20x5x24xf32> to vector<4x4x24xf32>
    %6 = vector.extract_strided_slice %2 {offsets = [0, 0, 0], sizes = [1, 1, 24], strides = [1, 1, 1]} : vector<9x1x24xf32> to vector<1x1x24xf32>
    %7 = vector.shape_cast %6 : vector<1x1x24xf32> to vector<1x24xf32>
    %8 = vector.shape_cast %7 : vector<1x24xf32> to vector<1x1x24xf32>
    %9 = vector.broadcast %8 : vector<1x1x24xf32> to vector<4x4x24xf32>
    %10 = arith.mulf %5, %9 : vector<4x4x24xf32>
    %11 = vector.extract_strided_slice %1 {offsets = [5, 0, 0], sizes = [4, 4, 24], strides = [1, 1, 1]} : vector<20x5x24xf32> to vector<4x4x24xf32>
    %12 = vector.extract_strided_slice %2 {offsets = [1, 0, 0], sizes = [1, 1, 24], strides = [1, 1, 1]} : vector<9x1x24xf32> to vector<1x1x24xf32>
    %13 = vector.shape_cast %12 : vector<1x1x24xf32> to vector<1x24xf32>
    %14 = vector.shape_cast %13 : vector<1x24xf32> to vector<1x1x24xf32>
    %15 = vector.broadcast %14 : vector<1x1x24xf32> to vector<4x4x24xf32>
    %16 = arith.mulf %11, %15 : vector<4x4x24xf32>
    %17 = arith.addf %10, %16 : vector<4x4x24xf32>
    %18 = vector.extract_strided_slice %1 {offsets = [0, 1, 0], sizes = [4, 4, 24], strides = [1, 1, 1]} : vector<20x5x24xf32> to vector<4x4x24xf32>
    %19 = vector.extract_strided_slice %2 {offsets = [2, 0, 0], sizes = [1, 1, 24], strides = [1, 1, 1]} : vector<9x1x24xf32> to vector<1x1x24xf32>
    %20 = vector.shape_cast %19 : vector<1x1x24xf32> to vector<1x24xf32>
    %21 = vector.shape_cast %20 : vector<1x24xf32> to vector<1x1x24xf32>
    %22 = vector.broadcast %21 : vector<1x1x24xf32> to vector<4x4x24xf32>
    %23 = arith.mulf %18, %22 : vector<4x4x24xf32>
    %24 = arith.addf %17, %23 : vector<4x4x24xf32>
    %25 = vector.extract_strided_slice %1 {offsets = [10, 0, 0], sizes = [4, 4, 24], strides = [1, 1, 1]} : vector<20x5x24xf32> to vector<4x4x24xf32>
    %26 = vector.extract_strided_slice %2 {offsets = [3, 0, 0], sizes = [1, 1, 24], strides = [1, 1, 1]} : vector<9x1x24xf32> to vector<1x1x24xf32>
    %27 = vector.shape_cast %26 : vector<1x1x24xf32> to vector<1x24xf32>
    %28 = vector.shape_cast %27 : vector<1x24xf32> to vector<1x1x24xf32>
    %29 = vector.broadcast %28 : vector<1x1x24xf32> to vector<4x4x24xf32>
    %30 = arith.mulf %25, %29 : vector<4x4x24xf32>
    %31 = arith.addf %24, %30 : vector<4x4x24xf32>
    %32 = vector.extract_strided_slice %1 {offsets = [15, 0, 0], sizes = [4, 4, 24], strides = [1, 1, 1]} : vector<20x5x24xf32> to vector<4x4x24xf32>
    %33 = vector.extract_strided_slice %2 {offsets = [4, 0, 0], sizes = [1, 1, 24], strides = [1, 1, 1]} : vector<9x1x24xf32> to vector<1x1x24xf32>
    %34 = vector.shape_cast %33 : vector<1x1x24xf32> to vector<1x24xf32>
    %35 = vector.shape_cast %34 : vector<1x24xf32> to vector<1x1x24xf32>
    %36 = vector.broadcast %35 : vector<1x1x24xf32> to vector<4x4x24xf32>
    %37 = arith.mulf %32, %36 : vector<4x4x24xf32>
    %38 = arith.addf %31, %37 : vector<4x4x24xf32>
    %39 = vector.extract_strided_slice %1 {offsets = [10, 1, 0], sizes = [4, 4, 24], strides = [1, 1, 1]} : vector<20x5x24xf32> to vector<4x4x24xf32>
    %40 = vector.extract_strided_slice %2 {offsets = [5, 0, 0], sizes = [1, 1, 24], strides = [1, 1, 1]} : vector<9x1x24xf32> to vector<1x1x24xf32>
    %41 = vector.shape_cast %40 : vector<1x1x24xf32> to vector<1x24xf32>
    %42 = vector.shape_cast %41 : vector<1x24xf32> to vector<1x1x24xf32>
    %43 = vector.broadcast %42 : vector<1x1x24xf32> to vector<4x4x24xf32>
    %44 = arith.mulf %39, %43 : vector<4x4x24xf32>
    %45 = arith.addf %38, %44 : vector<4x4x24xf32>
    %46 = vector.extract_strided_slice %1 {offsets = [1, 0, 0], sizes = [4, 4, 24], strides = [1, 1, 1]} : vector<20x5x24xf32> to vector<4x4x24xf32>
    %47 = vector.extract_strided_slice %2 {offsets = [6, 0, 0], sizes = [1, 1, 24], strides = [1, 1, 1]} : vector<9x1x24xf32> to vector<1x1x24xf32>
    %48 = vector.shape_cast %47 : vector<1x1x24xf32> to vector<1x24xf32>
    %49 = vector.shape_cast %48 : vector<1x24xf32> to vector<1x1x24xf32>
    %50 = vector.broadcast %49 : vector<1x1x24xf32> to vector<4x4x24xf32>
    %51 = arith.mulf %46, %50 : vector<4x4x24xf32>
    %52 = arith.addf %45, %51 : vector<4x4x24xf32>
    %53 = vector.extract_strided_slice %1 {offsets = [6, 0, 0], sizes = [4, 4, 24], strides = [1, 1, 1]} : vector<20x5x24xf32> to vector<4x4x24xf32>
    %54 = vector.extract_strided_slice %2 {offsets = [7, 0, 0], sizes = [1, 1, 24], strides = [1, 1, 1]} : vector<9x1x24xf32> to vector<1x1x24xf32>
    %55 = vector.shape_cast %54 : vector<1x1x24xf32> to vector<1x24xf32>
    %56 = vector.shape_cast %55 : vector<1x24xf32> to vector<1x1x24xf32>
    %57 = vector.broadcast %56 : vector<1x1x24xf32> to vector<4x4x24xf32>
    %58 = arith.mulf %53, %57 : vector<4x4x24xf32>
    %59 = arith.addf %52, %58 : vector<4x4x24xf32>
    %60 = vector.extract_strided_slice %1 {offsets = [1, 1, 0], sizes = [4, 4, 24], strides = [1, 1, 1]} : vector<20x5x24xf32> to vector<4x4x24xf32>
    %61 = vector.extract_strided_slice %2 {offsets = [8, 0, 0], sizes = [1, 1, 24], strides = [1, 1, 1]} : vector<9x1x24xf32> to vector<1x1x24xf32>
    %62 = vector.shape_cast %61 : vector<1x1x24xf32> to vector<1x24xf32>
    %63 = vector.shape_cast %62 : vector<1x24xf32> to vector<1x1x24xf32>
    %64 = vector.broadcast %63 : vector<1x1x24xf32> to vector<4x4x24xf32>
    %65 = arith.mulf %60, %64 : vector<4x4x24xf32>
    %66 = arith.addf %59, %65 : vector<4x4x24xf32>
    %67 = vector.shape_cast %4 : vector<1x24xf32> to vector<1x1x24xf32>
    %68 = vector.broadcast %67 : vector<1x1x24xf32> to vector<4x4x24xf32>
    %69 = arith.addf %66, %68 : vector<4x4x24xf32>
    %c0_9 = arith.constant 0 : index
    %c0_10 = arith.constant 0 : index
    %c0_11 = arith.constant 0 : index
    %c0_12 = arith.constant 0 : index
    %70 = vector.load %arg4[%c0_9, %c0_10, %c0_11, %c0_12] : memref<1x4x4x24xf32, #tpu.memory_space<vmem>>, vector<1x4x4x24xf32>
    %71 = vector.shape_cast %70 : vector<1x4x4x24xf32> to vector<4x4x24xf32>
    %72 = vector.shape_cast %69 : vector<4x4x24xf32> to vector<1x4x4x24xf32>
    tpu.vector_store %arg4[%c0_9, %c0_10, %c0_11, %c0_12], %72 {strides = array<i32>} : memref<1x4x4x24xf32, #tpu.memory_space<vmem>>, vector<1x4x4x24xf32>,
    return
  }
  func.func @transform_0(%arg0: i32) -> (i32, i32, i32, i32) {
    %c0_i32 = arith.constant 0 : i32
    %c0_i32_0 = arith.constant 0 : i32
    %c0_i32_1 = arith.constant 0 : i32
    %c0_i32_2 = arith.constant 0 : i32
    return %arg0, %c0_i32, %c0_i32_0, %c0_i32_1 : i32, i32, i32, i32
  }
  func.func @transform_1(%arg0: i32) -> (i32, i32, i32) {
    %c0_i32 = arith.constant 0 : i32
    %c0_i32_0 = arith.constant 0 : i32
    %c0_i32_1 = arith.constant 0 : i32
    %c0_i32_2 = arith.constant 0 : i32
    return %c0_i32, %c0_i32_0, %c0_i32_1 : i32, i32, i32
  }
  func.func @transform_2(%arg0: i32) -> (i32, i32, i32) {
    %c0_i32 = arith.constant 0 : i32
    %c0_i32_0 = arith.constant 0 : i32
    %c0_i32_1 = arith.constant 0 : i32
    %c0_i32_2 = arith.constant 0 : i32
    return %c0_i32, %c0_i32_0, %c0_i32_1 : i32, i32, i32
  }
  func.func @transform_3(%arg0: i32) -> (i32, i32, i32, i32) {
    %c0_i32 = arith.constant 0 : i32
    %c0_i32_0 = arith.constant 0 : i32
    %c0_i32_1 = arith.constant 0 : i32
    %c0_i32_2 = arith.constant 0 : i32
    return %arg0, %c0_i32, %c0_i32_0, %c0_i32_1 : i32, i32, i32, i32
  }
}

module attributes {stable_mosaic.version = 11 : i64} {
  func.func @_dw_s1_kernel(%arg0: i32, %arg1: memref<1x6x6x58xf32, #tpu.memory_space<vmem>>, %arg2: memref<9x1x58xf32, #tpu.memory_space<vmem>>, %arg3: memref<1x1x58xf32, #tpu.memory_space<vmem>>, %arg4: memref<1x4x4x58xf32, #tpu.memory_space<vmem>>) attributes {dimension_semantics = [#tpu.dimension_semantics<parallel>], iteration_bounds = array<i64: 2>, scalar_prefetch = 0 : i64, scratch_operands = 0 : i64, tpu.core_type = #tpu.core_type<tc>, window_params = [{transform_indices = @transform_0, window_bounds = array<i64: 1, 6, 6, 58>}, {pipeline_mode = #tpu.pipeline_mode<synchronous>, transform_indices = @transform_1, window_bounds = array<i64: 9, 1, 58>}, {pipeline_mode = #tpu.pipeline_mode<synchronous>, transform_indices = @transform_2, window_bounds = array<i64: 1, 1, 58>}, {transform_indices = @transform_3, window_bounds = array<i64: 1, 4, 4, 58>}]} {
    %c0 = arith.constant 0 : index
    %c0_0 = arith.constant 0 : index
    %c0_1 = arith.constant 0 : index
    %c0_2 = arith.constant 0 : index
    %0 = vector.load %arg1[%c0, %c0_0, %c0_1, %c0_2] : memref<1x6x6x58xf32, #tpu.memory_space<vmem>>, vector<1x6x6x58xf32>
    %1 = vector.shape_cast %0 : vector<1x6x6x58xf32> to vector<6x6x58xf32>
    %c0_3 = arith.constant 0 : index
    %c0_4 = arith.constant 0 : index
    %c0_5 = arith.constant 0 : index
    %2 = vector.load %arg2[%c0_3, %c0_4, %c0_5] : memref<9x1x58xf32, #tpu.memory_space<vmem>>, vector<9x1x58xf32>
    %c0_6 = arith.constant 0 : index
    %c0_7 = arith.constant 0 : index
    %c0_8 = arith.constant 0 : index
    %3 = vector.load %arg3[%c0_6, %c0_7, %c0_8] : memref<1x1x58xf32, #tpu.memory_space<vmem>>, vector<1x1x58xf32>
    %4 = vector.shape_cast %3 : vector<1x1x58xf32> to vector<1x58xf32>
    %5 = vector.extract_strided_slice %1 {offsets = [0, 0, 0], sizes = [4, 4, 58], strides = [1, 1, 1]} : vector<6x6x58xf32> to vector<4x4x58xf32>
    %6 = vector.extract_strided_slice %2 {offsets = [0, 0, 0], sizes = [1, 1, 58], strides = [1, 1, 1]} : vector<9x1x58xf32> to vector<1x1x58xf32>
    %7 = vector.shape_cast %6 : vector<1x1x58xf32> to vector<1x58xf32>
    %8 = vector.shape_cast %7 : vector<1x58xf32> to vector<1x1x58xf32>
    %9 = vector.broadcast %8 : vector<1x1x58xf32> to vector<4x4x58xf32>
    %10 = arith.mulf %5, %9 : vector<4x4x58xf32>
    %11 = vector.extract_strided_slice %1 {offsets = [0, 1, 0], sizes = [4, 4, 58], strides = [1, 1, 1]} : vector<6x6x58xf32> to vector<4x4x58xf32>
    %12 = vector.extract_strided_slice %2 {offsets = [1, 0, 0], sizes = [1, 1, 58], strides = [1, 1, 1]} : vector<9x1x58xf32> to vector<1x1x58xf32>
    %13 = vector.shape_cast %12 : vector<1x1x58xf32> to vector<1x58xf32>
    %14 = vector.shape_cast %13 : vector<1x58xf32> to vector<1x1x58xf32>
    %15 = vector.broadcast %14 : vector<1x1x58xf32> to vector<4x4x58xf32>
    %16 = arith.mulf %11, %15 : vector<4x4x58xf32>
    %17 = arith.addf %10, %16 : vector<4x4x58xf32>
    %18 = vector.extract_strided_slice %1 {offsets = [0, 2, 0], sizes = [4, 4, 58], strides = [1, 1, 1]} : vector<6x6x58xf32> to vector<4x4x58xf32>
    %19 = vector.extract_strided_slice %2 {offsets = [2, 0, 0], sizes = [1, 1, 58], strides = [1, 1, 1]} : vector<9x1x58xf32> to vector<1x1x58xf32>
    %20 = vector.shape_cast %19 : vector<1x1x58xf32> to vector<1x58xf32>
    %21 = vector.shape_cast %20 : vector<1x58xf32> to vector<1x1x58xf32>
    %22 = vector.broadcast %21 : vector<1x1x58xf32> to vector<4x4x58xf32>
    %23 = arith.mulf %18, %22 : vector<4x4x58xf32>
    %24 = arith.addf %17, %23 : vector<4x4x58xf32>
    %25 = vector.extract_strided_slice %1 {offsets = [1, 0, 0], sizes = [4, 4, 58], strides = [1, 1, 1]} : vector<6x6x58xf32> to vector<4x4x58xf32>
    %26 = vector.extract_strided_slice %2 {offsets = [3, 0, 0], sizes = [1, 1, 58], strides = [1, 1, 1]} : vector<9x1x58xf32> to vector<1x1x58xf32>
    %27 = vector.shape_cast %26 : vector<1x1x58xf32> to vector<1x58xf32>
    %28 = vector.shape_cast %27 : vector<1x58xf32> to vector<1x1x58xf32>
    %29 = vector.broadcast %28 : vector<1x1x58xf32> to vector<4x4x58xf32>
    %30 = arith.mulf %25, %29 : vector<4x4x58xf32>
    %31 = arith.addf %24, %30 : vector<4x4x58xf32>
    %32 = vector.extract_strided_slice %1 {offsets = [1, 1, 0], sizes = [4, 4, 58], strides = [1, 1, 1]} : vector<6x6x58xf32> to vector<4x4x58xf32>
    %33 = vector.extract_strided_slice %2 {offsets = [4, 0, 0], sizes = [1, 1, 58], strides = [1, 1, 1]} : vector<9x1x58xf32> to vector<1x1x58xf32>
    %34 = vector.shape_cast %33 : vector<1x1x58xf32> to vector<1x58xf32>
    %35 = vector.shape_cast %34 : vector<1x58xf32> to vector<1x1x58xf32>
    %36 = vector.broadcast %35 : vector<1x1x58xf32> to vector<4x4x58xf32>
    %37 = arith.mulf %32, %36 : vector<4x4x58xf32>
    %38 = arith.addf %31, %37 : vector<4x4x58xf32>
    %39 = vector.extract_strided_slice %1 {offsets = [1, 2, 0], sizes = [4, 4, 58], strides = [1, 1, 1]} : vector<6x6x58xf32> to vector<4x4x58xf32>
    %40 = vector.extract_strided_slice %2 {offsets = [5, 0, 0], sizes = [1, 1, 58], strides = [1, 1, 1]} : vector<9x1x58xf32> to vector<1x1x58xf32>
    %41 = vector.shape_cast %40 : vector<1x1x58xf32> to vector<1x58xf32>
    %42 = vector.shape_cast %41 : vector<1x58xf32> to vector<1x1x58xf32>
    %43 = vector.broadcast %42 : vector<1x1x58xf32> to vector<4x4x58xf32>
    %44 = arith.mulf %39, %43 : vector<4x4x58xf32>
    %45 = arith.addf %38, %44 : vector<4x4x58xf32>
    %46 = vector.extract_strided_slice %1 {offsets = [2, 0, 0], sizes = [4, 4, 58], strides = [1, 1, 1]} : vector<6x6x58xf32> to vector<4x4x58xf32>
    %47 = vector.extract_strided_slice %2 {offsets = [6, 0, 0], sizes = [1, 1, 58], strides = [1, 1, 1]} : vector<9x1x58xf32> to vector<1x1x58xf32>
    %48 = vector.shape_cast %47 : vector<1x1x58xf32> to vector<1x58xf32>
    %49 = vector.shape_cast %48 : vector<1x58xf32> to vector<1x1x58xf32>
    %50 = vector.broadcast %49 : vector<1x1x58xf32> to vector<4x4x58xf32>
    %51 = arith.mulf %46, %50 : vector<4x4x58xf32>
    %52 = arith.addf %45, %51 : vector<4x4x58xf32>
    %53 = vector.extract_strided_slice %1 {offsets = [2, 1, 0], sizes = [4, 4, 58], strides = [1, 1, 1]} : vector<6x6x58xf32> to vector<4x4x58xf32>
    %54 = vector.extract_strided_slice %2 {offsets = [7, 0, 0], sizes = [1, 1, 58], strides = [1, 1, 1]} : vector<9x1x58xf32> to vector<1x1x58xf32>
    %55 = vector.shape_cast %54 : vector<1x1x58xf32> to vector<1x58xf32>
    %56 = vector.shape_cast %55 : vector<1x58xf32> to vector<1x1x58xf32>
    %57 = vector.broadcast %56 : vector<1x1x58xf32> to vector<4x4x58xf32>
    %58 = arith.mulf %53, %57 : vector<4x4x58xf32>
    %59 = arith.addf %52, %58 : vector<4x4x58xf32>
    %60 = vector.extract_strided_slice %1 {offsets = [2, 2, 0], sizes = [4, 4, 58], strides = [1, 1, 1]} : vector<6x6x58xf32> to vector<4x4x58xf32>
    %61 = vector.extract_strided_slice %2 {offsets = [8, 0, 0], sizes = [1, 1, 58], strides = [1, 1, 1]} : vector<9x1x58xf32> to vector<1x1x58xf32>
    %62 = vector.shape_cast %61 : vector<1x1x58xf32> to vector<1x58xf32>
    %63 = vector.shape_cast %62 : vector<1x58xf32> to vector<1x1x58xf32>
    %64 = vector.broadcast %63 : vector<1x1x58xf32> to vector<4x4x58xf32>
    %65 = arith.mulf %60, %64 : vector<4x4x58xf32>
    %66 = arith.addf %59, %65 : vector<4x4x58xf32>
    %67 = vector.shape_cast %4 : vector<1x58xf32> to vector<1x1x58xf32>
    %68 = vector.broadcast %67 : vector<1x1x58xf32> to vector<4x4x58xf32>
    %69 = arith.addf %66, %68 : vector<4x4x58xf32>
    %c0_9 = arith.constant 0 : index
    %c0_10 = arith.constant 0 : index
    %c0_11 = arith.constant 0 : index
    %c0_12 = arith.constant 0 : index
    %70 = vector.load %arg4[%c0_9, %c0_10, %c0_11, %c0_12] : memref<1x4x4x58xf32, #tpu.memory_space<vmem>>, vector<1x4x4x58xf32>
    %71 = vector.shape_cast %70 : vector<1x4x4x58xf32> to vector<4x4x58xf32>
    %72 = vector.shape_cast %69 : vector<4x4x58xf32> to vector<1x4x4x58xf32>
    tpu.vector_store %arg4[%c0_9, %c0_10, %c0_11, %c0_12], %72 {strides = array<i32>} : memref<1x4x4x58xf32, #tpu.memory_space<vmem>>, vector<1x4x4x58xf32>,
    return
  }
  func.func @transform_0(%arg0: i32) -> (i32, i32, i32, i32) {
    %c0_i32 = arith.constant 0 : i32
    %c0_i32_0 = arith.constant 0 : i32
    %c0_i32_1 = arith.constant 0 : i32
    %c0_i32_2 = arith.constant 0 : i32
    return %arg0, %c0_i32, %c0_i32_0, %c0_i32_1 : i32, i32, i32, i32
  }
  func.func @transform_1(%arg0: i32) -> (i32, i32, i32) {
    %c0_i32 = arith.constant 0 : i32
    %c0_i32_0 = arith.constant 0 : i32
    %c0_i32_1 = arith.constant 0 : i32
    %c0_i32_2 = arith.constant 0 : i32
    return %c0_i32, %c0_i32_0, %c0_i32_1 : i32, i32, i32
  }
  func.func @transform_2(%arg0: i32) -> (i32, i32, i32) {
    %c0_i32 = arith.constant 0 : i32
    %c0_i32_0 = arith.constant 0 : i32
    %c0_i32_1 = arith.constant 0 : i32
    %c0_i32_2 = arith.constant 0 : i32
    return %c0_i32, %c0_i32_0, %c0_i32_1 : i32, i32, i32
  }
  func.func @transform_3(%arg0: i32) -> (i32, i32, i32, i32) {
    %c0_i32 = arith.constant 0 : i32
    %c0_i32_0 = arith.constant 0 : i32
    %c0_i32_1 = arith.constant 0 : i32
    %c0_i32_2 = arith.constant 0 : i32
    return %arg0, %c0_i32, %c0_i32_0, %c0_i32_1 : i32, i32, i32, i32
  }
}

module attributes {stable_mosaic.version = 11 : i64} {
  func.func @_mm_bias_kernel(%arg0: i32, %arg1: memref<32x116xf32, #tpu.memory_space<vmem>>, %arg2: memref<116x116xbf16, #tpu.memory_space<vmem>>, %arg3: memref<1x116xf32, #tpu.memory_space<vmem>>, %arg4: memref<32x116xf32, #tpu.memory_space<vmem>>) attributes {dimension_semantics = [#tpu.dimension_semantics<parallel>], iteration_bounds = array<i64: 1>, scalar_prefetch = 0 : i64, scratch_operands = 0 : i64, tpu.core_type = #tpu.core_type<tc>, window_params = [{transform_indices = @transform_0, window_bounds = array<i64: 32, 116>}, {pipeline_mode = #tpu.pipeline_mode<synchronous>, transform_indices = @transform_1, window_bounds = array<i64: 116, 116>}, {pipeline_mode = #tpu.pipeline_mode<synchronous>, transform_indices = @transform_2, window_bounds = array<i64: 1, 116>}, {transform_indices = @transform_3, window_bounds = array<i64: 32, 116>}]} {
    %c0 = arith.constant 0 : index
    %c0_0 = arith.constant 0 : index
    %0 = vector.load %arg1[%c0, %c0_0] : memref<32x116xf32, #tpu.memory_space<vmem>>, vector<32x116xf32>
    %1 = arith.truncf %0 : vector<32x116xf32> to vector<32x116xbf16>
    %c0_1 = arith.constant 0 : index
    %c0_2 = arith.constant 0 : index
    %2 = vector.load %arg2[%c0_1, %c0_2] : memref<116x116xbf16, #tpu.memory_space<vmem>>, vector<116x116xbf16>
    %cst = arith.constant dense<0.000000e+00> : vector<32x116xf32>
    %3 = tpu.matmul %1, %2, %cst {dimension_numbers = #tpu.dot_dimension_numbers<[1], [0], [0], [1], [0, 0, 1, 1], [], []>} : vector<32x116xbf16>, vector<116x116xbf16>, vector<32x116xf32> -> vector<32x116xf32>
    %c0_3 = arith.constant 0 : index
    %c0_4 = arith.constant 0 : index
    %4 = vector.load %arg3[%c0_3, %c0_4] : memref<1x116xf32, #tpu.memory_space<vmem>>, vector<1x116xf32>
    %5 = vector.broadcast %4 : vector<1x116xf32> to vector<32x116xf32>
    %6 = arith.addf %3, %5 : vector<32x116xf32>
    %cst_5 = arith.constant 0.000000e+00 : f32
    %7 = vector.broadcast %cst_5 : f32 to vector<32x116xf32>
    %8 = arith.maximumf %6, %7 : vector<32x116xf32>
    %c0_6 = arith.constant 0 : index
    %c0_7 = arith.constant 0 : index
    %9 = vector.load %arg4[%c0_6, %c0_7] : memref<32x116xf32, #tpu.memory_space<vmem>>, vector<32x116xf32>
    tpu.vector_store %arg4[%c0_6, %c0_7], %8 {strides = array<i32>} : memref<32x116xf32, #tpu.memory_space<vmem>>, vector<32x116xf32>,
    return
  }
  func.func @transform_0(%arg0: i32) -> (i32, i32) {
    %c0_i32 = arith.constant 0 : i32
    %c0_i32_0 = arith.constant 0 : i32
    return %arg0, %c0_i32 : i32, i32
  }
  func.func @transform_1(%arg0: i32) -> (i32, i32) {
    %c0_i32 = arith.constant 0 : i32
    %c0_i32_0 = arith.constant 0 : i32
    %c0_i32_1 = arith.constant 0 : i32
    return %c0_i32, %c0_i32_0 : i32, i32
  }
  func.func @transform_2(%arg0: i32) -> (i32, i32) {
    %c0_i32 = arith.constant 0 : i32
    %c0_i32_0 = arith.constant 0 : i32
    %c0_i32_1 = arith.constant 0 : i32
    return %c0_i32, %c0_i32_0 : i32, i32
  }
  func.func @transform_3(%arg0: i32) -> (i32, i32) {
    %c0_i32 = arith.constant 0 : i32
    %c0_i32_0 = arith.constant 0 : i32
    return %arg0, %c0_i32 : i32, i32
  }
}

module attributes {stable_mosaic.version = 11 : i64} {
  func.func @_dw_s2_kernel(%arg0: i32, %arg1: memref<1x12x3x116xf32, #tpu.memory_space<vmem>>, %arg2: memref<9x1x116xf32, #tpu.memory_space<vmem>>, %arg3: memref<1x1x116xf32, #tpu.memory_space<vmem>>, %arg4: memref<1x2x2x116xf32, #tpu.memory_space<vmem>>) attributes {dimension_semantics = [#tpu.dimension_semantics<parallel>], iteration_bounds = array<i64: 2>, scalar_prefetch = 0 : i64, scratch_operands = 0 : i64, tpu.core_type = #tpu.core_type<tc>, window_params = [{transform_indices = @transform_0, window_bounds = array<i64: 1, 12, 3, 116>}, {pipeline_mode = #tpu.pipeline_mode<synchronous>, transform_indices = @transform_1, window_bounds = array<i64: 9, 1, 116>}, {pipeline_mode = #tpu.pipeline_mode<synchronous>, transform_indices = @transform_2, window_bounds = array<i64: 1, 1, 116>}, {transform_indices = @transform_3, window_bounds = array<i64: 1, 2, 2, 116>}]} {
    %c0 = arith.constant 0 : index
    %c0_0 = arith.constant 0 : index
    %c0_1 = arith.constant 0 : index
    %c0_2 = arith.constant 0 : index
    %0 = vector.load %arg1[%c0, %c0_0, %c0_1, %c0_2] : memref<1x12x3x116xf32, #tpu.memory_space<vmem>>, vector<1x12x3x116xf32>
    %1 = vector.shape_cast %0 : vector<1x12x3x116xf32> to vector<12x3x116xf32>
    %c0_3 = arith.constant 0 : index
    %c0_4 = arith.constant 0 : index
    %c0_5 = arith.constant 0 : index
    %2 = vector.load %arg2[%c0_3, %c0_4, %c0_5] : memref<9x1x116xf32, #tpu.memory_space<vmem>>, vector<9x1x116xf32>
    %c0_6 = arith.constant 0 : index
    %c0_7 = arith.constant 0 : index
    %c0_8 = arith.constant 0 : index
    %3 = vector.load %arg3[%c0_6, %c0_7, %c0_8] : memref<1x1x116xf32, #tpu.memory_space<vmem>>, vector<1x1x116xf32>
    %4 = vector.shape_cast %3 : vector<1x1x116xf32> to vector<1x116xf32>
    %5 = vector.extract_strided_slice %1 {offsets = [0, 0, 0], sizes = [2, 2, 116], strides = [1, 1, 1]} : vector<12x3x116xf32> to vector<2x2x116xf32>
    %6 = vector.extract_strided_slice %2 {offsets = [0, 0, 0], sizes = [1, 1, 116], strides = [1, 1, 1]} : vector<9x1x116xf32> to vector<1x1x116xf32>
    %7 = vector.shape_cast %6 : vector<1x1x116xf32> to vector<1x116xf32>
    %8 = vector.shape_cast %7 : vector<1x116xf32> to vector<1x1x116xf32>
    %9 = vector.broadcast %8 : vector<1x1x116xf32> to vector<2x2x116xf32>
    %10 = arith.mulf %5, %9 : vector<2x2x116xf32>
    %11 = vector.extract_strided_slice %1 {offsets = [3, 0, 0], sizes = [2, 2, 116], strides = [1, 1, 1]} : vector<12x3x116xf32> to vector<2x2x116xf32>
    %12 = vector.extract_strided_slice %2 {offsets = [1, 0, 0], sizes = [1, 1, 116], strides = [1, 1, 1]} : vector<9x1x116xf32> to vector<1x1x116xf32>
    %13 = vector.shape_cast %12 : vector<1x1x116xf32> to vector<1x116xf32>
    %14 = vector.shape_cast %13 : vector<1x116xf32> to vector<1x1x116xf32>
    %15 = vector.broadcast %14 : vector<1x1x116xf32> to vector<2x2x116xf32>
    %16 = arith.mulf %11, %15 : vector<2x2x116xf32>
    %17 = arith.addf %10, %16 : vector<2x2x116xf32>
    %18 = vector.extract_strided_slice %1 {offsets = [0, 1, 0], sizes = [2, 2, 116], strides = [1, 1, 1]} : vector<12x3x116xf32> to vector<2x2x116xf32>
    %19 = vector.extract_strided_slice %2 {offsets = [2, 0, 0], sizes = [1, 1, 116], strides = [1, 1, 1]} : vector<9x1x116xf32> to vector<1x1x116xf32>
    %20 = vector.shape_cast %19 : vector<1x1x116xf32> to vector<1x116xf32>
    %21 = vector.shape_cast %20 : vector<1x116xf32> to vector<1x1x116xf32>
    %22 = vector.broadcast %21 : vector<1x1x116xf32> to vector<2x2x116xf32>
    %23 = arith.mulf %18, %22 : vector<2x2x116xf32>
    %24 = arith.addf %17, %23 : vector<2x2x116xf32>
    %25 = vector.extract_strided_slice %1 {offsets = [6, 0, 0], sizes = [2, 2, 116], strides = [1, 1, 1]} : vector<12x3x116xf32> to vector<2x2x116xf32>
    %26 = vector.extract_strided_slice %2 {offsets = [3, 0, 0], sizes = [1, 1, 116], strides = [1, 1, 1]} : vector<9x1x116xf32> to vector<1x1x116xf32>
    %27 = vector.shape_cast %26 : vector<1x1x116xf32> to vector<1x116xf32>
    %28 = vector.shape_cast %27 : vector<1x116xf32> to vector<1x1x116xf32>
    %29 = vector.broadcast %28 : vector<1x1x116xf32> to vector<2x2x116xf32>
    %30 = arith.mulf %25, %29 : vector<2x2x116xf32>
    %31 = arith.addf %24, %30 : vector<2x2x116xf32>
    %32 = vector.extract_strided_slice %1 {offsets = [9, 0, 0], sizes = [2, 2, 116], strides = [1, 1, 1]} : vector<12x3x116xf32> to vector<2x2x116xf32>
    %33 = vector.extract_strided_slice %2 {offsets = [4, 0, 0], sizes = [1, 1, 116], strides = [1, 1, 1]} : vector<9x1x116xf32> to vector<1x1x116xf32>
    %34 = vector.shape_cast %33 : vector<1x1x116xf32> to vector<1x116xf32>
    %35 = vector.shape_cast %34 : vector<1x116xf32> to vector<1x1x116xf32>
    %36 = vector.broadcast %35 : vector<1x1x116xf32> to vector<2x2x116xf32>
    %37 = arith.mulf %32, %36 : vector<2x2x116xf32>
    %38 = arith.addf %31, %37 : vector<2x2x116xf32>
    %39 = vector.extract_strided_slice %1 {offsets = [6, 1, 0], sizes = [2, 2, 116], strides = [1, 1, 1]} : vector<12x3x116xf32> to vector<2x2x116xf32>
    %40 = vector.extract_strided_slice %2 {offsets = [5, 0, 0], sizes = [1, 1, 116], strides = [1, 1, 1]} : vector<9x1x116xf32> to vector<1x1x116xf32>
    %41 = vector.shape_cast %40 : vector<1x1x116xf32> to vector<1x116xf32>
    %42 = vector.shape_cast %41 : vector<1x116xf32> to vector<1x1x116xf32>
    %43 = vector.broadcast %42 : vector<1x1x116xf32> to vector<2x2x116xf32>
    %44 = arith.mulf %39, %43 : vector<2x2x116xf32>
    %45 = arith.addf %38, %44 : vector<2x2x116xf32>
    %46 = vector.extract_strided_slice %1 {offsets = [1, 0, 0], sizes = [2, 2, 116], strides = [1, 1, 1]} : vector<12x3x116xf32> to vector<2x2x116xf32>
    %47 = vector.extract_strided_slice %2 {offsets = [6, 0, 0], sizes = [1, 1, 116], strides = [1, 1, 1]} : vector<9x1x116xf32> to vector<1x1x116xf32>
    %48 = vector.shape_cast %47 : vector<1x1x116xf32> to vector<1x116xf32>
    %49 = vector.shape_cast %48 : vector<1x116xf32> to vector<1x1x116xf32>
    %50 = vector.broadcast %49 : vector<1x1x116xf32> to vector<2x2x116xf32>
    %51 = arith.mulf %46, %50 : vector<2x2x116xf32>
    %52 = arith.addf %45, %51 : vector<2x2x116xf32>
    %53 = vector.extract_strided_slice %1 {offsets = [4, 0, 0], sizes = [2, 2, 116], strides = [1, 1, 1]} : vector<12x3x116xf32> to vector<2x2x116xf32>
    %54 = vector.extract_strided_slice %2 {offsets = [7, 0, 0], sizes = [1, 1, 116], strides = [1, 1, 1]} : vector<9x1x116xf32> to vector<1x1x116xf32>
    %55 = vector.shape_cast %54 : vector<1x1x116xf32> to vector<1x116xf32>
    %56 = vector.shape_cast %55 : vector<1x116xf32> to vector<1x1x116xf32>
    %57 = vector.broadcast %56 : vector<1x1x116xf32> to vector<2x2x116xf32>
    %58 = arith.mulf %53, %57 : vector<2x2x116xf32>
    %59 = arith.addf %52, %58 : vector<2x2x116xf32>
    %60 = vector.extract_strided_slice %1 {offsets = [1, 1, 0], sizes = [2, 2, 116], strides = [1, 1, 1]} : vector<12x3x116xf32> to vector<2x2x116xf32>
    %61 = vector.extract_strided_slice %2 {offsets = [8, 0, 0], sizes = [1, 1, 116], strides = [1, 1, 1]} : vector<9x1x116xf32> to vector<1x1x116xf32>
    %62 = vector.shape_cast %61 : vector<1x1x116xf32> to vector<1x116xf32>
    %63 = vector.shape_cast %62 : vector<1x116xf32> to vector<1x1x116xf32>
    %64 = vector.broadcast %63 : vector<1x1x116xf32> to vector<2x2x116xf32>
    %65 = arith.mulf %60, %64 : vector<2x2x116xf32>
    %66 = arith.addf %59, %65 : vector<2x2x116xf32>
    %67 = vector.shape_cast %4 : vector<1x116xf32> to vector<1x1x116xf32>
    %68 = vector.broadcast %67 : vector<1x1x116xf32> to vector<2x2x116xf32>
    %69 = arith.addf %66, %68 : vector<2x2x116xf32>
    %c0_9 = arith.constant 0 : index
    %c0_10 = arith.constant 0 : index
    %c0_11 = arith.constant 0 : index
    %c0_12 = arith.constant 0 : index
    %70 = vector.load %arg4[%c0_9, %c0_10, %c0_11, %c0_12] : memref<1x2x2x116xf32, #tpu.memory_space<vmem>>, vector<1x2x2x116xf32>
    %71 = vector.shape_cast %70 : vector<1x2x2x116xf32> to vector<2x2x116xf32>
    %72 = vector.shape_cast %69 : vector<2x2x116xf32> to vector<1x2x2x116xf32>
    tpu.vector_store %arg4[%c0_9, %c0_10, %c0_11, %c0_12], %72 {strides = array<i32>} : memref<1x2x2x116xf32, #tpu.memory_space<vmem>>, vector<1x2x2x116xf32>,
    return
  }
  func.func @transform_0(%arg0: i32) -> (i32, i32, i32, i32) {
    %c0_i32 = arith.constant 0 : i32
    %c0_i32_0 = arith.constant 0 : i32
    %c0_i32_1 = arith.constant 0 : i32
    %c0_i32_2 = arith.constant 0 : i32
    return %arg0, %c0_i32, %c0_i32_0, %c0_i32_1 : i32, i32, i32, i32
  }
  func.func @transform_1(%arg0: i32) -> (i32, i32, i32) {
    %c0_i32 = arith.constant 0 : i32
    %c0_i32_0 = arith.constant 0 : i32
    %c0_i32_1 = arith.constant 0 : i32
    %c0_i32_2 = arith.constant 0 : i32
    return %c0_i32, %c0_i32_0, %c0_i32_1 : i32, i32, i32
  }
  func.func @transform_2(%arg0: i32) -> (i32, i32, i32) {
    %c0_i32 = arith.constant 0 : i32
    %c0_i32_0 = arith.constant 0 : i32
    %c0_i32_1 = arith.constant 0 : i32
    %c0_i32_2 = arith.constant 0 : i32
    return %c0_i32, %c0_i32_0, %c0_i32_1 : i32, i32, i32
  }
  func.func @transform_3(%arg0: i32) -> (i32, i32, i32, i32) {
    %c0_i32 = arith.constant 0 : i32
    %c0_i32_0 = arith.constant 0 : i32
    %c0_i32_1 = arith.constant 0 : i32
    %c0_i32_2 = arith.constant 0 : i32
    return %arg0, %c0_i32, %c0_i32_0, %c0_i32_1 : i32, i32, i32, i32
  }
}

module attributes {stable_mosaic.version = 11 : i64} {
  func.func @_mm_bias_kernel(%arg0: i32, %arg1: memref<8x116xf32, #tpu.memory_space<vmem>>, %arg2: memref<116x116xbf16, #tpu.memory_space<vmem>>, %arg3: memref<1x116xf32, #tpu.memory_space<vmem>>, %arg4: memref<8x116xf32, #tpu.memory_space<vmem>>) attributes {dimension_semantics = [#tpu.dimension_semantics<parallel>], iteration_bounds = array<i64: 1>, scalar_prefetch = 0 : i64, scratch_operands = 0 : i64, tpu.core_type = #tpu.core_type<tc>, window_params = [{transform_indices = @transform_0, window_bounds = array<i64: 8, 116>}, {pipeline_mode = #tpu.pipeline_mode<synchronous>, transform_indices = @transform_1, window_bounds = array<i64: 116, 116>}, {pipeline_mode = #tpu.pipeline_mode<synchronous>, transform_indices = @transform_2, window_bounds = array<i64: 1, 116>}, {transform_indices = @transform_3, window_bounds = array<i64: 8, 116>}]} {
    %c0 = arith.constant 0 : index
    %c0_0 = arith.constant 0 : index
    %0 = vector.load %arg1[%c0, %c0_0] : memref<8x116xf32, #tpu.memory_space<vmem>>, vector<8x116xf32>
    %1 = arith.truncf %0 : vector<8x116xf32> to vector<8x116xbf16>
    %c0_1 = arith.constant 0 : index
    %c0_2 = arith.constant 0 : index
    %2 = vector.load %arg2[%c0_1, %c0_2] : memref<116x116xbf16, #tpu.memory_space<vmem>>, vector<116x116xbf16>
    %cst = arith.constant dense<0.000000e+00> : vector<8x116xf32>
    %3 = tpu.matmul %1, %2, %cst {dimension_numbers = #tpu.dot_dimension_numbers<[1], [0], [0], [1], [0, 0, 1, 1], [], []>} : vector<8x116xbf16>, vector<116x116xbf16>, vector<8x116xf32> -> vector<8x116xf32>
    %c0_3 = arith.constant 0 : index
    %c0_4 = arith.constant 0 : index
    %4 = vector.load %arg3[%c0_3, %c0_4] : memref<1x116xf32, #tpu.memory_space<vmem>>, vector<1x116xf32>
    %5 = vector.broadcast %4 : vector<1x116xf32> to vector<8x116xf32>
    %6 = arith.addf %3, %5 : vector<8x116xf32>
    %cst_5 = arith.constant 0.000000e+00 : f32
    %7 = vector.broadcast %cst_5 : f32 to vector<8x116xf32>
    %8 = arith.maximumf %6, %7 : vector<8x116xf32>
    %c0_6 = arith.constant 0 : index
    %c0_7 = arith.constant 0 : index
    %9 = vector.load %arg4[%c0_6, %c0_7] : memref<8x116xf32, #tpu.memory_space<vmem>>, vector<8x116xf32>
    tpu.vector_store %arg4[%c0_6, %c0_7], %8 {strides = array<i32>} : memref<8x116xf32, #tpu.memory_space<vmem>>, vector<8x116xf32>,
    return
  }
  func.func @transform_0(%arg0: i32) -> (i32, i32) {
    %c0_i32 = arith.constant 0 : i32
    %c0_i32_0 = arith.constant 0 : i32
    return %arg0, %c0_i32 : i32, i32
  }
  func.func @transform_1(%arg0: i32) -> (i32, i32) {
    %c0_i32 = arith.constant 0 : i32
    %c0_i32_0 = arith.constant 0 : i32
    %c0_i32_1 = arith.constant 0 : i32
    return %c0_i32, %c0_i32_0 : i32, i32
  }
  func.func @transform_2(%arg0: i32) -> (i32, i32) {
    %c0_i32 = arith.constant 0 : i32
    %c0_i32_0 = arith.constant 0 : i32
    %c0_i32_1 = arith.constant 0 : i32
    return %c0_i32, %c0_i32_0 : i32, i32
  }
  func.func @transform_3(%arg0: i32) -> (i32, i32) {
    %c0_i32 = arith.constant 0 : i32
    %c0_i32_0 = arith.constant 0 : i32
    return %arg0, %c0_i32 : i32, i32
  }
}

module attributes {stable_mosaic.version = 11 : i64} {
  func.func @_dw_s1_kernel(%arg0: i32, %arg1: memref<1x4x4x116xf32, #tpu.memory_space<vmem>>, %arg2: memref<9x1x116xf32, #tpu.memory_space<vmem>>, %arg3: memref<1x1x116xf32, #tpu.memory_space<vmem>>, %arg4: memref<1x2x2x116xf32, #tpu.memory_space<vmem>>) attributes {dimension_semantics = [#tpu.dimension_semantics<parallel>], iteration_bounds = array<i64: 2>, scalar_prefetch = 0 : i64, scratch_operands = 0 : i64, tpu.core_type = #tpu.core_type<tc>, window_params = [{transform_indices = @transform_0, window_bounds = array<i64: 1, 4, 4, 116>}, {pipeline_mode = #tpu.pipeline_mode<synchronous>, transform_indices = @transform_1, window_bounds = array<i64: 9, 1, 116>}, {pipeline_mode = #tpu.pipeline_mode<synchronous>, transform_indices = @transform_2, window_bounds = array<i64: 1, 1, 116>}, {transform_indices = @transform_3, window_bounds = array<i64: 1, 2, 2, 116>}]} {
    %c0 = arith.constant 0 : index
    %c0_0 = arith.constant 0 : index
    %c0_1 = arith.constant 0 : index
    %c0_2 = arith.constant 0 : index
    %0 = vector.load %arg1[%c0, %c0_0, %c0_1, %c0_2] : memref<1x4x4x116xf32, #tpu.memory_space<vmem>>, vector<1x4x4x116xf32>
    %1 = vector.shape_cast %0 : vector<1x4x4x116xf32> to vector<4x4x116xf32>
    %c0_3 = arith.constant 0 : index
    %c0_4 = arith.constant 0 : index
    %c0_5 = arith.constant 0 : index
    %2 = vector.load %arg2[%c0_3, %c0_4, %c0_5] : memref<9x1x116xf32, #tpu.memory_space<vmem>>, vector<9x1x116xf32>
    %c0_6 = arith.constant 0 : index
    %c0_7 = arith.constant 0 : index
    %c0_8 = arith.constant 0 : index
    %3 = vector.load %arg3[%c0_6, %c0_7, %c0_8] : memref<1x1x116xf32, #tpu.memory_space<vmem>>, vector<1x1x116xf32>
    %4 = vector.shape_cast %3 : vector<1x1x116xf32> to vector<1x116xf32>
    %5 = vector.extract_strided_slice %1 {offsets = [0, 0, 0], sizes = [2, 2, 116], strides = [1, 1, 1]} : vector<4x4x116xf32> to vector<2x2x116xf32>
    %6 = vector.extract_strided_slice %2 {offsets = [0, 0, 0], sizes = [1, 1, 116], strides = [1, 1, 1]} : vector<9x1x116xf32> to vector<1x1x116xf32>
    %7 = vector.shape_cast %6 : vector<1x1x116xf32> to vector<1x116xf32>
    %8 = vector.shape_cast %7 : vector<1x116xf32> to vector<1x1x116xf32>
    %9 = vector.broadcast %8 : vector<1x1x116xf32> to vector<2x2x116xf32>
    %10 = arith.mulf %5, %9 : vector<2x2x116xf32>
    %11 = vector.extract_strided_slice %1 {offsets = [0, 1, 0], sizes = [2, 2, 116], strides = [1, 1, 1]} : vector<4x4x116xf32> to vector<2x2x116xf32>
    %12 = vector.extract_strided_slice %2 {offsets = [1, 0, 0], sizes = [1, 1, 116], strides = [1, 1, 1]} : vector<9x1x116xf32> to vector<1x1x116xf32>
    %13 = vector.shape_cast %12 : vector<1x1x116xf32> to vector<1x116xf32>
    %14 = vector.shape_cast %13 : vector<1x116xf32> to vector<1x1x116xf32>
    %15 = vector.broadcast %14 : vector<1x1x116xf32> to vector<2x2x116xf32>
    %16 = arith.mulf %11, %15 : vector<2x2x116xf32>
    %17 = arith.addf %10, %16 : vector<2x2x116xf32>
    %18 = vector.extract_strided_slice %1 {offsets = [0, 2, 0], sizes = [2, 2, 116], strides = [1, 1, 1]} : vector<4x4x116xf32> to vector<2x2x116xf32>
    %19 = vector.extract_strided_slice %2 {offsets = [2, 0, 0], sizes = [1, 1, 116], strides = [1, 1, 1]} : vector<9x1x116xf32> to vector<1x1x116xf32>
    %20 = vector.shape_cast %19 : vector<1x1x116xf32> to vector<1x116xf32>
    %21 = vector.shape_cast %20 : vector<1x116xf32> to vector<1x1x116xf32>
    %22 = vector.broadcast %21 : vector<1x1x116xf32> to vector<2x2x116xf32>
    %23 = arith.mulf %18, %22 : vector<2x2x116xf32>
    %24 = arith.addf %17, %23 : vector<2x2x116xf32>
    %25 = vector.extract_strided_slice %1 {offsets = [1, 0, 0], sizes = [2, 2, 116], strides = [1, 1, 1]} : vector<4x4x116xf32> to vector<2x2x116xf32>
    %26 = vector.extract_strided_slice %2 {offsets = [3, 0, 0], sizes = [1, 1, 116], strides = [1, 1, 1]} : vector<9x1x116xf32> to vector<1x1x116xf32>
    %27 = vector.shape_cast %26 : vector<1x1x116xf32> to vector<1x116xf32>
    %28 = vector.shape_cast %27 : vector<1x116xf32> to vector<1x1x116xf32>
    %29 = vector.broadcast %28 : vector<1x1x116xf32> to vector<2x2x116xf32>
    %30 = arith.mulf %25, %29 : vector<2x2x116xf32>
    %31 = arith.addf %24, %30 : vector<2x2x116xf32>
    %32 = vector.extract_strided_slice %1 {offsets = [1, 1, 0], sizes = [2, 2, 116], strides = [1, 1, 1]} : vector<4x4x116xf32> to vector<2x2x116xf32>
    %33 = vector.extract_strided_slice %2 {offsets = [4, 0, 0], sizes = [1, 1, 116], strides = [1, 1, 1]} : vector<9x1x116xf32> to vector<1x1x116xf32>
    %34 = vector.shape_cast %33 : vector<1x1x116xf32> to vector<1x116xf32>
    %35 = vector.shape_cast %34 : vector<1x116xf32> to vector<1x1x116xf32>
    %36 = vector.broadcast %35 : vector<1x1x116xf32> to vector<2x2x116xf32>
    %37 = arith.mulf %32, %36 : vector<2x2x116xf32>
    %38 = arith.addf %31, %37 : vector<2x2x116xf32>
    %39 = vector.extract_strided_slice %1 {offsets = [1, 2, 0], sizes = [2, 2, 116], strides = [1, 1, 1]} : vector<4x4x116xf32> to vector<2x2x116xf32>
    %40 = vector.extract_strided_slice %2 {offsets = [5, 0, 0], sizes = [1, 1, 116], strides = [1, 1, 1]} : vector<9x1x116xf32> to vector<1x1x116xf32>
    %41 = vector.shape_cast %40 : vector<1x1x116xf32> to vector<1x116xf32>
    %42 = vector.shape_cast %41 : vector<1x116xf32> to vector<1x1x116xf32>
    %43 = vector.broadcast %42 : vector<1x1x116xf32> to vector<2x2x116xf32>
    %44 = arith.mulf %39, %43 : vector<2x2x116xf32>
    %45 = arith.addf %38, %44 : vector<2x2x116xf32>
    %46 = vector.extract_strided_slice %1 {offsets = [2, 0, 0], sizes = [2, 2, 116], strides = [1, 1, 1]} : vector<4x4x116xf32> to vector<2x2x116xf32>
    %47 = vector.extract_strided_slice %2 {offsets = [6, 0, 0], sizes = [1, 1, 116], strides = [1, 1, 1]} : vector<9x1x116xf32> to vector<1x1x116xf32>
    %48 = vector.shape_cast %47 : vector<1x1x116xf32> to vector<1x116xf32>
    %49 = vector.shape_cast %48 : vector<1x116xf32> to vector<1x1x116xf32>
    %50 = vector.broadcast %49 : vector<1x1x116xf32> to vector<2x2x116xf32>
    %51 = arith.mulf %46, %50 : vector<2x2x116xf32>
    %52 = arith.addf %45, %51 : vector<2x2x116xf32>
    %53 = vector.extract_strided_slice %1 {offsets = [2, 1, 0], sizes = [2, 2, 116], strides = [1, 1, 1]} : vector<4x4x116xf32> to vector<2x2x116xf32>
    %54 = vector.extract_strided_slice %2 {offsets = [7, 0, 0], sizes = [1, 1, 116], strides = [1, 1, 1]} : vector<9x1x116xf32> to vector<1x1x116xf32>
    %55 = vector.shape_cast %54 : vector<1x1x116xf32> to vector<1x116xf32>
    %56 = vector.shape_cast %55 : vector<1x116xf32> to vector<1x1x116xf32>
    %57 = vector.broadcast %56 : vector<1x1x116xf32> to vector<2x2x116xf32>
    %58 = arith.mulf %53, %57 : vector<2x2x116xf32>
    %59 = arith.addf %52, %58 : vector<2x2x116xf32>
    %60 = vector.extract_strided_slice %1 {offsets = [2, 2, 0], sizes = [2, 2, 116], strides = [1, 1, 1]} : vector<4x4x116xf32> to vector<2x2x116xf32>
    %61 = vector.extract_strided_slice %2 {offsets = [8, 0, 0], sizes = [1, 1, 116], strides = [1, 1, 1]} : vector<9x1x116xf32> to vector<1x1x116xf32>
    %62 = vector.shape_cast %61 : vector<1x1x116xf32> to vector<1x116xf32>
    %63 = vector.shape_cast %62 : vector<1x116xf32> to vector<1x1x116xf32>
    %64 = vector.broadcast %63 : vector<1x1x116xf32> to vector<2x2x116xf32>
    %65 = arith.mulf %60, %64 : vector<2x2x116xf32>
    %66 = arith.addf %59, %65 : vector<2x2x116xf32>
    %67 = vector.shape_cast %4 : vector<1x116xf32> to vector<1x1x116xf32>
    %68 = vector.broadcast %67 : vector<1x1x116xf32> to vector<2x2x116xf32>
    %69 = arith.addf %66, %68 : vector<2x2x116xf32>
    %c0_9 = arith.constant 0 : index
    %c0_10 = arith.constant 0 : index
    %c0_11 = arith.constant 0 : index
    %c0_12 = arith.constant 0 : index
    %70 = vector.load %arg4[%c0_9, %c0_10, %c0_11, %c0_12] : memref<1x2x2x116xf32, #tpu.memory_space<vmem>>, vector<1x2x2x116xf32>
    %71 = vector.shape_cast %70 : vector<1x2x2x116xf32> to vector<2x2x116xf32>
    %72 = vector.shape_cast %69 : vector<2x2x116xf32> to vector<1x2x2x116xf32>
    tpu.vector_store %arg4[%c0_9, %c0_10, %c0_11, %c0_12], %72 {strides = array<i32>} : memref<1x2x2x116xf32, #tpu.memory_space<vmem>>, vector<1x2x2x116xf32>,
    return
  }
  func.func @transform_0(%arg0: i32) -> (i32, i32, i32, i32) {
    %c0_i32 = arith.constant 0 : i32
    %c0_i32_0 = arith.constant 0 : i32
    %c0_i32_1 = arith.constant 0 : i32
    %c0_i32_2 = arith.constant 0 : i32
    return %arg0, %c0_i32, %c0_i32_0, %c0_i32_1 : i32, i32, i32, i32
  }
  func.func @transform_1(%arg0: i32) -> (i32, i32, i32) {
    %c0_i32 = arith.constant 0 : i32
    %c0_i32_0 = arith.constant 0 : i32
    %c0_i32_1 = arith.constant 0 : i32
    %c0_i32_2 = arith.constant 0 : i32
    return %c0_i32, %c0_i32_0, %c0_i32_1 : i32, i32, i32
  }
  func.func @transform_2(%arg0: i32) -> (i32, i32, i32) {
    %c0_i32 = arith.constant 0 : i32
    %c0_i32_0 = arith.constant 0 : i32
    %c0_i32_1 = arith.constant 0 : i32
    %c0_i32_2 = arith.constant 0 : i32
    return %c0_i32, %c0_i32_0, %c0_i32_1 : i32, i32, i32
  }
  func.func @transform_3(%arg0: i32) -> (i32, i32, i32, i32) {
    %c0_i32 = arith.constant 0 : i32
    %c0_i32_0 = arith.constant 0 : i32
    %c0_i32_1 = arith.constant 0 : i32
    %c0_i32_2 = arith.constant 0 : i32
    return %arg0, %c0_i32, %c0_i32_0, %c0_i32_1 : i32, i32, i32, i32
  }
}

module attributes {stable_mosaic.version = 11 : i64} {
  func.func @_mm_bias_kernel(%arg0: i32, %arg1: memref<8x232xf32, #tpu.memory_space<vmem>>, %arg2: memref<232x232xbf16, #tpu.memory_space<vmem>>, %arg3: memref<1x232xf32, #tpu.memory_space<vmem>>, %arg4: memref<8x232xf32, #tpu.memory_space<vmem>>) attributes {dimension_semantics = [#tpu.dimension_semantics<parallel>], iteration_bounds = array<i64: 1>, scalar_prefetch = 0 : i64, scratch_operands = 0 : i64, tpu.core_type = #tpu.core_type<tc>, window_params = [{transform_indices = @transform_0, window_bounds = array<i64: 8, 232>}, {pipeline_mode = #tpu.pipeline_mode<synchronous>, transform_indices = @transform_1, window_bounds = array<i64: 232, 232>}, {pipeline_mode = #tpu.pipeline_mode<synchronous>, transform_indices = @transform_2, window_bounds = array<i64: 1, 232>}, {transform_indices = @transform_3, window_bounds = array<i64: 8, 232>}]} {
    %c0 = arith.constant 0 : index
    %c0_0 = arith.constant 0 : index
    %0 = vector.load %arg1[%c0, %c0_0] : memref<8x232xf32, #tpu.memory_space<vmem>>, vector<8x232xf32>
    %1 = arith.truncf %0 : vector<8x232xf32> to vector<8x232xbf16>
    %c0_1 = arith.constant 0 : index
    %c0_2 = arith.constant 0 : index
    %2 = vector.load %arg2[%c0_1, %c0_2] : memref<232x232xbf16, #tpu.memory_space<vmem>>, vector<232x232xbf16>
    %cst = arith.constant dense<0.000000e+00> : vector<8x232xf32>
    %3 = tpu.matmul %1, %2, %cst {dimension_numbers = #tpu.dot_dimension_numbers<[1], [0], [0], [1], [0, 0, 1, 1], [], []>} : vector<8x232xbf16>, vector<232x232xbf16>, vector<8x232xf32> -> vector<8x232xf32>
    %c0_3 = arith.constant 0 : index
    %c0_4 = arith.constant 0 : index
    %4 = vector.load %arg3[%c0_3, %c0_4] : memref<1x232xf32, #tpu.memory_space<vmem>>, vector<1x232xf32>
    %5 = vector.broadcast %4 : vector<1x232xf32> to vector<8x232xf32>
    %6 = arith.addf %3, %5 : vector<8x232xf32>
    %cst_5 = arith.constant 0.000000e+00 : f32
    %7 = vector.broadcast %cst_5 : f32 to vector<8x232xf32>
    %8 = arith.maximumf %6, %7 : vector<8x232xf32>
    %c0_6 = arith.constant 0 : index
    %c0_7 = arith.constant 0 : index
    %9 = vector.load %arg4[%c0_6, %c0_7] : memref<8x232xf32, #tpu.memory_space<vmem>>, vector<8x232xf32>
    tpu.vector_store %arg4[%c0_6, %c0_7], %8 {strides = array<i32>} : memref<8x232xf32, #tpu.memory_space<vmem>>, vector<8x232xf32>,
    return
  }
  func.func @transform_0(%arg0: i32) -> (i32, i32) {
    %c0_i32 = arith.constant 0 : i32
    %c0_i32_0 = arith.constant 0 : i32
    return %arg0, %c0_i32 : i32, i32
  }
  func.func @transform_1(%arg0: i32) -> (i32, i32) {
    %c0_i32 = arith.constant 0 : i32
    %c0_i32_0 = arith.constant 0 : i32
    %c0_i32_1 = arith.constant 0 : i32
    return %c0_i32, %c0_i32_0 : i32, i32
  }
  func.func @transform_2(%arg0: i32) -> (i32, i32) {
    %c0_i32 = arith.constant 0 : i32
    %c0_i32_0 = arith.constant 0 : i32
    %c0_i32_1 = arith.constant 0 : i32
    return %c0_i32, %c0_i32_0 : i32, i32
  }
  func.func @transform_3(%arg0: i32) -> (i32, i32) {
    %c0_i32 = arith.constant 0 : i32
    %c0_i32_0 = arith.constant 0 : i32
    return %arg0, %c0_i32 : i32, i32
  }
}

module attributes {stable_mosaic.version = 11 : i64} {
  func.func @_dw_s2_kernel(%arg0: i32, %arg1: memref<1x8x2x232xf32, #tpu.memory_space<vmem>>, %arg2: memref<9x1x232xf32, #tpu.memory_space<vmem>>, %arg3: memref<1x1x232xf32, #tpu.memory_space<vmem>>, %arg4: memref<1x1x1x232xf32, #tpu.memory_space<vmem>>) attributes {dimension_semantics = [#tpu.dimension_semantics<parallel>], iteration_bounds = array<i64: 2>, scalar_prefetch = 0 : i64, scratch_operands = 0 : i64, tpu.core_type = #tpu.core_type<tc>, window_params = [{transform_indices = @transform_0, window_bounds = array<i64: 1, 8, 2, 232>}, {pipeline_mode = #tpu.pipeline_mode<synchronous>, transform_indices = @transform_1, window_bounds = array<i64: 9, 1, 232>}, {pipeline_mode = #tpu.pipeline_mode<synchronous>, transform_indices = @transform_2, window_bounds = array<i64: 1, 1, 232>}, {transform_indices = @transform_3, window_bounds = array<i64: 1, 1, 1, 232>}]} {
    %c0 = arith.constant 0 : index
    %c0_0 = arith.constant 0 : index
    %c0_1 = arith.constant 0 : index
    %c0_2 = arith.constant 0 : index
    %0 = vector.load %arg1[%c0, %c0_0, %c0_1, %c0_2] : memref<1x8x2x232xf32, #tpu.memory_space<vmem>>, vector<1x8x2x232xf32>
    %1 = vector.shape_cast %0 : vector<1x8x2x232xf32> to vector<8x2x232xf32>
    %c0_3 = arith.constant 0 : index
    %c0_4 = arith.constant 0 : index
    %c0_5 = arith.constant 0 : index
    %2 = vector.load %arg2[%c0_3, %c0_4, %c0_5] : memref<9x1x232xf32, #tpu.memory_space<vmem>>, vector<9x1x232xf32>
    %c0_6 = arith.constant 0 : index
    %c0_7 = arith.constant 0 : index
    %c0_8 = arith.constant 0 : index
    %3 = vector.load %arg3[%c0_6, %c0_7, %c0_8] : memref<1x1x232xf32, #tpu.memory_space<vmem>>, vector<1x1x232xf32>
    %4 = vector.shape_cast %3 : vector<1x1x232xf32> to vector<1x232xf32>
    %5 = vector.extract_strided_slice %1 {offsets = [0, 0, 0], sizes = [1, 1, 232], strides = [1, 1, 1]} : vector<8x2x232xf32> to vector<1x1x232xf32>
    %6 = vector.extract_strided_slice %2 {offsets = [0, 0, 0], sizes = [1, 1, 232], strides = [1, 1, 1]} : vector<9x1x232xf32> to vector<1x1x232xf32>
    %7 = vector.shape_cast %6 : vector<1x1x232xf32> to vector<1x232xf32>
    %8 = vector.shape_cast %7 : vector<1x232xf32> to vector<1x1x232xf32>
    %9 = arith.mulf %5, %8 : vector<1x1x232xf32>
    %10 = vector.extract_strided_slice %1 {offsets = [2, 0, 0], sizes = [1, 1, 232], strides = [1, 1, 1]} : vector<8x2x232xf32> to vector<1x1x232xf32>
    %11 = vector.extract_strided_slice %2 {offsets = [1, 0, 0], sizes = [1, 1, 232], strides = [1, 1, 1]} : vector<9x1x232xf32> to vector<1x1x232xf32>
    %12 = vector.shape_cast %11 : vector<1x1x232xf32> to vector<1x232xf32>
    %13 = vector.shape_cast %12 : vector<1x232xf32> to vector<1x1x232xf32>
    %14 = arith.mulf %10, %13 : vector<1x1x232xf32>
    %15 = arith.addf %9, %14 : vector<1x1x232xf32>
    %16 = vector.extract_strided_slice %1 {offsets = [0, 1, 0], sizes = [1, 1, 232], strides = [1, 1, 1]} : vector<8x2x232xf32> to vector<1x1x232xf32>
    %17 = vector.extract_strided_slice %2 {offsets = [2, 0, 0], sizes = [1, 1, 232], strides = [1, 1, 1]} : vector<9x1x232xf32> to vector<1x1x232xf32>
    %18 = vector.shape_cast %17 : vector<1x1x232xf32> to vector<1x232xf32>
    %19 = vector.shape_cast %18 : vector<1x232xf32> to vector<1x1x232xf32>
    %20 = arith.mulf %16, %19 : vector<1x1x232xf32>
    %21 = arith.addf %15, %20 : vector<1x1x232xf32>
    %22 = vector.extract_strided_slice %1 {offsets = [4, 0, 0], sizes = [1, 1, 232], strides = [1, 1, 1]} : vector<8x2x232xf32> to vector<1x1x232xf32>
    %23 = vector.extract_strided_slice %2 {offsets = [3, 0, 0], sizes = [1, 1, 232], strides = [1, 1, 1]} : vector<9x1x232xf32> to vector<1x1x232xf32>
    %24 = vector.shape_cast %23 : vector<1x1x232xf32> to vector<1x232xf32>
    %25 = vector.shape_cast %24 : vector<1x232xf32> to vector<1x1x232xf32>
    %26 = arith.mulf %22, %25 : vector<1x1x232xf32>
    %27 = arith.addf %21, %26 : vector<1x1x232xf32>
    %28 = vector.extract_strided_slice %1 {offsets = [6, 0, 0], sizes = [1, 1, 232], strides = [1, 1, 1]} : vector<8x2x232xf32> to vector<1x1x232xf32>
    %29 = vector.extract_strided_slice %2 {offsets = [4, 0, 0], sizes = [1, 1, 232], strides = [1, 1, 1]} : vector<9x1x232xf32> to vector<1x1x232xf32>
    %30 = vector.shape_cast %29 : vector<1x1x232xf32> to vector<1x232xf32>
    %31 = vector.shape_cast %30 : vector<1x232xf32> to vector<1x1x232xf32>
    %32 = arith.mulf %28, %31 : vector<1x1x232xf32>
    %33 = arith.addf %27, %32 : vector<1x1x232xf32>
    %34 = vector.extract_strided_slice %1 {offsets = [4, 1, 0], sizes = [1, 1, 232], strides = [1, 1, 1]} : vector<8x2x232xf32> to vector<1x1x232xf32>
    %35 = vector.extract_strided_slice %2 {offsets = [5, 0, 0], sizes = [1, 1, 232], strides = [1, 1, 1]} : vector<9x1x232xf32> to vector<1x1x232xf32>
    %36 = vector.shape_cast %35 : vector<1x1x232xf32> to vector<1x232xf32>
    %37 = vector.shape_cast %36 : vector<1x232xf32> to vector<1x1x232xf32>
    %38 = arith.mulf %34, %37 : vector<1x1x232xf32>
    %39 = arith.addf %33, %38 : vector<1x1x232xf32>
    %40 = vector.extract_strided_slice %1 {offsets = [1, 0, 0], sizes = [1, 1, 232], strides = [1, 1, 1]} : vector<8x2x232xf32> to vector<1x1x232xf32>
    %41 = vector.extract_strided_slice %2 {offsets = [6, 0, 0], sizes = [1, 1, 232], strides = [1, 1, 1]} : vector<9x1x232xf32> to vector<1x1x232xf32>
    %42 = vector.shape_cast %41 : vector<1x1x232xf32> to vector<1x232xf32>
    %43 = vector.shape_cast %42 : vector<1x232xf32> to vector<1x1x232xf32>
    %44 = arith.mulf %40, %43 : vector<1x1x232xf32>
    %45 = arith.addf %39, %44 : vector<1x1x232xf32>
    %46 = vector.extract_strided_slice %1 {offsets = [3, 0, 0], sizes = [1, 1, 232], strides = [1, 1, 1]} : vector<8x2x232xf32> to vector<1x1x232xf32>
    %47 = vector.extract_strided_slice %2 {offsets = [7, 0, 0], sizes = [1, 1, 232], strides = [1, 1, 1]} : vector<9x1x232xf32> to vector<1x1x232xf32>
    %48 = vector.shape_cast %47 : vector<1x1x232xf32> to vector<1x232xf32>
    %49 = vector.shape_cast %48 : vector<1x232xf32> to vector<1x1x232xf32>
    %50 = arith.mulf %46, %49 : vector<1x1x232xf32>
    %51 = arith.addf %45, %50 : vector<1x1x232xf32>
    %52 = vector.extract_strided_slice %1 {offsets = [1, 1, 0], sizes = [1, 1, 232], strides = [1, 1, 1]} : vector<8x2x232xf32> to vector<1x1x232xf32>
    %53 = vector.extract_strided_slice %2 {offsets = [8, 0, 0], sizes = [1, 1, 232], strides = [1, 1, 1]} : vector<9x1x232xf32> to vector<1x1x232xf32>
    %54 = vector.shape_cast %53 : vector<1x1x232xf32> to vector<1x232xf32>
    %55 = vector.shape_cast %54 : vector<1x232xf32> to vector<1x1x232xf32>
    %56 = arith.mulf %52, %55 : vector<1x1x232xf32>
    %57 = arith.addf %51, %56 : vector<1x1x232xf32>
    %58 = vector.shape_cast %4 : vector<1x232xf32> to vector<1x1x232xf32>
    %59 = arith.addf %57, %58 : vector<1x1x232xf32>
    %c0_9 = arith.constant 0 : index
    %c0_10 = arith.constant 0 : index
    %c0_11 = arith.constant 0 : index
    %c0_12 = arith.constant 0 : index
    %60 = vector.load %arg4[%c0_9, %c0_10, %c0_11, %c0_12] : memref<1x1x1x232xf32, #tpu.memory_space<vmem>>, vector<1x1x1x232xf32>
    %61 = vector.shape_cast %60 : vector<1x1x1x232xf32> to vector<1x1x232xf32>
    %62 = vector.shape_cast %59 : vector<1x1x232xf32> to vector<1x1x1x232xf32>
    tpu.vector_store %arg4[%c0_9, %c0_10, %c0_11, %c0_12], %62 {strides = array<i32>} : memref<1x1x1x232xf32, #tpu.memory_space<vmem>>, vector<1x1x1x232xf32>,
    return
  }
  func.func @transform_0(%arg0: i32) -> (i32, i32, i32, i32) {
    %c0_i32 = arith.constant 0 : i32
    %c0_i32_0 = arith.constant 0 : i32
    %c0_i32_1 = arith.constant 0 : i32
    %c0_i32_2 = arith.constant 0 : i32
    return %arg0, %c0_i32, %c0_i32_0, %c0_i32_1 : i32, i32, i32, i32
  }
  func.func @transform_1(%arg0: i32) -> (i32, i32, i32) {
    %c0_i32 = arith.constant 0 : i32
    %c0_i32_0 = arith.constant 0 : i32
    %c0_i32_1 = arith.constant 0 : i32
    %c0_i32_2 = arith.constant 0 : i32
    return %c0_i32, %c0_i32_0, %c0_i32_1 : i32, i32, i32
  }
  func.func @transform_2(%arg0: i32) -> (i32, i32, i32) {
    %c0_i32 = arith.constant 0 : i32
    %c0_i32_0 = arith.constant 0 : i32
    %c0_i32_1 = arith.constant 0 : i32
    %c0_i32_2 = arith.constant 0 : i32
    return %c0_i32, %c0_i32_0, %c0_i32_1 : i32, i32, i32
  }
  func.func @transform_3(%arg0: i32) -> (i32, i32, i32, i32) {
    %c0_i32 = arith.constant 0 : i32
    %c0_i32_0 = arith.constant 0 : i32
    %c0_i32_1 = arith.constant 0 : i32
    %c0_i32_2 = arith.constant 0 : i32
    return %arg0, %c0_i32, %c0_i32_0, %c0_i32_1 : i32, i32, i32, i32
  }
}

module attributes {stable_mosaic.version = 11 : i64} {
  func.func @_dw_s1_kernel(%arg0: i32, %arg1: memref<1x3x3x232xf32, #tpu.memory_space<vmem>>, %arg2: memref<9x1x232xf32, #tpu.memory_space<vmem>>, %arg3: memref<1x1x232xf32, #tpu.memory_space<vmem>>, %arg4: memref<1x1x1x232xf32, #tpu.memory_space<vmem>>) attributes {dimension_semantics = [#tpu.dimension_semantics<parallel>], iteration_bounds = array<i64: 2>, scalar_prefetch = 0 : i64, scratch_operands = 0 : i64, tpu.core_type = #tpu.core_type<tc>, window_params = [{transform_indices = @transform_0, window_bounds = array<i64: 1, 3, 3, 232>}, {pipeline_mode = #tpu.pipeline_mode<synchronous>, transform_indices = @transform_1, window_bounds = array<i64: 9, 1, 232>}, {pipeline_mode = #tpu.pipeline_mode<synchronous>, transform_indices = @transform_2, window_bounds = array<i64: 1, 1, 232>}, {transform_indices = @transform_3, window_bounds = array<i64: 1, 1, 1, 232>}]} {
    %c0 = arith.constant 0 : index
    %c0_0 = arith.constant 0 : index
    %c0_1 = arith.constant 0 : index
    %c0_2 = arith.constant 0 : index
    %0 = vector.load %arg1[%c0, %c0_0, %c0_1, %c0_2] : memref<1x3x3x232xf32, #tpu.memory_space<vmem>>, vector<1x3x3x232xf32>
    %1 = vector.shape_cast %0 : vector<1x3x3x232xf32> to vector<3x3x232xf32>
    %c0_3 = arith.constant 0 : index
    %c0_4 = arith.constant 0 : index
    %c0_5 = arith.constant 0 : index
    %2 = vector.load %arg2[%c0_3, %c0_4, %c0_5] : memref<9x1x232xf32, #tpu.memory_space<vmem>>, vector<9x1x232xf32>
    %c0_6 = arith.constant 0 : index
    %c0_7 = arith.constant 0 : index
    %c0_8 = arith.constant 0 : index
    %3 = vector.load %arg3[%c0_6, %c0_7, %c0_8] : memref<1x1x232xf32, #tpu.memory_space<vmem>>, vector<1x1x232xf32>
    %4 = vector.shape_cast %3 : vector<1x1x232xf32> to vector<1x232xf32>
    %5 = vector.extract_strided_slice %1 {offsets = [0, 0, 0], sizes = [1, 1, 232], strides = [1, 1, 1]} : vector<3x3x232xf32> to vector<1x1x232xf32>
    %6 = vector.extract_strided_slice %2 {offsets = [0, 0, 0], sizes = [1, 1, 232], strides = [1, 1, 1]} : vector<9x1x232xf32> to vector<1x1x232xf32>
    %7 = vector.shape_cast %6 : vector<1x1x232xf32> to vector<1x232xf32>
    %8 = vector.shape_cast %7 : vector<1x232xf32> to vector<1x1x232xf32>
    %9 = arith.mulf %5, %8 : vector<1x1x232xf32>
    %10 = vector.extract_strided_slice %1 {offsets = [0, 1, 0], sizes = [1, 1, 232], strides = [1, 1, 1]} : vector<3x3x232xf32> to vector<1x1x232xf32>
    %11 = vector.extract_strided_slice %2 {offsets = [1, 0, 0], sizes = [1, 1, 232], strides = [1, 1, 1]} : vector<9x1x232xf32> to vector<1x1x232xf32>
    %12 = vector.shape_cast %11 : vector<1x1x232xf32> to vector<1x232xf32>
    %13 = vector.shape_cast %12 : vector<1x232xf32> to vector<1x1x232xf32>
    %14 = arith.mulf %10, %13 : vector<1x1x232xf32>
    %15 = arith.addf %9, %14 : vector<1x1x232xf32>
    %16 = vector.extract_strided_slice %1 {offsets = [0, 2, 0], sizes = [1, 1, 232], strides = [1, 1, 1]} : vector<3x3x232xf32> to vector<1x1x232xf32>
    %17 = vector.extract_strided_slice %2 {offsets = [2, 0, 0], sizes = [1, 1, 232], strides = [1, 1, 1]} : vector<9x1x232xf32> to vector<1x1x232xf32>
    %18 = vector.shape_cast %17 : vector<1x1x232xf32> to vector<1x232xf32>
    %19 = vector.shape_cast %18 : vector<1x232xf32> to vector<1x1x232xf32>
    %20 = arith.mulf %16, %19 : vector<1x1x232xf32>
    %21 = arith.addf %15, %20 : vector<1x1x232xf32>
    %22 = vector.extract_strided_slice %1 {offsets = [1, 0, 0], sizes = [1, 1, 232], strides = [1, 1, 1]} : vector<3x3x232xf32> to vector<1x1x232xf32>
    %23 = vector.extract_strided_slice %2 {offsets = [3, 0, 0], sizes = [1, 1, 232], strides = [1, 1, 1]} : vector<9x1x232xf32> to vector<1x1x232xf32>
    %24 = vector.shape_cast %23 : vector<1x1x232xf32> to vector<1x232xf32>
    %25 = vector.shape_cast %24 : vector<1x232xf32> to vector<1x1x232xf32>
    %26 = arith.mulf %22, %25 : vector<1x1x232xf32>
    %27 = arith.addf %21, %26 : vector<1x1x232xf32>
    %28 = vector.extract_strided_slice %1 {offsets = [1, 1, 0], sizes = [1, 1, 232], strides = [1, 1, 1]} : vector<3x3x232xf32> to vector<1x1x232xf32>
    %29 = vector.extract_strided_slice %2 {offsets = [4, 0, 0], sizes = [1, 1, 232], strides = [1, 1, 1]} : vector<9x1x232xf32> to vector<1x1x232xf32>
    %30 = vector.shape_cast %29 : vector<1x1x232xf32> to vector<1x232xf32>
    %31 = vector.shape_cast %30 : vector<1x232xf32> to vector<1x1x232xf32>
    %32 = arith.mulf %28, %31 : vector<1x1x232xf32>
    %33 = arith.addf %27, %32 : vector<1x1x232xf32>
    %34 = vector.extract_strided_slice %1 {offsets = [1, 2, 0], sizes = [1, 1, 232], strides = [1, 1, 1]} : vector<3x3x232xf32> to vector<1x1x232xf32>
    %35 = vector.extract_strided_slice %2 {offsets = [5, 0, 0], sizes = [1, 1, 232], strides = [1, 1, 1]} : vector<9x1x232xf32> to vector<1x1x232xf32>
    %36 = vector.shape_cast %35 : vector<1x1x232xf32> to vector<1x232xf32>
    %37 = vector.shape_cast %36 : vector<1x232xf32> to vector<1x1x232xf32>
    %38 = arith.mulf %34, %37 : vector<1x1x232xf32>
    %39 = arith.addf %33, %38 : vector<1x1x232xf32>
    %40 = vector.extract_strided_slice %1 {offsets = [2, 0, 0], sizes = [1, 1, 232], strides = [1, 1, 1]} : vector<3x3x232xf32> to vector<1x1x232xf32>
    %41 = vector.extract_strided_slice %2 {offsets = [6, 0, 0], sizes = [1, 1, 232], strides = [1, 1, 1]} : vector<9x1x232xf32> to vector<1x1x232xf32>
    %42 = vector.shape_cast %41 : vector<1x1x232xf32> to vector<1x232xf32>
    %43 = vector.shape_cast %42 : vector<1x232xf32> to vector<1x1x232xf32>
    %44 = arith.mulf %40, %43 : vector<1x1x232xf32>
    %45 = arith.addf %39, %44 : vector<1x1x232xf32>
    %46 = vector.extract_strided_slice %1 {offsets = [2, 1, 0], sizes = [1, 1, 232], strides = [1, 1, 1]} : vector<3x3x232xf32> to vector<1x1x232xf32>
    %47 = vector.extract_strided_slice %2 {offsets = [7, 0, 0], sizes = [1, 1, 232], strides = [1, 1, 1]} : vector<9x1x232xf32> to vector<1x1x232xf32>
    %48 = vector.shape_cast %47 : vector<1x1x232xf32> to vector<1x232xf32>
    %49 = vector.shape_cast %48 : vector<1x232xf32> to vector<1x1x232xf32>
    %50 = arith.mulf %46, %49 : vector<1x1x232xf32>
    %51 = arith.addf %45, %50 : vector<1x1x232xf32>
    %52 = vector.extract_strided_slice %1 {offsets = [2, 2, 0], sizes = [1, 1, 232], strides = [1, 1, 1]} : vector<3x3x232xf32> to vector<1x1x232xf32>
    %53 = vector.extract_strided_slice %2 {offsets = [8, 0, 0], sizes = [1, 1, 232], strides = [1, 1, 1]} : vector<9x1x232xf32> to vector<1x1x232xf32>
    %54 = vector.shape_cast %53 : vector<1x1x232xf32> to vector<1x232xf32>
    %55 = vector.shape_cast %54 : vector<1x232xf32> to vector<1x1x232xf32>
    %56 = arith.mulf %52, %55 : vector<1x1x232xf32>
    %57 = arith.addf %51, %56 : vector<1x1x232xf32>
    %58 = vector.shape_cast %4 : vector<1x232xf32> to vector<1x1x232xf32>
    %59 = arith.addf %57, %58 : vector<1x1x232xf32>
    %c0_9 = arith.constant 0 : index
    %c0_10 = arith.constant 0 : index
    %c0_11 = arith.constant 0 : index
    %c0_12 = arith.constant 0 : index
    %60 = vector.load %arg4[%c0_9, %c0_10, %c0_11, %c0_12] : memref<1x1x1x232xf32, #tpu.memory_space<vmem>>, vector<1x1x1x232xf32>
    %61 = vector.shape_cast %60 : vector<1x1x1x232xf32> to vector<1x1x232xf32>
    %62 = vector.shape_cast %59 : vector<1x1x232xf32> to vector<1x1x1x232xf32>
    tpu.vector_store %arg4[%c0_9, %c0_10, %c0_11, %c0_12], %62 {strides = array<i32>} : memref<1x1x1x232xf32, #tpu.memory_space<vmem>>, vector<1x1x1x232xf32>,
    return
  }
  func.func @transform_0(%arg0: i32) -> (i32, i32, i32, i32) {
    %c0_i32 = arith.constant 0 : i32
    %c0_i32_0 = arith.constant 0 : i32
    %c0_i32_1 = arith.constant 0 : i32
    %c0_i32_2 = arith.constant 0 : i32
    return %arg0, %c0_i32, %c0_i32_0, %c0_i32_1 : i32, i32, i32, i32
  }
  func.func @transform_1(%arg0: i32) -> (i32, i32, i32) {
    %c0_i32 = arith.constant 0 : i32
    %c0_i32_0 = arith.constant 0 : i32
    %c0_i32_1 = arith.constant 0 : i32
    %c0_i32_2 = arith.constant 0 : i32
    return %c0_i32, %c0_i32_0, %c0_i32_1 : i32, i32, i32
  }
  func.func @transform_2(%arg0: i32) -> (i32, i32, i32) {
    %c0_i32 = arith.constant 0 : i32
    %c0_i32_0 = arith.constant 0 : i32
    %c0_i32_1 = arith.constant 0 : i32
    %c0_i32_2 = arith.constant 0 : i32
    return %c0_i32, %c0_i32_0, %c0_i32_1 : i32, i32, i32
  }
  func.func @transform_3(%arg0: i32) -> (i32, i32, i32, i32) {
    %c0_i32 = arith.constant 0 : i32
    %c0_i32_0 = arith.constant 0 : i32
    %c0_i32_1 = arith.constant 0 : i32
    %c0_i32_2 = arith.constant 0 : i32
    return %arg0, %c0_i32, %c0_i32_0, %c0_i32_1 : i32, i32, i32, i32
  }
}

module attributes {stable_mosaic.version = 11 : i64} {
  func.func @_gap_fc_kernel(%arg0: memref<2x1x1024xf32, #tpu.memory_space<vmem>>, %arg1: memref<1024x39xbf16, #tpu.memory_space<vmem>>, %arg2: memref<1x39xf32, #tpu.memory_space<vmem>>, %arg3: memref<2x39xf32, #tpu.memory_space<vmem>>) attributes {dimension_semantics = [], scalar_prefetch = 0 : i64, scratch_operands = 0 : i64, tpu.core_type = #tpu.core_type<tc>} {
    %c0 = arith.constant 0 : index
    %c0_0 = arith.constant 0 : index
    %c0_1 = arith.constant 0 : index
    %0 = vector.load %arg0[%c0, %c0_0, %c0_1] : memref<2x1x1024xf32, #tpu.memory_space<vmem>>, vector<2x1x1024xf32>
    %cst = arith.constant dense<0.000000e+00> : vector<2x1024xf32>
    %1 = vector.multi_reduction <add>, %0, %cst [1] : vector<2x1x1024xf32> to vector<2x1024xf32>
    %cst_2 = arith.constant 1.000000e+00 : f32
    %2 = vector.broadcast %cst_2 : f32 to vector<2x1024xf32>
    %3 = arith.mulf %1, %2 : vector<2x1024xf32>
    %4 = arith.truncf %3 : vector<2x1024xf32> to vector<2x1024xbf16>
    %c0_3 = arith.constant 0 : index
    %c0_4 = arith.constant 0 : index
    %5 = vector.load %arg1[%c0_3, %c0_4] : memref<1024x39xbf16, #tpu.memory_space<vmem>>, vector<1024x39xbf16>
    %cst_5 = arith.constant dense<0.000000e+00> : vector<2x39xf32>
    %6 = tpu.matmul %4, %5, %cst_5 {dimension_numbers = #tpu.dot_dimension_numbers<[1], [0], [0], [1], [0, 0, 1, 1], [], []>} : vector<2x1024xbf16>, vector<1024x39xbf16>, vector<2x39xf32> -> vector<2x39xf32>
    %c0_6 = arith.constant 0 : index
    %c0_7 = arith.constant 0 : index
    %7 = vector.load %arg2[%c0_6, %c0_7] : memref<1x39xf32, #tpu.memory_space<vmem>>, vector<1x39xf32>
    %8 = vector.broadcast %7 : vector<1x39xf32> to vector<2x39xf32>
    %9 = arith.addf %6, %8 : vector<2x39xf32>
    %c0_8 = arith.constant 0 : index
    %c0_9 = arith.constant 0 : index
    %10 = vector.load %arg3[%c0_8, %c0_9] : memref<2x39xf32, #tpu.memory_space<vmem>>, vector<2x39xf32>
    tpu.vector_store %arg3[%c0_8, %c0_9], %9 {strides = array<i32>} : memref<2x39xf32, #tpu.memory_space<vmem>>, vector<2x39xf32>,
    return
  }
}

module attributes {stable_mosaic.version = 11 : i64} {
  func.func @_mm_bias_kernel(%arg0: i32, %arg1: memref<8x464xf32, #tpu.memory_space<vmem>>, %arg2: memref<464x1024xbf16, #tpu.memory_space<vmem>>, %arg3: memref<1x1024xf32, #tpu.memory_space<vmem>>, %arg4: memref<8x1024xf32, #tpu.memory_space<vmem>>) attributes {dimension_semantics = [#tpu.dimension_semantics<parallel>], iteration_bounds = array<i64: 1>, scalar_prefetch = 0 : i64, scratch_operands = 0 : i64, tpu.core_type = #tpu.core_type<tc>, window_params = [{transform_indices = @transform_0, window_bounds = array<i64: 8, 464>}, {pipeline_mode = #tpu.pipeline_mode<synchronous>, transform_indices = @transform_1, window_bounds = array<i64: 464, 1024>}, {pipeline_mode = #tpu.pipeline_mode<synchronous>, transform_indices = @transform_2, window_bounds = array<i64: 1, 1024>}, {transform_indices = @transform_3, window_bounds = array<i64: 8, 1024>}]} {
    %c0 = arith.constant 0 : index
    %c0_0 = arith.constant 0 : index
    %0 = vector.load %arg1[%c0, %c0_0] : memref<8x464xf32, #tpu.memory_space<vmem>>, vector<8x464xf32>
    %1 = arith.truncf %0 : vector<8x464xf32> to vector<8x464xbf16>
    %c0_1 = arith.constant 0 : index
    %c0_2 = arith.constant 0 : index
    %2 = vector.load %arg2[%c0_1, %c0_2] : memref<464x1024xbf16, #tpu.memory_space<vmem>>, vector<464x1024xbf16>
    %cst = arith.constant dense<0.000000e+00> : vector<8x1024xf32>
    %3 = tpu.matmul %1, %2, %cst {dimension_numbers = #tpu.dot_dimension_numbers<[1], [0], [0], [1], [0, 0, 1, 1], [], []>} : vector<8x464xbf16>, vector<464x1024xbf16>, vector<8x1024xf32> -> vector<8x1024xf32>
    %c0_3 = arith.constant 0 : index
    %c0_4 = arith.constant 0 : index
    %4 = vector.load %arg3[%c0_3, %c0_4] : memref<1x1024xf32, #tpu.memory_space<vmem>>, vector<1x1024xf32>
    %5 = vector.broadcast %4 : vector<1x1024xf32> to vector<8x1024xf32>
    %6 = arith.addf %3, %5 : vector<8x1024xf32>
    %cst_5 = arith.constant 0.000000e+00 : f32
    %7 = vector.broadcast %cst_5 : f32 to vector<8x1024xf32>
    %8 = arith.maximumf %6, %7 : vector<8x1024xf32>
    %c0_6 = arith.constant 0 : index
    %c0_7 = arith.constant 0 : index
    %9 = vector.load %arg4[%c0_6, %c0_7] : memref<8x1024xf32, #tpu.memory_space<vmem>>, vector<8x1024xf32>
    tpu.vector_store %arg4[%c0_6, %c0_7], %8 {strides = array<i32>} : memref<8x1024xf32, #tpu.memory_space<vmem>>, vector<8x1024xf32>,
    return
  }
  func.func @transform_0(%arg0: i32) -> (i32, i32) {
    %c0_i32 = arith.constant 0 : i32
    %c0_i32_0 = arith.constant 0 : i32
    return %arg0, %c0_i32 : i32, i32
  }
  func.func @transform_1(%arg0: i32) -> (i32, i32) {
    %c0_i32 = arith.constant 0 : i32
    %c0_i32_0 = arith.constant 0 : i32
    %c0_i32_1 = arith.constant 0 : i32
    return %c0_i32, %c0_i32_0 : i32, i32
  }
  func.func @transform_2(%arg0: i32) -> (i32, i32) {
    %c0_i32 = arith.constant 0 : i32
    %c0_i32_0 = arith.constant 0 : i32
    %c0_i32_1 = arith.constant 0 : i32
    return %c0_i32, %c0_i32_0 : i32, i32
  }
  func.func @transform_3(%arg0: i32) -> (i32, i32) {
    %c0_i32 = arith.constant 0 : i32
    %c0_i32_0 = arith.constant 0 : i32
    return %arg0, %c0_i32 : i32, i32
  }
}

</mosaic_0001>

<llo_original>
// kernel: _lambda_.58
$region0: #{_lambda_.58}
  #allocation0 [shape = 'u32[]', space=smem, size = 0x4, offset = 0x4, fixed_abs, tag = 'smem constant byte address 0x4 - core index']
  #allocation1 [shape = 'u32[144,128]{1,0:T(1,128)}', space=vmem, size = 0x12000, scoped, tag = 'internal scratch']
  %s0 = inlined_call_operand.vmem [shape: f32[512,27], index: 0, kind: input, shape index: {}]
  %s1 = inlined_call_operand.vmem [shape: bf16[27,24], index: 1, kind: input, shape index: {}]
  %s2 = inlined_call_operand.vmem [shape: f32[1,24], index: 2, kind: input, shape index: {}]
  %s3 = inlined_call_operand.vmem [shape: f32[512,24], index: 3, kind: output, shape index: {}]
  %s4 = sld [smem:[#allocation0]]
  $region22: #{_lambda_.58} parent=0
    _
  %s6 = ssub.s32 1, %s4
  %s7 = scalar_select 0, %s6, %s4
  // Predicated region
  $region2: #{_lambda_.58} parent=0 // pred_check
    _
  $region3: #{_lambda_.58} parent=0 // pred_check_branch
    %9 = sbr.rel (0) target = $region5
  $region4: #{_lambda_.58} parent=0 // pred_region
    _
  $region5: #{_lambda_.58} parent=0 // pred_fallthru
    _
  // Predicated region
  $region6: #{_lambda_.58} parent=0 // pred_check
    _
  $region7: #{_lambda_.58} parent=0 // pred_check_branch
    %11 = sbr.rel (0) target = $region9
  $region8: #{_lambda_.58} parent=0 // pred_region
    _
  $region9: #{_lambda_.58} parent=0 // pred_fallthru
    _
  // Predicated region
  $region10: #{_lambda_.58} parent=0 // pred_check
    _
  $region11: #{_lambda_.58} parent=0 // pred_check_branch
    %13 = sbr.rel (0) target = $region13
  $region12: #{_lambda_.58} parent=0 // pred_region
    _
  $region13: #{_lambda_.58} parent=0 // pred_fallthru
    _
  %v15 = vld [vmem:[%s0] sm:$0xff]
  %v16 = vld [vmem:[%s0 + $0x8] sm:$0xff]
  %v17 = vld [vmem:[%s0 + $0x10] sm:$0xff]
  %v18 = vld [vmem:[%s0 + $0x18] sm:$0xff]
  %v19 = vld [vmem:[%s0 + $0x20] sm:$0xff]
  %v20 = vld [vmem:[%s0 + $0x28] sm:$0xff]
  %v21 = vld [vmem:[%s0 + $0x30] sm:$0xff]
  %v22 = vld [vmem:[%s0 + $0x38] sm:$0xff]
  %v23 = vld [vmem:[%s0 + $0x40] sm:$0xff]
  %v24 = vld [vmem:[%s0 + $0x48] sm:$0xff]
  %v25 = vld [vmem:[%s0 + $0x50] sm:$0xff]
  %v26 = vld [vmem:[%s0 + $0x58] sm:$0xff]
  %v27 = vld [vmem:[%s0 + $0x60] sm:$0xff]
  %v28 = vld [vmem:[%s0 + $0x68] sm:$0xff]
  %v29 = vld [vmem:[%s0 + $0x70] sm:$0xff]
  %v30 = vld [vmem:[%s0 + $0x78] sm:$0xff]
  %v31 = vld [vmem:[%s0 + $0x80] sm:$0xff]
  %v32 = vld [vmem:[%s0 + $0x88] sm:$0xff]
  %v33 = vld [vmem:[%s0 + $0x90] sm:$0xff]
  %v34 = vld [vmem:[%s0 + $0x98] sm:$0xff]
  %v35 = vld [vmem:[%s0 + $0xa0] sm:$0xff]
  %v36 = vld [vmem:[%s0 + $0xa8] sm:$0xff]
  %v37 = vld [vmem:[%s0 + $0xb0] sm:$0xff]
  %v38 = vld [vmem:[%s0 + $0xb8] sm:$0xff]
  %v39 = vld [vmem:[%s0 + $0xc0] sm:$0xff]
  %v40 = vld [vmem:[%s0 + $0xc8] sm:$0xff]
  %v41 = vld [vmem:[%s0 + $0xd0] sm:$0xff]
  %v42 = vld [vmem:[%s0 + $0xd8] sm:$0xff]
  %v43 = vld [vmem:[%s0 + $0xe0] sm:$0xff]
  %v44 = vld [vmem:[%s0 + $0xe8] sm:$0xff]
  %v45 = vld [vmem:[%s0 + $0xf0] sm:$0xff]
  %v46 = vld [vmem:[%s0 + $0xf8] sm:$0xff]
  %v47 = vld [vmem:[%s0 + $0x100] sm:$0xff]
  %v48 = vld [vmem:[%s0 + $0x108] sm:$0xff]
  %v49 = vld [vmem:[%s0 + $0x110] sm:$0xff]
  %v50 = vld [vmem:[%s0 + $0x118] sm:$0xff]
  %v51 = vld [vmem:[%s0 + $0x120] sm:$0xff]
  %v52 = vld [vmem:[%s0 + $0x128] sm:$0xff]
  %v53 = vld [vmem:[%s0 + $0x130] sm:$0xff]
  %v54 = vld [vmem:[%s0 + $0x138] sm:$0xff]
  %v55 = vld [vmem:[%s0 + $0x140] sm:$0xff]
  %v56 = vld [vmem:[%s0 + $0x148] sm:$0xff]
  %v57 = vld [vmem:[%s0 + $0x150] sm:$0xff]
  %v58 = vld [vmem:[%s0 + $0x158] sm:$0xff]
  %v59 = vld [vmem:[%s0 + $0x160] sm:$0xff]
  %v60 = vld [vmem:[%s0 + $0x168] sm:$0xff]
  %v61 = vld [vmem:[%s0 + $0x170] sm:$0xff]
  %v62 = vld [vmem:[%s0 + $0x178] sm:$0xff]
  %v63 = vld [vmem:[%s0 + $0x180] sm:$0xff]
  %v64 = vld [vmem:[%s0 + $0x188] sm:$0xff]
  %v65 = vld [vmem:[%s0 + $0x190] sm:$0xff]
  %v66 = vld [vmem:[%s0 + $0x198] sm:$0xff]
  %v67 = vld [vmem:[%s0 + $0x1a0] sm:$0xff]
  %v68 = vld [vmem:[%s0 + $0x1a8] sm:$0xff]
  %v69 = vld [vmem:[%s0 + $0x1b0] sm:$0xff]
  %v70 = vld [vmem:[%s0 + $0x1b8] sm:$0xff]
  %v71 = vld [vmem:[%s0 + $0x1c0] sm:$0xff]
  %v72 = vld [vmem:[%s0 + $0x1c8] sm:$0xff]
  %v73 = vld [vmem:[%s0 + $0x1d0] sm:$0xff]
  %v74 = vld [vmem:[%s0 + $0x1d8] sm:$0xff]
  %v75 = vld [vmem:[%s0 + $0x1e0] sm:$0xff]
  %v76 = vld [vmem:[%s0 + $0x1e8] sm:$0xff]
  %v77 = vld [vmem:[%s0 + $0x1f0] sm:$0xff]
  %v78 = vld [vmem:[%s0 + $0x1f8] sm:$0xff]
  %v79 = vpack.c.bf16 %v16, %v15
  %v80 = vpack.c.bf16 %v18, %v17
  %v81 = vpack.c.bf16 %v20, %v19
  %v82 = vpack.c.bf16 %v22, %v21
  %v83 = vpack.c.bf16 %v24, %v23
  %v84 = vpack.c.bf16 %v26, %v25
  %v85 = vpack.c.bf16 %v28, %v27
  %v86 = vpack.c.bf16 %v30, %v29
  %v87 = vpack.c.bf16 %v32, %v31
  %v88 = vpack.c.bf16 %v34, %v33
  %v89 = vpack.c.bf16 %v36, %v35
  %v90 = vpack.c.bf16 %v38, %v37
  %v91 = vpack.c.bf16 %v40, %v39
  %v92 = vpack.c.bf16 %v42, %v41
  %v93 = vpack.c.bf16 %v44, %v43
  %v94 = vpack.c.bf16 %v46, %v45
  %v95 = vpack.c.bf16 %v48, %v47
  %v96 = vpack.c.bf16 %v50, %v49
  %v97 = vpack.c.bf16 %v52, %v51
  %v98 = vpack.c.bf16 %v54, %v53
  %v99 = vpack.c.bf16 %v56, %v55
  %v100 = vpack.c.bf16 %v58, %v57
  %v101 = vpack.c.bf16 %v60, %v59
  %v102 = vpack.c.bf16 %v62, %v61
  %v103 = vpack.c.bf16 %v64, %v63
  %v104 = vpack.c.bf16 %v66, %v65
  %v105 = vpack.c.bf16 %v68, %v67
  %v106 = vpack.c.bf16 %v70, %v69
  %v107 = vpack.c.bf16 %v72, %v71
  %v108 = vpack.c.bf16 %v74, %v73
  %v109 = vpack.c.bf16 %v76, %v75
  %v110 = vpack.c.bf16 %v78, %v77
  %v111 = vld [vmem:[%s1] sm:$0xf]
  %v112 = vld [vmem:[%s1 + $0x4] sm:$0xf]
  %v113 = vld [vmem:[%s1 + $0x8] sm:$0xf]
  %v114 = vld [vmem:[%s1 + $0xc] sm:$0x3]
  %v115 = vld [vmem:[%s2] sm:$0x1]
  %v117 = vlaneseq
  %v118 = vshrl.u32 %v117, 7
  %v119 = vsub.s32 0, %v118
  %v120 = vrot.slane %v115, %v119
  %v126 = vunpack.c.l.b16 %v111
  %v127 = vunpack.c.l.b16 %v112
  %v128 = vunpack.c.l.b16 %v113
  %v129 = vunpack.c.l.b16 %v114
  %v130 = vpack.c.b16 %v127, %v126
  %v131 = vpack.c.b16 %v129, %v128
  %vm133 = vcmask 220160
  %v135 = vsel %vm133, %v79, 0
  %v138 = vsel %vm133, %v80, 0
  %v141 = vsel %vm133, %v81, 0
  %v144 = vsel %vm133, %v82, 0
  %v147 = vsel %vm133, %v83, 0
  %v150 = vsel %vm133, %v84, 0
  %v153 = vsel %vm133, %v85, 0
  %v156 = vsel %vm133, %v86, 0
  %v159 = vsel %vm133, %v87, 0
  %v162 = vsel %vm133, %v88, 0
  %v165 = vsel %vm133, %v89, 0
  %v168 = vsel %vm133, %v90, 0
  %v171 = vsel %vm133, %v91, 0
  %v174 = vsel %vm133, %v92, 0
  %v177 = vsel %vm133, %v93, 0
  %v180 = vsel %vm133, %v94, 0
  %v183 = vsel %vm133, %v95, 0
  %v186 = vsel %vm133, %v96, 0
  %v189 = vsel %vm133, %v97, 0
  %v192 = vsel %vm133, %v98, 0
  %v195 = vsel %vm133, %v99, 0
  %v198 = vsel %vm133, %v100, 0
  %v201 = vsel %vm133, %v101, 0
  %v204 = vsel %vm133, %v102, 0
  %v207 = vsel %vm133, %v103, 0
  %v210 = vsel %vm133, %v104, 0
  %v213 = vsel %vm133, %v105, 0
  %v216 = vsel %vm133, %v106, 0
  %v219 = vsel %vm133, %v107, 0
  %v222 = vsel %vm133, %v108, 0
  %v225 = vsel %vm133, %v109, 0
  %v228 = vsel %vm133, %v110, 0
  %vm230 = vcmask 1044480
  %vm231 = vcmask 1045504
  %v232 = vsel %vm230, 4294967295, 65535
  %v233 = vsel %vm231, %v232, 0
  %v235 = vand.u32 %v131, %v233
  %237 = vmatprep.subr.bf16.mxu0 0
  %238 = vmatpush1.bf16.msra.mxu0 0
  %239 = vmatprep.subr.bf16.mxu0 0
  %240 = vmatpush1.bf16.msra.mxu0 0
  %241 = vmatprep.subr.bf16.mxu0 0
  %242 = vmatpush1.bf16.msra.mxu0 0
  %243 = vmatprep.subr.bf16.mxu0 0
  %244 = vmatpush1.bf16.msra.mxu0 0
  %245 = vmatprep.subr.bf16.mxu0 0
  %246 = vmatpush1.bf16.msra.mxu0 0
  %247 = vmatprep.subr.bf16.mxu0 0
  %248 = vmatpush1.bf16.msra.mxu0 0
  %249 = vmatprep.subr.bf16.mxu0 0
  %250 = vmatpush1.bf16.msra.mxu0 %v235
  %251 = vmatprep.subr.bf16.mxu0 0
  %252 = vmatpush1.bf16.msra.mxu0 %v130
  %253 = vmatprep.subr.bf16.mxu0 0
  %254 = vmatpush2.bf16.msra.mxu0 0
  %255 = vmatprep.subr.bf16.mxu0 0
  %256 = vmatpush2.bf16.msra.mxu0 0
  %257 = vmatprep.subr.bf16.mxu0 0
  %258 = vmatpush2.bf16.msra.mxu0 0
  %259 = vmatprep.subr.bf16.mxu0 0
  %260 = vmatpush2.bf16.msra.mxu0 0
  %261 = vmatprep.subr.bf16.mxu0 0
  %262 = vmatpush2.bf16.msra.mxu0 0
  %263 = vmatprep.subr.bf16.mxu0 0
  %264 = vmatpush2.bf16.msra.mxu0 0
  %265 = vmatprep.subr.bf16.mxu0 0
  %266 = vmatpush2.bf16.msra.mxu0 0
  %267 = vmatprep.subr.bf16.mxu0 0
  %268 = vmatpush2.bf16.msra.mxu0 0
  %269 = vmatprep.mubr.bf16.mxu0 0
  %270 = vmatmul.mubr.bf16.gmra.mxu0 %v135
  %v271 = vpop.f32.mrf.mxu0
  %v272 = vadd.f32 %v120, %v271
  %v273 = vpop.f32.mrf.mxu0
  %v274 = vpop.f32.mrf.mxu0
  %v275 = vadd.f32 %v120, %v274
  %v276 = vpop.f32.mrf.mxu0
  %277 = vmatprep.mubr.bf16.mxu0 0
  %278 = vmatmul.mubr.bf16.gmra.mxu0 %v138
  %v279 = vpop.f32.mrf.mxu0
  %v280 = vadd.f32 %v120, %v279
  %v281 = vpop.f32.mrf.mxu0
  %v282 = vpop.f32.mrf.mxu0
  %v283 = vadd.f32 %v120, %v282
  %v284 = vpop.f32.mrf.mxu0
  %285 = vmatprep.mubr.bf16.mxu0 0
  %286 = vmatmul.mubr.bf16.gmra.mxu0 %v141
  %v287 = vpop.f32.mrf.mxu0
  %v288 = vadd.f32 %v120, %v287
  %v289 = vpop.f32.mrf.mxu0
  %v290 = vpop.f32.mrf.mxu0
  %v291 = vadd.f32 %v120, %v290
  %v292 = vpop.f32.mrf.mxu0
  %293 = vmatprep.mubr.bf16.mxu0 0
  %294 = vmatmul.mubr.bf16.gmra.mxu0 %v144
  %v295 = vpop.f32.mrf.mxu0
  %v296 = vadd.f32 %v120, %v295
  %v297 = vpop.f32.mrf.mxu0
  %v298 = vpop.f32.mrf.mxu0
  %v299 = vadd.f32 %v120, %v298
  %v300 = vpop.f32.mrf.mxu0
  %301 = vmatprep.mubr.bf16.mxu0 0
  %302 = vmatmul.mubr.bf16.gmra.mxu0 %v147
  %v303 = vpop.f32.mrf.mxu0
  %v304 = vadd.f32 %v120, %v303
  %v305 = vpop.f32.mrf.mxu0
  %v306 = vpop.f32.mrf.mxu0
  %v307 = vadd.f32 %v120, %v306
  %v308 = vpop.f32.mrf.mxu0
  %309 = vmatprep.mubr.bf16.mxu0 0
  %310 = vmatmul.mubr.bf16.gmra.mxu0 %v150
  %v311 = vpop.f32.mrf.mxu0
  %v312 = vadd.f32 %v120, %v311
  %v313 = vpop.f32.mrf.mxu0
  %v314 = vpop.f32.mrf.mxu0
  %v315 = vadd.f32 %v120, %v314
  %v316 = vpop.f32.mrf.mxu0
  %317 = vmatprep.mubr.bf16.mxu0 0
  %318 = vmatmul.mubr.bf16.gmra.mxu0 %v153
  %v319 = vpop.f32.mrf.mxu0
  %v320 = vadd.f32 %v120, %v319
  %v321 = vpop.f32.mrf.mxu0
  %v322 = vpop.f32.mrf.mxu0
  %v323 = vadd.f32 %v120, %v322
  %v324 = vpop.f32.mrf.mxu0
  %325 = vmatprep.mubr.bf16.mxu0 0
  %326 = vmatmul.mubr.bf16.gmra.mxu0 %v156
  %v327 = vpop.f32.mrf.mxu0
  %v328 = vadd.f32 %v120, %v327
  %v329 = vpop.f32.mrf.mxu0
  %v330 = vpop.f32.mrf.mxu0
  %v331 = vadd.f32 %v120, %v330
  %v332 = vpop.f32.mrf.mxu0
  %333 = vmatprep.mubr.bf16.mxu0 0
  %334 = vmatmul.mubr.bf16.gmra.mxu0 %v159
  %v335 = vpop.f32.mrf.mxu0
  %v336 = vadd.f32 %v120, %v335
  %v337 = vpop.f32.mrf.mxu0
  %v338 = vpop.f32.mrf.mxu0
  %v339 = vadd.f32 %v120, %v338
  %v340 = vpop.f32.mrf.mxu0
  %341 = vmatprep.mubr.bf16.mxu0 0
  %342 = vmatmul.mubr.bf16.gmra.mxu0 %v162
  %v343 = vpop.f32.mrf.mxu0
  %v344 = vadd.f32 %v120, %v343
  %v345 = vpop.f32.mrf.mxu0
  %v346 = vpop.f32.mrf.mxu0
  %v347 = vadd.f32 %v120, %v346
  %v348 = vpop.f32.mrf.mxu0
  %349 = vmatprep.mubr.bf16.mxu0 0
  %350 = vmatmul.mubr.bf16.gmra.mxu0 %v165
  %v351 = vpop.f32.mrf.mxu0
  %v352 = vadd.f32 %v120, %v351
  %v353 = vpop.f32.mrf.mxu0
  %v354 = vpop.f32.mrf.mxu0
  %v355 = vadd.f32 %v120, %v354
  %v356 = vpop.f32.mrf.mxu0
  %357 = vmatprep.mubr.bf16.mxu0 0
  %358 = vmatmul.mubr.bf16.gmra.mxu0 %v168
  %v359 = vpop.f32.mrf.mxu0
  %v360 = vadd.f32 %v120, %v359
  %v361 = vpop.f32.mrf.mxu0
  %v362 = vpop.f32.mrf.mxu0
  %v363 = vadd.f32 %v120, %v362
  %v364 = vpop.f32.mrf.mxu0
  %365 = vmatprep.mubr.bf16.mxu0 0
  %366 = vmatmul.mubr.bf16.gmra.mxu0 %v171
  %v367 = vpop.f32.mrf.mxu0
  %v368 = vadd.f32 %v120, %v367
  %v369 = vpop.f32.mrf.mxu0
  %v370 = vpop.f32.mrf.mxu0
  %v371 = vadd.f32 %v120, %v370
  %v372 = vpop.f32.mrf.mxu0
  %373 = vmatprep.mubr.bf16.mxu0 0
  %374 = vmatmul.mubr.bf16.gmra.mxu0 %v174
  %v375 = vpop.f32.mrf.mxu0
  %v376 = vadd.f32 %v120, %v375
  %v377 = vpop.f32.mrf.mxu0
  %v378 = vpop.f32.mrf.mxu0
  %v379 = vadd.f32 %v120, %v378
  %v380 = vpop.f32.mrf.mxu0
  %381 = vmatprep.mubr.bf16.mxu0 0
  %382 = vmatmul.mubr.bf16.gmra.mxu0 %v177
  %v383 = vpop.f32.mrf.mxu0
  %v384 = vadd.f32 %v120, %v383
  %v385 = vpop.f32.mrf.mxu0
  %v386 = vpop.f32.mrf.mxu0
  %v387 = vadd.f32 %v120, %v386
  %v388 = vpop.f32.mrf.mxu0
  %389 = vmatprep.mubr.bf16.mxu0 0
  %390 = vmatmul.mubr.bf16.gmra.mxu0 %v180
  %v391 = vpop.f32.mrf.mxu0
  %v392 = vadd.f32 %v120, %v391
  %v393 = vpop.f32.mrf.mxu0
  %v394 = vpop.f32.mrf.mxu0
  %v395 = vadd.f32 %v120, %v394
  %v396 = vpop.f32.mrf.mxu0
  %397 = vmatprep.mubr.bf16.mxu0 0
  %398 = vmatmul.mubr.bf16.gmra.mxu0 %v183
  %v399 = vpop.f32.mrf.mxu0
  %v400 = vadd.f32 %v120, %v399
  %v401 = vpop.f32.mrf.mxu0
  %v402 = vpop.f32.mrf.mxu0
  %v403 = vadd.f32 %v120, %v402
  %v404 = vpop.f32.mrf.mxu0
  %405 = vmatprep.mubr.bf16.mxu0 0
  %406 = vmatmul.mubr.bf16.gmra.mxu0 %v186
  %v407 = vpop.f32.mrf.mxu0
  %v408 = vadd.f32 %v120, %v407
  %v409 = vpop.f32.mrf.mxu0
  %v410 = vpop.f32.mrf.mxu0
  %v411 = vadd.f32 %v120, %v410
  %v412 = vpop.f32.mrf.mxu0
  %413 = vmatprep.mubr.bf16.mxu0 0
  %414 = vmatmul.mubr.bf16.gmra.mxu0 %v189
  %v415 = vpop.f32.mrf.mxu0
  %v416 = vadd.f32 %v120, %v415
  %v417 = vpop.f32.mrf.mxu0
  %v418 = vpop.f32.mrf.mxu0
  %v419 = vadd.f32 %v120, %v418
  %v420 = vpop.f32.mrf.mxu0
  %421 = vmatprep.mubr.bf16.mxu0 0
  %422 = vmatmul.mubr.bf16.gmra.mxu0 %v192
  %v423 = vpop.f32.mrf.mxu0
  %v424 = vadd.f32 %v120, %v423
  %v425 = vpop.f32.mrf.mxu0
  %v426 = vpop.f32.mrf.mxu0
  %v427 = vadd.f32 %v120, %v426
  %v428 = vpop.f32.mrf.mxu0
  %429 = vmatprep.mubr.bf16.mxu0 0
  %430 = vmatmul.mubr.bf16.gmra.mxu0 %v195
  %v431 = vpop.f32.mrf.mxu0
  %v432 = vadd.f32 %v120, %v431
  %v433 = vpop.f32.mrf.mxu0
  %v434 = vpop.f32.mrf.mxu0
  %v435 = vadd.f32 %v120, %v434
  %v436 = vpop.f32.mrf.mxu0
  %437 = vmatprep.mubr.bf16.mxu0 0
  %438 = vmatmul.mubr.bf16.gmra.mxu0 %v198
  %v439 = vpop.f32.mrf.mxu0
  %v440 = vadd.f32 %v120, %v439
  %v441 = vpop.f32.mrf.mxu0
  %v442 = vpop.f32.mrf.mxu0
  %v443 = vadd.f32 %v120, %v442
  %v444 = vpop.f32.mrf.mxu0
  %445 = vmatprep.mubr.bf16.mxu0 0
  %446 = vmatmul.mubr.bf16.gmra.mxu0 %v201
  %v447 = vpop.f32.mrf.mxu0
  %v448 = vadd.f32 %v120, %v447
  %v449 = vpop.f32.mrf.mxu0
  %v450 = vpop.f32.mrf.mxu0
  %v451 = vadd.f32 %v120, %v450
  %v452 = vpop.f32.mrf.mxu0
  %453 = vmatprep.mubr.bf16.mxu0 0
  %454 = vmatmul.mubr.bf16.gmra.mxu0 %v204
  %v455 = vpop.f32.mrf.mxu0
  %v456 = vadd.f32 %v120, %v455
  %v457 = vpop.f32.mrf.mxu0
  %v458 = vpop.f32.mrf.mxu0
  %v459 = vadd.f32 %v120, %v458
  %v460 = vpop.f32.mrf.mxu0
  %461 = vmatprep.mubr.bf16.mxu0 0
  %462 = vmatmul.mubr.bf16.gmra.mxu0 %v207
  %v463 = vpop.f32.mrf.mxu0
  %v464 = vadd.f32 %v120, %v463
  %v465 = vpop.f32.mrf.mxu0
  %v466 = vpop.f32.mrf.mxu0
  %v467 = vadd.f32 %v120, %v466
  %v468 = vpop.f32.mrf.mxu0
  %469 = vmatprep.mubr.bf16.mxu0 0
  %470 = vmatmul.mubr.bf16.gmra.mxu0 %v210
  %v471 = vpop.f32.mrf.mxu0
  %v472 = vadd.f32 %v120, %v471
  %v473 = vpop.f32.mrf.mxu0
  %v474 = vpop.f32.mrf.mxu0
  %v475 = vadd.f32 %v120, %v474
  %v476 = vpop.f32.mrf.mxu0
  %477 = vmatprep.mubr.bf16.mxu0 0
  %478 = vmatmul.mubr.bf16.gmra.mxu0 %v213
  %v479 = vpop.f32.mrf.mxu0
  %v480 = vadd.f32 %v120, %v479
  %v481 = vpop.f32.mrf.mxu0
  %v482 = vpop.f32.mrf.mxu0
  %v483 = vadd.f32 %v120, %v482
  %v484 = vpop.f32.mrf.mxu0
  %485 = vmatprep.mubr.bf16.mxu0 0
  %486 = vmatmul.mubr.bf16.gmra.mxu0 %v216
  %v487 = vpop.f32.mrf.mxu0
  %v488 = vadd.f32 %v120, %v487
  %v489 = vpop.f32.mrf.mxu0
  %v490 = vpop.f32.mrf.mxu0
  %v491 = vadd.f32 %v120, %v490
  %v492 = vpop.f32.mrf.mxu0
  %493 = vmatprep.mubr.bf16.mxu0 0
  %494 = vmatmul.mubr.bf16.gmra.mxu0 %v219
  %v495 = vpop.f32.mrf.mxu0
  %v496 = vadd.f32 %v120, %v495
  %v497 = vpop.f32.mrf.mxu0
  %v498 = vpop.f32.mrf.mxu0
  %v499 = vadd.f32 %v120, %v498
  %v500 = vpop.f32.mrf.mxu0
  %501 = vmatprep.mubr.bf16.mxu0 0
  %502 = vmatmul.mubr.bf16.gmra.mxu0 %v222
  %v503 = vpop.f32.mrf.mxu0
  %v504 = vadd.f32 %v120, %v503
  %v505 = vpop.f32.mrf.mxu0
  %v506 = vpop.f32.mrf.mxu0
  %v507 = vadd.f32 %v120, %v506
  %v508 = vpop.f32.mrf.mxu0
  %509 = vmatprep.mubr.bf16.mxu0 0
  %510 = vmatmul.mubr.bf16.gmra.mxu0 %v225
  %v511 = vpop.f32.mrf.mxu0
  %v512 = vadd.f32 %v120, %v511
  %v513 = vpop.f32.mrf.mxu0
  %v514 = vpop.f32.mrf.mxu0
  %v515 = vadd.f32 %v120, %v514
  %v516 = vpop.f32.mrf.mxu0
  %517 = vmatprep.mubr.bf16.mxu0 0
  %518 = vmatmul.mubr.bf16.gmra.mxu0 %v228
  %v519 = vpop.f32.mrf.mxu0
  %v520 = vadd.f32 %v120, %v519
  %v521 = vpop.f32.mrf.mxu0
  %v522 = vpop.f32.mrf.mxu0
  %v523 = vadd.f32 %v120, %v522
  %v524 = vpop.f32.mrf.mxu0
  %525 = vdwg.mxu0
  %v526 = vmax.f32 %v272, 0.0
  %v527 = vmax.f32 %v275, 0.0
  %v528 = vmax.f32 %v280, 0.0
  %v529 = vmax.f32 %v283, 0.0
  %v530 = vmax.f32 %v288, 0.0
  %v531 = vmax.f32 %v291, 0.0
  %v532 = vmax.f32 %v296, 0.0
  %v533 = vmax.f32 %v299, 0.0
  %v534 = vmax.f32 %v304, 0.0
  %v535 = vmax.f32 %v307, 0.0
  %v536 = vmax.f32 %v312, 0.0
  %v537 = vmax.f32 %v315, 0.0
  %v538 = vmax.f32 %v320, 0.0
  %v539 = vmax.f32 %v323, 0.0
  %v540 = vmax.f32 %v328, 0.0
  %v541 = vmax.f32 %v331, 0.0
  %v542 = vmax.f32 %v336, 0.0
  %v543 = vmax.f32 %v339, 0.0
  %v544 = vmax.f32 %v344, 0.0
  %v545 = vmax.f32 %v347, 0.0
  %v546 = vmax.f32 %v352, 0.0
  %v547 = vmax.f32 %v355, 0.0
  %v548 = vmax.f32 %v360, 0.0
  %v549 = vmax.f32 %v363, 0.0
  %v550 = vmax.f32 %v368, 0.0
  %v551 = vmax.f32 %v371, 0.0
  %v552 = vmax.f32 %v376, 0.0
  %v553 = vmax.f32 %v379, 0.0
  %v554 = vmax.f32 %v384, 0.0
  %v555 = vmax.f32 %v387, 0.0
  %v556 = vmax.f32 %v392, 0.0
  %v557 = vmax.f32 %v395, 0.0
  %v558 = vmax.f32 %v400, 0.0
  %v559 = vmax.f32 %v403, 0.0
  %v560 = vmax.f32 %v408, 0.0
  %v561 = vmax.f32 %v411, 0.0
  %v562 = vmax.f32 %v416, 0.0
  %v563 = vmax.f32 %v419, 0.0
  %v564 = vmax.f32 %v424, 0.0
  %v565 = vmax.f32 %v427, 0.0
  %v566 = vmax.f32 %v432, 0.0
  %v567 = vmax.f32 %v435, 0.0
  %v568 = vmax.f32 %v440, 0.0
  %v569 = vmax.f32 %v443, 0.0
  %v570 = vmax.f32 %v448, 0.0
  %v571 = vmax.f32 %v451, 0.0
  %v572 = vmax.f32 %v456, 0.0
  %v573 = vmax.f32 %v459, 0.0
  %v574 = vmax.f32 %v464, 0.0
  %v575 = vmax.f32 %v467, 0.0
  %v576 = vmax.f32 %v472, 0.0
  %v577 = vmax.f32 %v475, 0.0
  %v578 = vmax.f32 %v480, 0.0
  %v579 = vmax.f32 %v483, 0.0
  %v580 = vmax.f32 %v488, 0.0
  %v581 = vmax.f32 %v491, 0.0
  %v582 = vmax.f32 %v496, 0.0
  %v583 = vmax.f32 %v499, 0.0
  %v584 = vmax.f32 %v504, 0.0
  %v585 = vmax.f32 %v507, 0.0
  %v586 = vmax.f32 %v512, 0.0
  %v587 = vmax.f32 %v515, 0.0
  %v588 = vmax.f32 %v520, 0.0
  %v589 = vmax.f32 %v523, 0.0
  %vm590 = vcmask 195584
  %591 = vst.msk [vmem:[%s3] sm:$0xff] %vm590, %v526
  %592 = vst.msk [vmem:[%s3 + $0x8] sm:$0xff] %vm590, %v527
  %593 = vst.msk [vmem:[%s3 + $0x10] sm:$0xff] %vm590, %v528
  %594 = vst.msk [vmem:[%s3 + $0x18] sm:$0xff] %vm590, %v529
  %595 = vst.msk [vmem:[%s3 + $0x20] sm:$0xff] %vm590, %v530
  %596 = vst.msk [vmem:[%s3 + $0x28] sm:$0xff] %vm590, %v531
  %597 = vst.msk [vmem:[%s3 + $0x30] sm:$0xff] %vm590, %v532
  %598 = vst.msk [vmem:[%s3 + $0x38] sm:$0xff] %vm590, %v533
  %599 = vst.msk [vmem:[%s3 + $0x40] sm:$0xff] %vm590, %v534
  %600 = vst.msk [vmem:[%s3 + $0x48] sm:$0xff] %vm590, %v535
  %601 = vst.msk [vmem:[%s3 + $0x50] sm:$0xff] %vm590, %v536
  %602 = vst.msk [vmem:[%s3 + $0x58] sm:$0xff] %vm590, %v537
  %603 = vst.msk [vmem:[%s3 + $0x60] sm:$0xff] %vm590, %v538
  %604 = vst.msk [vmem:[%s3 + $0x68] sm:$0xff] %vm590, %v539
  %605 = vst.msk [vmem:[%s3 + $0x70] sm:$0xff] %vm590, %v540
  %606 = vst.msk [vmem:[%s3 + $0x78] sm:$0xff] %vm590, %v541
  %607 = vst.msk [vmem:[%s3 + $0x80] sm:$0xff] %vm590, %v542
  %608 = vst.msk [vmem:[%s3 + $0x88] sm:$0xff] %vm590, %v543
  %609 = vst.msk [vmem:[%s3 + $0x90] sm:$0xff] %vm590, %v544
  %610 = vst.msk [vmem:[%s3 + $0x98] sm:$0xff] %vm590, %v545
  %611 = vst.msk [vmem:[%s3 + $0xa0] sm:$0xff] %vm590, %v546
  %612 = vst.msk [vmem:[%s3 + $0xa8] sm:$0xff] %vm590, %v547
  %613 = vst.msk [vmem:[%s3 + $0xb0] sm:$0xff] %vm590, %v548
  %614 = vst.msk [vmem:[%s3 + $0xb8] sm:$0xff] %vm590, %v549
  %615 = vst.msk [vmem:[%s3 + $0xc0] sm:$0xff] %vm590, %v550
  %616 = vst.msk [vmem:[%s3 + $0xc8] sm:$0xff] %vm590, %v551
  %617 = vst.msk [vmem:[%s3 + $0xd0] sm:$0xff] %vm590, %v552
  %618 = vst.msk [vmem:[%s3 + $0xd8] sm:$0xff] %vm590, %v553
  %619 = vst.msk [vmem:[%s3 + $0xe0] sm:$0xff] %vm590, %v554
  %620 = vst.msk [vmem:[%s3 + $0xe8] sm:$0xff] %vm590, %v555
  %621 = vst.msk [vmem:[%s3 + $0xf0] sm:$0xff] %vm590, %v556
  %622 = vst.msk [vmem:[%s3 + $0xf8] sm:$0xff] %vm590, %v557
  %623 = vst.msk [vmem:[%s3 + $0x100] sm:$0xff] %vm590, %v558
  %624 = vst.msk [vmem:[%s3 + $0x108] sm:$0xff] %vm590, %v559
  %625 = vst.msk [vmem:[%s3 + $0x110] sm:$0xff] %vm590, %v560
  %626 = vst.msk [vmem:[%s3 + $0x118] sm:$0xff] %vm590, %v561
  %627 = vst.msk [vmem:[%s3 + $0x120] sm:$0xff] %vm590, %v562
  %628 = vst.msk [vmem:[%s3 + $0x128] sm:$0xff] %vm590, %v563
  %629 = vst.msk [vmem:[%s3 + $0x130] sm:$0xff] %vm590, %v564
  %630 = vst.msk [vmem:[%s3 + $0x138] sm:$0xff] %vm590, %v565
  %631 = vst.msk [vmem:[%s3 + $0x140] sm:$0xff] %vm590, %v566
  %632 = vst.msk [vmem:[%s3 + $0x148] sm:$0xff] %vm590, %v567
  %633 = vst.msk [vmem:[%s3 + $0x150] sm:$0xff] %vm590, %v568
  %634 = vst.msk [vmem:[%s3 + $0x158] sm:$0xff] %vm590, %v569
  %635 = vst.msk [vmem:[%s3 + $0x160] sm:$0xff] %vm590, %v570
  %636 = vst.msk [vmem:[%s3 + $0x168] sm:$0xff] %vm590, %v571
  %637 = vst.msk [vmem:[%s3 + $0x170] sm:$0xff] %vm590, %v572
  %638 = vst.msk [vmem:[%s3 + $0x178] sm:$0xff] %vm590, %v573
  %639 = vst.msk [vmem:[%s3 + $0x180] sm:$0xff] %vm590, %v574
  %640 = vst.msk [vmem:[%s3 + $0x188] sm:$0xff] %vm590, %v575
  %641 = vst.msk [vmem:[%s3 + $0x190] sm:$0xff] %vm590, %v576
  %642 = vst.msk [vmem:[%s3 + $0x198] sm:$0xff] %vm590, %v577
  %643 = vst.msk [vmem:[%s3 + $0x1a0] sm:$0xff] %vm590, %v578
  %644 = vst.msk [vmem:[%s3 + $0x1a8] sm:$0xff] %vm590, %v579
  %645 = vst.msk [vmem:[%s3 + $0x1b0] sm:$0xff] %vm590, %v580
  %646 = vst.msk [vmem:[%s3 + $0x1b8] sm:$0xff] %vm590, %v581
  %647 = vst.msk [vmem:[%s3 + $0x1c0] sm:$0xff] %vm590, %v582
  %648 = vst.msk [vmem:[%s3 + $0x1c8] sm:$0xff] %vm590, %v583
  %649 = vst.msk [vmem:[%s3 + $0x1d0] sm:$0xff] %vm590, %v584
  %650 = vst.msk [vmem:[%s3 + $0x1d8] sm:$0xff] %vm590, %v585
  %651 = vst.msk [vmem:[%s3 + $0x1e0] sm:$0xff] %vm590, %v586
  %652 = vst.msk [vmem:[%s3 + $0x1e8] sm:$0xff] %vm590, %v587
  %653 = vst.msk [vmem:[%s3 + $0x1f0] sm:$0xff] %vm590, %v588
  %654 = vst.msk [vmem:[%s3 + $0x1f8] sm:$0xff] %vm590, %v589
  // Predicated region
  $region14: #{_lambda_.58} parent=0 // pred_check
    _
  $region15: #{_lambda_.58} parent=0 // pred_check_branch
    %656 = sbr.rel (0) target = $region17
  $region16: #{_lambda_.58} parent=0 // pred_region
    _
  $region17: #{_lambda_.58} parent=0 // pred_fallthru
    _
  // Predicated region
  $region18: #{_lambda_.58} parent=0 // pred_check
    _
  $region19: #{_lambda_.58} parent=0 // pred_check_branch
    %658 = sbr.rel (0) target = $region21
  $region20: #{_lambda_.58} parent=0 // pred_region
    _
  $region21: #{_lambda_.58} parent=0 // pred_fallthru
    _

// kernel: _lambda_.62
$region0: #{_lambda_.62}
  #allocation0 [shape = 'u32[]', space=smem, size = 0x4, offset = 0x4, fixed_abs, tag = 'smem constant byte address 0x4 - core index']
  #allocation1 [shape = 'u32[144,128]{1,0:T(1,128)}', space=vmem, size = 0x12000, scoped, tag = 'internal scratch']
  %s0 = inlined_call_operand.vmem [shape: f32[128,24], index: 0, kind: input, shape index: {}]
  %s1 = inlined_call_operand.vmem [shape: bf16[24,58], index: 1, kind: input, shape index: {}]
  %s2 = inlined_call_operand.vmem [shape: f32[1,58], index: 2, kind: input, shape index: {}]
  %s3 = inlined_call_operand.vmem [shape: f32[128,58], index: 3, kind: output, shape index: {}]
  %s4 = sld [smem:[#allocation0]]
  $region22: #{_lambda_.62} parent=0
    _
  %s6 = ssub.s32 1, %s4
  %s7 = scalar_select 0, %s6, %s4
  // Predicated region
  $region2: #{_lambda_.62} parent=0 // pred_check
    _
  $region3: #{_lambda_.62} parent=0 // pred_check_branch
    %9 = sbr.rel (0) target = $region5
  $region4: #{_lambda_.62} parent=0 // pred_region
    _
  $region5: #{_lambda_.62} parent=0 // pred_fallthru
    _
  // Predicated region
  $region6: #{_lambda_.62} parent=0 // pred_check
    _
  $region7: #{_lambda_.62} parent=0 // pred_check_branch
    %11 = sbr.rel (0) target = $region9
  $region8: #{_lambda_.62} parent=0 // pred_region
    _
  $region9: #{_lambda_.62} parent=0 // pred_fallthru
    _
  // Predicated region
  $region10: #{_lambda_.62} parent=0 // pred_check
    _
  $region11: #{_lambda_.62} parent=0 // pred_check_branch
    %13 = sbr.rel (0) target = $region13
  $region12: #{_lambda_.62} parent=0 // pred_region
    _
  $region13: #{_lambda_.62} parent=0 // pred_fallthru
    _
  %v15 = vld [vmem:[%s0] sm:$0xff]
  %v16 = vld [vmem:[%s0 + $0x8] sm:$0xff]
  %v17 = vld [vmem:[%s0 + $0x10] sm:$0xff]
  %v18 = vld [vmem:[%s0 + $0x18] sm:$0xff]
  %v19 = vld [vmem:[%s0 + $0x20] sm:$0xff]
  %v20 = vld [vmem:[%s0 + $0x28] sm:$0xff]
  %v21 = vld [vmem:[%s0 + $0x30] sm:$0xff]
  %v22 = vld [vmem:[%s0 + $0x38] sm:$0xff]
  %v23 = vld [vmem:[%s0 + $0x40] sm:$0xff]
  %v24 = vld [vmem:[%s0 + $0x48] sm:$0xff]
  %v25 = vld [vmem:[%s0 + $0x50] sm:$0xff]
  %v26 = vld [vmem:[%s0 + $0x58] sm:$0xff]
  %v27 = vld [vmem:[%s0 + $0x60] sm:$0xff]
  %v28 = vld [vmem:[%s0 + $0x68] sm:$0xff]
  %v29 = vld [vmem:[%s0 + $0x70] sm:$0xff]
  %v30 = vld [vmem:[%s0 + $0x78] sm:$0xff]
  %v31 = vpack.c.bf16 %v16, %v15
  %v32 = vpack.c.bf16 %v18, %v17
  %v33 = vpack.c.bf16 %v20, %v19
  %v34 = vpack.c.bf16 %v22, %v21
  %v35 = vpack.c.bf16 %v24, %v23
  %v36 = vpack.c.bf16 %v26, %v25
  %v37 = vpack.c.bf16 %v28, %v27
  %v38 = vpack.c.bf16 %v30, %v29
  %v39 = vld [vmem:[%s1] sm:$0xf]
  %v40 = vld [vmem:[%s1 + $0x4] sm:$0xf]
  %v41 = vld [vmem:[%s1 + $0x8] sm:$0xf]
  %v42 = vld [vmem:[%s2] sm:$0x1]
  %v44 = vlaneseq
  %v45 = vshrl.u32 %v44, 7
  %v46 = vsub.s32 0, %v45
  %v47 = vrot.slane %v42, %v46
  %v52 = vunpack.c.l.b16 %v39
  %v53 = vunpack.c.l.b16 %v40
  %v54 = vunpack.c.l.b16 %v41
  %v55 = vpack.c.b16 %v53, %v52
  %v56 = vpack.c.b16 %v54, %v54
  %vm58 = vcmask 195584
  %v60 = vsel %vm58, %v31, 0
  %v63 = vsel %vm58, %v32, 0
  %v66 = vsel %vm58, %v33, 0
  %v69 = vsel %vm58, %v34, 0
  %v72 = vsel %vm58, %v35, 0
  %v75 = vsel %vm58, %v36, 0
  %v78 = vsel %vm58, %v37, 0
  %v81 = vsel %vm58, %v38, 0
  %vm83 = vcmask 1043456
  %v85 = vsel %vm83, %v56, 0
  %87 = vmatprep.subr.bf16.mxu0 0
  %88 = vmatpush1.bf16.msra.mxu0 0
  %89 = vmatprep.subr.bf16.mxu0 0
  %90 = vmatpush1.bf16.msra.mxu0 0
  %91 = vmatprep.subr.bf16.mxu0 0
  %92 = vmatpush1.bf16.msra.mxu0 0
  %93 = vmatprep.subr.bf16.mxu0 0
  %94 = vmatpush1.bf16.msra.mxu0 0
  %95 = vmatprep.subr.bf16.mxu0 0
  %96 = vmatpush1.bf16.msra.mxu0 0
  %97 = vmatprep.subr.bf16.mxu0 0
  %98 = vmatpush1.bf16.msra.mxu0 0
  %99 = vmatprep.subr.bf16.mxu0 0
  %100 = vmatpush1.bf16.msra.mxu0 %v85
  %101 = vmatprep.subr.bf16.mxu0 0
  %102 = vmatpush1.bf16.msra.mxu0 %v55
  %103 = vmatprep.subr.bf16.mxu0 0
  %104 = vmatpush2.bf16.msra.mxu0 0
  %105 = vmatprep.subr.bf16.mxu0 0
  %106 = vmatpush2.bf16.msra.mxu0 0
  %107 = vmatprep.subr.bf16.mxu0 0
  %108 = vmatpush2.bf16.msra.mxu0 0
  %109 = vmatprep.subr.bf16.mxu0 0
  %110 = vmatpush2.bf16.msra.mxu0 0
  %111 = vmatprep.subr.bf16.mxu0 0
  %112 = vmatpush2.bf16.msra.mxu0 0
  %113 = vmatprep.subr.bf16.mxu0 0
  %114 = vmatpush2.bf16.msra.mxu0 0
  %115 = vmatprep.subr.bf16.mxu0 0
  %116 = vmatpush2.bf16.msra.mxu0 0
  %117 = vmatprep.subr.bf16.mxu0 0
  %118 = vmatpush2.bf16.msra.mxu0 0
  %119 = vmatprep.mubr.bf16.mxu0 0
  %120 = vmatmul.mubr.bf16.gmra.mxu0 %v60
  %v121 = vpop.f32.mrf.mxu0
  %v122 = vadd.f32 %v47, %v121
  %v123 = vpop.f32.mrf.mxu0
  %v124 = vpop.f32.mrf.mxu0
  %v125 = vadd.f32 %v47, %v124
  %v126 = vpop.f32.mrf.mxu0
  %127 = vmatprep.mubr.bf16.mxu0 0
  %128 = vmatmul.mubr.bf16.gmra.mxu0 %v63
  %v129 = vpop.f32.mrf.mxu0
  %v130 = vadd.f32 %v47, %v129
  %v131 = vpop.f32.mrf.mxu0
  %v132 = vpop.f32.mrf.mxu0
  %v133 = vadd.f32 %v47, %v132
  %v134 = vpop.f32.mrf.mxu0
  %135 = vmatprep.mubr.bf16.mxu0 0
  %136 = vmatmul.mubr.bf16.gmra.mxu0 %v66
  %v137 = vpop.f32.mrf.mxu0
  %v138 = vadd.f32 %v47, %v137
  %v139 = vpop.f32.mrf.mxu0
  %v140 = vpop.f32.mrf.mxu0
  %v141 = vadd.f32 %v47, %v140
  %v142 = vpop.f32.mrf.mxu0
  %143 = vmatprep.mubr.bf16.mxu0 0
  %144 = vmatmul.mubr.bf16.gmra.mxu0 %v69
  %v145 = vpop.f32.mrf.mxu0
  %v146 = vadd.f32 %v47, %v145
  %v147 = vpop.f32.mrf.mxu0
  %v148 = vpop.f32.mrf.mxu0
  %v149 = vadd.f32 %v47, %v148
  %v150 = vpop.f32.mrf.mxu0
  %151 = vmatprep.mubr.bf16.mxu0 0
  %152 = vmatmul.mubr.bf16.gmra.mxu0 %v72
  %v153 = vpop.f32.mrf.mxu0
  %v154 = vadd.f32 %v47, %v153
  %v155 = vpop.f32.mrf.mxu0
  %v156 = vpop.f32.mrf.mxu0
  %v157 = vadd.f32 %v47, %v156
  %v158 = vpop.f32.mrf.mxu0
  %159 = vmatprep.mubr.bf16.mxu0 0
  %160 = vmatmul.mubr.bf16.gmra.mxu0 %v75
  %v161 = vpop.f32.mrf.mxu0
  %v162 = vadd.f32 %v47, %v161
  %v163 = vpop.f32.mrf.mxu0
  %v164 = vpop.f32.mrf.mxu0
  %v165 = vadd.f32 %v47, %v164
  %v166 = vpop.f32.mrf.mxu0
  %167 = vmatprep.mubr.bf16.mxu0 0
  %168 = vmatmul.mubr.bf16.gmra.mxu0 %v78
  %v169 = vpop.f32.mrf.mxu0
  %v170 = vadd.f32 %v47, %v169
  %v171 = vpop.f32.mrf.mxu0
  %v172 = vpop.f32.mrf.mxu0
  %v173 = vadd.f32 %v47, %v172
  %v174 = vpop.f32.mrf.mxu0
  %175 = vmatprep.mubr.bf16.mxu0 0
  %176 = vmatmul.mubr.bf16.gmra.mxu0 %v81
  %v177 = vpop.f32.mrf.mxu0
  %v178 = vadd.f32 %v47, %v177
  %v179 = vpop.f32.mrf.mxu0
  %v180 = vpop.f32.mrf.mxu0
  %v181 = vadd.f32 %v47, %v180
  %v182 = vpop.f32.mrf.mxu0
  %183 = vdwg.mxu0
  %v184 = vmax.f32 %v122, 0.0
  %v185 = vmax.f32 %v125, 0.0
  %v186 = vmax.f32 %v130, 0.0
  %v187 = vmax.f32 %v133, 0.0
  %v188 = vmax.f32 %v138, 0.0
  %v189 = vmax.f32 %v141, 0.0
  %v190 = vmax.f32 %v146, 0.0
  %v191 = vmax.f32 %v149, 0.0
  %v192 = vmax.f32 %v154, 0.0
  %v193 = vmax.f32 %v157, 0.0
  %v194 = vmax.f32 %v162, 0.0
  %v195 = vmax.f32 %v165, 0.0
  %v196 = vmax.f32 %v170, 0.0
  %v197 = vmax.f32 %v173, 0.0
  %v198 = vmax.f32 %v178, 0.0
  %v199 = vmax.f32 %v181, 0.0
  %vm200 = vcmask 474112
  %201 = vst.msk [vmem:[%s3] sm:$0xff] %vm200, %v184
  %202 = vst.msk [vmem:[%s3 + $0x8] sm:$0xff] %vm200, %v185
  %203 = vst.msk [vmem:[%s3 + $0x10] sm:$0xff] %vm200, %v186
  %204 = vst.msk [vmem:[%s3 + $0x18] sm:$0xff] %vm200, %v187
  %205 = vst.msk [vmem:[%s3 + $0x20] sm:$0xff] %vm200, %v188
  %206 = vst.msk [vmem:[%s3 + $0x28] sm:$0xff] %vm200, %v189
  %207 = vst.msk [vmem:[%s3 + $0x30] sm:$0xff] %vm200, %v190
  %208 = vst.msk [vmem:[%s3 + $0x38] sm:$0xff] %vm200, %v191
  %209 = vst.msk [vmem:[%s3 + $0x40] sm:$0xff] %vm200, %v192
  %210 = vst.msk [vmem:[%s3 + $0x48] sm:$0xff] %vm200, %v193
  %211 = vst.msk [vmem:[%s3 + $0x50] sm:$0xff] %vm200, %v194
  %212 = vst.msk [vmem:[%s3 + $0x58] sm:$0xff] %vm200, %v195
  %213 = vst.msk [vmem:[%s3 + $0x60] sm:$0xff] %vm200, %v196
  %214 = vst.msk [vmem:[%s3 + $0x68] sm:$0xff] %vm200, %v197
  %215 = vst.msk [vmem:[%s3 + $0x70] sm:$0xff] %vm200, %v198
  %216 = vst.msk [vmem:[%s3 + $0x78] sm:$0xff] %vm200, %v199
  // Predicated region
  $region14: #{_lambda_.62} parent=0 // pred_check
    _
  $region15: #{_lambda_.62} parent=0 // pred_check_branch
    %218 = sbr.rel (0) target = $region17
  $region16: #{_lambda_.62} parent=0 // pred_region
    _
  $region17: #{_lambda_.62} parent=0 // pred_fallthru
    _
  // Predicated region
  $region18: #{_lambda_.62} parent=0 // pred_check
    _
  $region19: #{_lambda_.62} parent=0 // pred_check_branch
    %220 = sbr.rel (0) target = $region21
  $region20: #{_lambda_.62} parent=0 // pred_region
    _
  $region21: #{_lambda_.62} parent=0 // pred_fallthru
    _

// kernel: _lambda_.59
$region0: #{_lambda_.59}
  #allocation0 [shape = 'u32[]', space=smem, size = 0x4, offset = 0x4, fixed_abs, tag = 'smem constant byte address 0x4 - core index']
  #allocation1 [shape = 'u32[144,128]{1,0:T(1,128)}', space=vmem, size = 0x12000, scoped, tag = 'internal scratch']
  %s0 = inlined_call_operand.vmem [shape: f32[2,36,9,24], index: 0, kind: input, shape index: {}]
  %s1 = inlined_call_operand.vmem [shape: f32[2,8,8,24], index: 1, kind: output, shape index: {}]
  %s2 = sld [smem:[#allocation0]]
  $region37: #{_lambda_.59} parent=0
    _
  %s4 = ssub.s32 1, %s2
  %s5 = scalar_select 0, %s4, %s2
  loop: start=0, step=1, limit=4
  $region2: #{_lambda_.59} parent=0 // loop_pre_header
    _
  $region3: #{_lambda_.59} parent=0 // loop_header
    %s7 = sphi 0, %s11
    %p8 = scmp.ge.s32.totalorder %s7, 4
    %s17 = sphi 0, %s19
    %s20 = sphi 0, %s17
    %s21 = sphi 0, %s20
    %s37 = sphi 0, %s21
    %s43 = sphi 0, %s45
    %s46 = sphi 0, %s43
    %s47 = sphi 0, %s46
    %s63 = sphi 0, %s47
  $region4: #{_lambda_.59} parent=0 // loop_header_branch
    %10 = sbr.rel (%p8) target = $region8
  $region5: #{_lambda_.59} parent=0 // loop_body
    %s12 = ssub.s32 %s7, 1
    %s13 = ssub.s32 %s7, 2
    %s14 = sadd.s32 %s7, 1
    %s15 = ssub.s32 %s7, %s14
    %p16 = scmp.eq.s32.totalorder %s15, 0
    %s18 = sadd.s32 %s17, 1
    %s19 = scalar_select %p16, %s17, %s18
    %p22 = pneg %p16
    %p23 = scmp.eq.s32.totalorder %s7, 1
    %p24 = por %p22, %p23
    %p25 = scmp.ne.s32.totalorder %s17, %s20
    %p26 = scmp.eq.s32.totalorder %s7, 0
    %p27 = por %p25, %p26
    %p28 = scmp.ne.s32.totalorder %s17, %s20
    %p29 = scmp.eq.s32.totalorder %s12, 1
    %p30 = por %p28, %p29
    %p31 = scmp.ne.s32.totalorder %s20, %s21
    %p32 = scmp.eq.s32.totalorder %s12, 0
    %p33 = por %p31, %p32
    %p34 = scmp.ne.s32.totalorder %s20, %s21
    %p35 = scmp.eq.s32.totalorder %s13, 1
    %p36 = por %p34, %p35
    %p38 = scmp.ne.s32.totalorder %s21, %s37
    %p39 = scmp.eq.s32.totalorder %s13, 0
    %p40 = por %p38, %p39
    %s41 = ssub.s32 %s7, %s14
    %p42 = scmp.eq.s32.totalorder %s41, 0
    %s44 = sadd.s32 %s43, 1
    %s45 = scalar_select %p42, %s43, %s44
    %p48 = pneg %p42
    %p49 = scmp.eq.s32.totalorder %s7, 1
    %p50 = por %p48, %p49
    %p51 = scmp.ne.s32.totalorder %s43, %s46
    %p52 = scmp.eq.s32.totalorder %s7, 0
    %p53 = por %p51, %p52
    %p54 = scmp.ne.s32.totalorder %s43, %s46
    %p55 = scmp.eq.s32.totalorder %s12, 1
    %p56 = por %p54, %p55
    %p57 = scmp.ne.s32.totalorder %s46, %s47
    %p58 = scmp.eq.s32.totalorder %s12, 0
    %p59 = por %p57, %p58
    %p60 = scmp.ne.s32.totalorder %s46, %s47
    %p61 = scmp.eq.s32.totalorder %s13, 1
    %p62 = por %p60, %p61
    %p64 = scmp.ne.s32.totalorder %s47, %s63
    %p65 = scmp.eq.s32.totalorder %s13, 0
    %p66 = por %p64, %p65
    %p67 = scmp.le.s32.totalorder 1, %s7
    %p68 = scmp.lt.s32.totalorder %s7, 3
    %p69 = pnand %p67, %p68
    %p70 = pneg %p69
    // Predicated region
    $region9: #{_lambda_.59} parent=5 // pred_check
      _
    $region10: #{_lambda_.59} parent=5 // pred_check_branch
      %72 = sbr.rel (%p69) target = $region12
    $region11: #{_lambda_.59} parent=5 // pred_region
      %s73 = ssub.s32 %s7, 1
    $region12: #{_lambda_.59} parent=5 // pred_fallthru
      _
    %p74 = scmp.lt.s32.totalorder %s7, 2
    // Predicated region
    $region13: #{_lambda_.59} parent=5 // pred_check
      %p75 = pneg %p74
    $region14: #{_lambda_.59} parent=5 // pred_check_branch
      %77 = sbr.rel (%p75) target = $region16
    $region15: #{_lambda_.59} parent=5 // pred_region
      // Predicated region
      $region17: #{_lambda_.59} parent=15 // pred_check
        %p78 = pneg %p27
      $region18: #{_lambda_.59} parent=15 // pred_check_branch
        %80 = sbr.rel (%p78) target = $region20
      $region19: #{_lambda_.59} parent=15 // pred_region
        %p81 = scmp.lt.s32.totalorder %s7, 1
        %s82 = scalar_select %p81, %s7, 1
        %s83 = smul.addr %s82, 72
        %s84 = smul.addr %s83, 8
        %s85 = scalar_lea.vmem %s0, %s84
      $region20: #{_lambda_.59} parent=15 // pred_fallthru
        _
    $region16: #{_lambda_.59} parent=5 // pred_fallthru
      _
    %p86 = scmp.le.s32.totalorder 1, %s7
    %p87 = scmp.lt.s32.totalorder %s7, 3
    %p88 = pnand %p86, %p87
    %p89 = pneg %p88
    // Predicated region
    $region21: #{_lambda_.59} parent=5 // pred_check
      _
    $region22: #{_lambda_.59} parent=5 // pred_check_branch
      %91 = sbr.rel (%p88) target = $region24
    $region23: #{_lambda_.59} parent=5 // pred_region
      %s92 = ssub.s32 %s7, 1
      %p93 = scmp.lt.s32.totalorder %s12, 1
      %s94 = scalar_select %p93, %s12, 1
      %s95 = smul.addr %s94, 72
      %s96 = smul.addr %s95, 8
      %s97 = scalar_lea.vmem %s0, %s96
      %p98 = pneg %p33
      %p99 = pneg %p30
      %p100 = pneg %p59
      %p101 = pneg %p56
      %p102 = scmp.lt.s32.totalorder %s12, 1
      %s103 = scalar_select %p102, %s12, 1
      %s104 = smul.addr %s103, 8
      %s105 = smul.addr %s104, 8
      %s106 = scalar_lea.vmem %s1, %s105
      %p107 = scmp.lt.s32.totalorder %s12, 1
      %s108 = scalar_select %p107, %s12, 1
      %s109 = smul.addr %s108, 72
      %s110 = smul.addr %s109, 8
      %s111 = scalar_lea.vmem %s0, %s110
      %p112 = scmp.lt.s32.totalorder %s12, 1
      %s113 = scalar_select %p112, %s12, 1
      %s114 = smul.addr %s113, 8
      %s115 = smul.addr %s114, 8
      %s116 = scalar_lea.vmem %s1, %s115
      %v117 = vld [vmem:[%s111] sm:$0xff]
      %v118 = vld [vmem:[%s111 + $0x8] sm:$0x1]
      %v119 = vld [vmem:[%s111 + $0x10] sm:$0xff]
      %v120 = vld [vmem:[%s111 + $0x18] sm:$0x1]
      %v121 = vld [vmem:[%s111 + $0x20] sm:$0xff]
      %v122 = vld [vmem:[%s111 + $0x28] sm:$0x1]
      %v123 = vld [vmem:[%s111 + $0x30] sm:$0xff]
      %v124 = vld [vmem:[%s111 + $0x38] sm:$0x1]
      %v125 = vld [vmem:[%s111 + $0x40] sm:$0xff]
      %v126 = vld [vmem:[%s111 + $0x48] sm:$0x1]
      %v127 = vld [vmem:[%s111 + $0x50] sm:$0xff]
      %v128 = vld [vmem:[%s111 + $0x58] sm:$0x1]
      %v129 = vld [vmem:[%s111 + $0x60] sm:$0xff]
      %v130 = vld [vmem:[%s111 + $0x68] sm:$0x1]
      %v131 = vld [vmem:[%s111 + $0x70] sm:$0xff]
      %v132 = vld [vmem:[%s111 + $0x78] sm:$0x1]
      %v133 = vld [vmem:[%s111 + $0x80] sm:$0xff]
      %v134 = vld [vmem:[%s111 + $0x88] sm:$0x1]
      %v135 = vld [vmem:[%s111 + $0x90] sm:$0xff]
      %v136 = vld [vmem:[%s111 + $0xa0] sm:$0xff]
      %v137 = vld [vmem:[%s111 + $0xb0] sm:$0xff]
      %v138 = vld [vmem:[%s111 + $0xc0] sm:$0xff]
      %v139 = vld [vmem:[%s111 + $0xd0] sm:$0xff]
      %v140 = vld [vmem:[%s111 + $0xe0] sm:$0xff]
      %v141 = vld [vmem:[%s111 + $0xf0] sm:$0xff]
      %v142 = vld [vmem:[%s111 + $0x100] sm:$0xff]
      %v143 = vld [vmem:[%s111 + $0x110] sm:$0xff]
      %v144 = vld [vmem:[%s111 + $0x120] sm:$0xff]
      %v145 = vld [vmem:[%s111 + $0x128] sm:$0x1]
      %v146 = vld [vmem:[%s111 + $0x130] sm:$0xff]
      %v147 = vld [vmem:[%s111 + $0x138] sm:$0x1]
      %v148 = vld [vmem:[%s111 + $0x140] sm:$0xff]
      %v149 = vld [vmem:[%s111 + $0x148] sm:$0x1]
      %v150 = vld [vmem:[%s111 + $0x150] sm:$0xff]
      %v151 = vld [vmem:[%s111 + $0x158] sm:$0x1]
      %v152 = vld [vmem:[%s111 + $0x160] sm:$0xff]
      %v153 = vld [vmem:[%s111 + $0x168] sm:$0x1]
      %v154 = vld [vmem:[%s111 + $0x170] sm:$0xff]
      %v155 = vld [vmem:[%s111 + $0x178] sm:$0x1]
      %v156 = vld [vmem:[%s111 + $0x180] sm:$0xff]
      %v157 = vld [vmem:[%s111 + $0x188] sm:$0x1]
      %v158 = vld [vmem:[%s111 + $0x190] sm:$0xff]
      %v159 = vld [vmem:[%s111 + $0x198] sm:$0x1]
      %v160 = vld [vmem:[%s111 + $0x1b0] sm:$0xff]
      %v161 = vld [vmem:[%s111 + $0x1c0] sm:$0xff]
      %v162 = vld [vmem:[%s111 + $0x1d0] sm:$0xff]
      %v163 = vld [vmem:[%s111 + $0x1e0] sm:$0xff]
      %v164 = vld [vmem:[%s111 + $0x1f0] sm:$0xff]
      %v165 = vld [vmem:[%s111 + $0x200] sm:$0xff]
      %v166 = vld [vmem:[%s111 + $0x210] sm:$0xff]
      %v167 = vld [vmem:[%s111 + $0x220] sm:$0xff]
      %v168 = vmax.f32 %v117, %v135
      %v169 = vmax.f32 %v119, %v136
      %v170 = vmax.f32 %v121, %v137
      %v171 = vmax.f32 %v123, %v138
      %v172 = vmax.f32 %v125, %v139
      %v173 = vmax.f32 %v127, %v140
      %v174 = vmax.f32 %v129, %v141
      %v175 = vmax.f32 %v131, %v142
      %vm192 = vcmask 1046528
      %v193 = vrot.slane %v117, 1
      %v194 = vrot.slane %v118, 1
      %v195 = vsel %vm192, %v193, %v194
      %v196 = vrot.slane %v119, 1
      %v197 = vrot.slane %v120, 1
      %v198 = vsel %vm192, %v196, %v197
      %v199 = vrot.slane %v121, 1
      %v200 = vrot.slane %v122, 1
      %v201 = vsel %vm192, %v199, %v200
      %v202 = vrot.slane %v123, 1
      %v203 = vrot.slane %v124, 1
      %v204 = vsel %vm192, %v202, %v203
      %v205 = vrot.slane %v125, 1
      %v206 = vrot.slane %v126, 1
      %v207 = vsel %vm192, %v205, %v206
      %v208 = vrot.slane %v127, 1
      %v209 = vrot.slane %v128, 1
      %v210 = vsel %vm192, %v208, %v209
      %v211 = vrot.slane %v129, 1
      %v212 = vrot.slane %v130, 1
      %v213 = vsel %vm192, %v211, %v212
      %v214 = vrot.slane %v131, 1
      %v215 = vrot.slane %v132, 1
      %v216 = vsel %vm192, %v214, %v215
      %v225 = vmax.f32 %v168, %v195
      %v226 = vmax.f32 %v169, %v198
      %v227 = vmax.f32 %v170, %v201
      %v228 = vmax.f32 %v171, %v204
      %v229 = vmax.f32 %v172, %v207
      %v230 = vmax.f32 %v173, %v210
      %v231 = vmax.f32 %v174, %v213
      %v232 = vmax.f32 %v175, %v216
      %v233 = vmax.f32 %v225, %v144
      %v234 = vmax.f32 %v226, %v146
      %v235 = vmax.f32 %v227, %v148
      %v236 = vmax.f32 %v228, %v150
      %v237 = vmax.f32 %v229, %v152
      %v238 = vmax.f32 %v230, %v154
      %v239 = vmax.f32 %v231, %v156
      %v240 = vmax.f32 %v232, %v158
      %v241 = vmax.f32 %v233, %v160
      %v242 = vmax.f32 %v234, %v161
      %v243 = vmax.f32 %v235, %v162
      %v244 = vmax.f32 %v236, %v163
      %v245 = vmax.f32 %v237, %v164
      %v246 = vmax.f32 %v238, %v165
      %v247 = vmax.f32 %v239, %v166
      %v248 = vmax.f32 %v240, %v167
      %v265 = vrot.slane %v144, 1
      %v266 = vrot.slane %v145, 1
      %v267 = vsel %vm192, %v265, %v266
      %v268 = vrot.slane %v146, 1
      %v269 = vrot.slane %v147, 1
      %v270 = vsel %vm192, %v268, %v269
      %v271 = vrot.slane %v148, 1
      %v272 = vrot.slane %v149, 1
      %v273 = vsel %vm192, %v271, %v272
      %v274 = vrot.slane %v150, 1
      %v275 = vrot.slane %v151, 1
      %v276 = vsel %vm192, %v274, %v275
      %v277 = vrot.slane %v152, 1
      %v278 = vrot.slane %v153, 1
      %v279 = vsel %vm192, %v277, %v278
      %v280 = vrot.slane %v154, 1
      %v281 = vrot.slane %v155, 1
      %v282 = vsel %vm192, %v280, %v281
      %v283 = vrot.slane %v156, 1
      %v284 = vrot.slane %v157, 1
      %v285 = vsel %vm192, %v283, %v284
      %v286 = vrot.slane %v158, 1
      %v287 = vrot.slane %v159, 1
      %v288 = vsel %vm192, %v286, %v287
      %v297 = vmax.f32 %v241, %v267
      %v298 = vmax.f32 %v242, %v270
      %v299 = vmax.f32 %v243, %v273
      %v300 = vmax.f32 %v244, %v276
      %v301 = vmax.f32 %v245, %v279
      %v302 = vmax.f32 %v246, %v282
      %v303 = vmax.f32 %v247, %v285
      %v304 = vmax.f32 %v248, %v288
      %v305 = vmax.f32 %v297, %v119
      %v306 = vmax.f32 %v298, %v121
      %v307 = vmax.f32 %v299, %v123
      %v308 = vmax.f32 %v300, %v125
      %v309 = vmax.f32 %v301, %v127
      %v310 = vmax.f32 %v302, %v129
      %v311 = vmax.f32 %v303, %v131
      %v312 = vmax.f32 %v304, %v133
      %v313 = vmax.f32 %v305, %v136
      %v314 = vmax.f32 %v306, %v137
      %v315 = vmax.f32 %v307, %v138
      %v316 = vmax.f32 %v308, %v139
      %v317 = vmax.f32 %v309, %v140
      %v318 = vmax.f32 %v310, %v141
      %v319 = vmax.f32 %v311, %v142
      %v320 = vmax.f32 %v312, %v143
      %v323 = vrot.slane %v133, 1
      %v324 = vrot.slane %v134, 1
      %v325 = vsel %vm192, %v323, %v324
      %v327 = vmax.f32 %v313, %v198
      %v328 = vmax.f32 %v314, %v201
      %v329 = vmax.f32 %v315, %v204
      %v330 = vmax.f32 %v316, %v207
      %v331 = vmax.f32 %v317, %v210
      %v332 = vmax.f32 %v318, %v213
      %v333 = vmax.f32 %v319, %v216
      %v334 = vmax.f32 %v320, %v325
      %vm335 = vcmask 195584
      %336 = vst.msk [vmem:[%s116] sm:$0xff] %vm335, %v327
      %337 = vst.msk [vmem:[%s116 + $0x8] sm:$0xff] %vm335, %v328
      %338 = vst.msk [vmem:[%s116 + $0x10] sm:$0xff] %vm335, %v329
      %339 = vst.msk [vmem:[%s116 + $0x18] sm:$0xff] %vm335, %v330
      %340 = vst.msk [vmem:[%s116 + $0x20] sm:$0xff] %vm335, %v331
      %341 = vst.msk [vmem:[%s116 + $0x28] sm:$0xff] %vm335, %v332
      %342 = vst.msk [vmem:[%s116 + $0x30] sm:$0xff] %vm335, %v333
      %343 = vst.msk [vmem:[%s116 + $0x38] sm:$0xff] %vm335, %v334
      %p344 = scmp.lt.s32.totalorder %s12, 1
      %s345 = scalar_select %p344, %s12, 1
      %s346 = smul.addr %s345, 8
      %s347 = smul.addr %s346, 8
      %s348 = scalar_lea.vmem %s1, %s347
      // Predicated region
      $region25: #{_lambda_.59} parent=23 // pred_check
        %p349 = pneg %p56
      $region26: #{_lambda_.59} parent=23 // pred_check_branch
        %351 = sbr.rel (%p349) target = $region28
      $region27: #{_lambda_.59} parent=23 // pred_region
        _
      $region28: #{_lambda_.59} parent=23 // pred_fallthru
        _
    $region24: #{_lambda_.59} parent=5 // pred_fallthru
      _
    %p352 = scmp.le.s32.totalorder 2, %s7
    // Predicated region
    $region29: #{_lambda_.59} parent=5 // pred_check
      %p353 = pneg %p352
    $region30: #{_lambda_.59} parent=5 // pred_check_branch
      %355 = sbr.rel (%p353) target = $region32
    $region31: #{_lambda_.59} parent=5 // pred_region
      %s356 = ssub.s32 %s7, 2
      // Predicated region
      $region33: #{_lambda_.59} parent=31 // pred_check
        %p357 = pneg %p62
      $region34: #{_lambda_.59} parent=31 // pred_check_branch
        %359 = sbr.rel (%p357) target = $region36
      $region35: #{_lambda_.59} parent=31 // pred_region
        %p360 = scmp.lt.s32.totalorder %s13, 1
        %s361 = scalar_select %p360, %s13, 1
        %s362 = smul.addr %s361, 8
        %s363 = smul.addr %s362, 8
        %s364 = scalar_lea.vmem %s1, %s363
      $region36: #{_lambda_.59} parent=31 // pred_fallthru
        _
    $region32: #{_lambda_.59} parent=5 // pred_fallthru
      _
  $region6: #{_lambda_.59} parent=0 // loop_footer
    %s11 = sadd.s32 1, %s7
  $region7: #{_lambda_.59} parent=0 // loop_footer_branch
    %6 = sbr.rel target = $region3
  $region8: #{_lambda_.59} parent=0 // loop_exit
    _

// kernel: _lambda_.63
$region0: #{_lambda_.63}
  #allocation0 [shape = 'u32[]', space=smem, size = 0x4, offset = 0x4, fixed_abs, tag = 'smem constant byte address 0x4 - core index']
  #allocation1 [shape = 'u32[144,128]{1,0:T(1,128)}', space=vmem, size = 0x12000, scoped, tag = 'internal scratch']
  %s0 = inlined_call_operand.vmem [shape: f32[2,20,5,58], index: 0, kind: input, shape index: {}]
  %s1 = inlined_call_operand.vmem [shape: f32[9,1,58], index: 1, kind: input, shape index: {}]
  %s2 = inlined_call_operand.vmem [shape: f32[1,1,58], index: 2, kind: input, shape index: {}]
  %s3 = inlined_call_operand.vmem [shape: f32[2,4,4,58], index: 3, kind: output, shape index: {}]
  %s4 = sld [smem:[#allocation0]]
  $region45: #{_lambda_.63} parent=0
    _
  %s6 = ssub.s32 1, %s4
  %s7 = scalar_select 0, %s6, %s4
  loop: start=0, step=1, limit=4
  $region2: #{_lambda_.63} parent=0 // loop_pre_header
    _
  $region3: #{_lambda_.63} parent=0 // loop_header
    %s9 = sphi 0, %s13
    %p10 = scmp.ge.s32.totalorder %s9, 4
    %s19 = sphi 0, %s21
    %s22 = sphi 0, %s19
    %s23 = sphi 0, %s22
    %s39 = sphi 0, %s23
    %s43 = sphi 0, %s43
    %s45 = sphi 0, %s43
    %s46 = sphi 0, %s45
    %s60 = sphi 0, %s46
    %s64 = sphi 0, %s64
    %s66 = sphi 0, %s64
    %s67 = sphi 0, %s66
    %s81 = sphi 0, %s67
    %s87 = sphi 0, %s89
    %s90 = sphi 0, %s87
    %s91 = sphi 0, %s90
    %s107 = sphi 0, %s91
  $region4: #{_lambda_.63} parent=0 // loop_header_branch
    %12 = sbr.rel (%p10) target = $region8
  $region5: #{_lambda_.63} parent=0 // loop_body
    %s14 = ssub.s32 %s9, 1
    %s15 = ssub.s32 %s9, 2
    %s16 = sadd.s32 %s9, 1
    %s17 = ssub.s32 %s9, %s16
    %p18 = scmp.eq.s32.totalorder %s17, 0
    %s20 = sadd.s32 %s19, 1
    %s21 = scalar_select %p18, %s19, %s20
    %p24 = pneg %p18
    %p25 = scmp.eq.s32.totalorder %s9, 1
    %p26 = por %p24, %p25
    %p27 = scmp.ne.s32.totalorder %s19, %s22
    %p28 = scmp.eq.s32.totalorder %s9, 0
    %p29 = por %p27, %p28
    %p30 = scmp.ne.s32.totalorder %s19, %s22
    %p31 = scmp.eq.s32.totalorder %s14, 1
    %p32 = por %p30, %p31
    %p33 = scmp.ne.s32.totalorder %s22, %s23
    %p34 = scmp.eq.s32.totalorder %s14, 0
    %p35 = por %p33, %p34
    %p36 = scmp.ne.s32.totalorder %s22, %s23
    %p37 = scmp.eq.s32.totalorder %s15, 1
    %p38 = por %p36, %p37
    %p40 = scmp.ne.s32.totalorder %s23, %s39
    %p41 = scmp.eq.s32.totalorder %s15, 0
    %p42 = por %p40, %p41
    %s44 = sadd.s32 %s43, 1
    %p47 = scmp.eq.s32.totalorder %s9, 1
    %p48 = scmp.ne.s32.totalorder %s43, %s45
    %p49 = scmp.eq.s32.totalorder %s9, 0
    %p50 = por %p48, %p49
    %p51 = scmp.ne.s32.totalorder %s43, %s45
    %p52 = scmp.eq.s32.totalorder %s14, 1
    %p53 = por %p51, %p52
    %p54 = scmp.ne.s32.totalorder %s45, %s46
    %p55 = scmp.eq.s32.totalorder %s14, 0
    %p56 = por %p54, %p55
    %p57 = scmp.ne.s32.totalorder %s45, %s46
    %p58 = scmp.eq.s32.totalorder %s15, 1
    %p59 = por %p57, %p58
    %p61 = scmp.ne.s32.totalorder %s46, %s60
    %p62 = scmp.eq.s32.totalorder %s15, 0
    %p63 = por %p61, %p62
    %s65 = sadd.s32 %s64, 1
    %p68 = scmp.eq.s32.totalorder %s9, 1
    %p69 = scmp.ne.s32.totalorder %s64, %s66
    %p70 = scmp.eq.s32.totalorder %s9, 0
    %p71 = por %p69, %p70
    %p72 = scmp.ne.s32.totalorder %s64, %s66
    %p73 = scmp.eq.s32.totalorder %s14, 1
    %p74 = por %p72, %p73
    %p75 = scmp.ne.s32.totalorder %s66, %s67
    %p76 = scmp.eq.s32.totalorder %s14, 0
    %p77 = por %p75, %p76
    %p78 = scmp.ne.s32.totalorder %s66, %s67
    %p79 = scmp.eq.s32.totalorder %s15, 1
    %p80 = por %p78, %p79
    %p82 = scmp.ne.s32.totalorder %s67, %s81
    %p83 = scmp.eq.s32.totalorder %s15, 0
    %p84 = por %p82, %p83
    %s85 = ssub.s32 %s9, %s16
    %p86 = scmp.eq.s32.totalorder %s85, 0
    %s88 = sadd.s32 %s87, 1
    %s89 = scalar_select %p86, %s87, %s88
    %p92 = pneg %p86
    %p93 = scmp.eq.s32.totalorder %s9, 1
    %p94 = por %p92, %p93
    %p95 = scmp.ne.s32.totalorder %s87, %s90
    %p96 = scmp.eq.s32.totalorder %s9, 0
    %p97 = por %p95, %p96
    %p98 = scmp.ne.s32.totalorder %s87, %s90
    %p99 = scmp.eq.s32.totalorder %s14, 1
    %p100 = por %p98, %p99
    %p101 = scmp.ne.s32.totalorder %s90, %s91
    %p102 = scmp.eq.s32.totalorder %s14, 0
    %p103 = por %p101, %p102
    %p104 = scmp.ne.s32.totalorder %s90, %s91
    %p105 = scmp.eq.s32.totalorder %s15, 1
    %p106 = por %p104, %p105
    %p108 = scmp.ne.s32.totalorder %s91, %s107
    %p109 = scmp.eq.s32.totalorder %s15, 0
    %p110 = por %p108, %p109
    %p111 = scmp.le.s32.totalorder 1, %s9
    %p112 = scmp.lt.s32.totalorder %s9, 3
    %p113 = pnand %p111, %p112
    %p114 = pneg %p113
    // Predicated region
    $region9: #{_lambda_.63} parent=5 // pred_check
      _
    $region10: #{_lambda_.63} parent=5 // pred_check_branch
      %116 = sbr.rel (%p113) target = $region12
    $region11: #{_lambda_.63} parent=5 // pred_region
      %s117 = ssub.s32 %s9, 1
      // Predicated region
      $region13: #{_lambda_.63} parent=11 // pred_check
        %p118 = pneg %p56
      $region14: #{_lambda_.63} parent=11 // pred_check_branch
        %120 = sbr.rel (%p118) target = $region16
      $region15: #{_lambda_.63} parent=11 // pred_region
        _
      $region16: #{_lambda_.63} parent=11 // pred_fallthru
        _
      // Predicated region
      $region17: #{_lambda_.63} parent=11 // pred_check
        %p121 = pneg %p77
      $region18: #{_lambda_.63} parent=11 // pred_check_branch
        %123 = sbr.rel (%p121) target = $region20
      $region19: #{_lambda_.63} parent=11 // pred_region
        _
      $region20: #{_lambda_.63} parent=11 // pred_fallthru
        _
    $region12: #{_lambda_.63} parent=5 // pred_fallthru
      _
    %p124 = scmp.lt.s32.totalorder %s9, 2
    // Predicated region
    $region21: #{_lambda_.63} parent=5 // pred_check
      %p125 = pneg %p124
    $region22: #{_lambda_.63} parent=5 // pred_check_branch
      %127 = sbr.rel (%p125) target = $region24
    $region23: #{_lambda_.63} parent=5 // pred_region
      // Predicated region
      $region25: #{_lambda_.63} parent=23 // pred_check
        %p128 = pneg %p29
      $region26: #{_lambda_.63} parent=23 // pred_check_branch
        %130 = sbr.rel (%p128) target = $region28
      $region27: #{_lambda_.63} parent=23 // pred_region
        %p131 = scmp.lt.s32.totalorder %s9, 1
        %s132 = scalar_select %p131, %s9, 1
        %s133 = smul.addr %s132, 20
        %s134 = smul.addr %s133, 8
        %s135 = scalar_lea.vmem %s0, %s134
      $region28: #{_lambda_.63} parent=23 // pred_fallthru
        _
    $region24: #{_lambda_.63} parent=5 // pred_fallthru
      _
    %p136 = scmp.le.s32.totalorder 1, %s9
    %p137 = scmp.lt.s32.totalorder %s9, 3
    %p138 = pnand %p136, %p137
    %p139 = pneg %p138
    // Predicated region
    $region29: #{_lambda_.63} parent=5 // pred_check
      _
    $region30: #{_lambda_.63} parent=5 // pred_check_branch
      %141 = sbr.rel (%p138) target = $region32
    $region31: #{_lambda_.63} parent=5 // pred_region
      %s142 = ssub.s32 %s9, 1
      %p143 = scmp.lt.s32.totalorder %s14, 1
      %s144 = scalar_select %p143, %s14, 1
      %s145 = smul.addr %s144, 20
      %s146 = smul.addr %s145, 8
      %s147 = scalar_lea.vmem %s0, %s146
      %p148 = pneg %p35
      %p149 = pneg %p32
      %p150 = pneg %p56
      %p151 = pneg %p53
      %p152 = pneg %p77
      %p153 = pneg %p74
      %p154 = pneg %p103
      %p155 = pneg %p100
      %p156 = scmp.lt.s32.totalorder %s14, 1
      %s157 = scalar_select %p156, %s14, 1
      %s158 = smul.addr %s157, 4
      %s159 = smul.addr %s158, 4
      %s160 = scalar_lea.vmem %s3, %s159
      %p161 = scmp.lt.s32.totalorder %s14, 1
      %s162 = scalar_select %p161, %s14, 1
      %s163 = smul.addr %s162, 20
      %s164 = smul.addr %s163, 8
      %s165 = scalar_lea.vmem %s0, %s164
      %p166 = scmp.lt.s32.totalorder %s14, 1
      %s167 = scalar_select %p166, %s14, 1
      %s168 = smul.addr %s167, 4
      %s169 = smul.addr %s168, 4
      %s170 = scalar_lea.vmem %s3, %s169
      %v171 = vld [vmem:[%s165] sm:$0x1f]
      %v172 = vld [vmem:[%s165 + $0x8] sm:$0x1f]
      %v173 = vld [vmem:[%s165 + $0x10] sm:$0x1f]
      %v174 = vld [vmem:[%s165 + $0x18] sm:$0x1f]
      %v175 = vld [vmem:[%s165 + $0x20] sm:$0x1f]
      %v176 = vld [vmem:[%s165 + $0x28] sm:$0x1f]
      %v177 = vld [vmem:[%s165 + $0x30] sm:$0x1f]
      %v178 = vld [vmem:[%s165 + $0x38] sm:$0x1f]
      %v179 = vld [vmem:[%s165 + $0x40] sm:$0x1f]
      %v180 = vld [vmem:[%s165 + $0x48] sm:$0x1f]
      %v181 = vld [vmem:[%s165 + $0x50] sm:$0x1f]
      %v182 = vld [vmem:[%s165 + $0x58] sm:$0x1f]
      %v183 = vld [vmem:[%s165 + $0x60] sm:$0x1f]
      %v184 = vld [vmem:[%s165 + $0x68] sm:$0x1f]
      %v185 = vld [vmem:[%s165 + $0x78] sm:$0x1f]
      %v186 = vld [vmem:[%s165 + $0x80] sm:$0x1f]
      %v187 = vld [vmem:[%s165 + $0x88] sm:$0x1f]
      %v188 = vld [vmem:[%s165 + $0x90] sm:$0x1f]
      %v189 = vld [vmem:[%s1] sm:$0x1]
      %v190 = vld [vmem:[%s1 + $0x1] sm:$0x1]
      %v191 = vld [vmem:[%s1 + $0x2] sm:$0x1]
      %v192 = vld [vmem:[%s1 + $0x3] sm:$0x1]
      %v193 = vld [vmem:[%s1 + $0x4] sm:$0x1]
      %v194 = vld [vmem:[%s1 + $0x5] sm:$0x1]
      %v195 = vld [vmem:[%s1 + $0x6] sm:$0x1]
      %v196 = vld [vmem:[%s1 + $0x7] sm:$0x1]
      %v197 = vld [vmem:[%s1 + $0x8] sm:$0x1]
      %v198 = vld [vmem:[%s2] sm:$0x1]
      %v200 = vlaneseq
      %v201 = vshrl.u32 %v200, 7
      %v202 = vsub.s32 0, %v201
      %v203 = vrot.slane %v189, %v202
      %v205 = vmul.f32 %v171, %v203
      %v206 = vmul.f32 %v172, %v203
      %v207 = vmul.f32 %v173, %v203
      %v208 = vmul.f32 %v174, %v203
      %v210 = vlaneseq
      %v211 = vshrl.u32 %v210, 7
      %v212 = vsub.s32 0, %v211
      %v213 = vrot.slane %v190, %v212
      %v215 = vmul.f32 %v176, %v213
      %v216 = vmul.f32 %v177, %v213
      %v217 = vmul.f32 %v178, %v213
      %v218 = vmul.f32 %v179, %v213
      %v219 = vadd.f32 %v205, %v215
      %v220 = vadd.f32 %v206, %v216
      %v221 = vadd.f32 %v207, %v217
      %v222 = vadd.f32 %v208, %v218
      %v224 = vlaneseq
      %v225 = vshrl.u32 %v224, 7
      %v226 = vsub.s32 0, %v225
      %v227 = vrot.slane %v191, %v226
      %v229 = vmul.f32 %v171, %v227
      %v230 = vmul.f32 %v172, %v227
      %v231 = vmul.f32 %v173, %v227
      %v232 = vmul.f32 %v174, %v227
      %v237 = vrot.slane %v229, 1
      %v238 = vrot.slane %v230, 1
      %v239 = vrot.slane %v231, 1
      %v240 = vrot.slane %v232, 1
      %v245 = vadd.f32 %v219, %v237
      %v246 = vadd.f32 %v220, %v238
      %v247 = vadd.f32 %v221, %v239
      %v248 = vadd.f32 %v222, %v240
      %v250 = vlaneseq
      %v251 = vshrl.u32 %v250, 7
      %v252 = vsub.s32 0, %v251
      %v253 = vrot.slane %v192, %v252
      %v255 = vmul.f32 %v181, %v253
      %v256 = vmul.f32 %v182, %v253
      %v257 = vmul.f32 %v183, %v253
      %v258 = vmul.f32 %v184, %v253
      %v259 = vadd.f32 %v245, %v255
      %v260 = vadd.f32 %v246, %v256
      %v261 = vadd.f32 %v247, %v257
      %v262 = vadd.f32 %v248, %v258
      %v264 = vlaneseq
      %v265 = vshrl.u32 %v264, 7
      %v266 = vsub.s32 0, %v265
      %v267 = vrot.slane %v193, %v266
      %v269 = vmul.f32 %v185, %v267
      %v270 = vmul.f32 %v186, %v267
      %v271 = vmul.f32 %v187, %v267
      %v272 = vmul.f32 %v188, %v267
      %v273 = vadd.f32 %v259, %v269
      %v274 = vadd.f32 %v260, %v270
      %v275 = vadd.f32 %v261, %v271
      %v276 = vadd.f32 %v262, %v272
      %v278 = vlaneseq
      %v279 = vshrl.u32 %v278, 7
      %v280 = vsub.s32 0, %v279
      %v281 = vrot.slane %v194, %v280
      %v283 = vmul.f32 %v181, %v281
      %v284 = vmul.f32 %v182, %v281
      %v285 = vmul.f32 %v183, %v281
      %v286 = vmul.f32 %v184, %v281
      %v291 = vrot.slane %v283, 1
      %v292 = vrot.slane %v284, 1
      %v293 = vrot.slane %v285, 1
      %v294 = vrot.slane %v286, 1
      %v299 = vadd.f32 %v273, %v291
      %v300 = vadd.f32 %v274, %v292
      %v301 = vadd.f32 %v275, %v293
      %v302 = vadd.f32 %v276, %v294
      %v304 = vlaneseq
      %v305 = vshrl.u32 %v304, 7
      %v306 = vsub.s32 0, %v305
      %v307 = vrot.slane %v195, %v306
      %v309 = vmul.f32 %v172, %v307
      %v310 = vmul.f32 %v173, %v307
      %v311 = vmul.f32 %v174, %v307
      %v312 = vmul.f32 %v175, %v307
      %v313 = vadd.f32 %v299, %v309
      %v314 = vadd.f32 %v300, %v310
      %v315 = vadd.f32 %v301, %v311
      %v316 = vadd.f32 %v302, %v312
      %v318 = vlaneseq
      %v319 = vshrl.u32 %v318, 7
      %v320 = vsub.s32 0, %v319
      %v321 = vrot.slane %v196, %v320
      %v323 = vmul.f32 %v177, %v321
      %v324 = vmul.f32 %v178, %v321
      %v325 = vmul.f32 %v179, %v321
      %v326 = vmul.f32 %v180, %v321
      %v327 = vadd.f32 %v313, %v323
      %v328 = vadd.f32 %v314, %v324
      %v329 = vadd.f32 %v315, %v325
      %v330 = vadd.f32 %v316, %v326
      %v332 = vlaneseq
      %v333 = vshrl.u32 %v332, 7
      %v334 = vsub.s32 0, %v333
      %v335 = vrot.slane %v197, %v334
      %v337 = vmul.f32 %v172, %v335
      %v338 = vmul.f32 %v173, %v335
      %v339 = vmul.f32 %v174, %v335
      %v340 = vmul.f32 %v175, %v335
      %v345 = vrot.slane %v337, 1
      %v346 = vrot.slane %v338, 1
      %v347 = vrot.slane %v339, 1
      %v348 = vrot.slane %v340, 1
      %v353 = vadd.f32 %v327, %v345
      %v354 = vadd.f32 %v328, %v346
      %v355 = vadd.f32 %v329, %v347
      %v356 = vadd.f32 %v330, %v348
      %v358 = vlaneseq
      %v359 = vshrl.u32 %v358, 7
      %v360 = vsub.s32 0, %v359
      %v361 = vrot.slane %v198, %v360
      %v363 = vadd.f32 %v353, %v361
      %v364 = vadd.f32 %v354, %v361
      %v365 = vadd.f32 %v355, %v361
      %v366 = vadd.f32 %v356, %v361
      %vm367 = vcmask 470016
      %368 = vst.msk [vmem:[%s170] sm:$0xf] %vm367, %v363
      %369 = vst.msk [vmem:[%s170 + $0x4] sm:$0xf] %vm367, %v364
      %370 = vst.msk [vmem:[%s170 + $0x8] sm:$0xf] %vm367, %v365
      %371 = vst.msk [vmem:[%s170 + $0xc] sm:$0xf] %vm367, %v366
      %p372 = scmp.lt.s32.totalorder %s14, 1
      %s373 = scalar_select %p372, %s14, 1
      %s374 = smul.addr %s373, 4
      %s375 = smul.addr %s374, 4
      %s376 = scalar_lea.vmem %s3, %s375
      // Predicated region
      $region33: #{_lambda_.63} parent=31 // pred_check
        %p377 = pneg %p100
      $region34: #{_lambda_.63} parent=31 // pred_check_branch
        %379 = sbr.rel (%p377) target = $region36
      $region35: #{_lambda_.63} parent=31 // pred_region
        _
      $region36: #{_lambda_.63} parent=31 // pred_fallthru
        _
    $region32: #{_lambda_.63} parent=5 // pred_fallthru
      _
    %p380 = scmp.le.s32.totalorder 2, %s9
    // Predicated region
    $region37: #{_lambda_.63} parent=5 // pred_check
      %p381 = pneg %p380
    $region38: #{_lambda_.63} parent=5 // pred_check_branch
      %383 = sbr.rel (%p381) target = $region40
    $region39: #{_lambda_.63} parent=5 // pred_region
      %s384 = ssub.s32 %s9, 2
      // Predicated region
      $region41: #{_lambda_.63} parent=39 // pred_check
        %p385 = pneg %p106
      $region42: #{_lambda_.63} parent=39 // pred_check_branch
        %387 = sbr.rel (%p385) target = $region44
      $region43: #{_lambda_.63} parent=39 // pred_region
        %p388 = scmp.lt.s32.totalorder %s15, 1
        %s389 = scalar_select %p388, %s15, 1
        %s390 = smul.addr %s389, 4
        %s391 = smul.addr %s390, 4
        %s392 = scalar_lea.vmem %s3, %s391
      $region44: #{_lambda_.63} parent=39 // pred_fallthru
        _
    $region40: #{_lambda_.63} parent=5 // pred_fallthru
      _
  $region6: #{_lambda_.63} parent=0 // loop_footer
    %s13 = sadd.s32 1, %s9
  $region7: #{_lambda_.63} parent=0 // loop_footer_branch
    %8 = sbr.rel target = $region3
  $region8: #{_lambda_.63} parent=0 // loop_exit
    _

// kernel: _lambda_.64
$region0: #{_lambda_.64}
  #allocation0 [shape = 'u32[]', space=smem, size = 0x4, offset = 0x4, fixed_abs, tag = 'smem constant byte address 0x4 - core index']
  #allocation1 [shape = 'u32[144,128]{1,0:T(1,128)}', space=vmem, size = 0x12000, scoped, tag = 'internal scratch']
  %s0 = inlined_call_operand.vmem [shape: f32[32,58], index: 0, kind: input, shape index: {}]
  %s1 = inlined_call_operand.vmem [shape: bf16[58,58], index: 1, kind: input, shape index: {}]
  %s2 = inlined_call_operand.vmem [shape: f32[1,58], index: 2, kind: input, shape index: {}]
  %s3 = inlined_call_operand.vmem [shape: f32[32,58], index: 3, kind: output, shape index: {}]
  %s4 = sld [smem:[#allocation0]]
  $region22: #{_lambda_.64} parent=0
    _
  %s6 = ssub.s32 1, %s4
  %s7 = scalar_select 0, %s6, %s4
  // Predicated region
  $region2: #{_lambda_.64} parent=0 // pred_check
    _
  $region3: #{_lambda_.64} parent=0 // pred_check_branch
    %9 = sbr.rel (0) target = $region5
  $region4: #{_lambda_.64} parent=0 // pred_region
    _
  $region5: #{_lambda_.64} parent=0 // pred_fallthru
    _
  // Predicated region
  $region6: #{_lambda_.64} parent=0 // pred_check
    _
  $region7: #{_lambda_.64} parent=0 // pred_check_branch
    %11 = sbr.rel (0) target = $region9
  $region8: #{_lambda_.64} parent=0 // pred_region
    _
  $region9: #{_lambda_.64} parent=0 // pred_fallthru
    _
  // Predicated region
  $region10: #{_lambda_.64} parent=0 // pred_check
    _
  $region11: #{_lambda_.64} parent=0 // pred_check_branch
    %13 = sbr.rel (0) target = $region13
  $region12: #{_lambda_.64} parent=0 // pred_region
    _
  $region13: #{_lambda_.64} parent=0 // pred_fallthru
    _
  %v15 = vld [vmem:[%s0] sm:$0xff]
  %v16 = vld [vmem:[%s0 + $0x8] sm:$0xff]
  %v17 = vld [vmem:[%s0 + $0x10] sm:$0xff]
  %v18 = vld [vmem:[%s0 + $0x18] sm:$0xff]
  %v19 = vpack.c.bf16 %v16, %v15
  %v20 = vpack.c.bf16 %v18, %v17
  %v21 = vld [vmem:[%s1] sm:$0xf]
  %v22 = vld [vmem:[%s1 + $0x4] sm:$0xf]
  %v23 = vld [vmem:[%s1 + $0x8] sm:$0xf]
  %v24 = vld [vmem:[%s1 + $0xc] sm:$0xf]
  %v25 = vld [vmem:[%s1 + $0x10] sm:$0xf]
  %v26 = vld [vmem:[%s1 + $0x14] sm:$0xf]
  %v27 = vld [vmem:[%s1 + $0x18] sm:$0xf]
  %v28 = vld [vmem:[%s1 + $0x1c] sm:$0x1]
  %v29 = vld [vmem:[%s2] sm:$0x1]
  %v31 = vlaneseq
  %v32 = vshrl.u32 %v31, 7
  %v33 = vsub.s32 0, %v32
  %v34 = vrot.slane %v29, %v33
  %v44 = vunpack.c.l.b16 %v21
  %v45 = vunpack.c.l.b16 %v22
  %v46 = vunpack.c.l.b16 %v23
  %v47 = vunpack.c.l.b16 %v24
  %v48 = vunpack.c.l.b16 %v25
  %v49 = vunpack.c.l.b16 %v26
  %v50 = vunpack.c.l.b16 %v27
  %v51 = vunpack.c.l.b16 %v28
  %v52 = vpack.c.b16 %v45, %v44
  %v53 = vpack.c.b16 %v47, %v46
  %v54 = vpack.c.b16 %v49, %v48
  %v55 = vpack.c.b16 %v51, %v50
  %vm59 = vcmask 474112
  %v61 = vsel %vm59, %v19, 0
  %v64 = vsel %vm59, %v20, 0
  %vm66 = vcmask 1044480
  %v68 = vsel %vm66, %v55, 0
  %70 = vmatprep.subr.bf16.mxu0 0
  %71 = vmatpush1.bf16.msra.mxu0 0
  %72 = vmatprep.subr.bf16.mxu0 0
  %73 = vmatpush1.bf16.msra.mxu0 0
  %74 = vmatprep.subr.bf16.mxu0 0
  %75 = vmatpush1.bf16.msra.mxu0 0
  %76 = vmatprep.subr.bf16.mxu0 0
  %77 = vmatpush1.bf16.msra.mxu0 0
  %78 = vmatprep.subr.bf16.mxu0 0
  %79 = vmatpush1.bf16.msra.mxu0 %v68
  %80 = vmatprep.subr.bf16.mxu0 0
  %81 = vmatpush1.bf16.msra.mxu0 %v54
  %82 = vmatprep.subr.bf16.mxu0 0
  %83 = vmatpush1.bf16.msra.mxu0 %v53
  %84 = vmatprep.subr.bf16.mxu0 0
  %85 = vmatpush1.bf16.msra.mxu0 %v52
  %86 = vmatprep.subr.bf16.mxu0 0
  %87 = vmatpush2.bf16.msra.mxu0 0
  %88 = vmatprep.subr.bf16.mxu0 0
  %89 = vmatpush2.bf16.msra.mxu0 0
  %90 = vmatprep.subr.bf16.mxu0 0
  %91 = vmatpush2.bf16.msra.mxu0 0
  %92 = vmatprep.subr.bf16.mxu0 0
  %93 = vmatpush2.bf16.msra.mxu0 0
  %94 = vmatprep.subr.bf16.mxu0 0
  %95 = vmatpush2.bf16.msra.mxu0 0
  %96 = vmatprep.subr.bf16.mxu0 0
  %97 = vmatpush2.bf16.msra.mxu0 0
  %98 = vmatprep.subr.bf16.mxu0 0
  %99 = vmatpush2.bf16.msra.mxu0 0
  %100 = vmatprep.subr.bf16.mxu0 0
  %101 = vmatpush2.bf16.msra.mxu0 0
  %102 = vmatprep.mubr.bf16.mxu0 0
  %103 = vmatmul.mubr.bf16.gmra.mxu0 %v61
  %v104 = vpop.f32.mrf.mxu0
  %v105 = vadd.f32 %v34, %v104
  %v106 = vpop.f32.mrf.mxu0
  %v107 = vpop.f32.mrf.mxu0
  %v108 = vadd.f32 %v34, %v107
  %v109 = vpop.f32.mrf.mxu0
  %110 = vmatprep.mubr.bf16.mxu0 0
  %111 = vmatmul.mubr.bf16.gmra.mxu0 %v64
  %v112 = vpop.f32.mrf.mxu0
  %v113 = vadd.f32 %v34, %v112
  %v114 = vpop.f32.mrf.mxu0
  %v115 = vpop.f32.mrf.mxu0
  %v116 = vadd.f32 %v34, %v115
  %v117 = vpop.f32.mrf.mxu0
  %118 = vdwg.mxu0
  %v119 = vmax.f32 %v105, 0.0
  %v120 = vmax.f32 %v108, 0.0
  %v121 = vmax.f32 %v113, 0.0
  %v122 = vmax.f32 %v116, 0.0
  %123 = vst.msk [vmem:[%s3] sm:$0xff] %vm59, %v119
  %124 = vst.msk [vmem:[%s3 + $0x8] sm:$0xff] %vm59, %v120
  %125 = vst.msk [vmem:[%s3 + $0x10] sm:$0xff] %vm59, %v121
  %126 = vst.msk [vmem:[%s3 + $0x18] sm:$0xff] %vm59, %v122
  // Predicated region
  $region14: #{_lambda_.64} parent=0 // pred_check
    _
  $region15: #{_lambda_.64} parent=0 // pred_check_branch
    %128 = sbr.rel (0) target = $region17
  $region16: #{_lambda_.64} parent=0 // pred_region
    _
  $region17: #{_lambda_.64} parent=0 // pred_fallthru
    _
  // Predicated region
  $region18: #{_lambda_.64} parent=0 // pred_check
    _
  $region19: #{_lambda_.64} parent=0 // pred_check_branch
    %130 = sbr.rel (0) target = $region21
  $region20: #{_lambda_.64} parent=0 // pred_region
    _
  $region21: #{_lambda_.64} parent=0 // pred_fallthru
    _

// kernel: _lambda_.61
$region0: #{_lambda_.61}
  #allocation0 [shape = 'u32[]', space=smem, size = 0x4, offset = 0x4, fixed_abs, tag = 'smem constant byte address 0x4 - core index']
  #allocation1 [shape = 'u32[144,128]{1,0:T(1,128)}', space=vmem, size = 0x12000, scoped, tag = 'internal scratch']
  %s0 = inlined_call_operand.vmem [shape: f32[32,24], index: 0, kind: input, shape index: {}]
  %s1 = inlined_call_operand.vmem [shape: bf16[24,58], index: 1, kind: input, shape index: {}]
  %s2 = inlined_call_operand.vmem [shape: f32[1,58], index: 2, kind: input, shape index: {}]
  %s3 = inlined_call_operand.vmem [shape: f32[32,58], index: 3, kind: output, shape index: {}]
  %s4 = sld [smem:[#allocation0]]
  $region22: #{_lambda_.61} parent=0
    _
  %s6 = ssub.s32 1, %s4
  %s7 = scalar_select 0, %s6, %s4
  // Predicated region
  $region2: #{_lambda_.61} parent=0 // pred_check
    _
  $region3: #{_lambda_.61} parent=0 // pred_check_branch
    %9 = sbr.rel (0) target = $region5
  $region4: #{_lambda_.61} parent=0 // pred_region
    _
  $region5: #{_lambda_.61} parent=0 // pred_fallthru
    _
  // Predicated region
  $region6: #{_lambda_.61} parent=0 // pred_check
    _
  $region7: #{_lambda_.61} parent=0 // pred_check_branch
    %11 = sbr.rel (0) target = $region9
  $region8: #{_lambda_.61} parent=0 // pred_region
    _
  $region9: #{_lambda_.61} parent=0 // pred_fallthru
    _
  // Predicated region
  $region10: #{_lambda_.61} parent=0 // pred_check
    _
  $region11: #{_lambda_.61} parent=0 // pred_check_branch
    %13 = sbr.rel (0) target = $region13
  $region12: #{_lambda_.61} parent=0 // pred_region
    _
  $region13: #{_lambda_.61} parent=0 // pred_fallthru
    _
  %v15 = vld [vmem:[%s0] sm:$0xff]
  %v16 = vld [vmem:[%s0 + $0x8] sm:$0xff]
  %v17 = vld [vmem:[%s0 + $0x10] sm:$0xff]
  %v18 = vld [vmem:[%s0 + $0x18] sm:$0xff]
  %v19 = vpack.c.bf16 %v16, %v15
  %v20 = vpack.c.bf16 %v18, %v17
  %v21 = vld [vmem:[%s1] sm:$0xf]
  %v22 = vld [vmem:[%s1 + $0x4] sm:$0xf]
  %v23 = vld [vmem:[%s1 + $0x8] sm:$0xf]
  %v24 = vld [vmem:[%s2] sm:$0x1]
  %v26 = vlaneseq
  %v27 = vshrl.u32 %v26, 7
  %v28 = vsub.s32 0, %v27
  %v29 = vrot.slane %v24, %v28
  %v34 = vunpack.c.l.b16 %v21
  %v35 = vunpack.c.l.b16 %v22
  %v36 = vunpack.c.l.b16 %v23
  %v37 = vpack.c.b16 %v35, %v34
  %v38 = vpack.c.b16 %v36, %v36
  %vm40 = vcmask 195584
  %v42 = vsel %vm40, %v19, 0
  %v45 = vsel %vm40, %v20, 0
  %vm47 = vcmask 1043456
  %v49 = vsel %vm47, %v38, 0
  %51 = vmatprep.subr.bf16.mxu0 0
  %52 = vmatpush1.bf16.msra.mxu0 0
  %53 = vmatprep.subr.bf16.mxu0 0
  %54 = vmatpush1.bf16.msra.mxu0 0
  %55 = vmatprep.subr.bf16.mxu0 0
  %56 = vmatpush1.bf16.msra.mxu0 0
  %57 = vmatprep.subr.bf16.mxu0 0
  %58 = vmatpush1.bf16.msra.mxu0 0
  %59 = vmatprep.subr.bf16.mxu0 0
  %60 = vmatpush1.bf16.msra.mxu0 0
  %61 = vmatprep.subr.bf16.mxu0 0
  %62 = vmatpush1.bf16.msra.mxu0 0
  %63 = vmatprep.subr.bf16.mxu0 0
  %64 = vmatpush1.bf16.msra.mxu0 %v49
  %65 = vmatprep.subr.bf16.mxu0 0
  %66 = vmatpush1.bf16.msra.mxu0 %v37
  %67 = vmatprep.subr.bf16.mxu0 0
  %68 = vmatpush2.bf16.msra.mxu0 0
  %69 = vmatprep.subr.bf16.mxu0 0
  %70 = vmatpush2.bf16.msra.mxu0 0
  %71 = vmatprep.subr.bf16.mxu0 0
  %72 = vmatpush2.bf16.msra.mxu0 0
  %73 = vmatprep.subr.bf16.mxu0 0
  %74 = vmatpush2.bf16.msra.mxu0 0
  %75 = vmatprep.subr.bf16.mxu0 0
  %76 = vmatpush2.bf16.msra.mxu0 0
  %77 = vmatprep.subr.bf16.mxu0 0
  %78 = vmatpush2.bf16.msra.mxu0 0
  %79 = vmatprep.subr.bf16.mxu0 0
  %80 = vmatpush2.bf16.msra.mxu0 0
  %81 = vmatprep.subr.bf16.mxu0 0
  %82 = vmatpush2.bf16.msra.mxu0 0
  %83 = vmatprep.mubr.bf16.mxu0 0
  %84 = vmatmul.mubr.bf16.gmra.mxu0 %v42
  %v85 = vpop.f32.mrf.mxu0
  %v86 = vadd.f32 %v29, %v85
  %v87 = vpop.f32.mrf.mxu0
  %v88 = vpop.f32.mrf.mxu0
  %v89 = vadd.f32 %v29, %v88
  %v90 = vpop.f32.mrf.mxu0
  %91 = vmatprep.mubr.bf16.mxu0 0
  %92 = vmatmul.mubr.bf16.gmra.mxu0 %v45
  %v93 = vpop.f32.mrf.mxu0
  %v94 = vadd.f32 %v29, %v93
  %v95 = vpop.f32.mrf.mxu0
  %v96 = vpop.f32.mrf.mxu0
  %v97 = vadd.f32 %v29, %v96
  %v98 = vpop.f32.mrf.mxu0
  %99 = vdwg.mxu0
  %v100 = vmax.f32 %v86, 0.0
  %v101 = vmax.f32 %v89, 0.0
  %v102 = vmax.f32 %v94, 0.0
  %v103 = vmax.f32 %v97, 0.0
  %vm104 = vcmask 474112
  %105 = vst.msk [vmem:[%s3] sm:$0xff] %vm104, %v100
  %106 = vst.msk [vmem:[%s3 + $0x8] sm:$0xff] %vm104, %v101
  %107 = vst.msk [vmem:[%s3 + $0x10] sm:$0xff] %vm104, %v102
  %108 = vst.msk [vmem:[%s3 + $0x18] sm:$0xff] %vm104, %v103
  // Predicated region
  $region14: #{_lambda_.61} parent=0 // pred_check
    _
  $region15: #{_lambda_.61} parent=0 // pred_check_branch
    %110 = sbr.rel (0) target = $region17
  $region16: #{_lambda_.61} parent=0 // pred_region
    _
  $region17: #{_lambda_.61} parent=0 // pred_fallthru
    _
  // Predicated region
  $region18: #{_lambda_.61} parent=0 // pred_check
    _
  $region19: #{_lambda_.61} parent=0 // pred_check_branch
    %112 = sbr.rel (0) target = $region21
  $region20: #{_lambda_.61} parent=0 // pred_region
    _
  $region21: #{_lambda_.61} parent=0 // pred_fallthru
    _

// kernel: _lambda_.60
$region0: #{_lambda_.60}
  #allocation0 [shape = 'u32[]', space=smem, size = 0x4, offset = 0x4, fixed_abs, tag = 'smem constant byte address 0x4 - core index']
  #allocation1 [shape = 'u32[144,128]{1,0:T(1,128)}', space=vmem, size = 0x12000, scoped, tag = 'internal scratch']
  %s0 = inlined_call_operand.vmem [shape: f32[2,20,5,24], index: 0, kind: input, shape index: {}]
  %s1 = inlined_call_operand.vmem [shape: f32[9,1,24], index: 1, kind: input, shape index: {}]
  %s2 = inlined_call_operand.vmem [shape: f32[1,1,24], index: 2, kind: input, shape index: {}]
  %s3 = inlined_call_operand.vmem [shape: f32[2,4,4,24], index: 3, kind: output, shape index: {}]
  %s4 = sld [smem:[#allocation0]]
  $region45: #{_lambda_.60} parent=0
    _
  %s6 = ssub.s32 1, %s4
  %s7 = scalar_select 0, %s6, %s4
  loop: start=0, step=1, limit=4
  $region2: #{_lambda_.60} parent=0 // loop_pre_header
    _
  $region3: #{_lambda_.60} parent=0 // loop_header
    %s9 = sphi 0, %s13
    %p10 = scmp.ge.s32.totalorder %s9, 4
    %s19 = sphi 0, %s21
    %s22 = sphi 0, %s19
    %s23 = sphi 0, %s22
    %s39 = sphi 0, %s23
    %s43 = sphi 0, %s43
    %s45 = sphi 0, %s43
    %s46 = sphi 0, %s45
    %s60 = sphi 0, %s46
    %s64 = sphi 0, %s64
    %s66 = sphi 0, %s64
    %s67 = sphi 0, %s66
    %s81 = sphi 0, %s67
    %s87 = sphi 0, %s89
    %s90 = sphi 0, %s87
    %s91 = sphi 0, %s90
    %s107 = sphi 0, %s91
  $region4: #{_lambda_.60} parent=0 // loop_header_branch
    %12 = sbr.rel (%p10) target = $region8
  $region5: #{_lambda_.60} parent=0 // loop_body
    %s14 = ssub.s32 %s9, 1
    %s15 = ssub.s32 %s9, 2
    %s16 = sadd.s32 %s9, 1
    %s17 = ssub.s32 %s9, %s16
    %p18 = scmp.eq.s32.totalorder %s17, 0
    %s20 = sadd.s32 %s19, 1
    %s21 = scalar_select %p18, %s19, %s20
    %p24 = pneg %p18
    %p25 = scmp.eq.s32.totalorder %s9, 1
    %p26 = por %p24, %p25
    %p27 = scmp.ne.s32.totalorder %s19, %s22
    %p28 = scmp.eq.s32.totalorder %s9, 0
    %p29 = por %p27, %p28
    %p30 = scmp.ne.s32.totalorder %s19, %s22
    %p31 = scmp.eq.s32.totalorder %s14, 1
    %p32 = por %p30, %p31
    %p33 = scmp.ne.s32.totalorder %s22, %s23
    %p34 = scmp.eq.s32.totalorder %s14, 0
    %p35 = por %p33, %p34
    %p36 = scmp.ne.s32.totalorder %s22, %s23
    %p37 = scmp.eq.s32.totalorder %s15, 1
    %p38 = por %p36, %p37
    %p40 = scmp.ne.s32.totalorder %s23, %s39
    %p41 = scmp.eq.s32.totalorder %s15, 0
    %p42 = por %p40, %p41
    %s44 = sadd.s32 %s43, 1
    %p47 = scmp.eq.s32.totalorder %s9, 1
    %p48 = scmp.ne.s32.totalorder %s43, %s45
    %p49 = scmp.eq.s32.totalorder %s9, 0
    %p50 = por %p48, %p49
    %p51 = scmp.ne.s32.totalorder %s43, %s45
    %p52 = scmp.eq.s32.totalorder %s14, 1
    %p53 = por %p51, %p52
    %p54 = scmp.ne.s32.totalorder %s45, %s46
    %p55 = scmp.eq.s32.totalorder %s14, 0
    %p56 = por %p54, %p55
    %p57 = scmp.ne.s32.totalorder %s45, %s46
    %p58 = scmp.eq.s32.totalorder %s15, 1
    %p59 = por %p57, %p58
    %p61 = scmp.ne.s32.totalorder %s46, %s60
    %p62 = scmp.eq.s32.totalorder %s15, 0
    %p63 = por %p61, %p62
    %s65 = sadd.s32 %s64, 1
    %p68 = scmp.eq.s32.totalorder %s9, 1
    %p69 = scmp.ne.s32.totalorder %s64, %s66
    %p70 = scmp.eq.s32.totalorder %s9, 0
    %p71 = por %p69, %p70
    %p72 = scmp.ne.s32.totalorder %s64, %s66
    %p73 = scmp.eq.s32.totalorder %s14, 1
    %p74 = por %p72, %p73
    %p75 = scmp.ne.s32.totalorder %s66, %s67
    %p76 = scmp.eq.s32.totalorder %s14, 0
    %p77 = por %p75, %p76
    %p78 = scmp.ne.s32.totalorder %s66, %s67
    %p79 = scmp.eq.s32.totalorder %s15, 1
    %p80 = por %p78, %p79
    %p82 = scmp.ne.s32.totalorder %s67, %s81
    %p83 = scmp.eq.s32.totalorder %s15, 0
    %p84 = por %p82, %p83
    %s85 = ssub.s32 %s9, %s16
    %p86 = scmp.eq.s32.totalorder %s85, 0
    %s88 = sadd.s32 %s87, 1
    %s89 = scalar_select %p86, %s87, %s88
    %p92 = pneg %p86
    %p93 = scmp.eq.s32.totalorder %s9, 1
    %p94 = por %p92, %p93
    %p95 = scmp.ne.s32.totalorder %s87, %s90
    %p96 = scmp.eq.s32.totalorder %s9, 0
    %p97 = por %p95, %p96
    %p98 = scmp.ne.s32.totalorder %s87, %s90
    %p99 = scmp.eq.s32.totalorder %s14, 1
    %p100 = por %p98, %p99
    %p101 = scmp.ne.s32.totalorder %s90, %s91
    %p102 = scmp.eq.s32.totalorder %s14, 0
    %p103 = por %p101, %p102
    %p104 = scmp.ne.s32.totalorder %s90, %s91
    %p105 = scmp.eq.s32.totalorder %s15, 1
    %p106 = por %p104, %p105
    %p108 = scmp.ne.s32.totalorder %s91, %s107
    %p109 = scmp.eq.s32.totalorder %s15, 0
    %p110 = por %p108, %p109
    %p111 = scmp.le.s32.totalorder 1, %s9
    %p112 = scmp.lt.s32.totalorder %s9, 3
    %p113 = pnand %p111, %p112
    %p114 = pneg %p113
    // Predicated region
    $region9: #{_lambda_.60} parent=5 // pred_check
      _
    $region10: #{_lambda_.60} parent=5 // pred_check_branch
      %116 = sbr.rel (%p113) target = $region12
    $region11: #{_lambda_.60} parent=5 // pred_region
      %s117 = ssub.s32 %s9, 1
      // Predicated region
      $region13: #{_lambda_.60} parent=11 // pred_check
        %p118 = pneg %p56
      $region14: #{_lambda_.60} parent=11 // pred_check_branch
        %120 = sbr.rel (%p118) target = $region16
      $region15: #{_lambda_.60} parent=11 // pred_region
        _
      $region16: #{_lambda_.60} parent=11 // pred_fallthru
        _
      // Predicated region
      $region17: #{_lambda_.60} parent=11 // pred_check
        %p121 = pneg %p77
      $region18: #{_lambda_.60} parent=11 // pred_check_branch
        %123 = sbr.rel (%p121) target = $region20
      $region19: #{_lambda_.60} parent=11 // pred_region
        _
      $region20: #{_lambda_.60} parent=11 // pred_fallthru
        _
    $region12: #{_lambda_.60} parent=5 // pred_fallthru
      _
    %p124 = scmp.lt.s32.totalorder %s9, 2
    // Predicated region
    $region21: #{_lambda_.60} parent=5 // pred_check
      %p125 = pneg %p124
    $region22: #{_lambda_.60} parent=5 // pred_check_branch
      %127 = sbr.rel (%p125) target = $region24
    $region23: #{_lambda_.60} parent=5 // pred_region
      // Predicated region
      $region25: #{_lambda_.60} parent=23 // pred_check
        %p128 = pneg %p29
      $region26: #{_lambda_.60} parent=23 // pred_check_branch
        %130 = sbr.rel (%p128) target = $region28
      $region27: #{_lambda_.60} parent=23 // pred_region
        %p131 = scmp.lt.s32.totalorder %s9, 1
        %s132 = scalar_select %p131, %s9, 1
        %s133 = smul.addr %s132, 20
        %s134 = smul.addr %s133, 8
        %s135 = scalar_lea.vmem %s0, %s134
      $region28: #{_lambda_.60} parent=23 // pred_fallthru
        _
    $region24: #{_lambda_.60} parent=5 // pred_fallthru
      _
    %p136 = scmp.le.s32.totalorder 1, %s9
    %p137 = scmp.lt.s32.totalorder %s9, 3
    %p138 = pnand %p136, %p137
    %p139 = pneg %p138
    // Predicated region
    $region29: #{_lambda_.60} parent=5 // pred_check
      _
    $region30: #{_lambda_.60} parent=5 // pred_check_branch
      %141 = sbr.rel (%p138) target = $region32
    $region31: #{_lambda_.60} parent=5 // pred_region
      %s142 = ssub.s32 %s9, 1
      %p143 = scmp.lt.s32.totalorder %s14, 1
      %s144 = scalar_select %p143, %s14, 1
      %s145 = smul.addr %s144, 20
      %s146 = smul.addr %s145, 8
      %s147 = scalar_lea.vmem %s0, %s146
      %p148 = pneg %p35
      %p149 = pneg %p32
      %p150 = pneg %p56
      %p151 = pneg %p53
      %p152 = pneg %p77
      %p153 = pneg %p74
      %p154 = pneg %p103
      %p155 = pneg %p100
      %p156 = scmp.lt.s32.totalorder %s14, 1
      %s157 = scalar_select %p156, %s14, 1
      %s158 = smul.addr %s157, 4
      %s159 = smul.addr %s158, 4
      %s160 = scalar_lea.vmem %s3, %s159
      %p161 = scmp.lt.s32.totalorder %s14, 1
      %s162 = scalar_select %p161, %s14, 1
      %s163 = smul.addr %s162, 20
      %s164 = smul.addr %s163, 8
      %s165 = scalar_lea.vmem %s0, %s164
      %p166 = scmp.lt.s32.totalorder %s14, 1
      %s167 = scalar_select %p166, %s14, 1
      %s168 = smul.addr %s167, 4
      %s169 = smul.addr %s168, 4
      %s170 = scalar_lea.vmem %s3, %s169
      %v171 = vld [vmem:[%s165] sm:$0x1f]
      %v172 = vld [vmem:[%s165 + $0x8] sm:$0x1f]
      %v173 = vld [vmem:[%s165 + $0x10] sm:$0x1f]
      %v174 = vld [vmem:[%s165 + $0x18] sm:$0x1f]
      %v175 = vld [vmem:[%s165 + $0x20] sm:$0x1f]
      %v176 = vld [vmem:[%s165 + $0x28] sm:$0x1f]
      %v177 = vld [vmem:[%s165 + $0x30] sm:$0x1f]
      %v178 = vld [vmem:[%s165 + $0x38] sm:$0x1f]
      %v179 = vld [vmem:[%s165 + $0x40] sm:$0x1f]
      %v180 = vld [vmem:[%s165 + $0x48] sm:$0x1f]
      %v181 = vld [vmem:[%s165 + $0x50] sm:$0x1f]
      %v182 = vld [vmem:[%s165 + $0x58] sm:$0x1f]
      %v183 = vld [vmem:[%s165 + $0x60] sm:$0x1f]
      %v184 = vld [vmem:[%s165 + $0x68] sm:$0x1f]
      %v185 = vld [vmem:[%s165 + $0x78] sm:$0x1f]
      %v186 = vld [vmem:[%s165 + $0x80] sm:$0x1f]
      %v187 = vld [vmem:[%s165 + $0x88] sm:$0x1f]
      %v188 = vld [vmem:[%s165 + $0x90] sm:$0x1f]
      %v189 = vld [vmem:[%s1] sm:$0x1]
      %v190 = vld [vmem:[%s1 + $0x1] sm:$0x1]
      %v191 = vld [vmem:[%s1 + $0x2] sm:$0x1]
      %v192 = vld [vmem:[%s1 + $0x3] sm:$0x1]
      %v193 = vld [vmem:[%s1 + $0x4] sm:$0x1]
      %v194 = vld [vmem:[%s1 + $0x5] sm:$0x1]
      %v195 = vld [vmem:[%s1 + $0x6] sm:$0x1]
      %v196 = vld [vmem:[%s1 + $0x7] sm:$0x1]
      %v197 = vld [vmem:[%s1 + $0x8] sm:$0x1]
      %v198 = vld [vmem:[%s2] sm:$0x1]
      %v200 = vlaneseq
      %v201 = vshrl.u32 %v200, 7
      %v202 = vsub.s32 0, %v201
      %v203 = vrot.slane %v189, %v202
      %v205 = vmul.f32 %v171, %v203
      %v206 = vmul.f32 %v172, %v203
      %v207 = vmul.f32 %v173, %v203
      %v208 = vmul.f32 %v174, %v203
      %v210 = vlaneseq
      %v211 = vshrl.u32 %v210, 7
      %v212 = vsub.s32 0, %v211
      %v213 = vrot.slane %v190, %v212
      %v215 = vmul.f32 %v176, %v213
      %v216 = vmul.f32 %v177, %v213
      %v217 = vmul.f32 %v178, %v213
      %v218 = vmul.f32 %v179, %v213
      %v219 = vadd.f32 %v205, %v215
      %v220 = vadd.f32 %v206, %v216
      %v221 = vadd.f32 %v207, %v217
      %v222 = vadd.f32 %v208, %v218
      %v224 = vlaneseq
      %v225 = vshrl.u32 %v224, 7
      %v226 = vsub.s32 0, %v225
      %v227 = vrot.slane %v191, %v226
      %v229 = vmul.f32 %v171, %v227
      %v230 = vmul.f32 %v172, %v227
      %v231 = vmul.f32 %v173, %v227
      %v232 = vmul.f32 %v174, %v227
      %v237 = vrot.slane %v229, 1
      %v238 = vrot.slane %v230, 1
      %v239 = vrot.slane %v231, 1
      %v240 = vrot.slane %v232, 1
      %v245 = vadd.f32 %v219, %v237
      %v246 = vadd.f32 %v220, %v238
      %v247 = vadd.f32 %v221, %v239
      %v248 = vadd.f32 %v222, %v240
      %v250 = vlaneseq
      %v251 = vshrl.u32 %v250, 7
      %v252 = vsub.s32 0, %v251
      %v253 = vrot.slane %v192, %v252
      %v255 = vmul.f32 %v181, %v253
      %v256 = vmul.f32 %v182, %v253
      %v257 = vmul.f32 %v183, %v253
      %v258 = vmul.f32 %v184, %v253
      %v259 = vadd.f32 %v245, %v255
      %v260 = vadd.f32 %v246, %v256
      %v261 = vadd.f32 %v247, %v257
      %v262 = vadd.f32 %v248, %v258
      %v264 = vlaneseq
      %v265 = vshrl.u32 %v264, 7
      %v266 = vsub.s32 0, %v265
      %v267 = vrot.slane %v193, %v266
      %v269 = vmul.f32 %v185, %v267
      %v270 = vmul.f32 %v186, %v267
      %v271 = vmul.f32 %v187, %v267
      %v272 = vmul.f32 %v188, %v267
      %v273 = vadd.f32 %v259, %v269
      %v274 = vadd.f32 %v260, %v270
      %v275 = vadd.f32 %v261, %v271
      %v276 = vadd.f32 %v262, %v272
      %v278 = vlaneseq
      %v279 = vshrl.u32 %v278, 7
      %v280 = vsub.s32 0, %v279
      %v281 = vrot.slane %v194, %v280
      %v283 = vmul.f32 %v181, %v281
      %v284 = vmul.f32 %v182, %v281
      %v285 = vmul.f32 %v183, %v281
      %v286 = vmul.f32 %v184, %v281
      %v291 = vrot.slane %v283, 1
      %v292 = vrot.slane %v284, 1
      %v293 = vrot.slane %v285, 1
      %v294 = vrot.slane %v286, 1
      %v299 = vadd.f32 %v273, %v291
      %v300 = vadd.f32 %v274, %v292
      %v301 = vadd.f32 %v275, %v293
      %v302 = vadd.f32 %v276, %v294
      %v304 = vlaneseq
      %v305 = vshrl.u32 %v304, 7
      %v306 = vsub.s32 0, %v305
      %v307 = vrot.slane %v195, %v306
      %v309 = vmul.f32 %v172, %v307
      %v310 = vmul.f32 %v173, %v307
      %v311 = vmul.f32 %v174, %v307
      %v312 = vmul.f32 %v175, %v307
      %v313 = vadd.f32 %v299, %v309
      %v314 = vadd.f32 %v300, %v310
      %v315 = vadd.f32 %v301, %v311
      %v316 = vadd.f32 %v302, %v312
      %v318 = vlaneseq
      %v319 = vshrl.u32 %v318, 7
      %v320 = vsub.s32 0, %v319
      %v321 = vrot.slane %v196, %v320
      %v323 = vmul.f32 %v177, %v321
      %v324 = vmul.f32 %v178, %v321
      %v325 = vmul.f32 %v179, %v321
      %v326 = vmul.f32 %v180, %v321
      %v327 = vadd.f32 %v313, %v323
      %v328 = vadd.f32 %v314, %v324
      %v329 = vadd.f32 %v315, %v325
      %v330 = vadd.f32 %v316, %v326
      %v332 = vlaneseq
      %v333 = vshrl.u32 %v332, 7
      %v334 = vsub.s32 0, %v333
      %v335 = vrot.slane %v197, %v334
      %v337 = vmul.f32 %v172, %v335
      %v338 = vmul.f32 %v173, %v335
      %v339 = vmul.f32 %v174, %v335
      %v340 = vmul.f32 %v175, %v335
      %v345 = vrot.slane %v337, 1
      %v346 = vrot.slane %v338, 1
      %v347 = vrot.slane %v339, 1
      %v348 = vrot.slane %v340, 1
      %v353 = vadd.f32 %v327, %v345
      %v354 = vadd.f32 %v328, %v346
      %v355 = vadd.f32 %v329, %v347
      %v356 = vadd.f32 %v330, %v348
      %v358 = vlaneseq
      %v359 = vshrl.u32 %v358, 7
      %v360 = vsub.s32 0, %v359
      %v361 = vrot.slane %v198, %v360
      %v363 = vadd.f32 %v353, %v361
      %v364 = vadd.f32 %v354, %v361
      %v365 = vadd.f32 %v355, %v361
      %v366 = vadd.f32 %v356, %v361
      %vm367 = vcmask 191488
      %368 = vst.msk [vmem:[%s170] sm:$0xf] %vm367, %v363
      %369 = vst.msk [vmem:[%s170 + $0x4] sm:$0xf] %vm367, %v364
      %370 = vst.msk [vmem:[%s170 + $0x8] sm:$0xf] %vm367, %v365
      %371 = vst.msk [vmem:[%s170 + $0xc] sm:$0xf] %vm367, %v366
      %p372 = scmp.lt.s32.totalorder %s14, 1
      %s373 = scalar_select %p372, %s14, 1
      %s374 = smul.addr %s373, 4
      %s375 = smul.addr %s374, 4
      %s376 = scalar_lea.vmem %s3, %s375
      // Predicated region
      $region33: #{_lambda_.60} parent=31 // pred_check
        %p377 = pneg %p100
      $region34: #{_lambda_.60} parent=31 // pred_check_branch
        %379 = sbr.rel (%p377) target = $region36
      $region35: #{_lambda_.60} parent=31 // pred_region
        _
      $region36: #{_lambda_.60} parent=31 // pred_fallthru
        _
    $region32: #{_lambda_.60} parent=5 // pred_fallthru
      _
    %p380 = scmp.le.s32.totalorder 2, %s9
    // Predicated region
    $region37: #{_lambda_.60} parent=5 // pred_check
      %p381 = pneg %p380
    $region38: #{_lambda_.60} parent=5 // pred_check_branch
      %383 = sbr.rel (%p381) target = $region40
    $region39: #{_lambda_.60} parent=5 // pred_region
      %s384 = ssub.s32 %s9, 2
      // Predicated region
      $region41: #{_lambda_.60} parent=39 // pred_check
        %p385 = pneg %p106
      $region42: #{_lambda_.60} parent=39 // pred_check_branch
        %387 = sbr.rel (%p385) target = $region44
      $region43: #{_lambda_.60} parent=39 // pred_region
        %p388 = scmp.lt.s32.totalorder %s15, 1
        %s389 = scalar_select %p388, %s15, 1
        %s390 = smul.addr %s389, 4
        %s391 = smul.addr %s390, 4
        %s392 = scalar_lea.vmem %s3, %s391
      $region44: #{_lambda_.60} parent=39 // pred_fallthru
        _
    $region40: #{_lambda_.60} parent=5 // pred_fallthru
      _
  $region6: #{_lambda_.60} parent=0 // loop_footer
    %s13 = sadd.s32 1, %s9
  $region7: #{_lambda_.60} parent=0 // loop_footer_branch
    %8 = sbr.rel target = $region3
  $region8: #{_lambda_.60} parent=0 // loop_exit
    _

// kernel: _lambda_.66
$region0: #{_lambda_.66}
  #allocation0 [shape = 'u32[]', space=smem, size = 0x4, offset = 0x4, fixed_abs, tag = 'smem constant byte address 0x4 - core index']
  #allocation1 [shape = 'u32[144,128]{1,0:T(1,128)}', space=vmem, size = 0x12000, scoped, tag = 'internal scratch']
  %s0 = inlined_call_operand.vmem [shape: f32[2,6,6,58], index: 0, kind: input, shape index: {}]
  %s1 = inlined_call_operand.vmem [shape: f32[9,1,58], index: 1, kind: input, shape index: {}]
  %s2 = inlined_call_operand.vmem [shape: f32[1,1,58], index: 2, kind: input, shape index: {}]
  %s3 = inlined_call_operand.vmem [shape: f32[2,4,4,58], index: 3, kind: output, shape index: {}]
  %s4 = sld [smem:[#allocation0]]
  $region45: #{_lambda_.66} parent=0
    _
  %s6 = ssub.s32 1, %s4
  %s7 = scalar_select 0, %s6, %s4
  loop: start=0, step=1, limit=4
  $region2: #{_lambda_.66} parent=0 // loop_pre_header
    _
  $region3: #{_lambda_.66} parent=0 // loop_header
    %s9 = sphi 0, %s13
    %p10 = scmp.ge.s32.totalorder %s9, 4
    %s19 = sphi 0, %s21
    %s22 = sphi 0, %s19
    %s23 = sphi 0, %s22
    %s39 = sphi 0, %s23
    %s43 = sphi 0, %s43
    %s45 = sphi 0, %s43
    %s46 = sphi 0, %s45
    %s60 = sphi 0, %s46
    %s64 = sphi 0, %s64
    %s66 = sphi 0, %s64
    %s67 = sphi 0, %s66
    %s81 = sphi 0, %s67
    %s87 = sphi 0, %s89
    %s90 = sphi 0, %s87
    %s91 = sphi 0, %s90
    %s107 = sphi 0, %s91
  $region4: #{_lambda_.66} parent=0 // loop_header_branch
    %12 = sbr.rel (%p10) target = $region8
  $region5: #{_lambda_.66} parent=0 // loop_body
    %s14 = ssub.s32 %s9, 1
    %s15 = ssub.s32 %s9, 2
    %s16 = sadd.s32 %s9, 1
    %s17 = ssub.s32 %s9, %s16
    %p18 = scmp.eq.s32.totalorder %s17, 0
    %s20 = sadd.s32 %s19, 1
    %s21 = scalar_select %p18, %s19, %s20
    %p24 = pneg %p18
    %p25 = scmp.eq.s32.totalorder %s9, 1
    %p26 = por %p24, %p25
    %p27 = scmp.ne.s32.totalorder %s19, %s22
    %p28 = scmp.eq.s32.totalorder %s9, 0
    %p29 = por %p27, %p28
    %p30 = scmp.ne.s32.totalorder %s19, %s22
    %p31 = scmp.eq.s32.totalorder %s14, 1
    %p32 = por %p30, %p31
    %p33 = scmp.ne.s32.totalorder %s22, %s23
    %p34 = scmp.eq.s32.totalorder %s14, 0
    %p35 = por %p33, %p34
    %p36 = scmp.ne.s32.totalorder %s22, %s23
    %p37 = scmp.eq.s32.totalorder %s15, 1
    %p38 = por %p36, %p37
    %p40 = scmp.ne.s32.totalorder %s23, %s39
    %p41 = scmp.eq.s32.totalorder %s15, 0
    %p42 = por %p40, %p41
    %s44 = sadd.s32 %s43, 1
    %p47 = scmp.eq.s32.totalorder %s9, 1
    %p48 = scmp.ne.s32.totalorder %s43, %s45
    %p49 = scmp.eq.s32.totalorder %s9, 0
    %p50 = por %p48, %p49
    %p51 = scmp.ne.s32.totalorder %s43, %s45
    %p52 = scmp.eq.s32.totalorder %s14, 1
    %p53 = por %p51, %p52
    %p54 = scmp.ne.s32.totalorder %s45, %s46
    %p55 = scmp.eq.s32.totalorder %s14, 0
    %p56 = por %p54, %p55
    %p57 = scmp.ne.s32.totalorder %s45, %s46
    %p58 = scmp.eq.s32.totalorder %s15, 1
    %p59 = por %p57, %p58
    %p61 = scmp.ne.s32.totalorder %s46, %s60
    %p62 = scmp.eq.s32.totalorder %s15, 0
    %p63 = por %p61, %p62
    %s65 = sadd.s32 %s64, 1
    %p68 = scmp.eq.s32.totalorder %s9, 1
    %p69 = scmp.ne.s32.totalorder %s64, %s66
    %p70 = scmp.eq.s32.totalorder %s9, 0
    %p71 = por %p69, %p70
    %p72 = scmp.ne.s32.totalorder %s64, %s66
    %p73 = scmp.eq.s32.totalorder %s14, 1
    %p74 = por %p72, %p73
    %p75 = scmp.ne.s32.totalorder %s66, %s67
    %p76 = scmp.eq.s32.totalorder %s14, 0
    %p77 = por %p75, %p76
    %p78 = scmp.ne.s32.totalorder %s66, %s67
    %p79 = scmp.eq.s32.totalorder %s15, 1
    %p80 = por %p78, %p79
    %p82 = scmp.ne.s32.totalorder %s67, %s81
    %p83 = scmp.eq.s32.totalorder %s15, 0
    %p84 = por %p82, %p83
    %s85 = ssub.s32 %s9, %s16
    %p86 = scmp.eq.s32.totalorder %s85, 0
    %s88 = sadd.s32 %s87, 1
    %s89 = scalar_select %p86, %s87, %s88
    %p92 = pneg %p86
    %p93 = scmp.eq.s32.totalorder %s9, 1
    %p94 = por %p92, %p93
    %p95 = scmp.ne.s32.totalorder %s87, %s90
    %p96 = scmp.eq.s32.totalorder %s9, 0
    %p97 = por %p95, %p96
    %p98 = scmp.ne.s32.totalorder %s87, %s90
    %p99 = scmp.eq.s32.totalorder %s14, 1
    %p100 = por %p98, %p99
    %p101 = scmp.ne.s32.totalorder %s90, %s91
    %p102 = scmp.eq.s32.totalorder %s14, 0
    %p103 = por %p101, %p102
    %p104 = scmp.ne.s32.totalorder %s90, %s91
    %p105 = scmp.eq.s32.totalorder %s15, 1
    %p106 = por %p104, %p105
    %p108 = scmp.ne.s32.totalorder %s91, %s107
    %p109 = scmp.eq.s32.totalorder %s15, 0
    %p110 = por %p108, %p109
    %p111 = scmp.le.s32.totalorder 1, %s9
    %p112 = scmp.lt.s32.totalorder %s9, 3
    %p113 = pnand %p111, %p112
    %p114 = pneg %p113
    // Predicated region
    $region9: #{_lambda_.66} parent=5 // pred_check
      _
    $region10: #{_lambda_.66} parent=5 // pred_check_branch
      %116 = sbr.rel (%p113) target = $region12
    $region11: #{_lambda_.66} parent=5 // pred_region
      %s117 = ssub.s32 %s9, 1
      // Predicated region
      $region13: #{_lambda_.66} parent=11 // pred_check
        %p118 = pneg %p56
      $region14: #{_lambda_.66} parent=11 // pred_check_branch
        %120 = sbr.rel (%p118) target = $region16
      $region15: #{_lambda_.66} parent=11 // pred_region
        _
      $region16: #{_lambda_.66} parent=11 // pred_fallthru
        _
      // Predicated region
      $region17: #{_lambda_.66} parent=11 // pred_check
        %p121 = pneg %p77
      $region18: #{_lambda_.66} parent=11 // pred_check_branch
        %123 = sbr.rel (%p121) target = $region20
      $region19: #{_lambda_.66} parent=11 // pred_region
        _
      $region20: #{_lambda_.66} parent=11 // pred_fallthru
        _
    $region12: #{_lambda_.66} parent=5 // pred_fallthru
      _
    %p124 = scmp.lt.s32.totalorder %s9, 2
    // Predicated region
    $region21: #{_lambda_.66} parent=5 // pred_check
      %p125 = pneg %p124
    $region22: #{_lambda_.66} parent=5 // pred_check_branch
      %127 = sbr.rel (%p125) target = $region24
    $region23: #{_lambda_.66} parent=5 // pred_region
      // Predicated region
      $region25: #{_lambda_.66} parent=23 // pred_check
        %p128 = pneg %p29
      $region26: #{_lambda_.66} parent=23 // pred_check_branch
        %130 = sbr.rel (%p128) target = $region28
      $region27: #{_lambda_.66} parent=23 // pred_region
        %p131 = scmp.lt.s32.totalorder %s9, 1
        %s132 = scalar_select %p131, %s9, 1
        %s133 = smul.addr %s132, 6
        %s134 = smul.addr %s133, 8
        %s135 = scalar_lea.vmem %s0, %s134
      $region28: #{_lambda_.66} parent=23 // pred_fallthru
        _
    $region24: #{_lambda_.66} parent=5 // pred_fallthru
      _
    %p136 = scmp.le.s32.totalorder 1, %s9
    %p137 = scmp.lt.s32.totalorder %s9, 3
    %p138 = pnand %p136, %p137
    %p139 = pneg %p138
    // Predicated region
    $region29: #{_lambda_.66} parent=5 // pred_check
      _
    $region30: #{_lambda_.66} parent=5 // pred_check_branch
      %141 = sbr.rel (%p138) target = $region32
    $region31: #{_lambda_.66} parent=5 // pred_region
      %s142 = ssub.s32 %s9, 1
      %p143 = scmp.lt.s32.totalorder %s14, 1
      %s144 = scalar_select %p143, %s14, 1
      %s145 = smul.addr %s144, 6
      %s146 = smul.addr %s145, 8
      %s147 = scalar_lea.vmem %s0, %s146
      %p148 = pneg %p35
      %p149 = pneg %p32
      %p150 = pneg %p56
      %p151 = pneg %p53
      %p152 = pneg %p77
      %p153 = pneg %p74
      %p154 = pneg %p103
      %p155 = pneg %p100
      %p156 = scmp.lt.s32.totalorder %s14, 1
      %s157 = scalar_select %p156, %s14, 1
      %s158 = smul.addr %s157, 4
      %s159 = smul.addr %s158, 4
      %s160 = scalar_lea.vmem %s3, %s159
      %p161 = scmp.lt.s32.totalorder %s14, 1
      %s162 = scalar_select %p161, %s14, 1
      %s163 = smul.addr %s162, 6
      %s164 = smul.addr %s163, 8
      %s165 = scalar_lea.vmem %s0, %s164
      %p166 = scmp.lt.s32.totalorder %s14, 1
      %s167 = scalar_select %p166, %s14, 1
      %s168 = smul.addr %s167, 4
      %s169 = smul.addr %s168, 4
      %s170 = scalar_lea.vmem %s3, %s169
      %v171 = vld [vmem:[%s165] sm:$0x3f]
      %v172 = vld [vmem:[%s165 + $0x8] sm:$0x3f]
      %v173 = vld [vmem:[%s165 + $0x10] sm:$0x3f]
      %v174 = vld [vmem:[%s165 + $0x18] sm:$0x3f]
      %v175 = vld [vmem:[%s165 + $0x20] sm:$0x3f]
      %v176 = vld [vmem:[%s165 + $0x28] sm:$0x3f]
      %v177 = vld [vmem:[%s1] sm:$0x1]
      %v178 = vld [vmem:[%s1 + $0x1] sm:$0x1]
      %v179 = vld [vmem:[%s1 + $0x2] sm:$0x1]
      %v180 = vld [vmem:[%s1 + $0x3] sm:$0x1]
      %v181 = vld [vmem:[%s1 + $0x4] sm:$0x1]
      %v182 = vld [vmem:[%s1 + $0x5] sm:$0x1]
      %v183 = vld [vmem:[%s1 + $0x6] sm:$0x1]
      %v184 = vld [vmem:[%s1 + $0x7] sm:$0x1]
      %v185 = vld [vmem:[%s1 + $0x8] sm:$0x1]
      %v186 = vld [vmem:[%s2] sm:$0x1]
      %v188 = vlaneseq
      %v189 = vshrl.u32 %v188, 7
      %v190 = vsub.s32 0, %v189
      %v191 = vrot.slane %v177, %v190
      %v193 = vmul.f32 %v171, %v191
      %v194 = vmul.f32 %v172, %v191
      %v195 = vmul.f32 %v173, %v191
      %v196 = vmul.f32 %v174, %v191
      %v198 = vlaneseq
      %v199 = vshrl.u32 %v198, 7
      %v200 = vsub.s32 0, %v199
      %v201 = vrot.slane %v178, %v200
      %v203 = vmul.f32 %v171, %v201
      %v204 = vmul.f32 %v172, %v201
      %v205 = vmul.f32 %v173, %v201
      %v206 = vmul.f32 %v174, %v201
      %v211 = vrot.slane %v203, 1
      %v212 = vrot.slane %v204, 1
      %v213 = vrot.slane %v205, 1
      %v214 = vrot.slane %v206, 1
      %v219 = vadd.f32 %v193, %v211
      %v220 = vadd.f32 %v194, %v212
      %v221 = vadd.f32 %v195, %v213
      %v222 = vadd.f32 %v196, %v214
      %v224 = vlaneseq
      %v225 = vshrl.u32 %v224, 7
      %v226 = vsub.s32 0, %v225
      %v227 = vrot.slane %v179, %v226
      %v229 = vmul.f32 %v171, %v227
      %v230 = vmul.f32 %v172, %v227
      %v231 = vmul.f32 %v173, %v227
      %v232 = vmul.f32 %v174, %v227
      %v237 = vrot.slane %v229, 2
      %v238 = vrot.slane %v230, 2
      %v239 = vrot.slane %v231, 2
      %v240 = vrot.slane %v232, 2
      %v245 = vadd.f32 %v219, %v237
      %v246 = vadd.f32 %v220, %v238
      %v247 = vadd.f32 %v221, %v239
      %v248 = vadd.f32 %v222, %v240
      %v250 = vlaneseq
      %v251 = vshrl.u32 %v250, 7
      %v252 = vsub.s32 0, %v251
      %v253 = vrot.slane %v180, %v252
      %v255 = vmul.f32 %v172, %v253
      %v256 = vmul.f32 %v173, %v253
      %v257 = vmul.f32 %v174, %v253
      %v258 = vmul.f32 %v175, %v253
      %v259 = vadd.f32 %v245, %v255
      %v260 = vadd.f32 %v246, %v256
      %v261 = vadd.f32 %v247, %v257
      %v262 = vadd.f32 %v248, %v258
      %v264 = vlaneseq
      %v265 = vshrl.u32 %v264, 7
      %v266 = vsub.s32 0, %v265
      %v267 = vrot.slane %v181, %v266
      %v269 = vmul.f32 %v172, %v267
      %v270 = vmul.f32 %v173, %v267
      %v271 = vmul.f32 %v174, %v267
      %v272 = vmul.f32 %v175, %v267
      %v277 = vrot.slane %v269, 1
      %v278 = vrot.slane %v270, 1
      %v279 = vrot.slane %v271, 1
      %v280 = vrot.slane %v272, 1
      %v285 = vadd.f32 %v259, %v277
      %v286 = vadd.f32 %v260, %v278
      %v287 = vadd.f32 %v261, %v279
      %v288 = vadd.f32 %v262, %v280
      %v290 = vlaneseq
      %v291 = vshrl.u32 %v290, 7
      %v292 = vsub.s32 0, %v291
      %v293 = vrot.slane %v182, %v292
      %v295 = vmul.f32 %v172, %v293
      %v296 = vmul.f32 %v173, %v293
      %v297 = vmul.f32 %v174, %v293
      %v298 = vmul.f32 %v175, %v293
      %v303 = vrot.slane %v295, 2
      %v304 = vrot.slane %v296, 2
      %v305 = vrot.slane %v297, 2
      %v306 = vrot.slane %v298, 2
      %v311 = vadd.f32 %v285, %v303
      %v312 = vadd.f32 %v286, %v304
      %v313 = vadd.f32 %v287, %v305
      %v314 = vadd.f32 %v288, %v306
      %v316 = vlaneseq
      %v317 = vshrl.u32 %v316, 7
      %v318 = vsub.s32 0, %v317
      %v319 = vrot.slane %v183, %v318
      %v321 = vmul.f32 %v173, %v319
      %v322 = vmul.f32 %v174, %v319
      %v323 = vmul.f32 %v175, %v319
      %v324 = vmul.f32 %v176, %v319
      %v325 = vadd.f32 %v311, %v321
      %v326 = vadd.f32 %v312, %v322
      %v327 = vadd.f32 %v313, %v323
      %v328 = vadd.f32 %v314, %v324
      %v330 = vlaneseq
      %v331 = vshrl.u32 %v330, 7
      %v332 = vsub.s32 0, %v331
      %v333 = vrot.slane %v184, %v332
      %v335 = vmul.f32 %v173, %v333
      %v336 = vmul.f32 %v174, %v333
      %v337 = vmul.f32 %v175, %v333
      %v338 = vmul.f32 %v176, %v333
      %v343 = vrot.slane %v335, 1
      %v344 = vrot.slane %v336, 1
      %v345 = vrot.slane %v337, 1
      %v346 = vrot.slane %v338, 1
      %v351 = vadd.f32 %v325, %v343
      %v352 = vadd.f32 %v326, %v344
      %v353 = vadd.f32 %v327, %v345
      %v354 = vadd.f32 %v328, %v346
      %v356 = vlaneseq
      %v357 = vshrl.u32 %v356, 7
      %v358 = vsub.s32 0, %v357
      %v359 = vrot.slane %v185, %v358
      %v361 = vmul.f32 %v173, %v359
      %v362 = vmul.f32 %v174, %v359
      %v363 = vmul.f32 %v175, %v359
      %v364 = vmul.f32 %v176, %v359
      %v369 = vrot.slane %v361, 2
      %v370 = vrot.slane %v362, 2
      %v371 = vrot.slane %v363, 2
      %v372 = vrot.slane %v364, 2
      %v377 = vadd.f32 %v351, %v369
      %v378 = vadd.f32 %v352, %v370
      %v379 = vadd.f32 %v353, %v371
      %v380 = vadd.f32 %v354, %v372
      %v382 = vlaneseq
      %v383 = vshrl.u32 %v382, 7
      %v384 = vsub.s32 0, %v383
      %v385 = vrot.slane %v186, %v384
      %v387 = vadd.f32 %v377, %v385
      %v388 = vadd.f32 %v378, %v385
      %v389 = vadd.f32 %v379, %v385
      %v390 = vadd.f32 %v380, %v385
      %vm391 = vcmask 470016
      %392 = vst.msk [vmem:[%s170] sm:$0xf] %vm391, %v387
      %393 = vst.msk [vmem:[%s170 + $0x4] sm:$0xf] %vm391, %v388
      %394 = vst.msk [vmem:[%s170 + $0x8] sm:$0xf] %vm391, %v389
      %395 = vst.msk [vmem:[%s170 + $0xc] sm:$0xf] %vm391, %v390
      %p396 = scmp.lt.s32.totalorder %s14, 1
      %s397 = scalar_select %p396, %s14, 1
      %s398 = smul.addr %s397, 4
      %s399 = smul.addr %s398, 4
      %s400 = scalar_lea.vmem %s3, %s399
      // Predicated region
      $region33: #{_lambda_.66} parent=31 // pred_check
        %p401 = pneg %p100
      $region34: #{_lambda_.66} parent=31 // pred_check_branch
        %403 = sbr.rel (%p401) target = $region36
      $region35: #{_lambda_.66} parent=31 // pred_region
        _
      $region36: #{_lambda_.66} parent=31 // pred_fallthru
        _
    $region32: #{_lambda_.66} parent=5 // pred_fallthru
      _
    %p404 = scmp.le.s32.totalorder 2, %s9
    // Predicated region
    $region37: #{_lambda_.66} parent=5 // pred_check
      %p405 = pneg %p404
    $region38: #{_lambda_.66} parent=5 // pred_check_branch
      %407 = sbr.rel (%p405) target = $region40
    $region39: #{_lambda_.66} parent=5 // pred_region
      %s408 = ssub.s32 %s9, 2
      // Predicated region
      $region41: #{_lambda_.66} parent=39 // pred_check
        %p409 = pneg %p106
      $region42: #{_lambda_.66} parent=39 // pred_check_branch
        %411 = sbr.rel (%p409) target = $region44
      $region43: #{_lambda_.66} parent=39 // pred_region
        %p412 = scmp.lt.s32.totalorder %s15, 1
        %s413 = scalar_select %p412, %s15, 1
        %s414 = smul.addr %s413, 4
        %s415 = smul.addr %s414, 4
        %s416 = scalar_lea.vmem %s3, %s415
      $region44: #{_lambda_.66} parent=39 // pred_fallthru
        _
    $region40: #{_lambda_.66} parent=5 // pred_fallthru
      _
  $region6: #{_lambda_.66} parent=0 // loop_footer
    %s13 = sadd.s32 1, %s9
  $region7: #{_lambda_.66} parent=0 // loop_footer_branch
    %8 = sbr.rel target = $region3
  $region8: #{_lambda_.66} parent=0 // loop_exit
    _

// kernel: _lambda_.76
$region0: #{_lambda_.76}
  #allocation0 [shape = 'u32[]', space=smem, size = 0x4, offset = 0x4, fixed_abs, tag = 'smem constant byte address 0x4 - core index']
  #allocation1 [shape = 'u32[144,128]{1,0:T(1,128)}', space=vmem, size = 0x12000, scoped, tag = 'internal scratch']
  %s0 = inlined_call_operand.vmem [shape: f32[32,116], index: 0, kind: input, shape index: {}]
  %s1 = inlined_call_operand.vmem [shape: bf16[116,116], index: 1, kind: input, shape index: {}]
  %s2 = inlined_call_operand.vmem [shape: f32[1,116], index: 2, kind: input, shape index: {}]
  %s3 = inlined_call_operand.vmem [shape: f32[32,116], index: 3, kind: output, shape index: {}]
  %s4 = sld [smem:[#allocation0]]
  $region22: #{_lambda_.76} parent=0
    _
  %s6 = ssub.s32 1, %s4
  %s7 = scalar_select 0, %s6, %s4
  // Predicated region
  $region2: #{_lambda_.76} parent=0 // pred_check
    _
  $region3: #{_lambda_.76} parent=0 // pred_check_branch
    %9 = sbr.rel (0) target = $region5
  $region4: #{_lambda_.76} parent=0 // pred_region
    _
  $region5: #{_lambda_.76} parent=0 // pred_fallthru
    _
  // Predicated region
  $region6: #{_lambda_.76} parent=0 // pred_check
    _
  $region7: #{_lambda_.76} parent=0 // pred_check_branch
    %11 = sbr.rel (0) target = $region9
  $region8: #{_lambda_.76} parent=0 // pred_region
    _
  $region9: #{_lambda_.76} parent=0 // pred_fallthru
    _
  // Predicated region
  $region10: #{_lambda_.76} parent=0 // pred_check
    _
  $region11: #{_lambda_.76} parent=0 // pred_check_branch
    %13 = sbr.rel (0) target = $region13
  $region12: #{_lambda_.76} parent=0 // pred_region
    _
  $region13: #{_lambda_.76} parent=0 // pred_fallthru
    _
  %v15 = vld [vmem:[%s0] sm:$0xff]
  %v16 = vld [vmem:[%s0 + $0x8] sm:$0xff]
  %v17 = vld [vmem:[%s0 + $0x10] sm:$0xff]
  %v18 = vld [vmem:[%s0 + $0x18] sm:$0xff]
  %v19 = vpack.c.bf16 %v16, %v15
  %v20 = vpack.c.bf16 %v18, %v17
  %v21 = vld [vmem:[%s1] sm:$0xf]
  %v22 = vld [vmem:[%s1 + $0x4] sm:$0xf]
  %v23 = vld [vmem:[%s1 + $0x8] sm:$0xf]
  %v24 = vld [vmem:[%s1 + $0xc] sm:$0xf]
  %v25 = vld [vmem:[%s1 + $0x10] sm:$0xf]
  %v26 = vld [vmem:[%s1 + $0x14] sm:$0xf]
  %v27 = vld [vmem:[%s1 + $0x18] sm:$0xf]
  %v28 = vld [vmem:[%s1 + $0x1c] sm:$0xf]
  %v29 = vld [vmem:[%s1 + $0x20] sm:$0xf]
  %v30 = vld [vmem:[%s1 + $0x24] sm:$0xf]
  %v31 = vld [vmem:[%s1 + $0x28] sm:$0xf]
  %v32 = vld [vmem:[%s1 + $0x2c] sm:$0xf]
  %v33 = vld [vmem:[%s1 + $0x30] sm:$0xf]
  %v34 = vld [vmem:[%s1 + $0x34] sm:$0xf]
  %v35 = vld [vmem:[%s1 + $0x38] sm:$0x3]
  %v36 = vld [vmem:[%s2] sm:$0x1]
  %v38 = vlaneseq
  %v39 = vshrl.u32 %v38, 7
  %v40 = vsub.s32 0, %v39
  %v41 = vrot.slane %v36, %v40
  %v58 = vunpack.c.l.b16 %v21
  %v59 = vunpack.c.l.b16 %v22
  %v60 = vunpack.c.l.b16 %v23
  %v61 = vunpack.c.l.b16 %v24
  %v62 = vunpack.c.l.b16 %v25
  %v63 = vunpack.c.l.b16 %v26
  %v64 = vunpack.c.l.b16 %v27
  %v65 = vunpack.c.l.b16 %v28
  %v66 = vunpack.c.l.b16 %v29
  %v67 = vunpack.c.l.b16 %v30
  %v68 = vunpack.c.l.b16 %v31
  %v69 = vunpack.c.l.b16 %v32
  %v70 = vunpack.c.l.b16 %v33
  %v71 = vunpack.c.l.b16 %v34
  %v72 = vunpack.c.l.b16 %v35
  %v73 = vpack.c.b16 %v59, %v58
  %v74 = vpack.c.b16 %v61, %v60
  %v75 = vpack.c.b16 %v63, %v62
  %v76 = vpack.c.b16 %v65, %v64
  %v77 = vpack.c.b16 %v67, %v66
  %v78 = vpack.c.b16 %v69, %v68
  %v79 = vpack.c.b16 %v71, %v70
  %v80 = vpack.c.b16 %v72, %v72
  %vm88 = vcmask 949248
  %v90 = vsel %vm88, %v19, 0
  %v93 = vsel %vm88, %v20, 0
  %vm95 = vcmask 1041408
  %v97 = vsel %vm95, %v80, 0
  %99 = vmatprep.subr.bf16.mxu0 0
  %100 = vmatpush1.bf16.msra.mxu0 %v97
  %101 = vmatprep.subr.bf16.mxu0 0
  %102 = vmatpush1.bf16.msra.mxu0 %v79
  %103 = vmatprep.subr.bf16.mxu0 0
  %104 = vmatpush1.bf16.msra.mxu0 %v78
  %105 = vmatprep.subr.bf16.mxu0 0
  %106 = vmatpush1.bf16.msra.mxu0 %v77
  %107 = vmatprep.subr.bf16.mxu0 0
  %108 = vmatpush1.bf16.msra.mxu0 %v76
  %109 = vmatprep.subr.bf16.mxu0 0
  %110 = vmatpush1.bf16.msra.mxu0 %v75
  %111 = vmatprep.subr.bf16.mxu0 0
  %112 = vmatpush1.bf16.msra.mxu0 %v74
  %113 = vmatprep.subr.bf16.mxu0 0
  %114 = vmatpush1.bf16.msra.mxu0 %v73
  %115 = vmatprep.subr.bf16.mxu0 0
  %116 = vmatpush2.bf16.msra.mxu0 0
  %117 = vmatprep.subr.bf16.mxu0 0
  %118 = vmatpush2.bf16.msra.mxu0 0
  %119 = vmatprep.subr.bf16.mxu0 0
  %120 = vmatpush2.bf16.msra.mxu0 0
  %121 = vmatprep.subr.bf16.mxu0 0
  %122 = vmatpush2.bf16.msra.mxu0 0
  %123 = vmatprep.subr.bf16.mxu0 0
  %124 = vmatpush2.bf16.msra.mxu0 0
  %125 = vmatprep.subr.bf16.mxu0 0
  %126 = vmatpush2.bf16.msra.mxu0 0
  %127 = vmatprep.subr.bf16.mxu0 0
  %128 = vmatpush2.bf16.msra.mxu0 0
  %129 = vmatprep.subr.bf16.mxu0 0
  %130 = vmatpush2.bf16.msra.mxu0 0
  %131 = vmatprep.mubr.bf16.mxu0 0
  %132 = vmatmul.mubr.bf16.gmra.mxu0 %v90
  %v133 = vpop.f32.mrf.mxu0
  %v134 = vadd.f32 %v41, %v133
  %v135 = vpop.f32.mrf.mxu0
  %v136 = vpop.f32.mrf.mxu0
  %v137 = vadd.f32 %v41, %v136
  %v138 = vpop.f32.mrf.mxu0
  %139 = vmatprep.mubr.bf16.mxu0 0
  %140 = vmatmul.mubr.bf16.gmra.mxu0 %v93
  %v141 = vpop.f32.mrf.mxu0
  %v142 = vadd.f32 %v41, %v141
  %v143 = vpop.f32.mrf.mxu0
  %v144 = vpop.f32.mrf.mxu0
  %v145 = vadd.f32 %v41, %v144
  %v146 = vpop.f32.mrf.mxu0
  %147 = vdwg.mxu0
  %v148 = vmax.f32 %v134, 0.0
  %v149 = vmax.f32 %v137, 0.0
  %v150 = vmax.f32 %v142, 0.0
  %v151 = vmax.f32 %v145, 0.0
  %152 = vst.msk [vmem:[%s3] sm:$0xff] %vm88, %v148
  %153 = vst.msk [vmem:[%s3 + $0x8] sm:$0xff] %vm88, %v149
  %154 = vst.msk [vmem:[%s3 + $0x10] sm:$0xff] %vm88, %v150
  %155 = vst.msk [vmem:[%s3 + $0x18] sm:$0xff] %vm88, %v151
  // Predicated region
  $region14: #{_lambda_.76} parent=0 // pred_check
    _
  $region15: #{_lambda_.76} parent=0 // pred_check_branch
    %157 = sbr.rel (0) target = $region17
  $region16: #{_lambda_.76} parent=0 // pred_region
    _
  $region17: #{_lambda_.76} parent=0 // pred_fallthru
    _
  // Predicated region
  $region18: #{_lambda_.76} parent=0 // pred_check
    _
  $region19: #{_lambda_.76} parent=0 // pred_check_branch
    %159 = sbr.rel (0) target = $region21
  $region20: #{_lambda_.76} parent=0 // pred_region
    _
  $region21: #{_lambda_.76} parent=0 // pred_fallthru
    _

// kernel: _lambda_.77
$region0: #{_lambda_.77}
  #allocation0 [shape = 'u32[]', space=smem, size = 0x4, offset = 0x4, fixed_abs, tag = 'smem constant byte address 0x4 - core index']
  #allocation1 [shape = 'u32[144,128]{1,0:T(1,128)}', space=vmem, size = 0x12000, scoped, tag = 'internal scratch']
  %s0 = inlined_call_operand.vmem [shape: f32[2,12,3,116], index: 0, kind: input, shape index: {}]
  %s1 = inlined_call_operand.vmem [shape: f32[9,1,116], index: 1, kind: input, shape index: {}]
  %s2 = inlined_call_operand.vmem [shape: f32[1,1,116], index: 2, kind: input, shape index: {}]
  %s3 = inlined_call_operand.vmem [shape: f32[2,2,2,116], index: 3, kind: output, shape index: {}]
  %s4 = sld [smem:[#allocation0]]
  $region45: #{_lambda_.77} parent=0
    _
  %s6 = ssub.s32 1, %s4
  %s7 = scalar_select 0, %s6, %s4
  loop: start=0, step=1, limit=4
  $region2: #{_lambda_.77} parent=0 // loop_pre_header
    _
  $region3: #{_lambda_.77} parent=0 // loop_header
    %s9 = sphi 0, %s13
    %p10 = scmp.ge.s32.totalorder %s9, 4
    %s19 = sphi 0, %s21
    %s22 = sphi 0, %s19
    %s23 = sphi 0, %s22
    %s39 = sphi 0, %s23
    %s43 = sphi 0, %s43
    %s45 = sphi 0, %s43
    %s46 = sphi 0, %s45
    %s60 = sphi 0, %s46
    %s64 = sphi 0, %s64
    %s66 = sphi 0, %s64
    %s67 = sphi 0, %s66
    %s81 = sphi 0, %s67
    %s87 = sphi 0, %s89
    %s90 = sphi 0, %s87
    %s91 = sphi 0, %s90
    %s107 = sphi 0, %s91
  $region4: #{_lambda_.77} parent=0 // loop_header_branch
    %12 = sbr.rel (%p10) target = $region8
  $region5: #{_lambda_.77} parent=0 // loop_body
    %s14 = ssub.s32 %s9, 1
    %s15 = ssub.s32 %s9, 2
    %s16 = sadd.s32 %s9, 1
    %s17 = ssub.s32 %s9, %s16
    %p18 = scmp.eq.s32.totalorder %s17, 0
    %s20 = sadd.s32 %s19, 1
    %s21 = scalar_select %p18, %s19, %s20
    %p24 = pneg %p18
    %p25 = scmp.eq.s32.totalorder %s9, 1
    %p26 = por %p24, %p25
    %p27 = scmp.ne.s32.totalorder %s19, %s22
    %p28 = scmp.eq.s32.totalorder %s9, 0
    %p29 = por %p27, %p28
    %p30 = scmp.ne.s32.totalorder %s19, %s22
    %p31 = scmp.eq.s32.totalorder %s14, 1
    %p32 = por %p30, %p31
    %p33 = scmp.ne.s32.totalorder %s22, %s23
    %p34 = scmp.eq.s32.totalorder %s14, 0
    %p35 = por %p33, %p34
    %p36 = scmp.ne.s32.totalorder %s22, %s23
    %p37 = scmp.eq.s32.totalorder %s15, 1
    %p38 = por %p36, %p37
    %p40 = scmp.ne.s32.totalorder %s23, %s39
    %p41 = scmp.eq.s32.totalorder %s15, 0
    %p42 = por %p40, %p41
    %s44 = sadd.s32 %s43, 1
    %p47 = scmp.eq.s32.totalorder %s9, 1
    %p48 = scmp.ne.s32.totalorder %s43, %s45
    %p49 = scmp.eq.s32.totalorder %s9, 0
    %p50 = por %p48, %p49
    %p51 = scmp.ne.s32.totalorder %s43, %s45
    %p52 = scmp.eq.s32.totalorder %s14, 1
    %p53 = por %p51, %p52
    %p54 = scmp.ne.s32.totalorder %s45, %s46
    %p55 = scmp.eq.s32.totalorder %s14, 0
    %p56 = por %p54, %p55
    %p57 = scmp.ne.s32.totalorder %s45, %s46
    %p58 = scmp.eq.s32.totalorder %s15, 1
    %p59 = por %p57, %p58
    %p61 = scmp.ne.s32.totalorder %s46, %s60
    %p62 = scmp.eq.s32.totalorder %s15, 0
    %p63 = por %p61, %p62
    %s65 = sadd.s32 %s64, 1
    %p68 = scmp.eq.s32.totalorder %s9, 1
    %p69 = scmp.ne.s32.totalorder %s64, %s66
    %p70 = scmp.eq.s32.totalorder %s9, 0
    %p71 = por %p69, %p70
    %p72 = scmp.ne.s32.totalorder %s64, %s66
    %p73 = scmp.eq.s32.totalorder %s14, 1
    %p74 = por %p72, %p73
    %p75 = scmp.ne.s32.totalorder %s66, %s67
    %p76 = scmp.eq.s32.totalorder %s14, 0
    %p77 = por %p75, %p76
    %p78 = scmp.ne.s32.totalorder %s66, %s67
    %p79 = scmp.eq.s32.totalorder %s15, 1
    %p80 = por %p78, %p79
    %p82 = scmp.ne.s32.totalorder %s67, %s81
    %p83 = scmp.eq.s32.totalorder %s15, 0
    %p84 = por %p82, %p83
    %s85 = ssub.s32 %s9, %s16
    %p86 = scmp.eq.s32.totalorder %s85, 0
    %s88 = sadd.s32 %s87, 1
    %s89 = scalar_select %p86, %s87, %s88
    %p92 = pneg %p86
    %p93 = scmp.eq.s32.totalorder %s9, 1
    %p94 = por %p92, %p93
    %p95 = scmp.ne.s32.totalorder %s87, %s90
    %p96 = scmp.eq.s32.totalorder %s9, 0
    %p97 = por %p95, %p96
    %p98 = scmp.ne.s32.totalorder %s87, %s90
    %p99 = scmp.eq.s32.totalorder %s14, 1
    %p100 = por %p98, %p99
    %p101 = scmp.ne.s32.totalorder %s90, %s91
    %p102 = scmp.eq.s32.totalorder %s14, 0
    %p103 = por %p101, %p102
    %p104 = scmp.ne.s32.totalorder %s90, %s91
    %p105 = scmp.eq.s32.totalorder %s15, 1
    %p106 = por %p104, %p105
    %p108 = scmp.ne.s32.totalorder %s91, %s107
    %p109 = scmp.eq.s32.totalorder %s15, 0
    %p110 = por %p108, %p109
    %p111 = scmp.le.s32.totalorder 1, %s9
    %p112 = scmp.lt.s32.totalorder %s9, 3
    %p113 = pnand %p111, %p112
    %p114 = pneg %p113
    // Predicated region
    $region9: #{_lambda_.77} parent=5 // pred_check
      _
    $region10: #{_lambda_.77} parent=5 // pred_check_branch
      %116 = sbr.rel (%p113) target = $region12
    $region11: #{_lambda_.77} parent=5 // pred_region
      %s117 = ssub.s32 %s9, 1
      // Predicated region
      $region13: #{_lambda_.77} parent=11 // pred_check
        %p118 = pneg %p56
      $region14: #{_lambda_.77} parent=11 // pred_check_branch
        %120 = sbr.rel (%p118) target = $region16
      $region15: #{_lambda_.77} parent=11 // pred_region
        _
      $region16: #{_lambda_.77} parent=11 // pred_fallthru
        _
      // Predicated region
      $region17: #{_lambda_.77} parent=11 // pred_check
        %p121 = pneg %p77
      $region18: #{_lambda_.77} parent=11 // pred_check_branch
        %123 = sbr.rel (%p121) target = $region20
      $region19: #{_lambda_.77} parent=11 // pred_region
        _
      $region20: #{_lambda_.77} parent=11 // pred_fallthru
        _
    $region12: #{_lambda_.77} parent=5 // pred_fallthru
      _
    %p124 = scmp.lt.s32.totalorder %s9, 2
    // Predicated region
    $region21: #{_lambda_.77} parent=5 // pred_check
      %p125 = pneg %p124
    $region22: #{_lambda_.77} parent=5 // pred_check_branch
      %127 = sbr.rel (%p125) target = $region24
    $region23: #{_lambda_.77} parent=5 // pred_region
      // Predicated region
      $region25: #{_lambda_.77} parent=23 // pred_check
        %p128 = pneg %p29
      $region26: #{_lambda_.77} parent=23 // pred_check_branch
        %130 = sbr.rel (%p128) target = $region28
      $region27: #{_lambda_.77} parent=23 // pred_region
        %p131 = scmp.lt.s32.totalorder %s9, 1
        %s132 = scalar_select %p131, %s9, 1
        %s133 = smul.addr %s132, 12
        %s134 = smul.addr %s133, 4
        %s135 = scalar_lea.vmem %s0, %s134
      $region28: #{_lambda_.77} parent=23 // pred_fallthru
        _
    $region24: #{_lambda_.77} parent=5 // pred_fallthru
      _
    %p136 = scmp.le.s32.totalorder 1, %s9
    %p137 = scmp.lt.s32.totalorder %s9, 3
    %p138 = pnand %p136, %p137
    %p139 = pneg %p138
    // Predicated region
    $region29: #{_lambda_.77} parent=5 // pred_check
      _
    $region30: #{_lambda_.77} parent=5 // pred_check_branch
      %141 = sbr.rel (%p138) target = $region32
    $region31: #{_lambda_.77} parent=5 // pred_region
      %s142 = ssub.s32 %s9, 1
      %p143 = scmp.lt.s32.totalorder %s14, 1
      %s144 = scalar_select %p143, %s14, 1
      %s145 = smul.addr %s144, 12
      %s146 = smul.addr %s145, 4
      %s147 = scalar_lea.vmem %s0, %s146
      %p148 = pneg %p35
      %p149 = pneg %p32
      %p150 = pneg %p56
      %p151 = pneg %p53
      %p152 = pneg %p77
      %p153 = pneg %p74
      %p154 = pneg %p103
      %p155 = pneg %p100
      %p156 = scmp.lt.s32.totalorder %s14, 1
      %s157 = scalar_select %p156, %s14, 1
      %s158 = smul.addr %s157, 2
      %s159 = smul.addr %s158, 2
      %s160 = scalar_lea.vmem %s3, %s159
      %p161 = scmp.lt.s32.totalorder %s14, 1
      %s162 = scalar_select %p161, %s14, 1
      %s163 = smul.addr %s162, 12
      %s164 = smul.addr %s163, 4
      %s165 = scalar_lea.vmem %s0, %s164
      %p166 = scmp.lt.s32.totalorder %s14, 1
      %s167 = scalar_select %p166, %s14, 1
      %s168 = smul.addr %s167, 2
      %s169 = smul.addr %s168, 2
      %s170 = scalar_lea.vmem %s3, %s169
      %v171 = vld [vmem:[%s165] sm:$0x7]
      %v172 = vld [vmem:[%s165 + $0x4] sm:$0x7]
      %v173 = vld [vmem:[%s165 + $0x8] sm:$0x7]
      %v174 = vld [vmem:[%s165 + $0xc] sm:$0x7]
      %v175 = vld [vmem:[%s165 + $0x10] sm:$0x7]
      %v176 = vld [vmem:[%s165 + $0x14] sm:$0x7]
      %v177 = vld [vmem:[%s165 + $0x18] sm:$0x7]
      %v178 = vld [vmem:[%s165 + $0x1c] sm:$0x7]
      %v179 = vld [vmem:[%s165 + $0x24] sm:$0x7]
      %v180 = vld [vmem:[%s165 + $0x28] sm:$0x7]
      %v181 = vld [vmem:[%s1] sm:$0x1]
      %v182 = vld [vmem:[%s1 + $0x1] sm:$0x1]
      %v183 = vld [vmem:[%s1 + $0x2] sm:$0x1]
      %v184 = vld [vmem:[%s1 + $0x3] sm:$0x1]
      %v185 = vld [vmem:[%s1 + $0x4] sm:$0x1]
      %v186 = vld [vmem:[%s1 + $0x5] sm:$0x1]
      %v187 = vld [vmem:[%s1 + $0x6] sm:$0x1]
      %v188 = vld [vmem:[%s1 + $0x7] sm:$0x1]
      %v189 = vld [vmem:[%s1 + $0x8] sm:$0x1]
      %v190 = vld [vmem:[%s2] sm:$0x1]
      %v192 = vlaneseq
      %v193 = vshrl.u32 %v192, 7
      %v194 = vsub.s32 0, %v193
      %v195 = vrot.slane %v181, %v194
      %v197 = vmul.f32 %v171, %v195
      %v198 = vmul.f32 %v172, %v195
      %v200 = vlaneseq
      %v201 = vshrl.u32 %v200, 7
      %v202 = vsub.s32 0, %v201
      %v203 = vrot.slane %v182, %v202
      %v205 = vmul.f32 %v174, %v203
      %v206 = vmul.f32 %v175, %v203
      %v207 = vadd.f32 %v197, %v205
      %v208 = vadd.f32 %v198, %v206
      %v210 = vlaneseq
      %v211 = vshrl.u32 %v210, 7
      %v212 = vsub.s32 0, %v211
      %v213 = vrot.slane %v183, %v212
      %v215 = vmul.f32 %v171, %v213
      %v216 = vmul.f32 %v172, %v213
      %v219 = vrot.slane %v215, 1
      %v220 = vrot.slane %v216, 1
      %v223 = vadd.f32 %v207, %v219
      %v224 = vadd.f32 %v208, %v220
      %v226 = vlaneseq
      %v227 = vshrl.u32 %v226, 7
      %v228 = vsub.s32 0, %v227
      %v229 = vrot.slane %v184, %v228
      %v231 = vmul.f32 %v177, %v229
      %v232 = vmul.f32 %v178, %v229
      %v233 = vadd.f32 %v223, %v231
      %v234 = vadd.f32 %v224, %v232
      %v236 = vlaneseq
      %v237 = vshrl.u32 %v236, 7
      %v238 = vsub.s32 0, %v237
      %v239 = vrot.slane %v185, %v238
      %v241 = vmul.f32 %v179, %v239
      %v242 = vmul.f32 %v180, %v239
      %v243 = vadd.f32 %v233, %v241
      %v244 = vadd.f32 %v234, %v242
      %v246 = vlaneseq
      %v247 = vshrl.u32 %v246, 7
      %v248 = vsub.s32 0, %v247
      %v249 = vrot.slane %v186, %v248
      %v251 = vmul.f32 %v177, %v249
      %v252 = vmul.f32 %v178, %v249
      %v255 = vrot.slane %v251, 1
      %v256 = vrot.slane %v252, 1
      %v259 = vadd.f32 %v243, %v255
      %v260 = vadd.f32 %v244, %v256
      %v262 = vlaneseq
      %v263 = vshrl.u32 %v262, 7
      %v264 = vsub.s32 0, %v263
      %v265 = vrot.slane %v187, %v264
      %v267 = vmul.f32 %v172, %v265
      %v268 = vmul.f32 %v173, %v265
      %v269 = vadd.f32 %v259, %v267
      %v270 = vadd.f32 %v260, %v268
      %v272 = vlaneseq
      %v273 = vshrl.u32 %v272, 7
      %v274 = vsub.s32 0, %v273
      %v275 = vrot.slane %v188, %v274
      %v277 = vmul.f32 %v175, %v275
      %v278 = vmul.f32 %v176, %v275
      %v279 = vadd.f32 %v269, %v277
      %v280 = vadd.f32 %v270, %v278
      %v282 = vlaneseq
      %v283 = vshrl.u32 %v282, 7
      %v284 = vsub.s32 0, %v283
      %v285 = vrot.slane %v189, %v284
      %v287 = vmul.f32 %v172, %v285
      %v288 = vmul.f32 %v173, %v285
      %v291 = vrot.slane %v287, 1
      %v292 = vrot.slane %v288, 1
      %v295 = vadd.f32 %v279, %v291
      %v296 = vadd.f32 %v280, %v292
      %v298 = vlaneseq
      %v299 = vshrl.u32 %v298, 7
      %v300 = vsub.s32 0, %v299
      %v301 = vrot.slane %v190, %v300
      %v303 = vadd.f32 %v295, %v301
      %v304 = vadd.f32 %v296, %v301
      %vm305 = vcmask 943104
      %306 = vst.msk [vmem:[%s170] sm:$0x3] %vm305, %v303
      %307 = vst.msk [vmem:[%s170 + $0x2] sm:$0x3] %vm305, %v304
      %p308 = scmp.lt.s32.totalorder %s14, 1
      %s309 = scalar_select %p308, %s14, 1
      %s310 = smul.addr %s309, 2
      %s311 = smul.addr %s310, 2
      %s312 = scalar_lea.vmem %s3, %s311
      // Predicated region
      $region33: #{_lambda_.77} parent=31 // pred_check
        %p313 = pneg %p100
      $region34: #{_lambda_.77} parent=31 // pred_check_branch
        %315 = sbr.rel (%p313) target = $region36
      $region35: #{_lambda_.77} parent=31 // pred_region
        _
      $region36: #{_lambda_.77} parent=31 // pred_fallthru
        _
    $region32: #{_lambda_.77} parent=5 // pred_fallthru
      _
    %p316 = scmp.le.s32.totalorder 2, %s9
    // Predicated region
    $region37: #{_lambda_.77} parent=5 // pred_check
      %p317 = pneg %p316
    $region38: #{_lambda_.77} parent=5 // pred_check_branch
      %319 = sbr.rel (%p317) target = $region40
    $region39: #{_lambda_.77} parent=5 // pred_region
      %s320 = ssub.s32 %s9, 2
      // Predicated region
      $region41: #{_lambda_.77} parent=39 // pred_check
        %p321 = pneg %p106
      $region42: #{_lambda_.77} parent=39 // pred_check_branch
        %323 = sbr.rel (%p321) target = $region44
      $region43: #{_lambda_.77} parent=39 // pred_region
        %p324 = scmp.lt.s32.totalorder %s15, 1
        %s325 = scalar_select %p324, %s15, 1
        %s326 = smul.addr %s325, 2
        %s327 = smul.addr %s326, 2
        %s328 = scalar_lea.vmem %s3, %s327
      $region44: #{_lambda_.77} parent=39 // pred_fallthru
        _
    $region40: #{_lambda_.77} parent=5 // pred_fallthru
      _
  $region6: #{_lambda_.77} parent=0 // loop_footer
    %s13 = sadd.s32 1, %s9
  $region7: #{_lambda_.77} parent=0 // loop_footer_branch
    %8 = sbr.rel target = $region3
  $region8: #{_lambda_.77} parent=0 // loop_exit
    _

// kernel: _lambda_.78
$region0: #{_lambda_.78}
  #allocation0 [shape = 'u32[]', space=smem, size = 0x4, offset = 0x4, fixed_abs, tag = 'smem constant byte address 0x4 - core index']
  #allocation1 [shape = 'u32[144,128]{1,0:T(1,128)}', space=vmem, size = 0x12000, scoped, tag = 'internal scratch']
  %s0 = inlined_call_operand.vmem [shape: f32[8,116], index: 0, kind: input, shape index: {}]
  %s1 = inlined_call_operand.vmem [shape: bf16[116,116], index: 1, kind: input, shape index: {}]
  %s2 = inlined_call_operand.vmem [shape: f32[1,116], index: 2, kind: input, shape index: {}]
  %s3 = inlined_call_operand.vmem [shape: f32[8,116], index: 3, kind: output, shape index: {}]
  %s4 = sld [smem:[#allocation0]]
  $region22: #{_lambda_.78} parent=0
    _
  %s6 = ssub.s32 1, %s4
  %s7 = scalar_select 0, %s6, %s4
  // Predicated region
  $region2: #{_lambda_.78} parent=0 // pred_check
    _
  $region3: #{_lambda_.78} parent=0 // pred_check_branch
    %9 = sbr.rel (0) target = $region5
  $region4: #{_lambda_.78} parent=0 // pred_region
    _
  $region5: #{_lambda_.78} parent=0 // pred_fallthru
    _
  // Predicated region
  $region6: #{_lambda_.78} parent=0 // pred_check
    _
  $region7: #{_lambda_.78} parent=0 // pred_check_branch
    %11 = sbr.rel (0) target = $region9
  $region8: #{_lambda_.78} parent=0 // pred_region
    _
  $region9: #{_lambda_.78} parent=0 // pred_fallthru
    _
  // Predicated region
  $region10: #{_lambda_.78} parent=0 // pred_check
    _
  $region11: #{_lambda_.78} parent=0 // pred_check_branch
    %13 = sbr.rel (0) target = $region13
  $region12: #{_lambda_.78} parent=0 // pred_region
    _
  $region13: #{_lambda_.78} parent=0 // pred_fallthru
    _
  %v15 = vld [vmem:[%s0] sm:$0xff]
  %v16 = vpack.c.bf16 %v15, %v15
  %v17 = vld [vmem:[%s1] sm:$0xf]
  %v18 = vld [vmem:[%s1 + $0x4] sm:$0xf]
  %v19 = vld [vmem:[%s1 + $0x8] sm:$0xf]
  %v20 = vld [vmem:[%s1 + $0xc] sm:$0xf]
  %v21 = vld [vmem:[%s1 + $0x10] sm:$0xf]
  %v22 = vld [vmem:[%s1 + $0x14] sm:$0xf]
  %v23 = vld [vmem:[%s1 + $0x18] sm:$0xf]
  %v24 = vld [vmem:[%s1 + $0x1c] sm:$0xf]
  %v25 = vld [vmem:[%s1 + $0x20] sm:$0xf]
  %v26 = vld [vmem:[%s1 + $0x24] sm:$0xf]
  %v27 = vld [vmem:[%s1 + $0x28] sm:$0xf]
  %v28 = vld [vmem:[%s1 + $0x2c] sm:$0xf]
  %v29 = vld [vmem:[%s1 + $0x30] sm:$0xf]
  %v30 = vld [vmem:[%s1 + $0x34] sm:$0xf]
  %v31 = vld [vmem:[%s1 + $0x38] sm:$0x3]
  %v32 = vld [vmem:[%s2] sm:$0x1]
  %v34 = vlaneseq
  %v35 = vshrl.u32 %v34, 7
  %v36 = vsub.s32 0, %v35
  %v37 = vrot.slane %v32, %v36
  %v54 = vunpack.c.l.b16 %v17
  %v55 = vunpack.c.l.b16 %v18
  %v56 = vunpack.c.l.b16 %v19
  %v57 = vunpack.c.l.b16 %v20
  %v58 = vunpack.c.l.b16 %v21
  %v59 = vunpack.c.l.b16 %v22
  %v60 = vunpack.c.l.b16 %v23
  %v61 = vunpack.c.l.b16 %v24
  %v62 = vunpack.c.l.b16 %v25
  %v63 = vunpack.c.l.b16 %v26
  %v64 = vunpack.c.l.b16 %v27
  %v65 = vunpack.c.l.b16 %v28
  %v66 = vunpack.c.l.b16 %v29
  %v67 = vunpack.c.l.b16 %v30
  %v68 = vunpack.c.l.b16 %v31
  %v69 = vpack.c.b16 %v55, %v54
  %v70 = vpack.c.b16 %v57, %v56
  %v71 = vpack.c.b16 %v59, %v58
  %v72 = vpack.c.b16 %v61, %v60
  %v73 = vpack.c.b16 %v63, %v62
  %v74 = vpack.c.b16 %v65, %v64
  %v75 = vpack.c.b16 %v67, %v66
  %v76 = vpack.c.b16 %v68, %v68
  %vm84 = vcmask 949248
  %v86 = vsel %vm84, %v16, 0
  %vm88 = vcmask 1041408
  %v90 = vsel %vm88, %v76, 0
  %92 = vmatprep.subr.bf16.mxu0 0
  %93 = vmatpush1.bf16.msra.mxu0 %v90
  %94 = vmatprep.subr.bf16.mxu0 0
  %95 = vmatpush1.bf16.msra.mxu0 %v75
  %96 = vmatprep.subr.bf16.mxu0 0
  %97 = vmatpush1.bf16.msra.mxu0 %v74
  %98 = vmatprep.subr.bf16.mxu0 0
  %99 = vmatpush1.bf16.msra.mxu0 %v73
  %100 = vmatprep.subr.bf16.mxu0 0
  %101 = vmatpush1.bf16.msra.mxu0 %v72
  %102 = vmatprep.subr.bf16.mxu0 0
  %103 = vmatpush1.bf16.msra.mxu0 %v71
  %104 = vmatprep.subr.bf16.mxu0 0
  %105 = vmatpush1.bf16.msra.mxu0 %v70
  %106 = vmatprep.subr.bf16.mxu0 0
  %107 = vmatpush1.bf16.msra.mxu0 %v69
  %108 = vmatprep.subr.bf16.mxu0 0
  %109 = vmatpush2.bf16.msra.mxu0 0
  %110 = vmatprep.subr.bf16.mxu0 0
  %111 = vmatpush2.bf16.msra.mxu0 0
  %112 = vmatprep.subr.bf16.mxu0 0
  %113 = vmatpush2.bf16.msra.mxu0 0
  %114 = vmatprep.subr.bf16.mxu0 0
  %115 = vmatpush2.bf16.msra.mxu0 0
  %116 = vmatprep.subr.bf16.mxu0 0
  %117 = vmatpush2.bf16.msra.mxu0 0
  %118 = vmatprep.subr.bf16.mxu0 0
  %119 = vmatpush2.bf16.msra.mxu0 0
  %120 = vmatprep.subr.bf16.mxu0 0
  %121 = vmatpush2.bf16.msra.mxu0 0
  %122 = vmatprep.subr.bf16.mxu0 0
  %123 = vmatpush2.bf16.msra.mxu0 0
  %124 = vmatprep.mubr.bf16.mxu0 0
  %125 = vmatmul.mubr.bf16.gmra.mxu0 %v86
  %v126 = vpop.f32.mrf.mxu0
  %v127 = vadd.f32 %v37, %v126
  %v128 = vpop.f32.mrf.mxu0
  %v129 = vpop.f32.mrf.mxu0
  %v130 = vpop.f32.mrf.mxu0
  %131 = vdwg.mxu0
  %v132 = vmax.f32 %v127, 0.0
  %133 = vst.msk [vmem:[%s3] sm:$0xff] %vm84, %v132
  // Predicated region
  $region14: #{_lambda_.78} parent=0 // pred_check
    _
  $region15: #{_lambda_.78} parent=0 // pred_check_branch
    %135 = sbr.rel (0) target = $region17
  $region16: #{_lambda_.78} parent=0 // pred_region
    _
  $region17: #{_lambda_.78} parent=0 // pred_fallthru
    _
  // Predicated region
  $region18: #{_lambda_.78} parent=0 // pred_check
    _
  $region19: #{_lambda_.78} parent=0 // pred_check_branch
    %137 = sbr.rel (0) target = $region21
  $region20: #{_lambda_.78} parent=0 // pred_region
    _
  $region21: #{_lambda_.78} parent=0 // pred_fallthru
    _

// kernel: _lambda_.80
$region0: #{_lambda_.80}
  #allocation0 [shape = 'u32[]', space=smem, size = 0x4, offset = 0x4, fixed_abs, tag = 'smem constant byte address 0x4 - core index']
  #allocation1 [shape = 'u32[144,128]{1,0:T(1,128)}', space=vmem, size = 0x12000, scoped, tag = 'internal scratch']
  %s0 = inlined_call_operand.vmem [shape: f32[2,4,4,116], index: 0, kind: input, shape index: {}]
  %s1 = inlined_call_operand.vmem [shape: f32[9,1,116], index: 1, kind: input, shape index: {}]
  %s2 = inlined_call_operand.vmem [shape: f32[1,1,116], index: 2, kind: input, shape index: {}]
  %s3 = inlined_call_operand.vmem [shape: f32[2,2,2,116], index: 3, kind: output, shape index: {}]
  %s4 = sld [smem:[#allocation0]]
  $region45: #{_lambda_.80} parent=0
    _
  %s6 = ssub.s32 1, %s4
  %s7 = scalar_select 0, %s6, %s4
  loop: start=0, step=1, limit=4
  $region2: #{_lambda_.80} parent=0 // loop_pre_header
    _
  $region3: #{_lambda_.80} parent=0 // loop_header
    %s9 = sphi 0, %s13
    %p10 = scmp.ge.s32.totalorder %s9, 4
    %s19 = sphi 0, %s21
    %s22 = sphi 0, %s19
    %s23 = sphi 0, %s22
    %s39 = sphi 0, %s23
    %s43 = sphi 0, %s43
    %s45 = sphi 0, %s43
    %s46 = sphi 0, %s45
    %s60 = sphi 0, %s46
    %s64 = sphi 0, %s64
    %s66 = sphi 0, %s64
    %s67 = sphi 0, %s66
    %s81 = sphi 0, %s67
    %s87 = sphi 0, %s89
    %s90 = sphi 0, %s87
    %s91 = sphi 0, %s90
    %s107 = sphi 0, %s91
  $region4: #{_lambda_.80} parent=0 // loop_header_branch
    %12 = sbr.rel (%p10) target = $region8
  $region5: #{_lambda_.80} parent=0 // loop_body
    %s14 = ssub.s32 %s9, 1
    %s15 = ssub.s32 %s9, 2
    %s16 = sadd.s32 %s9, 1
    %s17 = ssub.s32 %s9, %s16
    %p18 = scmp.eq.s32.totalorder %s17, 0
    %s20 = sadd.s32 %s19, 1
    %s21 = scalar_select %p18, %s19, %s20
    %p24 = pneg %p18
    %p25 = scmp.eq.s32.totalorder %s9, 1
    %p26 = por %p24, %p25
    %p27 = scmp.ne.s32.totalorder %s19, %s22
    %p28 = scmp.eq.s32.totalorder %s9, 0
    %p29 = por %p27, %p28
    %p30 = scmp.ne.s32.totalorder %s19, %s22
    %p31 = scmp.eq.s32.totalorder %s14, 1
    %p32 = por %p30, %p31
    %p33 = scmp.ne.s32.totalorder %s22, %s23
    %p34 = scmp.eq.s32.totalorder %s14, 0
    %p35 = por %p33, %p34
    %p36 = scmp.ne.s32.totalorder %s22, %s23
    %p37 = scmp.eq.s32.totalorder %s15, 1
    %p38 = por %p36, %p37
    %p40 = scmp.ne.s32.totalorder %s23, %s39
    %p41 = scmp.eq.s32.totalorder %s15, 0
    %p42 = por %p40, %p41
    %s44 = sadd.s32 %s43, 1
    %p47 = scmp.eq.s32.totalorder %s9, 1
    %p48 = scmp.ne.s32.totalorder %s43, %s45
    %p49 = scmp.eq.s32.totalorder %s9, 0
    %p50 = por %p48, %p49
    %p51 = scmp.ne.s32.totalorder %s43, %s45
    %p52 = scmp.eq.s32.totalorder %s14, 1
    %p53 = por %p51, %p52
    %p54 = scmp.ne.s32.totalorder %s45, %s46
    %p55 = scmp.eq.s32.totalorder %s14, 0
    %p56 = por %p54, %p55
    %p57 = scmp.ne.s32.totalorder %s45, %s46
    %p58 = scmp.eq.s32.totalorder %s15, 1
    %p59 = por %p57, %p58
    %p61 = scmp.ne.s32.totalorder %s46, %s60
    %p62 = scmp.eq.s32.totalorder %s15, 0
    %p63 = por %p61, %p62
    %s65 = sadd.s32 %s64, 1
    %p68 = scmp.eq.s32.totalorder %s9, 1
    %p69 = scmp.ne.s32.totalorder %s64, %s66
    %p70 = scmp.eq.s32.totalorder %s9, 0
    %p71 = por %p69, %p70
    %p72 = scmp.ne.s32.totalorder %s64, %s66
    %p73 = scmp.eq.s32.totalorder %s14, 1
    %p74 = por %p72, %p73
    %p75 = scmp.ne.s32.totalorder %s66, %s67
    %p76 = scmp.eq.s32.totalorder %s14, 0
    %p77 = por %p75, %p76
    %p78 = scmp.ne.s32.totalorder %s66, %s67
    %p79 = scmp.eq.s32.totalorder %s15, 1
    %p80 = por %p78, %p79
    %p82 = scmp.ne.s32.totalorder %s67, %s81
    %p83 = scmp.eq.s32.totalorder %s15, 0
    %p84 = por %p82, %p83
    %s85 = ssub.s32 %s9, %s16
    %p86 = scmp.eq.s32.totalorder %s85, 0
    %s88 = sadd.s32 %s87, 1
    %s89 = scalar_select %p86, %s87, %s88
    %p92 = pneg %p86
    %p93 = scmp.eq.s32.totalorder %s9, 1
    %p94 = por %p92, %p93
    %p95 = scmp.ne.s32.totalorder %s87, %s90
    %p96 = scmp.eq.s32.totalorder %s9, 0
    %p97 = por %p95, %p96
    %p98 = scmp.ne.s32.totalorder %s87, %s90
    %p99 = scmp.eq.s32.totalorder %s14, 1
    %p100 = por %p98, %p99
    %p101 = scmp.ne.s32.totalorder %s90, %s91
    %p102 = scmp.eq.s32.totalorder %s14, 0
    %p103 = por %p101, %p102
    %p104 = scmp.ne.s32.totalorder %s90, %s91
    %p105 = scmp.eq.s32.totalorder %s15, 1
    %p106 = por %p104, %p105
    %p108 = scmp.ne.s32.totalorder %s91, %s107
    %p109 = scmp.eq.s32.totalorder %s15, 0
    %p110 = por %p108, %p109
    %p111 = scmp.le.s32.totalorder 1, %s9
    %p112 = scmp.lt.s32.totalorder %s9, 3
    %p113 = pnand %p111, %p112
    %p114 = pneg %p113
    // Predicated region
    $region9: #{_lambda_.80} parent=5 // pred_check
      _
    $region10: #{_lambda_.80} parent=5 // pred_check_branch
      %116 = sbr.rel (%p113) target = $region12
    $region11: #{_lambda_.80} parent=5 // pred_region
      %s117 = ssub.s32 %s9, 1
      // Predicated region
      $region13: #{_lambda_.80} parent=11 // pred_check
        %p118 = pneg %p56
      $region14: #{_lambda_.80} parent=11 // pred_check_branch
        %120 = sbr.rel (%p118) target = $region16
      $region15: #{_lambda_.80} parent=11 // pred_region
        _
      $region16: #{_lambda_.80} parent=11 // pred_fallthru
        _
      // Predicated region
      $region17: #{_lambda_.80} parent=11 // pred_check
        %p121 = pneg %p77
      $region18: #{_lambda_.80} parent=11 // pred_check_branch
        %123 = sbr.rel (%p121) target = $region20
      $region19: #{_lambda_.80} parent=11 // pred_region
        _
      $region20: #{_lambda_.80} parent=11 // pred_fallthru
        _
    $region12: #{_lambda_.80} parent=5 // pred_fallthru
      _
    %p124 = scmp.lt.s32.totalorder %s9, 2
    // Predicated region
    $region21: #{_lambda_.80} parent=5 // pred_check
      %p125 = pneg %p124
    $region22: #{_lambda_.80} parent=5 // pred_check_branch
      %127 = sbr.rel (%p125) target = $region24
    $region23: #{_lambda_.80} parent=5 // pred_region
      // Predicated region
      $region25: #{_lambda_.80} parent=23 // pred_check
        %p128 = pneg %p29
      $region26: #{_lambda_.80} parent=23 // pred_check_branch
        %130 = sbr.rel (%p128) target = $region28
      $region27: #{_lambda_.80} parent=23 // pred_region
        %p131 = scmp.lt.s32.totalorder %s9, 1
        %s132 = scalar_select %p131, %s9, 1
        %s133 = smul.addr %s132, 4
        %s134 = smul.addr %s133, 4
        %s135 = scalar_lea.vmem %s0, %s134
      $region28: #{_lambda_.80} parent=23 // pred_fallthru
        _
    $region24: #{_lambda_.80} parent=5 // pred_fallthru
      _
    %p136 = scmp.le.s32.totalorder 1, %s9
    %p137 = scmp.lt.s32.totalorder %s9, 3
    %p138 = pnand %p136, %p137
    %p139 = pneg %p138
    // Predicated region
    $region29: #{_lambda_.80} parent=5 // pred_check
      _
    $region30: #{_lambda_.80} parent=5 // pred_check_branch
      %141 = sbr.rel (%p138) target = $region32
    $region31: #{_lambda_.80} parent=5 // pred_region
      %s142 = ssub.s32 %s9, 1
      %p143 = scmp.lt.s32.totalorder %s14, 1
      %s144 = scalar_select %p143, %s14, 1
      %s145 = smul.addr %s144, 4
      %s146 = smul.addr %s145, 4
      %s147 = scalar_lea.vmem %s0, %s146
      %p148 = pneg %p35
      %p149 = pneg %p32
      %p150 = pneg %p56
      %p151 = pneg %p53
      %p152 = pneg %p77
      %p153 = pneg %p74
      %p154 = pneg %p103
      %p155 = pneg %p100
      %p156 = scmp.lt.s32.totalorder %s14, 1
      %s157 = scalar_select %p156, %s14, 1
      %s158 = smul.addr %s157, 2
      %s159 = smul.addr %s158, 2
      %s160 = scalar_lea.vmem %s3, %s159
      %p161 = scmp.lt.s32.totalorder %s14, 1
      %s162 = scalar_select %p161, %s14, 1
      %s163 = smul.addr %s162, 4
      %s164 = smul.addr %s163, 4
      %s165 = scalar_lea.vmem %s0, %s164
      %p166 = scmp.lt.s32.totalorder %s14, 1
      %s167 = scalar_select %p166, %s14, 1
      %s168 = smul.addr %s167, 2
      %s169 = smul.addr %s168, 2
      %s170 = scalar_lea.vmem %s3, %s169
      %v171 = vld [vmem:[%s165] sm:$0xf]
      %v172 = vld [vmem:[%s165 + $0x4] sm:$0xf]
      %v173 = vld [vmem:[%s165 + $0x8] sm:$0xf]
      %v174 = vld [vmem:[%s165 + $0xc] sm:$0xf]
      %v175 = vld [vmem:[%s1] sm:$0x1]
      %v176 = vld [vmem:[%s1 + $0x1] sm:$0x1]
      %v177 = vld [vmem:[%s1 + $0x2] sm:$0x1]
      %v178 = vld [vmem:[%s1 + $0x3] sm:$0x1]
      %v179 = vld [vmem:[%s1 + $0x4] sm:$0x1]
      %v180 = vld [vmem:[%s1 + $0x5] sm:$0x1]
      %v181 = vld [vmem:[%s1 + $0x6] sm:$0x1]
      %v182 = vld [vmem:[%s1 + $0x7] sm:$0x1]
      %v183 = vld [vmem:[%s1 + $0x8] sm:$0x1]
      %v184 = vld [vmem:[%s2] sm:$0x1]
      %v186 = vlaneseq
      %v187 = vshrl.u32 %v186, 7
      %v188 = vsub.s32 0, %v187
      %v189 = vrot.slane %v175, %v188
      %v191 = vmul.f32 %v171, %v189
      %v192 = vmul.f32 %v172, %v189
      %v194 = vlaneseq
      %v195 = vshrl.u32 %v194, 7
      %v196 = vsub.s32 0, %v195
      %v197 = vrot.slane %v176, %v196
      %v199 = vmul.f32 %v171, %v197
      %v200 = vmul.f32 %v172, %v197
      %v203 = vrot.slane %v199, 1
      %v204 = vrot.slane %v200, 1
      %v207 = vadd.f32 %v191, %v203
      %v208 = vadd.f32 %v192, %v204
      %v210 = vlaneseq
      %v211 = vshrl.u32 %v210, 7
      %v212 = vsub.s32 0, %v211
      %v213 = vrot.slane %v177, %v212
      %v215 = vmul.f32 %v171, %v213
      %v216 = vmul.f32 %v172, %v213
      %v219 = vrot.slane %v215, 2
      %v220 = vrot.slane %v216, 2
      %v223 = vadd.f32 %v207, %v219
      %v224 = vadd.f32 %v208, %v220
      %v226 = vlaneseq
      %v227 = vshrl.u32 %v226, 7
      %v228 = vsub.s32 0, %v227
      %v229 = vrot.slane %v178, %v228
      %v231 = vmul.f32 %v172, %v229
      %v232 = vmul.f32 %v173, %v229
      %v233 = vadd.f32 %v223, %v231
      %v234 = vadd.f32 %v224, %v232
      %v236 = vlaneseq
      %v237 = vshrl.u32 %v236, 7
      %v238 = vsub.s32 0, %v237
      %v239 = vrot.slane %v179, %v238
      %v241 = vmul.f32 %v172, %v239
      %v242 = vmul.f32 %v173, %v239
      %v245 = vrot.slane %v241, 1
      %v246 = vrot.slane %v242, 1
      %v249 = vadd.f32 %v233, %v245
      %v250 = vadd.f32 %v234, %v246
      %v252 = vlaneseq
      %v253 = vshrl.u32 %v252, 7
      %v254 = vsub.s32 0, %v253
      %v255 = vrot.slane %v180, %v254
      %v257 = vmul.f32 %v172, %v255
      %v258 = vmul.f32 %v173, %v255
      %v261 = vrot.slane %v257, 2
      %v262 = vrot.slane %v258, 2
      %v265 = vadd.f32 %v249, %v261
      %v266 = vadd.f32 %v250, %v262
      %v268 = vlaneseq
      %v269 = vshrl.u32 %v268, 7
      %v270 = vsub.s32 0, %v269
      %v271 = vrot.slane %v181, %v270
      %v273 = vmul.f32 %v173, %v271
      %v274 = vmul.f32 %v174, %v271
      %v275 = vadd.f32 %v265, %v273
      %v276 = vadd.f32 %v266, %v274
      %v278 = vlaneseq
      %v279 = vshrl.u32 %v278, 7
      %v280 = vsub.s32 0, %v279
      %v281 = vrot.slane %v182, %v280
      %v283 = vmul.f32 %v173, %v281
      %v284 = vmul.f32 %v174, %v281
      %v287 = vrot.slane %v283, 1
      %v288 = vrot.slane %v284, 1
      %v291 = vadd.f32 %v275, %v287
      %v292 = vadd.f32 %v276, %v288
      %v294 = vlaneseq
      %v295 = vshrl.u32 %v294, 7
      %v296 = vsub.s32 0, %v295
      %v297 = vrot.slane %v183, %v296
      %v299 = vmul.f32 %v173, %v297
      %v300 = vmul.f32 %v174, %v297
      %v303 = vrot.slane %v299, 2
      %v304 = vrot.slane %v300, 2
      %v307 = vadd.f32 %v291, %v303
      %v308 = vadd.f32 %v292, %v304
      %v310 = vlaneseq
      %v311 = vshrl.u32 %v310, 7
      %v312 = vsub.s32 0, %v311
      %v313 = vrot.slane %v184, %v312
      %v315 = vadd.f32 %v307, %v313
      %v316 = vadd.f32 %v308, %v313
      %vm317 = vcmask 943104
      %318 = vst.msk [vmem:[%s170] sm:$0x3] %vm317, %v315
      %319 = vst.msk [vmem:[%s170 + $0x2] sm:$0x3] %vm317, %v316
      %p320 = scmp.lt.s32.totalorder %s14, 1
      %s321 = scalar_select %p320, %s14, 1
      %s322 = smul.addr %s321, 2
      %s323 = smul.addr %s322, 2
      %s324 = scalar_lea.vmem %s3, %s323
      // Predicated region
      $region33: #{_lambda_.80} parent=31 // pred_check
        %p325 = pneg %p100
      $region34: #{_lambda_.80} parent=31 // pred_check_branch
        %327 = sbr.rel (%p325) target = $region36
      $region35: #{_lambda_.80} parent=31 // pred_region
        _
      $region36: #{_lambda_.80} parent=31 // pred_fallthru
        _
    $region32: #{_lambda_.80} parent=5 // pred_fallthru
      _
    %p328 = scmp.le.s32.totalorder 2, %s9
    // Predicated region
    $region37: #{_lambda_.80} parent=5 // pred_check
      %p329 = pneg %p328
    $region38: #{_lambda_.80} parent=5 // pred_check_branch
      %331 = sbr.rel (%p329) target = $region40
    $region39: #{_lambda_.80} parent=5 // pred_region
      %s332 = ssub.s32 %s9, 2
      // Predicated region
      $region41: #{_lambda_.80} parent=39 // pred_check
        %p333 = pneg %p106
      $region42: #{_lambda_.80} parent=39 // pred_check_branch
        %335 = sbr.rel (%p333) target = $region44
      $region43: #{_lambda_.80} parent=39 // pred_region
        %p336 = scmp.lt.s32.totalorder %s15, 1
        %s337 = scalar_select %p336, %s15, 1
        %s338 = smul.addr %s337, 2
        %s339 = smul.addr %s338, 2
        %s340 = scalar_lea.vmem %s3, %s339
      $region44: #{_lambda_.80} parent=39 // pred_fallthru
        _
    $region40: #{_lambda_.80} parent=5 // pred_fallthru
      _
  $region6: #{_lambda_.80} parent=0 // loop_footer
    %s13 = sadd.s32 1, %s9
  $region7: #{_lambda_.80} parent=0 // loop_footer_branch
    %8 = sbr.rel target = $region3
  $region8: #{_lambda_.80} parent=0 // loop_exit
    _

// kernel: _lambda_.102
$region0: #{_lambda_.102}
  #allocation0 [shape = 'u32[]', space=smem, size = 0x4, offset = 0x4, fixed_abs, tag = 'smem constant byte address 0x4 - core index']
  #allocation1 [shape = 'u32[144,128]{1,0:T(1,128)}', space=vmem, size = 0x12000, scoped, tag = 'internal scratch']
  %s0 = inlined_call_operand.vmem [shape: f32[8,232], index: 0, kind: input, shape index: {}]
  %s1 = inlined_call_operand.vmem [shape: bf16[232,232], index: 1, kind: input, shape index: {}]
  %s2 = inlined_call_operand.vmem [shape: f32[1,232], index: 2, kind: input, shape index: {}]
  %s3 = inlined_call_operand.vmem [shape: f32[8,232], index: 3, kind: output, shape index: {}]
  %s4 = sld [smem:[#allocation0]]
  $region22: #{_lambda_.102} parent=0
    _
  %s6 = ssub.s32 1, %s4
  %s7 = scalar_select 0, %s6, %s4
  // Predicated region
  $region2: #{_lambda_.102} parent=0 // pred_check
    _
  $region3: #{_lambda_.102} parent=0 // pred_check_branch
    %9 = sbr.rel (0) target = $region5
  $region4: #{_lambda_.102} parent=0 // pred_region
    _
  $region5: #{_lambda_.102} parent=0 // pred_fallthru
    _
  // Predicated region
  $region6: #{_lambda_.102} parent=0 // pred_check
    _
  $region7: #{_lambda_.102} parent=0 // pred_check_branch
    %11 = sbr.rel (0) target = $region9
  $region8: #{_lambda_.102} parent=0 // pred_region
    _
  $region9: #{_lambda_.102} parent=0 // pred_fallthru
    _
  // Predicated region
  $region10: #{_lambda_.102} parent=0 // pred_check
    _
  $region11: #{_lambda_.102} parent=0 // pred_check_branch
    %13 = sbr.rel (0) target = $region13
  $region12: #{_lambda_.102} parent=0 // pred_region
    _
  $region13: #{_lambda_.102} parent=0 // pred_fallthru
    _
  %v15 = vld [vmem:[%s0] sm:$0xff]
  %v16 = vld [vmem:[%s0 + $0x8] sm:$0xff]
  %v17 = vpack.c.bf16 %v15, %v15
  %v18 = vpack.c.bf16 %v16, %v16
  %v19 = vld [vmem:[%s1] sm:$0xff]
  %v20 = vld [vmem:[%s1 + $0x8] sm:$0xff]
  %v21 = vld [vmem:[%s1 + $0x10] sm:$0xff]
  %v22 = vld [vmem:[%s1 + $0x18] sm:$0xff]
  %v23 = vld [vmem:[%s1 + $0x20] sm:$0xff]
  %v24 = vld [vmem:[%s1 + $0x28] sm:$0xff]
  %v25 = vld [vmem:[%s1 + $0x30] sm:$0xff]
  %v26 = vld [vmem:[%s1 + $0x38] sm:$0xff]
  %v27 = vld [vmem:[%s1 + $0x40] sm:$0xff]
  %v28 = vld [vmem:[%s1 + $0x48] sm:$0xff]
  %v29 = vld [vmem:[%s1 + $0x50] sm:$0xff]
  %v30 = vld [vmem:[%s1 + $0x58] sm:$0xff]
  %v31 = vld [vmem:[%s1 + $0x60] sm:$0xff]
  %v32 = vld [vmem:[%s1 + $0x68] sm:$0xff]
  %v33 = vld [vmem:[%s1 + $0x70] sm:$0xff]
  %v34 = vld [vmem:[%s1 + $0x78] sm:$0xff]
  %v35 = vld [vmem:[%s1 + $0x80] sm:$0xff]
  %v36 = vld [vmem:[%s1 + $0x88] sm:$0xff]
  %v37 = vld [vmem:[%s1 + $0x90] sm:$0xff]
  %v38 = vld [vmem:[%s1 + $0x98] sm:$0xff]
  %v39 = vld [vmem:[%s1 + $0xa0] sm:$0xff]
  %v40 = vld [vmem:[%s1 + $0xa8] sm:$0xff]
  %v41 = vld [vmem:[%s1 + $0xb0] sm:$0xff]
  %v42 = vld [vmem:[%s1 + $0xb8] sm:$0xff]
  %v43 = vld [vmem:[%s1 + $0xc0] sm:$0xff]
  %v44 = vld [vmem:[%s1 + $0xc8] sm:$0xff]
  %v45 = vld [vmem:[%s1 + $0xd0] sm:$0xff]
  %v46 = vld [vmem:[%s1 + $0xd8] sm:$0xff]
  %v47 = vld [vmem:[%s1 + $0xe0] sm:$0xff]
  %v48 = vld [vmem:[%s2] sm:$0x3]
  %v50 = vlaneseq
  %v51 = vshrl.u32 %v50, 7
  %v52 = vsub.s32 0, %v51
  %v53 = vrot.slane %v48, %v52
  %v54 = vlaneseq
  %v55 = vshrl.u32 %v54, 7
  %v56 = vsub.s32 1, %v55
  %v57 = vrot.slane %v48, %v56
  %v89 = vunpack.c.l.b16 %v19
  %v90 = vunpack.c.h.b16 %v19
  %v91 = vunpack.c.l.b16 %v20
  %v92 = vunpack.c.h.b16 %v20
  %v93 = vunpack.c.l.b16 %v21
  %v94 = vunpack.c.h.b16 %v21
  %v95 = vunpack.c.l.b16 %v22
  %v96 = vunpack.c.h.b16 %v22
  %v97 = vunpack.c.l.b16 %v23
  %v98 = vunpack.c.h.b16 %v23
  %v99 = vunpack.c.l.b16 %v24
  %v100 = vunpack.c.h.b16 %v24
  %v101 = vunpack.c.l.b16 %v25
  %v102 = vunpack.c.h.b16 %v25
  %v103 = vunpack.c.l.b16 %v26
  %v104 = vunpack.c.h.b16 %v26
  %v105 = vunpack.c.l.b16 %v27
  %v106 = vunpack.c.h.b16 %v27
  %v107 = vunpack.c.l.b16 %v28
  %v108 = vunpack.c.h.b16 %v28
  %v109 = vunpack.c.l.b16 %v29
  %v110 = vunpack.c.h.b16 %v29
  %v111 = vunpack.c.l.b16 %v30
  %v112 = vunpack.c.h.b16 %v30
  %v113 = vunpack.c.l.b16 %v31
  %v114 = vunpack.c.h.b16 %v31
  %v115 = vunpack.c.l.b16 %v32
  %v116 = vunpack.c.h.b16 %v32
  %v117 = vunpack.c.l.b16 %v33
  %v118 = vunpack.c.h.b16 %v33
  %v119 = vunpack.c.l.b16 %v34
  %v120 = vunpack.c.h.b16 %v34
  %v121 = vunpack.c.l.b16 %v35
  %v122 = vunpack.c.h.b16 %v35
  %v123 = vunpack.c.l.b16 %v36
  %v124 = vunpack.c.h.b16 %v36
  %v125 = vunpack.c.l.b16 %v37
  %v126 = vunpack.c.h.b16 %v37
  %v127 = vunpack.c.l.b16 %v38
  %v128 = vunpack.c.h.b16 %v38
  %v129 = vunpack.c.l.b16 %v39
  %v130 = vunpack.c.h.b16 %v39
  %v131 = vunpack.c.l.b16 %v40
  %v132 = vunpack.c.h.b16 %v40
  %v133 = vunpack.c.l.b16 %v41
  %v134 = vunpack.c.h.b16 %v41
  %v135 = vunpack.c.l.b16 %v42
  %v136 = vunpack.c.h.b16 %v42
  %v137 = vunpack.c.l.b16 %v43
  %v138 = vunpack.c.h.b16 %v43
  %v139 = vunpack.c.l.b16 %v44
  %v140 = vunpack.c.h.b16 %v44
  %v141 = vunpack.c.l.b16 %v45
  %v142 = vunpack.c.h.b16 %v45
  %v143 = vunpack.c.l.b16 %v46
  %v144 = vunpack.c.h.b16 %v46
  %v145 = vunpack.c.l.b16 %v47
  %v146 = vunpack.c.h.b16 %v47
  %v147 = vpack.c.b16 %v91, %v89
  %v148 = vpack.c.b16 %v92, %v90
  %v149 = vpack.c.b16 %v95, %v93
  %v150 = vpack.c.b16 %v96, %v94
  %v151 = vpack.c.b16 %v99, %v97
  %v152 = vpack.c.b16 %v100, %v98
  %v153 = vpack.c.b16 %v103, %v101
  %v154 = vpack.c.b16 %v104, %v102
  %v155 = vpack.c.b16 %v107, %v105
  %v156 = vpack.c.b16 %v108, %v106
  %v157 = vpack.c.b16 %v111, %v109
  %v158 = vpack.c.b16 %v112, %v110
  %v159 = vpack.c.b16 %v115, %v113
  %v160 = vpack.c.b16 %v116, %v114
  %v161 = vpack.c.b16 %v119, %v117
  %v162 = vpack.c.b16 %v120, %v118
  %v163 = vpack.c.b16 %v123, %v121
  %v164 = vpack.c.b16 %v124, %v122
  %v165 = vpack.c.b16 %v127, %v125
  %v166 = vpack.c.b16 %v128, %v126
  %v167 = vpack.c.b16 %v131, %v129
  %v168 = vpack.c.b16 %v132, %v130
  %v169 = vpack.c.b16 %v135, %v133
  %v170 = vpack.c.b16 %v136, %v134
  %v171 = vpack.c.b16 %v139, %v137
  %v172 = vpack.c.b16 %v140, %v138
  %v173 = vpack.c.b16 %v143, %v141
  %v174 = vpack.c.b16 %v144, %v142
  %v175 = vpack.c.b16 %v145, %v145
  %v176 = vpack.c.b16 %v146, %v146
  %vm205 = vcmask 850944
  %v207 = vsel %vm205, %v18, 0
  %vm209 = vcmask 1043456
  %v211 = vsel %vm209, %v175, 0
  %v214 = vsel %vm209, %v176, 0
  %216 = vmatprep.subr.bf16.mxu0 %v162
  %217 = vmatpush1.bf16.msra.mxu0 %v161
  %218 = vmatprep.subr.bf16.mxu0 %v160
  %219 = vmatpush1.bf16.msra.mxu0 %v159
  %220 = vmatprep.subr.bf16.mxu0 %v158
  %221 = vmatpush1.bf16.msra.mxu0 %v157
  %222 = vmatprep.subr.bf16.mxu0 %v156
  %223 = vmatpush1.bf16.msra.mxu0 %v155
  %224 = vmatprep.subr.bf16.mxu0 %v154
  %225 = vmatpush1.bf16.msra.mxu0 %v153
  %226 = vmatprep.subr.bf16.mxu0 %v152
  %227 = vmatpush1.bf16.msra.mxu0 %v151
  %228 = vmatprep.subr.bf16.mxu0 %v150
  %229 = vmatpush1.bf16.msra.mxu0 %v149
  %230 = vmatprep.subr.bf16.mxu0 %v148
  %231 = vmatpush1.bf16.msra.mxu0 %v147
  %232 = vmatprep.subr.bf16.mxu0 0
  %233 = vmatpush2.bf16.msra.mxu0 0
  %234 = vmatprep.subr.bf16.mxu0 %v214
  %235 = vmatpush2.bf16.msra.mxu0 %v211
  %236 = vmatprep.subr.bf16.mxu0 %v174
  %237 = vmatpush2.bf16.msra.mxu0 %v173
  %238 = vmatprep.subr.bf16.mxu0 %v172
  %239 = vmatpush2.bf16.msra.mxu0 %v171
  %240 = vmatprep.subr.bf16.mxu0 %v170
  %241 = vmatpush2.bf16.msra.mxu0 %v169
  %242 = vmatprep.subr.bf16.mxu0 %v168
  %243 = vmatpush2.bf16.msra.mxu0 %v167
  %244 = vmatprep.subr.bf16.mxu0 %v166
  %245 = vmatpush2.bf16.msra.mxu0 %v165
  %246 = vmatprep.subr.bf16.mxu0 %v164
  %247 = vmatpush2.bf16.msra.mxu0 %v163
  %248 = vmatprep.mubr.bf16.mxu0 %v207
  %249 = vmatmul.mubr.bf16.gmra.mxu0 %v17
  %v250 = vpop.f32.mrf.mxu0
  %v251 = vadd.f32 %v53, %v250
  %v252 = vpop.f32.mrf.mxu0
  %v253 = vadd.f32 %v57, %v252
  %v254 = vpop.f32.mrf.mxu0
  %v255 = vpop.f32.mrf.mxu0
  %256 = vdwg.mxu0
  %v257 = vmax.f32 %v251, 0.0
  %v258 = vmax.f32 %v253, 0.0
  %259 = vst [vmem:[%s3] sm:$0xff] %v257
  %260 = vst.msk [vmem:[%s3 + $0x8] sm:$0xff] %vm205, %v258
  // Predicated region
  $region14: #{_lambda_.102} parent=0 // pred_check
    _
  $region15: #{_lambda_.102} parent=0 // pred_check_branch
    %262 = sbr.rel (0) target = $region17
  $region16: #{_lambda_.102} parent=0 // pred_region
    _
  $region17: #{_lambda_.102} parent=0 // pred_fallthru
    _
  // Predicated region
  $region18: #{_lambda_.102} parent=0 // pred_check
    _
  $region19: #{_lambda_.102} parent=0 // pred_check_branch
    %264 = sbr.rel (0) target = $region21
  $region20: #{_lambda_.102} parent=0 // pred_region
    _
  $region21: #{_lambda_.102} parent=0 // pred_fallthru
    _

// kernel: _lambda_.103
$region0: #{_lambda_.103}
  #allocation0 [shape = 'u32[]', space=smem, size = 0x4, offset = 0x4, fixed_abs, tag = 'smem constant byte address 0x4 - core index']
  #allocation1 [shape = 'u32[144,128]{1,0:T(1,128)}', space=vmem, size = 0x12000, scoped, tag = 'internal scratch']
  %s0 = inlined_call_operand.vmem [shape: f32[2,8,2,232], index: 0, kind: input, shape index: {}]
  %s1 = inlined_call_operand.vmem [shape: f32[9,1,232], index: 1, kind: input, shape index: {}]
  %s2 = inlined_call_operand.vmem [shape: f32[1,1,232], index: 2, kind: input, shape index: {}]
  %s3 = inlined_call_operand.vmem [shape: f32[2,1,1,232], index: 3, kind: output, shape index: {}]
  %s4 = sld [smem:[#allocation0]]
  $region45: #{_lambda_.103} parent=0
    _
  %s6 = ssub.s32 1, %s4
  %s7 = scalar_select 0, %s6, %s4
  loop: start=0, step=1, limit=4
  $region2: #{_lambda_.103} parent=0 // loop_pre_header
    _
  $region3: #{_lambda_.103} parent=0 // loop_header
    %s9 = sphi 0, %s13
    %p10 = scmp.ge.s32.totalorder %s9, 4
    %s19 = sphi 0, %s21
    %s22 = sphi 0, %s19
    %s23 = sphi 0, %s22
    %s39 = sphi 0, %s23
    %s43 = sphi 0, %s43
    %s45 = sphi 0, %s43
    %s46 = sphi 0, %s45
    %s60 = sphi 0, %s46
    %s64 = sphi 0, %s64
    %s66 = sphi 0, %s64
    %s67 = sphi 0, %s66
    %s81 = sphi 0, %s67
    %s87 = sphi 0, %s89
    %s90 = sphi 0, %s87
    %s91 = sphi 0, %s90
    %s107 = sphi 0, %s91
  $region4: #{_lambda_.103} parent=0 // loop_header_branch
    %12 = sbr.rel (%p10) target = $region8
  $region5: #{_lambda_.103} parent=0 // loop_body
    %s14 = ssub.s32 %s9, 1
    %s15 = ssub.s32 %s9, 2
    %s16 = sadd.s32 %s9, 1
    %s17 = ssub.s32 %s9, %s16
    %p18 = scmp.eq.s32.totalorder %s17, 0
    %s20 = sadd.s32 %s19, 1
    %s21 = scalar_select %p18, %s19, %s20
    %p24 = pneg %p18
    %p25 = scmp.eq.s32.totalorder %s9, 1
    %p26 = por %p24, %p25
    %p27 = scmp.ne.s32.totalorder %s19, %s22
    %p28 = scmp.eq.s32.totalorder %s9, 0
    %p29 = por %p27, %p28
    %p30 = scmp.ne.s32.totalorder %s19, %s22
    %p31 = scmp.eq.s32.totalorder %s14, 1
    %p32 = por %p30, %p31
    %p33 = scmp.ne.s32.totalorder %s22, %s23
    %p34 = scmp.eq.s32.totalorder %s14, 0
    %p35 = por %p33, %p34
    %p36 = scmp.ne.s32.totalorder %s22, %s23
    %p37 = scmp.eq.s32.totalorder %s15, 1
    %p38 = por %p36, %p37
    %p40 = scmp.ne.s32.totalorder %s23, %s39
    %p41 = scmp.eq.s32.totalorder %s15, 0
    %p42 = por %p40, %p41
    %s44 = sadd.s32 %s43, 1
    %p47 = scmp.eq.s32.totalorder %s9, 1
    %p48 = scmp.ne.s32.totalorder %s43, %s45
    %p49 = scmp.eq.s32.totalorder %s9, 0
    %p50 = por %p48, %p49
    %p51 = scmp.ne.s32.totalorder %s43, %s45
    %p52 = scmp.eq.s32.totalorder %s14, 1
    %p53 = por %p51, %p52
    %p54 = scmp.ne.s32.totalorder %s45, %s46
    %p55 = scmp.eq.s32.totalorder %s14, 0
    %p56 = por %p54, %p55
    %p57 = scmp.ne.s32.totalorder %s45, %s46
    %p58 = scmp.eq.s32.totalorder %s15, 1
    %p59 = por %p57, %p58
    %p61 = scmp.ne.s32.totalorder %s46, %s60
    %p62 = scmp.eq.s32.totalorder %s15, 0
    %p63 = por %p61, %p62
    %s65 = sadd.s32 %s64, 1
    %p68 = scmp.eq.s32.totalorder %s9, 1
    %p69 = scmp.ne.s32.totalorder %s64, %s66
    %p70 = scmp.eq.s32.totalorder %s9, 0
    %p71 = por %p69, %p70
    %p72 = scmp.ne.s32.totalorder %s64, %s66
    %p73 = scmp.eq.s32.totalorder %s14, 1
    %p74 = por %p72, %p73
    %p75 = scmp.ne.s32.totalorder %s66, %s67
    %p76 = scmp.eq.s32.totalorder %s14, 0
    %p77 = por %p75, %p76
    %p78 = scmp.ne.s32.totalorder %s66, %s67
    %p79 = scmp.eq.s32.totalorder %s15, 1
    %p80 = por %p78, %p79
    %p82 = scmp.ne.s32.totalorder %s67, %s81
    %p83 = scmp.eq.s32.totalorder %s15, 0
    %p84 = por %p82, %p83
    %s85 = ssub.s32 %s9, %s16
    %p86 = scmp.eq.s32.totalorder %s85, 0
    %s88 = sadd.s32 %s87, 1
    %s89 = scalar_select %p86, %s87, %s88
    %p92 = pneg %p86
    %p93 = scmp.eq.s32.totalorder %s9, 1
    %p94 = por %p92, %p93
    %p95 = scmp.ne.s32.totalorder %s87, %s90
    %p96 = scmp.eq.s32.totalorder %s9, 0
    %p97 = por %p95, %p96
    %p98 = scmp.ne.s32.totalorder %s87, %s90
    %p99 = scmp.eq.s32.totalorder %s14, 1
    %p100 = por %p98, %p99
    %p101 = scmp.ne.s32.totalorder %s90, %s91
    %p102 = scmp.eq.s32.totalorder %s14, 0
    %p103 = por %p101, %p102
    %p104 = scmp.ne.s32.totalorder %s90, %s91
    %p105 = scmp.eq.s32.totalorder %s15, 1
    %p106 = por %p104, %p105
    %p108 = scmp.ne.s32.totalorder %s91, %s107
    %p109 = scmp.eq.s32.totalorder %s15, 0
    %p110 = por %p108, %p109
    %p111 = scmp.le.s32.totalorder 1, %s9
    %p112 = scmp.lt.s32.totalorder %s9, 3
    %p113 = pnand %p111, %p112
    %p114 = pneg %p113
    // Predicated region
    $region9: #{_lambda_.103} parent=5 // pred_check
      _
    $region10: #{_lambda_.103} parent=5 // pred_check_branch
      %116 = sbr.rel (%p113) target = $region12
    $region11: #{_lambda_.103} parent=5 // pred_region
      %s117 = ssub.s32 %s9, 1
      // Predicated region
      $region13: #{_lambda_.103} parent=11 // pred_check
        %p118 = pneg %p56
      $region14: #{_lambda_.103} parent=11 // pred_check_branch
        %120 = sbr.rel (%p118) target = $region16
      $region15: #{_lambda_.103} parent=11 // pred_region
        _
      $region16: #{_lambda_.103} parent=11 // pred_fallthru
        _
      // Predicated region
      $region17: #{_lambda_.103} parent=11 // pred_check
        %p121 = pneg %p77
      $region18: #{_lambda_.103} parent=11 // pred_check_branch
        %123 = sbr.rel (%p121) target = $region20
      $region19: #{_lambda_.103} parent=11 // pred_region
        _
      $region20: #{_lambda_.103} parent=11 // pred_fallthru
        _
    $region12: #{_lambda_.103} parent=5 // pred_fallthru
      _
    %p124 = scmp.lt.s32.totalorder %s9, 2
    // Predicated region
    $region21: #{_lambda_.103} parent=5 // pred_check
      %p125 = pneg %p124
    $region22: #{_lambda_.103} parent=5 // pred_check_branch
      %127 = sbr.rel (%p125) target = $region24
    $region23: #{_lambda_.103} parent=5 // pred_region
      // Predicated region
      $region25: #{_lambda_.103} parent=23 // pred_check
        %p128 = pneg %p29
      $region26: #{_lambda_.103} parent=23 // pred_check_branch
        %130 = sbr.rel (%p128) target = $region28
      $region27: #{_lambda_.103} parent=23 // pred_region
        %p131 = scmp.lt.s32.totalorder %s9, 1
        %s132 = scalar_select %p131, %s9, 1
        %s133 = smul.addr %s132, 16
        %s134 = smul.addr %s133, 2
        %s135 = scalar_lea.vmem %s0, %s134
      $region28: #{_lambda_.103} parent=23 // pred_fallthru
        _
    $region24: #{_lambda_.103} parent=5 // pred_fallthru
      _
    %p136 = scmp.le.s32.totalorder 1, %s9
    %p137 = scmp.lt.s32.totalorder %s9, 3
    %p138 = pnand %p136, %p137
    %p139 = pneg %p138
    // Predicated region
    $region29: #{_lambda_.103} parent=5 // pred_check
      _
    $region30: #{_lambda_.103} parent=5 // pred_check_branch
      %141 = sbr.rel (%p138) target = $region32
    $region31: #{_lambda_.103} parent=5 // pred_region
      %s142 = ssub.s32 %s9, 1
      %p143 = scmp.lt.s32.totalorder %s14, 1
      %s144 = scalar_select %p143, %s14, 1
      %s145 = smul.addr %s144, 16
      %s146 = smul.addr %s145, 2
      %s147 = scalar_lea.vmem %s0, %s146
      %p148 = pneg %p35
      %p149 = pneg %p32
      %p150 = pneg %p56
      %p151 = pneg %p53
      %p152 = pneg %p77
      %p153 = pneg %p74
      %p154 = pneg %p103
      %p155 = pneg %p100
      %p156 = scmp.lt.s32.totalorder %s14, 1
      %s157 = scalar_select %p156, %s14, 1
      %s158 = smul.addr %s157, 2
      %s159 = scalar_lea.vmem %s3, %s158
      %p160 = scmp.lt.s32.totalorder %s14, 1
      %s161 = scalar_select %p160, %s14, 1
      %s162 = smul.addr %s161, 16
      %s163 = smul.addr %s162, 2
      %s164 = scalar_lea.vmem %s0, %s163
      %p165 = scmp.lt.s32.totalorder %s14, 1
      %s166 = scalar_select %p165, %s14, 1
      %s167 = smul.addr %s166, 2
      %s168 = scalar_lea.vmem %s3, %s167
      %v169 = vld [vmem:[%s164] sm:$0xf]
      %v170 = vld [vmem:[%s164 + $0x4] sm:$0xf]
      %v171 = vld [vmem:[%s164 + $0x8] sm:$0xf]
      %v172 = vld [vmem:[%s164 + $0xc] sm:$0xf]
      %v173 = vld [vmem:[%s164 + $0x10] sm:$0xf]
      %v174 = vld [vmem:[%s164 + $0x18] sm:$0xf]
      %v175 = vld [vmem:[%s1] sm:$0x3]
      %v176 = vld [vmem:[%s1 + $0x2] sm:$0x3]
      %v177 = vld [vmem:[%s1 + $0x4] sm:$0x3]
      %v178 = vld [vmem:[%s1 + $0x6] sm:$0x3]
      %v179 = vld [vmem:[%s1 + $0x8] sm:$0x3]
      %v180 = vld [vmem:[%s1 + $0xa] sm:$0x3]
      %v181 = vld [vmem:[%s1 + $0xc] sm:$0x3]
      %v182 = vld [vmem:[%s1 + $0xe] sm:$0x3]
      %v183 = vld [vmem:[%s1 + $0x10] sm:$0x3]
      %v184 = vld [vmem:[%s2] sm:$0x3]
      %v187 = vunpack.c.l.s4 857870592
      %v188 = vunpack.c.0.s8 %v187
      %v189 = vlaneseq
      %v190 = vshrl.u32 %v189, 7
      %v191 = vsub.s32 %v188, %v190
      %v192 = vrot.slane %v175, %v191
      %v194 = vmul.f32 %v169, %v192
      %v197 = vunpack.c.l.s4 857870592
      %v198 = vunpack.c.0.s8 %v197
      %v199 = vlaneseq
      %v200 = vshrl.u32 %v199, 7
      %v201 = vsub.s32 %v198, %v200
      %v202 = vrot.slane %v176, %v201
      %v204 = vmul.f32 %v171, %v202
      %v205 = vadd.f32 %v194, %v204
      %v208 = vunpack.c.l.s4 857870592
      %v209 = vunpack.c.0.s8 %v208
      %v210 = vlaneseq
      %v211 = vshrl.u32 %v210, 7
      %v212 = vsub.s32 %v209, %v211
      %v213 = vrot.slane %v177, %v212
      %v215 = vmul.f32 %v169, %v213
      %v217 = vrot.slane %v215, 7
      %v218 = vrot.slane %v217, 2
      %v220 = vadd.f32 %v205, %v218
      %v223 = vunpack.c.l.s4 857870592
      %v224 = vunpack.c.0.s8 %v223
      %v225 = vlaneseq
      %v226 = vshrl.u32 %v225, 7
      %v227 = vsub.s32 %v224, %v226
      %v228 = vrot.slane %v178, %v227
      %v230 = vmul.f32 %v173, %v228
      %v231 = vadd.f32 %v220, %v230
      %v234 = vunpack.c.l.s4 857870592
      %v235 = vunpack.c.0.s8 %v234
      %v236 = vlaneseq
      %v237 = vshrl.u32 %v236, 7
      %v238 = vsub.s32 %v235, %v237
      %v239 = vrot.slane %v179, %v238
      %v241 = vmul.f32 %v174, %v239
      %v242 = vadd.f32 %v231, %v241
      %v245 = vunpack.c.l.s4 857870592
      %v246 = vunpack.c.0.s8 %v245
      %v247 = vlaneseq
      %v248 = vshrl.u32 %v247, 7
      %v249 = vsub.s32 %v246, %v248
      %v250 = vrot.slane %v180, %v249
      %v252 = vmul.f32 %v173, %v250
      %v254 = vrot.slane %v252, 7
      %v255 = vrot.slane %v254, 2
      %v257 = vadd.f32 %v242, %v255
      %v260 = vunpack.c.l.s4 857870592
      %v261 = vunpack.c.0.s8 %v260
      %v262 = vlaneseq
      %v263 = vshrl.u32 %v262, 7
      %v264 = vsub.s32 %v261, %v263
      %v265 = vrot.slane %v181, %v264
      %v267 = vmul.f32 %v170, %v265
      %v268 = vadd.f32 %v257, %v267
      %v271 = vunpack.c.l.s4 857870592
      %v272 = vunpack.c.0.s8 %v271
      %v273 = vlaneseq
      %v274 = vshrl.u32 %v273, 7
      %v275 = vsub.s32 %v272, %v274
      %v276 = vrot.slane %v182, %v275
      %v278 = vmul.f32 %v172, %v276
      %v279 = vadd.f32 %v268, %v278
      %v282 = vunpack.c.l.s4 857870592
      %v283 = vunpack.c.0.s8 %v282
      %v284 = vlaneseq
      %v285 = vshrl.u32 %v284, 7
      %v286 = vsub.s32 %v283, %v285
      %v287 = vrot.slane %v183, %v286
      %v289 = vmul.f32 %v170, %v287
      %v291 = vrot.slane %v289, 7
      %v292 = vrot.slane %v291, 2
      %v294 = vadd.f32 %v279, %v292
      %v297 = vunpack.c.l.s4 857870592
      %v298 = vunpack.c.0.s8 %v297
      %v299 = vlaneseq
      %v300 = vshrl.u32 %v299, 7
      %v301 = vsub.s32 %v298, %v300
      %v302 = vrot.slane %v184, %v301
      %v304 = vadd.f32 %v294, %v302
      %v307 = vunpack.c.l.s4 1966171168
      %v308 = vunpack.c.0.s8 %v307
      %v309 = vlaneseq
      %v310 = vshrl.u32 %v309, 7
      %v311 = vsub.s32 %v308, %v310
      %v312 = vrot.slane %v304, %v311
      %v314 = vlaneseq
      %vm315 = vcmp.ge.s32.totalorder %v314, 0
      %vm316 = vcmp.lt.s32.totalorder %v314, 232
      %vm317 = vmand %vm315, %vm316
      %318 = vst.msk [vmem:[%s168] sm:$0x3] %vm317, %v312
      %p319 = scmp.lt.s32.totalorder %s14, 1
      %s320 = scalar_select %p319, %s14, 1
      %s321 = smul.addr %s320, 2
      %s322 = scalar_lea.vmem %s3, %s321
      // Predicated region
      $region33: #{_lambda_.103} parent=31 // pred_check
        %p323 = pneg %p100
      $region34: #{_lambda_.103} parent=31 // pred_check_branch
        %325 = sbr.rel (%p323) target = $region36
      $region35: #{_lambda_.103} parent=31 // pred_region
        _
      $region36: #{_lambda_.103} parent=31 // pred_fallthru
        _
    $region32: #{_lambda_.103} parent=5 // pred_fallthru
      _
    %p326 = scmp.le.s32.totalorder 2, %s9
    // Predicated region
    $region37: #{_lambda_.103} parent=5 // pred_check
      %p327 = pneg %p326
    $region38: #{_lambda_.103} parent=5 // pred_check_branch
      %329 = sbr.rel (%p327) target = $region40
    $region39: #{_lambda_.103} parent=5 // pred_region
      %s330 = ssub.s32 %s9, 2
      // Predicated region
      $region41: #{_lambda_.103} parent=39 // pred_check
        %p331 = pneg %p106
      $region42: #{_lambda_.103} parent=39 // pred_check_branch
        %333 = sbr.rel (%p331) target = $region44
      $region43: #{_lambda_.103} parent=39 // pred_region
        %p334 = scmp.lt.s32.totalorder %s15, 1
        %s335 = scalar_select %p334, %s15, 1
        %s336 = smul.addr %s335, 2
        %s337 = scalar_lea.vmem %s3, %s336
      $region44: #{_lambda_.103} parent=39 // pred_fallthru
        _
    $region40: #{_lambda_.103} parent=5 // pred_fallthru
      _
  $region6: #{_lambda_.103} parent=0 // loop_footer
    %s13 = sadd.s32 1, %s9
  $region7: #{_lambda_.103} parent=0 // loop_footer_branch
    %8 = sbr.rel target = $region3
  $region8: #{_lambda_.103} parent=0 // loop_exit
    _

// kernel: _lambda_.106
$region0: #{_lambda_.106}
  #allocation0 [shape = 'u32[]', space=smem, size = 0x4, offset = 0x4, fixed_abs, tag = 'smem constant byte address 0x4 - core index']
  #allocation1 [shape = 'u32[144,128]{1,0:T(1,128)}', space=vmem, size = 0x12000, scoped, tag = 'internal scratch']
  %s0 = inlined_call_operand.vmem [shape: f32[2,3,3,232], index: 0, kind: input, shape index: {}]
  %s1 = inlined_call_operand.vmem [shape: f32[9,1,232], index: 1, kind: input, shape index: {}]
  %s2 = inlined_call_operand.vmem [shape: f32[1,1,232], index: 2, kind: input, shape index: {}]
  %s3 = inlined_call_operand.vmem [shape: f32[2,1,1,232], index: 3, kind: output, shape index: {}]
  %s4 = sld [smem:[#allocation0]]
  $region45: #{_lambda_.106} parent=0
    _
  %s6 = ssub.s32 1, %s4
  %s7 = scalar_select 0, %s6, %s4
  loop: start=0, step=1, limit=4
  $region2: #{_lambda_.106} parent=0 // loop_pre_header
    _
  $region3: #{_lambda_.106} parent=0 // loop_header
    %s9 = sphi 0, %s13
    %p10 = scmp.ge.s32.totalorder %s9, 4
    %s19 = sphi 0, %s21
    %s22 = sphi 0, %s19
    %s23 = sphi 0, %s22
    %s39 = sphi 0, %s23
    %s43 = sphi 0, %s43
    %s45 = sphi 0, %s43
    %s46 = sphi 0, %s45
    %s60 = sphi 0, %s46
    %s64 = sphi 0, %s64
    %s66 = sphi 0, %s64
    %s67 = sphi 0, %s66
    %s81 = sphi 0, %s67
    %s87 = sphi 0, %s89
    %s90 = sphi 0, %s87
    %s91 = sphi 0, %s90
    %s107 = sphi 0, %s91
  $region4: #{_lambda_.106} parent=0 // loop_header_branch
    %12 = sbr.rel (%p10) target = $region8
  $region5: #{_lambda_.106} parent=0 // loop_body
    %s14 = ssub.s32 %s9, 1
    %s15 = ssub.s32 %s9, 2
    %s16 = sadd.s32 %s9, 1
    %s17 = ssub.s32 %s9, %s16
    %p18 = scmp.eq.s32.totalorder %s17, 0
    %s20 = sadd.s32 %s19, 1
    %s21 = scalar_select %p18, %s19, %s20
    %p24 = pneg %p18
    %p25 = scmp.eq.s32.totalorder %s9, 1
    %p26 = por %p24, %p25
    %p27 = scmp.ne.s32.totalorder %s19, %s22
    %p28 = scmp.eq.s32.totalorder %s9, 0
    %p29 = por %p27, %p28
    %p30 = scmp.ne.s32.totalorder %s19, %s22
    %p31 = scmp.eq.s32.totalorder %s14, 1
    %p32 = por %p30, %p31
    %p33 = scmp.ne.s32.totalorder %s22, %s23
    %p34 = scmp.eq.s32.totalorder %s14, 0
    %p35 = por %p33, %p34
    %p36 = scmp.ne.s32.totalorder %s22, %s23
    %p37 = scmp.eq.s32.totalorder %s15, 1
    %p38 = por %p36, %p37
    %p40 = scmp.ne.s32.totalorder %s23, %s39
    %p41 = scmp.eq.s32.totalorder %s15, 0
    %p42 = por %p40, %p41
    %s44 = sadd.s32 %s43, 1
    %p47 = scmp.eq.s32.totalorder %s9, 1
    %p48 = scmp.ne.s32.totalorder %s43, %s45
    %p49 = scmp.eq.s32.totalorder %s9, 0
    %p50 = por %p48, %p49
    %p51 = scmp.ne.s32.totalorder %s43, %s45
    %p52 = scmp.eq.s32.totalorder %s14, 1
    %p53 = por %p51, %p52
    %p54 = scmp.ne.s32.totalorder %s45, %s46
    %p55 = scmp.eq.s32.totalorder %s14, 0
    %p56 = por %p54, %p55
    %p57 = scmp.ne.s32.totalorder %s45, %s46
    %p58 = scmp.eq.s32.totalorder %s15, 1
    %p59 = por %p57, %p58
    %p61 = scmp.ne.s32.totalorder %s46, %s60
    %p62 = scmp.eq.s32.totalorder %s15, 0
    %p63 = por %p61, %p62
    %s65 = sadd.s32 %s64, 1
    %p68 = scmp.eq.s32.totalorder %s9, 1
    %p69 = scmp.ne.s32.totalorder %s64, %s66
    %p70 = scmp.eq.s32.totalorder %s9, 0
    %p71 = por %p69, %p70
    %p72 = scmp.ne.s32.totalorder %s64, %s66
    %p73 = scmp.eq.s32.totalorder %s14, 1
    %p74 = por %p72, %p73
    %p75 = scmp.ne.s32.totalorder %s66, %s67
    %p76 = scmp.eq.s32.totalorder %s14, 0
    %p77 = por %p75, %p76
    %p78 = scmp.ne.s32.totalorder %s66, %s67
    %p79 = scmp.eq.s32.totalorder %s15, 1
    %p80 = por %p78, %p79
    %p82 = scmp.ne.s32.totalorder %s67, %s81
    %p83 = scmp.eq.s32.totalorder %s15, 0
    %p84 = por %p82, %p83
    %s85 = ssub.s32 %s9, %s16
    %p86 = scmp.eq.s32.totalorder %s85, 0
    %s88 = sadd.s32 %s87, 1
    %s89 = scalar_select %p86, %s87, %s88
    %p92 = pneg %p86
    %p93 = scmp.eq.s32.totalorder %s9, 1
    %p94 = por %p92, %p93
    %p95 = scmp.ne.s32.totalorder %s87, %s90
    %p96 = scmp.eq.s32.totalorder %s9, 0
    %p97 = por %p95, %p96
    %p98 = scmp.ne.s32.totalorder %s87, %s90
    %p99 = scmp.eq.s32.totalorder %s14, 1
    %p100 = por %p98, %p99
    %p101 = scmp.ne.s32.totalorder %s90, %s91
    %p102 = scmp.eq.s32.totalorder %s14, 0
    %p103 = por %p101, %p102
    %p104 = scmp.ne.s32.totalorder %s90, %s91
    %p105 = scmp.eq.s32.totalorder %s15, 1
    %p106 = por %p104, %p105
    %p108 = scmp.ne.s32.totalorder %s91, %s107
    %p109 = scmp.eq.s32.totalorder %s15, 0
    %p110 = por %p108, %p109
    %p111 = scmp.le.s32.totalorder 1, %s9
    %p112 = scmp.lt.s32.totalorder %s9, 3
    %p113 = pnand %p111, %p112
    %p114 = pneg %p113
    // Predicated region
    $region9: #{_lambda_.106} parent=5 // pred_check
      _
    $region10: #{_lambda_.106} parent=5 // pred_check_branch
      %116 = sbr.rel (%p113) target = $region12
    $region11: #{_lambda_.106} parent=5 // pred_region
      %s117 = ssub.s32 %s9, 1
      // Predicated region
      $region13: #{_lambda_.106} parent=11 // pred_check
        %p118 = pneg %p56
      $region14: #{_lambda_.106} parent=11 // pred_check_branch
        %120 = sbr.rel (%p118) target = $region16
      $region15: #{_lambda_.106} parent=11 // pred_region
        _
      $region16: #{_lambda_.106} parent=11 // pred_fallthru
        _
      // Predicated region
      $region17: #{_lambda_.106} parent=11 // pred_check
        %p121 = pneg %p77
      $region18: #{_lambda_.106} parent=11 // pred_check_branch
        %123 = sbr.rel (%p121) target = $region20
      $region19: #{_lambda_.106} parent=11 // pred_region
        _
      $region20: #{_lambda_.106} parent=11 // pred_fallthru
        _
    $region12: #{_lambda_.106} parent=5 // pred_fallthru
      _
    %p124 = scmp.lt.s32.totalorder %s9, 2
    // Predicated region
    $region21: #{_lambda_.106} parent=5 // pred_check
      %p125 = pneg %p124
    $region22: #{_lambda_.106} parent=5 // pred_check_branch
      %127 = sbr.rel (%p125) target = $region24
    $region23: #{_lambda_.106} parent=5 // pred_region
      // Predicated region
      $region25: #{_lambda_.106} parent=23 // pred_check
        %p128 = pneg %p29
      $region26: #{_lambda_.106} parent=23 // pred_check_branch
        %130 = sbr.rel (%p128) target = $region28
      $region27: #{_lambda_.106} parent=23 // pred_region
        %p131 = scmp.lt.s32.totalorder %s9, 1
        %s132 = scalar_select %p131, %s9, 1
        %s133 = smul.addr %s132, 6
        %s134 = smul.addr %s133, 4
        %s135 = scalar_lea.vmem %s0, %s134
      $region28: #{_lambda_.106} parent=23 // pred_fallthru
        _
    $region24: #{_lambda_.106} parent=5 // pred_fallthru
      _
    %p136 = scmp.le.s32.totalorder 1, %s9
    %p137 = scmp.lt.s32.totalorder %s9, 3
    %p138 = pnand %p136, %p137
    %p139 = pneg %p138
    // Predicated region
    $region29: #{_lambda_.106} parent=5 // pred_check
      _
    $region30: #{_lambda_.106} parent=5 // pred_check_branch
      %141 = sbr.rel (%p138) target = $region32
    $region31: #{_lambda_.106} parent=5 // pred_region
      %s142 = ssub.s32 %s9, 1
      %p143 = scmp.lt.s32.totalorder %s14, 1
      %s144 = scalar_select %p143, %s14, 1
      %s145 = smul.addr %s144, 6
      %s146 = smul.addr %s145, 4
      %s147 = scalar_lea.vmem %s0, %s146
      %p148 = pneg %p35
      %p149 = pneg %p32
      %p150 = pneg %p56
      %p151 = pneg %p53
      %p152 = pneg %p77
      %p153 = pneg %p74
      %p154 = pneg %p103
      %p155 = pneg %p100
      %p156 = scmp.lt.s32.totalorder %s14, 1
      %s157 = scalar_select %p156, %s14, 1
      %s158 = smul.addr %s157, 2
      %s159 = scalar_lea.vmem %s3, %s158
      %p160 = scmp.lt.s32.totalorder %s14, 1
      %s161 = scalar_select %p160, %s14, 1
      %s162 = smul.addr %s161, 6
      %s163 = smul.addr %s162, 4
      %s164 = scalar_lea.vmem %s0, %s163
      %p165 = scmp.lt.s32.totalorder %s14, 1
      %s166 = scalar_select %p165, %s14, 1
      %s167 = smul.addr %s166, 2
      %s168 = scalar_lea.vmem %s3, %s167
      %v169 = vld [vmem:[%s164] sm:$0x77]
      %v170 = vld [vmem:[%s164 + $0x8] sm:$0x77]
      %v171 = vld [vmem:[%s164 + $0x10] sm:$0x77]
      %v172 = vld [vmem:[%s1] sm:$0x3]
      %v173 = vld [vmem:[%s1 + $0x2] sm:$0x3]
      %v174 = vld [vmem:[%s1 + $0x4] sm:$0x3]
      %v175 = vld [vmem:[%s1 + $0x6] sm:$0x3]
      %v176 = vld [vmem:[%s1 + $0x8] sm:$0x3]
      %v177 = vld [vmem:[%s1 + $0xa] sm:$0x3]
      %v178 = vld [vmem:[%s1 + $0xc] sm:$0x3]
      %v179 = vld [vmem:[%s1 + $0xe] sm:$0x3]
      %v180 = vld [vmem:[%s1 + $0x10] sm:$0x3]
      %v181 = vld [vmem:[%s2] sm:$0x3]
      %v184 = vunpack.c.l.s4 286326784
      %v185 = vunpack.c.0.s8 %v184
      %v186 = vlaneseq
      %v187 = vshrl.u32 %v186, 7
      %v188 = vsub.s32 %v185, %v187
      %v189 = vrot.slane %v172, %v188
      %v191 = vmul.f32 %v169, %v189
      %v194 = vunpack.c.l.s4 286326784
      %v195 = vunpack.c.0.s8 %v194
      %v196 = vlaneseq
      %v197 = vshrl.u32 %v196, 7
      %v198 = vsub.s32 %v195, %v197
      %v199 = vrot.slane %v173, %v198
      %v201 = vmul.f32 %v169, %v199
      %v203 = vrot.slane %v201, 5
      %v204 = vrot.slane %v203, 4
      %v206 = vadd.f32 %v191, %v204
      %v209 = vunpack.c.l.s4 286326784
      %v210 = vunpack.c.0.s8 %v209
      %v211 = vlaneseq
      %v212 = vshrl.u32 %v211, 7
      %v213 = vsub.s32 %v210, %v212
      %v214 = vrot.slane %v174, %v213
      %v216 = vmul.f32 %v169, %v214
      %v218 = vrot.slane %v216, 6
      %v219 = vrot.slane %v218, 4
      %v221 = vadd.f32 %v206, %v219
      %v224 = vunpack.c.l.s4 286326784
      %v225 = vunpack.c.0.s8 %v224
      %v226 = vlaneseq
      %v227 = vshrl.u32 %v226, 7
      %v228 = vsub.s32 %v225, %v227
      %v229 = vrot.slane %v175, %v228
      %v231 = vmul.f32 %v170, %v229
      %v232 = vadd.f32 %v221, %v231
      %v235 = vunpack.c.l.s4 286326784
      %v236 = vunpack.c.0.s8 %v235
      %v237 = vlaneseq
      %v238 = vshrl.u32 %v237, 7
      %v239 = vsub.s32 %v236, %v238
      %v240 = vrot.slane %v176, %v239
      %v242 = vmul.f32 %v170, %v240
      %v244 = vrot.slane %v242, 5
      %v245 = vrot.slane %v244, 4
      %v247 = vadd.f32 %v232, %v245
      %v250 = vunpack.c.l.s4 286326784
      %v251 = vunpack.c.0.s8 %v250
      %v252 = vlaneseq
      %v253 = vshrl.u32 %v252, 7
      %v254 = vsub.s32 %v251, %v253
      %v255 = vrot.slane %v177, %v254
      %v257 = vmul.f32 %v170, %v255
      %v259 = vrot.slane %v257, 6
      %v260 = vrot.slane %v259, 4
      %v262 = vadd.f32 %v247, %v260
      %v265 = vunpack.c.l.s4 286326784
      %v266 = vunpack.c.0.s8 %v265
      %v267 = vlaneseq
      %v268 = vshrl.u32 %v267, 7
      %v269 = vsub.s32 %v266, %v268
      %v270 = vrot.slane %v178, %v269
      %v272 = vmul.f32 %v171, %v270
      %v273 = vadd.f32 %v262, %v272
      %v276 = vunpack.c.l.s4 286326784
      %v277 = vunpack.c.0.s8 %v276
      %v278 = vlaneseq
      %v279 = vshrl.u32 %v278, 7
      %v280 = vsub.s32 %v277, %v279
      %v281 = vrot.slane %v179, %v280
      %v283 = vmul.f32 %v171, %v281
      %v285 = vrot.slane %v283, 5
      %v286 = vrot.slane %v285, 4
      %v288 = vadd.f32 %v273, %v286
      %v291 = vunpack.c.l.s4 286326784
      %v292 = vunpack.c.0.s8 %v291
      %v293 = vlaneseq
      %v294 = vshrl.u32 %v293, 7
      %v295 = vsub.s32 %v292, %v294
      %v296 = vrot.slane %v180, %v295
      %v298 = vmul.f32 %v171, %v296
      %v300 = vrot.slane %v298, 6
      %v301 = vrot.slane %v300, 4
      %v303 = vadd.f32 %v288, %v301
      %v306 = vunpack.c.l.s4 286326784
      %v307 = vunpack.c.0.s8 %v306
      %v308 = vlaneseq
      %v309 = vshrl.u32 %v308, 7
      %v310 = vsub.s32 %v307, %v309
      %v311 = vrot.slane %v181, %v310
      %v313 = vadd.f32 %v303, %v311
      %v316 = vunpack.c.l.s4 1966171168
      %v317 = vunpack.c.0.s8 %v316
      %v318 = vlaneseq
      %v319 = vshrl.u32 %v318, 7
      %v320 = vsub.s32 %v317, %v319
      %v321 = vrot.slane %v313, %v320
      %v323 = vunpack.c.l.s4 1966171168
      %v324 = vunpack.c.0.s8 %v323
      %v325 = vlaneseq
      %v326 = vshrl.u32 %v325, 7
      %v327 = vsub.s32 %v324, %v326
      %v328 = vrot.slane %v321, %v327
      %v330 = vlaneseq
      %vm331 = vcmp.ge.s32.totalorder %v330, 0
      %vm332 = vcmp.lt.s32.totalorder %v330, 232
      %vm333 = vmand %vm331, %vm332
      %334 = vst.msk [vmem:[%s168] sm:$0x3] %vm333, %v328
      %p335 = scmp.lt.s32.totalorder %s14, 1
      %s336 = scalar_select %p335, %s14, 1
      %s337 = smul.addr %s336, 2
      %s338 = scalar_lea.vmem %s3, %s337
      // Predicated region
      $region33: #{_lambda_.106} parent=31 // pred_check
        %p339 = pneg %p100
      $region34: #{_lambda_.106} parent=31 // pred_check_branch
        %341 = sbr.rel (%p339) target = $region36
      $region35: #{_lambda_.106} parent=31 // pred_region
        _
      $region36: #{_lambda_.106} parent=31 // pred_fallthru
        _
    $region32: #{_lambda_.106} parent=5 // pred_fallthru
      _
    %p342 = scmp.le.s32.totalorder 2, %s9
    // Predicated region
    $region37: #{_lambda_.106} parent=5 // pred_check
      %p343 = pneg %p342
    $region38: #{_lambda_.106} parent=5 // pred_check_branch
      %345 = sbr.rel (%p343) target = $region40
    $region39: #{_lambda_.106} parent=5 // pred_region
      %s346 = ssub.s32 %s9, 2
      // Predicated region
      $region41: #{_lambda_.106} parent=39 // pred_check
        %p347 = pneg %p106
      $region42: #{_lambda_.106} parent=39 // pred_check_branch
        %349 = sbr.rel (%p347) target = $region44
      $region43: #{_lambda_.106} parent=39 // pred_region
        %p350 = scmp.lt.s32.totalorder %s15, 1
        %s351 = scalar_select %p350, %s15, 1
        %s352 = smul.addr %s351, 2
        %s353 = scalar_lea.vmem %s3, %s352
      $region44: #{_lambda_.106} parent=39 // pred_fallthru
        _
    $region40: #{_lambda_.106} parent=5 // pred_fallthru
      _
  $region6: #{_lambda_.106} parent=0 // loop_footer
    %s13 = sadd.s32 1, %s9
  $region7: #{_lambda_.106} parent=0 // loop_footer_branch
    %8 = sbr.rel target = $region3
  $region8: #{_lambda_.106} parent=0 // loop_exit
    _

// kernel: _lambda_.115
$region0: #{_lambda_.115}
  #allocation0 [shape = 'u32[]', space=smem, size = 0x4, offset = 0x4, fixed_abs, tag = 'smem constant byte address 0x4 - core index']
  #allocation1 [shape = 'u32[144,128]{1,0:T(1,128)}', space=vmem, size = 0x12000, scoped, tag = 'internal scratch']
  %s0 = inlined_call_operand.vmem [shape: f32[2,1,1024], index: 0, kind: input, shape index: {}]
  %s1 = inlined_call_operand.vmem [shape: bf16[1024,39], index: 1, kind: input, shape index: {}]
  %s2 = inlined_call_operand.vmem [shape: f32[1,39], index: 2, kind: input, shape index: {}]
  %s3 = inlined_call_operand.hbm [shape: f32[2,39], index: 3, kind: output, shape index: {}]
  %s4 = sld [smem:[#allocation0]]
  $region22: #{_lambda_.115} parent=0
    _
  %s6 = ssub.s32 1, %s4
  %s7 = scalar_select 0, %s6, %s4
  $region1: #{_lambda_.115} parent=0
    #allocation2 [shape = 'u8[1024]{0}', space=vmem, size = 0x400, scoped, tag = 'output window, operand 0, single buffered']
    #allocation3 [shape = 's32[1]{0}', space=sflag, size = 0x4, scoped, tag = 'scoped memory for _lambda_.115']
    %8 = vsyncpa [#allocation3], 0
    // Predicated region
    $region2: #{_lambda_.115} parent=1 // pred_check
      _
    $region3: #{_lambda_.115} parent=1 // pred_check_branch
      %10 = sbr.rel (0) target = $region5
    $region4: #{_lambda_.115} parent=1 // pred_region
      _
    $region5: #{_lambda_.115} parent=1 // pred_fallthru
      _
    // Predicated region
    $region6: #{_lambda_.115} parent=1 // pred_check
      _
    $region7: #{_lambda_.115} parent=1 // pred_check_branch
      %12 = sbr.rel (0) target = $region9
    $region8: #{_lambda_.115} parent=1 // pred_region
      _
    $region9: #{_lambda_.115} parent=1 // pred_fallthru
      _
    // Predicated region
    $region10: #{_lambda_.115} parent=1 // pred_check
      _
    $region11: #{_lambda_.115} parent=1 // pred_check_branch
      %14 = sbr.rel (0) target = $region13
    $region12: #{_lambda_.115} parent=1 // pred_region
      _
    $region13: #{_lambda_.115} parent=1 // pred_fallthru
      _
    %v16 = vld [vmem:[%s0] sm:$0xff]
    %v17 = vld [vmem:[%s0 + $0x8] sm:$0xff]
    %v18 = vadd.f32 %v16, 0.0
    %v19 = vadd.f32 %v17, 0.0
    %v22 = vlaneseq
    %v23 = vshrl.u32 %v22, 7
    %v24 = vsub.s32 0, %v23
    %v25 = vrot.slane %v18, %v24
    %v26 = vlaneseq
    %v27 = vshrl.u32 %v26, 7
    %v28 = vsub.s32 1, %v27
    %v29 = vrot.slane %v18, %v28
    %v30 = vlaneseq
    %v31 = vshrl.u32 %v30, 7
    %v32 = vsub.s32 2, %v31
    %v33 = vrot.slane %v18, %v32
    %v34 = vlaneseq
    %v35 = vshrl.u32 %v34, 7
    %v36 = vsub.s32 3, %v35
    %v37 = vrot.slane %v18, %v36
    %v38 = vlaneseq
    %v39 = vshrl.u32 %v38, 7
    %v40 = vsub.s32 4, %v39
    %v41 = vrot.slane %v18, %v40
    %v42 = vlaneseq
    %v43 = vshrl.u32 %v42, 7
    %v44 = vsub.s32 5, %v43
    %v45 = vrot.slane %v18, %v44
    %v46 = vlaneseq
    %v47 = vshrl.u32 %v46, 7
    %v48 = vsub.s32 6, %v47
    %v49 = vrot.slane %v18, %v48
    %v50 = vlaneseq
    %v51 = vshrl.u32 %v50, 7
    %v52 = vsub.s32 7, %v51
    %v53 = vrot.slane %v18, %v52
    %v54 = vlaneseq
    %v55 = vshrl.u32 %v54, 7
    %v56 = vsub.s32 0, %v55
    %v57 = vrot.slane %v19, %v56
    %v58 = vlaneseq
    %v59 = vshrl.u32 %v58, 7
    %v60 = vsub.s32 1, %v59
    %v61 = vrot.slane %v19, %v60
    %v62 = vlaneseq
    %v63 = vshrl.u32 %v62, 7
    %v64 = vsub.s32 2, %v63
    %v65 = vrot.slane %v19, %v64
    %v66 = vlaneseq
    %v67 = vshrl.u32 %v66, 7
    %v68 = vsub.s32 3, %v67
    %v69 = vrot.slane %v19, %v68
    %v70 = vlaneseq
    %v71 = vshrl.u32 %v70, 7
    %v72 = vsub.s32 4, %v71
    %v73 = vrot.slane %v19, %v72
    %v74 = vlaneseq
    %v75 = vshrl.u32 %v74, 7
    %v76 = vsub.s32 5, %v75
    %v77 = vrot.slane %v19, %v76
    %v78 = vlaneseq
    %v79 = vshrl.u32 %v78, 7
    %v80 = vsub.s32 6, %v79
    %v81 = vrot.slane %v19, %v80
    %v82 = vlaneseq
    %v83 = vshrl.u32 %v82, 7
    %v84 = vsub.s32 7, %v83
    %v85 = vrot.slane %v19, %v84
    %v102 = vpack.c.bf16 %v25, %v25
    %v103 = vpack.c.bf16 %v29, %v29
    %v104 = vpack.c.bf16 %v33, %v33
    %v105 = vpack.c.bf16 %v37, %v37
    %v106 = vpack.c.bf16 %v41, %v41
    %v107 = vpack.c.bf16 %v45, %v45
    %v108 = vpack.c.bf16 %v49, %v49
    %v109 = vpack.c.bf16 %v53, %v53
    %v110 = vpack.c.bf16 %v57, %v57
    %v111 = vpack.c.bf16 %v61, %v61
    %v112 = vpack.c.bf16 %v65, %v65
    %v113 = vpack.c.bf16 %v69, %v69
    %v114 = vpack.c.bf16 %v73, %v73
    %v115 = vpack.c.bf16 %v77, %v77
    %v116 = vpack.c.bf16 %v81, %v81
    %v117 = vpack.c.bf16 %v85, %v85
    %v118 = vld [vmem:[%s1] sm:$0xf]
    %v119 = vld [vmem:[%s1 + $0x4] sm:$0xf]
    %v120 = vld [vmem:[%s1 + $0x8] sm:$0xf]
    %v121 = vld [vmem:[%s1 + $0xc] sm:$0xf]
    %v122 = vld [vmem:[%s1 + $0x10] sm:$0xf]
    %v123 = vld [vmem:[%s1 + $0x14] sm:$0xf]
    %v124 = vld [vmem:[%s1 + $0x18] sm:$0xf]
    %v125 = vld [vmem:[%s1 + $0x1c] sm:$0xf]
    %v126 = vld [vmem:[%s1 + $0x20] sm:$0xf]
    %v127 = vld [vmem:[%s1 + $0x24] sm:$0xf]
    %v128 = vld [vmem:[%s1 + $0x28] sm:$0xf]
    %v129 = vld [vmem:[%s1 + $0x2c] sm:$0xf]
    %v130 = vld [vmem:[%s1 + $0x30] sm:$0xf]
    %v131 = vld [vmem:[%s1 + $0x34] sm:$0xf]
    %v132 = vld [vmem:[%s1 + $0x38] sm:$0xf]
    %v133 = vld [vmem:[%s1 + $0x3c] sm:$0xf]
    %v134 = vld [vmem:[%s1 + $0x40] sm:$0xf]
    %v135 = vld [vmem:[%s1 + $0x44] sm:$0xf]
    %v136 = vld [vmem:[%s1 + $0x48] sm:$0xf]
    %v137 = vld [vmem:[%s1 + $0x4c] sm:$0xf]
    %v138 = vld [vmem:[%s1 + $0x50] sm:$0xf]
    %v139 = vld [vmem:[%s1 + $0x54] sm:$0xf]
    %v140 = vld [vmem:[%s1 + $0x58] sm:$0xf]
    %v141 = vld [vmem:[%s1 + $0x5c] sm:$0xf]
    %v142 = vld [vmem:[%s1 + $0x60] sm:$0xf]
    %v143 = vld [vmem:[%s1 + $0x64] sm:$0xf]
    %v144 = vld [vmem:[%s1 + $0x68] sm:$0xf]
    %v145 = vld [vmem:[%s1 + $0x6c] sm:$0xf]
    %v146 = vld [vmem:[%s1 + $0x70] sm:$0xf]
    %v147 = vld [vmem:[%s1 + $0x74] sm:$0xf]
    %v148 = vld [vmem:[%s1 + $0x78] sm:$0xf]
    %v149 = vld [vmem:[%s1 + $0x7c] sm:$0xf]
    %v150 = vld [vmem:[%s1 + $0x80] sm:$0xf]
    %v151 = vld [vmem:[%s1 + $0x84] sm:$0xf]
    %v152 = vld [vmem:[%s1 + $0x88] sm:$0xf]
    %v153 = vld [vmem:[%s1 + $0x8c] sm:$0xf]
    %v154 = vld [vmem:[%s1 + $0x90] sm:$0xf]
    %v155 = vld [vmem:[%s1 + $0x94] sm:$0xf]
    %v156 = vld [vmem:[%s1 + $0x98] sm:$0xf]
    %v157 = vld [vmem:[%s1 + $0x9c] sm:$0xf]
    %v158 = vld [vmem:[%s1 + $0xa0] sm:$0xf]
    %v159 = vld [vmem:[%s1 + $0xa4] sm:$0xf]
    %v160 = vld [vmem:[%s1 + $0xa8] sm:$0xf]
    %v161 = vld [vmem:[%s1 + $0xac] sm:$0xf]
    %v162 = vld [vmem:[%s1 + $0xb0] sm:$0xf]
    %v163 = vld [vmem:[%s1 + $0xb4] sm:$0xf]
    %v164 = vld [vmem:[%s1 + $0xb8] sm:$0xf]
    %v165 = vld [vmem:[%s1 + $0xbc] sm:$0xf]
    %v166 = vld [vmem:[%s1 + $0xc0] sm:$0xf]
    %v167 = vld [vmem:[%s1 + $0xc4] sm:$0xf]
    %v168 = vld [vmem:[%s1 + $0xc8] sm:$0xf]
    %v169 = vld [vmem:[%s1 + $0xcc] sm:$0xf]
    %v170 = vld [vmem:[%s1 + $0xd0] sm:$0xf]
    %v171 = vld [vmem:[%s1 + $0xd4] sm:$0xf]
    %v172 = vld [vmem:[%s1 + $0xd8] sm:$0xf]
    %v173 = vld [vmem:[%s1 + $0xdc] sm:$0xf]
    %v174 = vld [vmem:[%s1 + $0xe0] sm:$0xf]
    %v175 = vld [vmem:[%s1 + $0xe4] sm:$0xf]
    %v176 = vld [vmem:[%s1 + $0xe8] sm:$0xf]
    %v177 = vld [vmem:[%s1 + $0xec] sm:$0xf]
    %v178 = vld [vmem:[%s1 + $0xf0] sm:$0xf]
    %v179 = vld [vmem:[%s1 + $0xf4] sm:$0xf]
    %v180 = vld [vmem:[%s1 + $0xf8] sm:$0xf]
    %v181 = vld [vmem:[%s1 + $0xfc] sm:$0xf]
    %v182 = vld [vmem:[%s1 + $0x100] sm:$0xf]
    %v183 = vld [vmem:[%s1 + $0x104] sm:$0xf]
    %v184 = vld [vmem:[%s1 + $0x108] sm:$0xf]
    %v185 = vld [vmem:[%s1 + $0x10c] sm:$0xf]
    %v186 = vld [vmem:[%s1 + $0x110] sm:$0xf]
    %v187 = vld [vmem:[%s1 + $0x114] sm:$0xf]
    %v188 = vld [vmem:[%s1 + $0x118] sm:$0xf]
    %v189 = vld [vmem:[%s1 + $0x11c] sm:$0xf]
    %v190 = vld [vmem:[%s1 + $0x120] sm:$0xf]
    %v191 = vld [vmem:[%s1 + $0x124] sm:$0xf]
    %v192 = vld [vmem:[%s1 + $0x128] sm:$0xf]
    %v193 = vld [vmem:[%s1 + $0x12c] sm:$0xf]
    %v194 = vld [vmem:[%s1 + $0x130] sm:$0xf]
    %v195 = vld [vmem:[%s1 + $0x134] sm:$0xf]
    %v196 = vld [vmem:[%s1 + $0x138] sm:$0xf]
    %v197 = vld [vmem:[%s1 + $0x13c] sm:$0xf]
    %v198 = vld [vmem:[%s1 + $0x140] sm:$0xf]
    %v199 = vld [vmem:[%s1 + $0x144] sm:$0xf]
    %v200 = vld [vmem:[%s1 + $0x148] sm:$0xf]
    %v201 = vld [vmem:[%s1 + $0x14c] sm:$0xf]
    %v202 = vld [vmem:[%s1 + $0x150] sm:$0xf]
    %v203 = vld [vmem:[%s1 + $0x154] sm:$0xf]
    %v204 = vld [vmem:[%s1 + $0x158] sm:$0xf]
    %v205 = vld [vmem:[%s1 + $0x15c] sm:$0xf]
    %v206 = vld [vmem:[%s1 + $0x160] sm:$0xf]
    %v207 = vld [vmem:[%s1 + $0x164] sm:$0xf]
    %v208 = vld [vmem:[%s1 + $0x168] sm:$0xf]
    %v209 = vld [vmem:[%s1 + $0x16c] sm:$0xf]
    %v210 = vld [vmem:[%s1 + $0x170] sm:$0xf]
    %v211 = vld [vmem:[%s1 + $0x174] sm:$0xf]
    %v212 = vld [vmem:[%s1 + $0x178] sm:$0xf]
    %v213 = vld [vmem:[%s1 + $0x17c] sm:$0xf]
    %v214 = vld [vmem:[%s1 + $0x180] sm:$0xf]
    %v215 = vld [vmem:[%s1 + $0x184] sm:$0xf]
    %v216 = vld [vmem:[%s1 + $0x188] sm:$0xf]
    %v217 = vld [vmem:[%s1 + $0x18c] sm:$0xf]
    %v218 = vld [vmem:[%s1 + $0x190] sm:$0xf]
    %v219 = vld [vmem:[%s1 + $0x194] sm:$0xf]
    %v220 = vld [vmem:[%s1 + $0x198] sm:$0xf]
    %v221 = vld [vmem:[%s1 + $0x19c] sm:$0xf]
    %v222 = vld [vmem:[%s1 + $0x1a0] sm:$0xf]
    %v223 = vld [vmem:[%s1 + $0x1a4] sm:$0xf]
    %v224 = vld [vmem:[%s1 + $0x1a8] sm:$0xf]
    %v225 = vld [vmem:[%s1 + $0x1ac] sm:$0xf]
    %v226 = vld [vmem:[%s1 + $0x1b0] sm:$0xf]
    %v227 = vld [vmem:[%s1 + $0x1b4] sm:$0xf]
    %v228 = vld [vmem:[%s1 + $0x1b8] sm:$0xf]
    %v229 = vld [vmem:[%s1 + $0x1bc] sm:$0xf]
    %v230 = vld [vmem:[%s1 + $0x1c0] sm:$0xf]
    %v231 = vld [vmem:[%s1 + $0x1c4] sm:$0xf]
    %v232 = vld [vmem:[%s1 + $0x1c8] sm:$0xf]
    %v233 = vld [vmem:[%s1 + $0x1cc] sm:$0xf]
    %v234 = vld [vmem:[%s1 + $0x1d0] sm:$0xf]
    %v235 = vld [vmem:[%s1 + $0x1d4] sm:$0xf]
    %v236 = vld [vmem:[%s1 + $0x1d8] sm:$0xf]
    %v237 = vld [vmem:[%s1 + $0x1dc] sm:$0xf]
    %v238 = vld [vmem:[%s1 + $0x1e0] sm:$0xf]
    %v239 = vld [vmem:[%s1 + $0x1e4] sm:$0xf]
    %v240 = vld [vmem:[%s1 + $0x1e8] sm:$0xf]
    %v241 = vld [vmem:[%s1 + $0x1ec] sm:$0xf]
    %v242 = vld [vmem:[%s1 + $0x1f0] sm:$0xf]
    %v243 = vld [vmem:[%s1 + $0x1f4] sm:$0xf]
    %v244 = vld [vmem:[%s1 + $0x1f8] sm:$0xf]
    %v245 = vld [vmem:[%s1 + $0x1fc] sm:$0xf]
    %v246 = vld [vmem:[%s2] sm:$0x1]
    %v248 = vlaneseq
    %v249 = vshrl.u32 %v248, 7
    %v250 = vsub.s32 0, %v249
    %v251 = vrot.slane %v246, %v250
    %v269 = vunpack.c.l.b16 %v102
    %v270 = vunpack.c.l.b16 %v103
    %v271 = vunpack.c.l.b16 %v104
    %v272 = vunpack.c.l.b16 %v105
    %v273 = vunpack.c.l.b16 %v106
    %v274 = vunpack.c.l.b16 %v107
    %v275 = vunpack.c.l.b16 %v108
    %v276 = vunpack.c.l.b16 %v109
    %v277 = vunpack.c.l.b16 %v110
    %v278 = vunpack.c.l.b16 %v111
    %v279 = vunpack.c.l.b16 %v112
    %v280 = vunpack.c.l.b16 %v113
    %v281 = vunpack.c.l.b16 %v114
    %v282 = vunpack.c.l.b16 %v115
    %v283 = vunpack.c.l.b16 %v116
    %v284 = vunpack.c.l.b16 %v117
    %v285 = vrot.slane %v277, 7
    %vm286 = vcmask 1041409
    %v287 = vsel %vm286, %v285, %v269
    %v288 = vrot.slane %v278, 7
    %v289 = vsel %vm286, %v288, %v270
    %v290 = vrot.slane %v279, 7
    %v291 = vsel %vm286, %v290, %v271
    %v292 = vrot.slane %v280, 7
    %v293 = vsel %vm286, %v292, %v272
    %v294 = vrot.slane %v281, 7
    %v295 = vsel %vm286, %v294, %v273
    %v296 = vrot.slane %v282, 7
    %v297 = vsel %vm286, %v296, %v274
    %v298 = vrot.slane %v283, 7
    %v299 = vsel %vm286, %v298, %v275
    %v300 = vrot.slane %v284, 7
    %v301 = vsel %vm286, %v300, %v276
    %v302 = vpack.c.b16 %v287, %v287
    %v303 = vpack.c.b16 %v289, %v289
    %v304 = vpack.c.b16 %v291, %v291
    %v305 = vpack.c.b16 %v293, %v293
    %v306 = vpack.c.b16 %v295, %v295
    %v307 = vpack.c.b16 %v297, %v297
    %v308 = vpack.c.b16 %v299, %v299
    %v309 = vpack.c.b16 %v301, %v301
    %v446 = vunpack.c.l.b16 %v118
    %v447 = vunpack.c.l.b16 %v119
    %v448 = vunpack.c.l.b16 %v120
    %v449 = vunpack.c.l.b16 %v121
    %v450 = vunpack.c.l.b16 %v122
    %v451 = vunpack.c.l.b16 %v123
    %v452 = vunpack.c.l.b16 %v124
    %v453 = vunpack.c.l.b16 %v125
    %v454 = vunpack.c.l.b16 %v126
    %v455 = vunpack.c.l.b16 %v127
    %v456 = vunpack.c.l.b16 %v128
    %v457 = vunpack.c.l.b16 %v129
    %v458 = vunpack.c.l.b16 %v130
    %v459 = vunpack.c.l.b16 %v131
    %v460 = vunpack.c.l.b16 %v132
    %v461 = vunpack.c.l.b16 %v133
    %v462 = vunpack.c.l.b16 %v134
    %v463 = vunpack.c.l.b16 %v135
    %v464 = vunpack.c.l.b16 %v136
    %v465 = vunpack.c.l.b16 %v137
    %v466 = vunpack.c.l.b16 %v138
    %v467 = vunpack.c.l.b16 %v139
    %v468 = vunpack.c.l.b16 %v140
    %v469 = vunpack.c.l.b16 %v141
    %v470 = vunpack.c.l.b16 %v142
    %v471 = vunpack.c.l.b16 %v143
    %v472 = vunpack.c.l.b16 %v144
    %v473 = vunpack.c.l.b16 %v145
    %v474 = vunpack.c.l.b16 %v146
    %v475 = vunpack.c.l.b16 %v147
    %v476 = vunpack.c.l.b16 %v148
    %v477 = vunpack.c.l.b16 %v149
    %v478 = vunpack.c.l.b16 %v150
    %v479 = vunpack.c.l.b16 %v151
    %v480 = vunpack.c.l.b16 %v152
    %v481 = vunpack.c.l.b16 %v153
    %v482 = vunpack.c.l.b16 %v154
    %v483 = vunpack.c.l.b16 %v155
    %v484 = vunpack.c.l.b16 %v156
    %v485 = vunpack.c.l.b16 %v157
    %v486 = vunpack.c.l.b16 %v158
    %v487 = vunpack.c.l.b16 %v159
    %v488 = vunpack.c.l.b16 %v160
    %v489 = vunpack.c.l.b16 %v161
    %v490 = vunpack.c.l.b16 %v162
    %v491 = vunpack.c.l.b16 %v163
    %v492 = vunpack.c.l.b16 %v164
    %v493 = vunpack.c.l.b16 %v165
    %v494 = vunpack.c.l.b16 %v166
    %v495 = vunpack.c.l.b16 %v167
    %v496 = vunpack.c.l.b16 %v168
    %v497 = vunpack.c.l.b16 %v169
    %v498 = vunpack.c.l.b16 %v170
    %v499 = vunpack.c.l.b16 %v171
    %v500 = vunpack.c.l.b16 %v172
    %v501 = vunpack.c.l.b16 %v173
    %v502 = vunpack.c.l.b16 %v174
    %v503 = vunpack.c.l.b16 %v175
    %v504 = vunpack.c.l.b16 %v176
    %v505 = vunpack.c.l.b16 %v177
    %v506 = vunpack.c.l.b16 %v178
    %v507 = vunpack.c.l.b16 %v179
    %v508 = vunpack.c.l.b16 %v180
    %v509 = vunpack.c.l.b16 %v181
    %v510 = vunpack.c.l.b16 %v182
    %v511 = vunpack.c.l.b16 %v183
    %v512 = vunpack.c.l.b16 %v184
    %v513 = vunpack.c.l.b16 %v185
    %v514 = vunpack.c.l.b16 %v186
    %v515 = vunpack.c.l.b16 %v187
    %v516 = vunpack.c.l.b16 %v188
    %v517 = vunpack.c.l.b16 %v189
    %v518 = vunpack.c.l.b16 %v190
    %v519 = vunpack.c.l.b16 %v191
    %v520 = vunpack.c.l.b16 %v192
    %v521 = vunpack.c.l.b16 %v193
    %v522 = vunpack.c.l.b16 %v194
    %v523 = vunpack.c.l.b16 %v195
    %v524 = vunpack.c.l.b16 %v196
    %v525 = vunpack.c.l.b16 %v197
    %v526 = vunpack.c.l.b16 %v198
    %v527 = vunpack.c.l.b16 %v199
    %v528 = vunpack.c.l.b16 %v200
    %v529 = vunpack.c.l.b16 %v201
    %v530 = vunpack.c.l.b16 %v202
    %v531 = vunpack.c.l.b16 %v203
    %v532 = vunpack.c.l.b16 %v204
    %v533 = vunpack.c.l.b16 %v205
    %v534 = vunpack.c.l.b16 %v206
    %v535 = vunpack.c.l.b16 %v207
    %v536 = vunpack.c.l.b16 %v208
    %v537 = vunpack.c.l.b16 %v209
    %v538 = vunpack.c.l.b16 %v210
    %v539 = vunpack.c.l.b16 %v211
    %v540 = vunpack.c.l.b16 %v212
    %v541 = vunpack.c.l.b16 %v213
    %v542 = vunpack.c.l.b16 %v214
    %v543 = vunpack.c.l.b16 %v215
    %v544 = vunpack.c.l.b16 %v216
    %v545 = vunpack.c.l.b16 %v217
    %v546 = vunpack.c.l.b16 %v218
    %v547 = vunpack.c.l.b16 %v219
    %v548 = vunpack.c.l.b16 %v220
    %v549 = vunpack.c.l.b16 %v221
    %v550 = vunpack.c.l.b16 %v222
    %v551 = vunpack.c.l.b16 %v223
    %v552 = vunpack.c.l.b16 %v224
    %v553 = vunpack.c.l.b16 %v225
    %v554 = vunpack.c.l.b16 %v226
    %v555 = vunpack.c.l.b16 %v227
    %v556 = vunpack.c.l.b16 %v228
    %v557 = vunpack.c.l.b16 %v229
    %v558 = vunpack.c.l.b16 %v230
    %v559 = vunpack.c.l.b16 %v231
    %v560 = vunpack.c.l.b16 %v232
    %v561 = vunpack.c.l.b16 %v233
    %v562 = vunpack.c.l.b16 %v234
    %v563 = vunpack.c.l.b16 %v235
    %v564 = vunpack.c.l.b16 %v236
    %v565 = vunpack.c.l.b16 %v237
    %v566 = vunpack.c.l.b16 %v238
    %v567 = vunpack.c.l.b16 %v239
    %v568 = vunpack.c.l.b16 %v240
    %v569 = vunpack.c.l.b16 %v241
    %v570 = vunpack.c.l.b16 %v242
    %v571 = vunpack.c.l.b16 %v243
    %v572 = vunpack.c.l.b16 %v244
    %v573 = vunpack.c.l.b16 %v245
    %v574 = vpack.c.b16 %v447, %v446
    %v575 = vpack.c.b16 %v449, %v448
    %v576 = vpack.c.b16 %v451, %v450
    %v577 = vpack.c.b16 %v453, %v452
    %v578 = vpack.c.b16 %v455, %v454
    %v579 = vpack.c.b16 %v457, %v456
    %v580 = vpack.c.b16 %v459, %v458
    %v581 = vpack.c.b16 %v461, %v460
    %v582 = vpack.c.b16 %v463, %v462
    %v583 = vpack.c.b16 %v465, %v464
    %v584 = vpack.c.b16 %v467, %v466
    %v585 = vpack.c.b16 %v469, %v468
    %v586 = vpack.c.b16 %v471, %v470
    %v587 = vpack.c.b16 %v473, %v472
    %v588 = vpack.c.b16 %v475, %v474
    %v589 = vpack.c.b16 %v477, %v476
    %v590 = vpack.c.b16 %v479, %v478
    %v591 = vpack.c.b16 %v481, %v480
    %v592 = vpack.c.b16 %v483, %v482
    %v593 = vpack.c.b16 %v485, %v484
    %v594 = vpack.c.b16 %v487, %v486
    %v595 = vpack.c.b16 %v489, %v488
    %v596 = vpack.c.b16 %v491, %v490
    %v597 = vpack.c.b16 %v493, %v492
    %v598 = vpack.c.b16 %v495, %v494
    %v599 = vpack.c.b16 %v497, %v496
    %v600 = vpack.c.b16 %v499, %v498
    %v601 = vpack.c.b16 %v501, %v500
    %v602 = vpack.c.b16 %v503, %v502
    %v603 = vpack.c.b16 %v505, %v504
    %v604 = vpack.c.b16 %v507, %v506
    %v605 = vpack.c.b16 %v509, %v508
    %v606 = vpack.c.b16 %v511, %v510
    %v607 = vpack.c.b16 %v513, %v512
    %v608 = vpack.c.b16 %v515, %v514
    %v609 = vpack.c.b16 %v517, %v516
    %v610 = vpack.c.b16 %v519, %v518
    %v611 = vpack.c.b16 %v521, %v520
    %v612 = vpack.c.b16 %v523, %v522
    %v613 = vpack.c.b16 %v525, %v524
    %v614 = vpack.c.b16 %v527, %v526
    %v615 = vpack.c.b16 %v529, %v528
    %v616 = vpack.c.b16 %v531, %v530
    %v617 = vpack.c.b16 %v533, %v532
    %v618 = vpack.c.b16 %v535, %v534
    %v619 = vpack.c.b16 %v537, %v536
    %v620 = vpack.c.b16 %v539, %v538
    %v621 = vpack.c.b16 %v541, %v540
    %v622 = vpack.c.b16 %v543, %v542
    %v623 = vpack.c.b16 %v545, %v544
    %v624 = vpack.c.b16 %v547, %v546
    %v625 = vpack.c.b16 %v549, %v548
    %v626 = vpack.c.b16 %v551, %v550
    %v627 = vpack.c.b16 %v553, %v552
    %v628 = vpack.c.b16 %v555, %v554
    %v629 = vpack.c.b16 %v557, %v556
    %v630 = vpack.c.b16 %v559, %v558
    %v631 = vpack.c.b16 %v561, %v560
    %v632 = vpack.c.b16 %v563, %v562
    %v633 = vpack.c.b16 %v565, %v564
    %v634 = vpack.c.b16 %v567, %v566
    %v635 = vpack.c.b16 %v569, %v568
    %v636 = vpack.c.b16 %v571, %v570
    %v637 = vpack.c.b16 %v573, %v572
    %702 = vmatprep.subr.bf16.mxu0 0
    %703 = vmatpush1.bf16.msra.mxu0 %v581
    %704 = vmatprep.subr.bf16.mxu0 0
    %705 = vmatpush1.bf16.msra.mxu0 %v580
    %706 = vmatprep.subr.bf16.mxu0 0
    %707 = vmatpush1.bf16.msra.mxu0 %v579
    %708 = vmatprep.subr.bf16.mxu0 0
    %709 = vmatpush1.bf16.msra.mxu0 %v578
    %710 = vmatprep.subr.bf16.mxu0 0
    %711 = vmatpush1.bf16.msra.mxu0 %v577
    %712 = vmatprep.subr.bf16.mxu0 0
    %713 = vmatpush1.bf16.msra.mxu0 %v576
    %714 = vmatprep.subr.bf16.mxu0 0
    %715 = vmatpush1.bf16.msra.mxu0 %v575
    %716 = vmatprep.subr.bf16.mxu0 0
    %717 = vmatpush1.bf16.msra.mxu0 %v574
    %718 = vmatprep.subr.bf16.mxu0 0
    %719 = vmatpush2.bf16.msra.mxu0 %v589
    %720 = vmatprep.subr.bf16.mxu0 0
    %721 = vmatpush2.bf16.msra.mxu0 %v588
    %722 = vmatprep.subr.bf16.mxu0 0
    %723 = vmatpush2.bf16.msra.mxu0 %v587
    %724 = vmatprep.subr.bf16.mxu0 0
    %725 = vmatpush2.bf16.msra.mxu0 %v586
    %726 = vmatprep.subr.bf16.mxu0 0
    %727 = vmatpush2.bf16.msra.mxu0 %v585
    %728 = vmatprep.subr.bf16.mxu0 0
    %729 = vmatpush2.bf16.msra.mxu0 %v584
    %730 = vmatprep.subr.bf16.mxu0 0
    %731 = vmatpush2.bf16.msra.mxu0 %v583
    %732 = vmatprep.subr.bf16.mxu0 0
    %733 = vmatpush2.bf16.msra.mxu0 %v582
    %734 = vmatprep.mubr.bf16.mxu0 %v303
    %735 = vmatmul.mubr.bf16.gmra.mxu0 %v302
    %v736 = vpop.f32.mrf.mxu0
    %v737 = vadd.f32 %v251, %v736
    %v738 = vpop.f32.mrf.mxu0
    %v739 = vpop.f32.mrf.mxu0
    %v740 = vpop.f32.mrf.mxu0
    %741 = vdwg.mxu0
    %742 = vmatprep.subr.bf16.mxu0 0
    %743 = vmatpush1.bf16.msra.mxu0 %v597
    %744 = vmatprep.subr.bf16.mxu0 0
    %745 = vmatpush1.bf16.msra.mxu0 %v596
    %746 = vmatprep.subr.bf16.mxu0 0
    %747 = vmatpush1.bf16.msra.mxu0 %v595
    %748 = vmatprep.subr.bf16.mxu0 0
    %749 = vmatpush1.bf16.msra.mxu0 %v594
    %750 = vmatprep.subr.bf16.mxu0 0
    %751 = vmatpush1.bf16.msra.mxu0 %v593
    %752 = vmatprep.subr.bf16.mxu0 0
    %753 = vmatpush1.bf16.msra.mxu0 %v592
    %754 = vmatprep.subr.bf16.mxu0 0
    %755 = vmatpush1.bf16.msra.mxu0 %v591
    %756 = vmatprep.subr.bf16.mxu0 0
    %757 = vmatpush1.bf16.msra.mxu0 %v590
    %758 = vmatprep.subr.bf16.mxu0 0
    %759 = vmatpush2.bf16.msra.mxu0 %v605
    %760 = vmatprep.subr.bf16.mxu0 0
    %761 = vmatpush2.bf16.msra.mxu0 %v604
    %762 = vmatprep.subr.bf16.mxu0 0
    %763 = vmatpush2.bf16.msra.mxu0 %v603
    %764 = vmatprep.subr.bf16.mxu0 0
    %765 = vmatpush2.bf16.msra.mxu0 %v602
    %766 = vmatprep.subr.bf16.mxu0 0
    %767 = vmatpush2.bf16.msra.mxu0 %v601
    %768 = vmatprep.subr.bf16.mxu0 0
    %769 = vmatpush2.bf16.msra.mxu0 %v600
    %770 = vmatprep.subr.bf16.mxu0 0
    %771 = vmatpush2.bf16.msra.mxu0 %v599
    %772 = vmatprep.subr.bf16.mxu0 0
    %773 = vmatpush2.bf16.msra.mxu0 %v598
    %774 = vmatprep.mubr.bf16.mxu0 %v305
    %775 = vmatmul.mubr.bf16.gmra.mxu0 %v304
    %v776 = vpop.f32.mrf.mxu0
    %v777 = vadd.f32 %v737, %v776
    %v778 = vpop.f32.mrf.mxu0
    %v779 = vpop.f32.mrf.mxu0
    %v780 = vpop.f32.mrf.mxu0
    %781 = vdwg.mxu0
    %782 = vmatprep.subr.bf16.mxu0 0
    %783 = vmatpush1.bf16.msra.mxu0 %v613
    %784 = vmatprep.subr.bf16.mxu0 0
    %785 = vmatpush1.bf16.msra.mxu0 %v612
    %786 = vmatprep.subr.bf16.mxu0 0
    %787 = vmatpush1.bf16.msra.mxu0 %v611
    %788 = vmatprep.subr.bf16.mxu0 0
    %789 = vmatpush1.bf16.msra.mxu0 %v610
    %790 = vmatprep.subr.bf16.mxu0 0
    %791 = vmatpush1.bf16.msra.mxu0 %v609
    %792 = vmatprep.subr.bf16.mxu0 0
    %793 = vmatpush1.bf16.msra.mxu0 %v608
    %794 = vmatprep.subr.bf16.mxu0 0
    %795 = vmatpush1.bf16.msra.mxu0 %v607
    %796 = vmatprep.subr.bf16.mxu0 0
    %797 = vmatpush1.bf16.msra.mxu0 %v606
    %798 = vmatprep.subr.bf16.mxu0 0
    %799 = vmatpush2.bf16.msra.mxu0 %v621
    %800 = vmatprep.subr.bf16.mxu0 0
    %801 = vmatpush2.bf16.msra.mxu0 %v620
    %802 = vmatprep.subr.bf16.mxu0 0
    %803 = vmatpush2.bf16.msra.mxu0 %v619
    %804 = vmatprep.subr.bf16.mxu0 0
    %805 = vmatpush2.bf16.msra.mxu0 %v618
    %806 = vmatprep.subr.bf16.mxu0 0
    %807 = vmatpush2.bf16.msra.mxu0 %v617
    %808 = vmatprep.subr.bf16.mxu0 0
    %809 = vmatpush2.bf16.msra.mxu0 %v616
    %810 = vmatprep.subr.bf16.mxu0 0
    %811 = vmatpush2.bf16.msra.mxu0 %v615
    %812 = vmatprep.subr.bf16.mxu0 0
    %813 = vmatpush2.bf16.msra.mxu0 %v614
    %814 = vmatprep.mubr.bf16.mxu0 %v307
    %815 = vmatmul.mubr.bf16.gmra.mxu0 %v306
    %v816 = vpop.f32.mrf.mxu0
    %v817 = vadd.f32 %v777, %v816
    %v818 = vpop.f32.mrf.mxu0
    %v819 = vpop.f32.mrf.mxu0
    %v820 = vpop.f32.mrf.mxu0
    %821 = vdwg.mxu0
    %822 = vmatprep.subr.bf16.mxu0 0
    %823 = vmatpush1.bf16.msra.mxu0 %v629
    %824 = vmatprep.subr.bf16.mxu0 0
    %825 = vmatpush1.bf16.msra.mxu0 %v628
    %826 = vmatprep.subr.bf16.mxu0 0
    %827 = vmatpush1.bf16.msra.mxu0 %v627
    %828 = vmatprep.subr.bf16.mxu0 0
    %829 = vmatpush1.bf16.msra.mxu0 %v626
    %830 = vmatprep.subr.bf16.mxu0 0
    %831 = vmatpush1.bf16.msra.mxu0 %v625
    %832 = vmatprep.subr.bf16.mxu0 0
    %833 = vmatpush1.bf16.msra.mxu0 %v624
    %834 = vmatprep.subr.bf16.mxu0 0
    %835 = vmatpush1.bf16.msra.mxu0 %v623
    %836 = vmatprep.subr.bf16.mxu0 0
    %837 = vmatpush1.bf16.msra.mxu0 %v622
    %838 = vmatprep.subr.bf16.mxu0 0
    %839 = vmatpush2.bf16.msra.mxu0 %v637
    %840 = vmatprep.subr.bf16.mxu0 0
    %841 = vmatpush2.bf16.msra.mxu0 %v636
    %842 = vmatprep.subr.bf16.mxu0 0
    %843 = vmatpush2.bf16.msra.mxu0 %v635
    %844 = vmatprep.subr.bf16.mxu0 0
    %845 = vmatpush2.bf16.msra.mxu0 %v634
    %846 = vmatprep.subr.bf16.mxu0 0
    %847 = vmatpush2.bf16.msra.mxu0 %v633
    %848 = vmatprep.subr.bf16.mxu0 0
    %849 = vmatpush2.bf16.msra.mxu0 %v632
    %850 = vmatprep.subr.bf16.mxu0 0
    %851 = vmatpush2.bf16.msra.mxu0 %v631
    %852 = vmatprep.subr.bf16.mxu0 0
    %853 = vmatpush2.bf16.msra.mxu0 %v630
    %854 = vmatprep.mubr.bf16.mxu0 %v309
    %855 = vmatmul.mubr.bf16.gmra.mxu0 %v308
    %v856 = vpop.f32.mrf.mxu0
    %v857 = vadd.f32 %v817, %v856
    %v858 = vpop.f32.mrf.mxu0
    %v859 = vpop.f32.mrf.mxu0
    %v860 = vpop.f32.mrf.mxu0
    %861 = vdwg.mxu0
    %vm862 = vcmask 312320
    %863 = vst.msk [vmem:[#allocation2] sm:$0x3] %vm862, %v857
    // Predicated region
    $region14: #{_lambda_.115} parent=1 // pred_check
      _
    $region15: #{_lambda_.115} parent=1 // pred_check_branch
      %865 = sbr.rel (0) target = $region17
    $region16: #{_lambda_.115} parent=1 // pred_region
      %s867 = ssub.s32 32, 32
      %868 = vsyncadd [#allocation3], %s867
      %s870 = sshll.u32 [#allocation2], 4
      %s871 = int_to_ptr.vmem [resolvable:$true] %s870
      %873 = dma.vmem_to_hbm [thread:$0]  %s871, 32, %s3, [#allocation3]
    $region17: #{_lambda_.115} parent=1 // pred_fallthru
      _
    // Predicated region
    $region18: #{_lambda_.115} parent=1 // pred_check
      _
    $region19: #{_lambda_.115} parent=1 // pred_check_branch
      %875 = sbr.rel (0) target = $region21
    $region20: #{_lambda_.115} parent=1 // pred_region
      %876 = dma.done [#allocation3], 32
    $region21: #{_lambda_.115} parent=1 // pred_fallthru
      _
    %877 = vsyncpa [#allocation3], 1

// kernel: _lambda_.114
$region0: #{_lambda_.114}
  #allocation0 [shape = 'u32[]', space=smem, size = 0x4, offset = 0x4, fixed_abs, tag = 'smem constant byte address 0x4 - core index']
  #allocation1 [shape = 'u32[144,128]{1,0:T(1,128)}', space=vmem, size = 0x12000, scoped, tag = 'internal scratch']
  %s0 = inlined_call_operand.vmem [shape: f32[8,464], index: 0, kind: input, shape index: {}]
  %s1 = inlined_call_operand.vmem [shape: bf16[464,1024], index: 1, kind: input, shape index: {}]
  %s2 = inlined_call_operand.vmem [shape: f32[1,1024], index: 2, kind: input, shape index: {}]
  %s3 = inlined_call_operand.vmem [shape: f32[8,1024], index: 3, kind: output, shape index: {}]
  %s4 = sld [smem:[#allocation0]]
  $region22: #{_lambda_.114} parent=0
    _
  %s6 = ssub.s32 1, %s4
  %s7 = scalar_select 0, %s6, %s4
  // Predicated region
  $region2: #{_lambda_.114} parent=0 // pred_check
    _
  $region3: #{_lambda_.114} parent=0 // pred_check_branch
    %9 = sbr.rel (0) target = $region5
  $region4: #{_lambda_.114} parent=0 // pred_region
    _
  $region5: #{_lambda_.114} parent=0 // pred_fallthru
    _
  // Predicated region
  $region6: #{_lambda_.114} parent=0 // pred_check
    _
  $region7: #{_lambda_.114} parent=0 // pred_check_branch
    %11 = sbr.rel (0) target = $region9
  $region8: #{_lambda_.114} parent=0 // pred_region
    _
  $region9: #{_lambda_.114} parent=0 // pred_fallthru
    _
  // Predicated region
  $region10: #{_lambda_.114} parent=0 // pred_check
    _
  $region11: #{_lambda_.114} parent=0 // pred_check_branch
    %13 = sbr.rel (0) target = $region13
  $region12: #{_lambda_.114} parent=0 // pred_region
    _
  $region13: #{_lambda_.114} parent=0 // pred_fallthru
    _
  %v15 = vld [vmem:[%s0] sm:$0xff]
  %v16 = vld [vmem:[%s0 + $0x8] sm:$0xff]
  %v17 = vld [vmem:[%s0 + $0x10] sm:$0xff]
  %v18 = vld [vmem:[%s0 + $0x18] sm:$0xff]
  %v19 = vpack.c.bf16 %v15, %v15
  %v20 = vpack.c.bf16 %v16, %v16
  %v21 = vpack.c.bf16 %v17, %v17
  %v22 = vpack.c.bf16 %v18, %v18
  %v23 = vld [vmem:[%s1] sm:$0xff]
  %v24 = vld [vmem:[%s1 + $0x8] sm:$0xff]
  %v25 = vld [vmem:[%s1 + $0x10] sm:$0xff]
  %v26 = vld [vmem:[%s1 + $0x18] sm:$0xff]
  %v27 = vld [vmem:[%s1 + $0x20] sm:$0xff]
  %v28 = vld [vmem:[%s1 + $0x28] sm:$0xff]
  %v29 = vld [vmem:[%s1 + $0x30] sm:$0xff]
  %v30 = vld [vmem:[%s1 + $0x38] sm:$0xff]
  %v31 = vld [vmem:[%s1 + $0x40] sm:$0xff]
  %v32 = vld [vmem:[%s1 + $0x48] sm:$0xff]
  %v33 = vld [vmem:[%s1 + $0x50] sm:$0xff]
  %v34 = vld [vmem:[%s1 + $0x58] sm:$0xff]
  %v35 = vld [vmem:[%s1 + $0x60] sm:$0xff]
  %v36 = vld [vmem:[%s1 + $0x68] sm:$0xff]
  %v37 = vld [vmem:[%s1 + $0x70] sm:$0xff]
  %v38 = vld [vmem:[%s1 + $0x78] sm:$0xff]
  %v39 = vld [vmem:[%s1 + $0x80] sm:$0xff]
  %v40 = vld [vmem:[%s1 + $0x88] sm:$0xff]
  %v41 = vld [vmem:[%s1 + $0x90] sm:$0xff]
  %v42 = vld [vmem:[%s1 + $0x98] sm:$0xff]
  %v43 = vld [vmem:[%s1 + $0xa0] sm:$0xff]
  %v44 = vld [vmem:[%s1 + $0xa8] sm:$0xff]
  %v45 = vld [vmem:[%s1 + $0xb0] sm:$0xff]
  %v46 = vld [vmem:[%s1 + $0xb8] sm:$0xff]
  %v47 = vld [vmem:[%s1 + $0xc0] sm:$0xff]
  %v48 = vld [vmem:[%s1 + $0xc8] sm:$0xff]
  %v49 = vld [vmem:[%s1 + $0xd0] sm:$0xff]
  %v50 = vld [vmem:[%s1 + $0xd8] sm:$0xff]
  %v51 = vld [vmem:[%s1 + $0xe0] sm:$0xff]
  %v52 = vld [vmem:[%s1 + $0xe8] sm:$0xff]
  %v53 = vld [vmem:[%s1 + $0xf0] sm:$0xff]
  %v54 = vld [vmem:[%s1 + $0xf8] sm:$0xff]
  %v55 = vld [vmem:[%s1 + $0x100] sm:$0xff]
  %v56 = vld [vmem:[%s1 + $0x108] sm:$0xff]
  %v57 = vld [vmem:[%s1 + $0x110] sm:$0xff]
  %v58 = vld [vmem:[%s1 + $0x118] sm:$0xff]
  %v59 = vld [vmem:[%s1 + $0x120] sm:$0xff]
  %v60 = vld [vmem:[%s1 + $0x128] sm:$0xff]
  %v61 = vld [vmem:[%s1 + $0x130] sm:$0xff]
  %v62 = vld [vmem:[%s1 + $0x138] sm:$0xff]
  %v63 = vld [vmem:[%s1 + $0x140] sm:$0xff]
  %v64 = vld [vmem:[%s1 + $0x148] sm:$0xff]
  %v65 = vld [vmem:[%s1 + $0x150] sm:$0xff]
  %v66 = vld [vmem:[%s1 + $0x158] sm:$0xff]
  %v67 = vld [vmem:[%s1 + $0x160] sm:$0xff]
  %v68 = vld [vmem:[%s1 + $0x168] sm:$0xff]
  %v69 = vld [vmem:[%s1 + $0x170] sm:$0xff]
  %v70 = vld [vmem:[%s1 + $0x178] sm:$0xff]
  %v71 = vld [vmem:[%s1 + $0x180] sm:$0xff]
  %v72 = vld [vmem:[%s1 + $0x188] sm:$0xff]
  %v73 = vld [vmem:[%s1 + $0x190] sm:$0xff]
  %v74 = vld [vmem:[%s1 + $0x198] sm:$0xff]
  %v75 = vld [vmem:[%s1 + $0x1a0] sm:$0xff]
  %v76 = vld [vmem:[%s1 + $0x1a8] sm:$0xff]
  %v77 = vld [vmem:[%s1 + $0x1b0] sm:$0xff]
  %v78 = vld [vmem:[%s1 + $0x1b8] sm:$0xff]
  %v79 = vld [vmem:[%s1 + $0x1c0] sm:$0xff]
  %v80 = vld [vmem:[%s1 + $0x1c8] sm:$0xff]
  %v81 = vld [vmem:[%s1 + $0x1d0] sm:$0xff]
  %v82 = vld [vmem:[%s1 + $0x1d8] sm:$0xff]
  %v83 = vld [vmem:[%s1 + $0x1e0] sm:$0xff]
  %v84 = vld [vmem:[%s1 + $0x1e8] sm:$0xff]
  %v85 = vld [vmem:[%s1 + $0x1f0] sm:$0xff]
  %v86 = vld [vmem:[%s1 + $0x1f8] sm:$0xff]
  %v87 = vld [vmem:[%s1 + $0x200] sm:$0xff]
  %v88 = vld [vmem:[%s1 + $0x208] sm:$0xff]
  %v89 = vld [vmem:[%s1 + $0x210] sm:$0xff]
  %v90 = vld [vmem:[%s1 + $0x218] sm:$0xff]
  %v91 = vld [vmem:[%s1 + $0x220] sm:$0xff]
  %v92 = vld [vmem:[%s1 + $0x228] sm:$0xff]
  %v93 = vld [vmem:[%s1 + $0x230] sm:$0xff]
  %v94 = vld [vmem:[%s1 + $0x238] sm:$0xff]
  %v95 = vld [vmem:[%s1 + $0x240] sm:$0xff]
  %v96 = vld [vmem:[%s1 + $0x248] sm:$0xff]
  %v97 = vld [vmem:[%s1 + $0x250] sm:$0xff]
  %v98 = vld [vmem:[%s1 + $0x258] sm:$0xff]
  %v99 = vld [vmem:[%s1 + $0x260] sm:$0xff]
  %v100 = vld [vmem:[%s1 + $0x268] sm:$0xff]
  %v101 = vld [vmem:[%s1 + $0x270] sm:$0xff]
  %v102 = vld [vmem:[%s1 + $0x278] sm:$0xff]
  %v103 = vld [vmem:[%s1 + $0x280] sm:$0xff]
  %v104 = vld [vmem:[%s1 + $0x288] sm:$0xff]
  %v105 = vld [vmem:[%s1 + $0x290] sm:$0xff]
  %v106 = vld [vmem:[%s1 + $0x298] sm:$0xff]
  %v107 = vld [vmem:[%s1 + $0x2a0] sm:$0xff]
  %v108 = vld [vmem:[%s1 + $0x2a8] sm:$0xff]
  %v109 = vld [vmem:[%s1 + $0x2b0] sm:$0xff]
  %v110 = vld [vmem:[%s1 + $0x2b8] sm:$0xff]
  %v111 = vld [vmem:[%s1 + $0x2c0] sm:$0xff]
  %v112 = vld [vmem:[%s1 + $0x2c8] sm:$0xff]
  %v113 = vld [vmem:[%s1 + $0x2d0] sm:$0xff]
  %v114 = vld [vmem:[%s1 + $0x2d8] sm:$0xff]
  %v115 = vld [vmem:[%s1 + $0x2e0] sm:$0xff]
  %v116 = vld [vmem:[%s1 + $0x2e8] sm:$0xff]
  %v117 = vld [vmem:[%s1 + $0x2f0] sm:$0xff]
  %v118 = vld [vmem:[%s1 + $0x2f8] sm:$0xff]
  %v119 = vld [vmem:[%s1 + $0x300] sm:$0xff]
  %v120 = vld [vmem:[%s1 + $0x308] sm:$0xff]
  %v121 = vld [vmem:[%s1 + $0x310] sm:$0xff]
  %v122 = vld [vmem:[%s1 + $0x318] sm:$0xff]
  %v123 = vld [vmem:[%s1 + $0x320] sm:$0xff]
  %v124 = vld [vmem:[%s1 + $0x328] sm:$0xff]
  %v125 = vld [vmem:[%s1 + $0x330] sm:$0xff]
  %v126 = vld [vmem:[%s1 + $0x338] sm:$0xff]
  %v127 = vld [vmem:[%s1 + $0x340] sm:$0xff]
  %v128 = vld [vmem:[%s1 + $0x348] sm:$0xff]
  %v129 = vld [vmem:[%s1 + $0x350] sm:$0xff]
  %v130 = vld [vmem:[%s1 + $0x358] sm:$0xff]
  %v131 = vld [vmem:[%s1 + $0x360] sm:$0xff]
  %v132 = vld [vmem:[%s1 + $0x368] sm:$0xff]
  %v133 = vld [vmem:[%s1 + $0x370] sm:$0xff]
  %v134 = vld [vmem:[%s1 + $0x378] sm:$0xff]
  %v135 = vld [vmem:[%s1 + $0x380] sm:$0xff]
  %v136 = vld [vmem:[%s1 + $0x388] sm:$0xff]
  %v137 = vld [vmem:[%s1 + $0x390] sm:$0xff]
  %v138 = vld [vmem:[%s1 + $0x398] sm:$0xff]
  %v139 = vld [vmem:[%s1 + $0x3a0] sm:$0xff]
  %v140 = vld [vmem:[%s1 + $0x3a8] sm:$0xff]
  %v141 = vld [vmem:[%s1 + $0x3b0] sm:$0xff]
  %v142 = vld [vmem:[%s1 + $0x3b8] sm:$0xff]
  %v143 = vld [vmem:[%s1 + $0x3c0] sm:$0xff]
  %v144 = vld [vmem:[%s1 + $0x3c8] sm:$0xff]
  %v145 = vld [vmem:[%s1 + $0x3d0] sm:$0xff]
  %v146 = vld [vmem:[%s1 + $0x3d8] sm:$0xff]
  %v147 = vld [vmem:[%s1 + $0x3e0] sm:$0xff]
  %v148 = vld [vmem:[%s1 + $0x3e8] sm:$0xff]
  %v149 = vld [vmem:[%s1 + $0x3f0] sm:$0xff]
  %v150 = vld [vmem:[%s1 + $0x3f8] sm:$0xff]
  %v151 = vld [vmem:[%s1 + $0x400] sm:$0xff]
  %v152 = vld [vmem:[%s1 + $0x408] sm:$0xff]
  %v153 = vld [vmem:[%s1 + $0x410] sm:$0xff]
  %v154 = vld [vmem:[%s1 + $0x418] sm:$0xff]
  %v155 = vld [vmem:[%s1 + $0x420] sm:$0xff]
  %v156 = vld [vmem:[%s1 + $0x428] sm:$0xff]
  %v157 = vld [vmem:[%s1 + $0x430] sm:$0xff]
  %v158 = vld [vmem:[%s1 + $0x438] sm:$0xff]
  %v159 = vld [vmem:[%s1 + $0x440] sm:$0xff]
  %v160 = vld [vmem:[%s1 + $0x448] sm:$0xff]
  %v161 = vld [vmem:[%s1 + $0x450] sm:$0xff]
  %v162 = vld [vmem:[%s1 + $0x458] sm:$0xff]
  %v163 = vld [vmem:[%s1 + $0x460] sm:$0xff]
  %v164 = vld [vmem:[%s1 + $0x468] sm:$0xff]
  %v165 = vld [vmem:[%s1 + $0x470] sm:$0xff]
  %v166 = vld [vmem:[%s1 + $0x478] sm:$0xff]
  %v167 = vld [vmem:[%s1 + $0x480] sm:$0xff]
  %v168 = vld [vmem:[%s1 + $0x488] sm:$0xff]
  %v169 = vld [vmem:[%s1 + $0x490] sm:$0xff]
  %v170 = vld [vmem:[%s1 + $0x498] sm:$0xff]
  %v171 = vld [vmem:[%s1 + $0x4a0] sm:$0xff]
  %v172 = vld [vmem:[%s1 + $0x4a8] sm:$0xff]
  %v173 = vld [vmem:[%s1 + $0x4b0] sm:$0xff]
  %v174 = vld [vmem:[%s1 + $0x4b8] sm:$0xff]
  %v175 = vld [vmem:[%s1 + $0x4c0] sm:$0xff]
  %v176 = vld [vmem:[%s1 + $0x4c8] sm:$0xff]
  %v177 = vld [vmem:[%s1 + $0x4d0] sm:$0xff]
  %v178 = vld [vmem:[%s1 + $0x4d8] sm:$0xff]
  %v179 = vld [vmem:[%s1 + $0x4e0] sm:$0xff]
  %v180 = vld [vmem:[%s1 + $0x4e8] sm:$0xff]
  %v181 = vld [vmem:[%s1 + $0x4f0] sm:$0xff]
  %v182 = vld [vmem:[%s1 + $0x4f8] sm:$0xff]
  %v183 = vld [vmem:[%s1 + $0x500] sm:$0xff]
  %v184 = vld [vmem:[%s1 + $0x508] sm:$0xff]
  %v185 = vld [vmem:[%s1 + $0x510] sm:$0xff]
  %v186 = vld [vmem:[%s1 + $0x518] sm:$0xff]
  %v187 = vld [vmem:[%s1 + $0x520] sm:$0xff]
  %v188 = vld [vmem:[%s1 + $0x528] sm:$0xff]
  %v189 = vld [vmem:[%s1 + $0x530] sm:$0xff]
  %v190 = vld [vmem:[%s1 + $0x538] sm:$0xff]
  %v191 = vld [vmem:[%s1 + $0x540] sm:$0xff]
  %v192 = vld [vmem:[%s1 + $0x548] sm:$0xff]
  %v193 = vld [vmem:[%s1 + $0x550] sm:$0xff]
  %v194 = vld [vmem:[%s1 + $0x558] sm:$0xff]
  %v195 = vld [vmem:[%s1 + $0x560] sm:$0xff]
  %v196 = vld [vmem:[%s1 + $0x568] sm:$0xff]
  %v197 = vld [vmem:[%s1 + $0x570] sm:$0xff]
  %v198 = vld [vmem:[%s1 + $0x578] sm:$0xff]
  %v199 = vld [vmem:[%s1 + $0x580] sm:$0xff]
  %v200 = vld [vmem:[%s1 + $0x588] sm:$0xff]
  %v201 = vld [vmem:[%s1 + $0x590] sm:$0xff]
  %v202 = vld [vmem:[%s1 + $0x598] sm:$0xff]
  %v203 = vld [vmem:[%s1 + $0x5a0] sm:$0xff]
  %v204 = vld [vmem:[%s1 + $0x5a8] sm:$0xff]
  %v205 = vld [vmem:[%s1 + $0x5b0] sm:$0xff]
  %v206 = vld [vmem:[%s1 + $0x5b8] sm:$0xff]
  %v207 = vld [vmem:[%s1 + $0x5c0] sm:$0xff]
  %v208 = vld [vmem:[%s1 + $0x5c8] sm:$0xff]
  %v209 = vld [vmem:[%s1 + $0x5d0] sm:$0xff]
  %v210 = vld [vmem:[%s1 + $0x5d8] sm:$0xff]
  %v211 = vld [vmem:[%s1 + $0x5e0] sm:$0xff]
  %v212 = vld [vmem:[%s1 + $0x5e8] sm:$0xff]
  %v213 = vld [vmem:[%s1 + $0x5f0] sm:$0xff]
  %v214 = vld [vmem:[%s1 + $0x5f8] sm:$0xff]
  %v215 = vld [vmem:[%s1 + $0x600] sm:$0xff]
  %v216 = vld [vmem:[%s1 + $0x608] sm:$0xff]
  %v217 = vld [vmem:[%s1 + $0x610] sm:$0xff]
  %v218 = vld [vmem:[%s1 + $0x618] sm:$0xff]
  %v219 = vld [vmem:[%s1 + $0x620] sm:$0xff]
  %v220 = vld [vmem:[%s1 + $0x628] sm:$0xff]
  %v221 = vld [vmem:[%s1 + $0x630] sm:$0xff]
  %v222 = vld [vmem:[%s1 + $0x638] sm:$0xff]
  %v223 = vld [vmem:[%s1 + $0x640] sm:$0xff]
  %v224 = vld [vmem:[%s1 + $0x648] sm:$0xff]
  %v225 = vld [vmem:[%s1 + $0x650] sm:$0xff]
  %v226 = vld [vmem:[%s1 + $0x658] sm:$0xff]
  %v227 = vld [vmem:[%s1 + $0x660] sm:$0xff]
  %v228 = vld [vmem:[%s1 + $0x668] sm:$0xff]
  %v229 = vld [vmem:[%s1 + $0x670] sm:$0xff]
  %v230 = vld [vmem:[%s1 + $0x678] sm:$0xff]
  %v231 = vld [vmem:[%s1 + $0x680] sm:$0xff]
  %v232 = vld [vmem:[%s1 + $0x688] sm:$0xff]
  %v233 = vld [vmem:[%s1 + $0x690] sm:$0xff]
  %v234 = vld [vmem:[%s1 + $0x698] sm:$0xff]
  %v235 = vld [vmem:[%s1 + $0x6a0] sm:$0xff]
  %v236 = vld [vmem:[%s1 + $0x6a8] sm:$0xff]
  %v237 = vld [vmem:[%s1 + $0x6b0] sm:$0xff]
  %v238 = vld [vmem:[%s1 + $0x6b8] sm:$0xff]
  %v239 = vld [vmem:[%s1 + $0x6c0] sm:$0xff]
  %v240 = vld [vmem:[%s1 + $0x6c8] sm:$0xff]
  %v241 = vld [vmem:[%s1 + $0x6d0] sm:$0xff]
  %v242 = vld [vmem:[%s1 + $0x6d8] sm:$0xff]
  %v243 = vld [vmem:[%s1 + $0x6e0] sm:$0xff]
  %v244 = vld [vmem:[%s1 + $0x6e8] sm:$0xff]
  %v245 = vld [vmem:[%s1 + $0x6f0] sm:$0xff]
  %v246 = vld [vmem:[%s1 + $0x6f8] sm:$0xff]
  %v247 = vld [vmem:[%s1 + $0x700] sm:$0xff]
  %v248 = vld [vmem:[%s1 + $0x708] sm:$0xff]
  %v249 = vld [vmem:[%s1 + $0x710] sm:$0xff]
  %v250 = vld [vmem:[%s1 + $0x718] sm:$0xff]
  %v251 = vld [vmem:[%s1 + $0x720] sm:$0xff]
  %v252 = vld [vmem:[%s1 + $0x728] sm:$0xff]
  %v253 = vld [vmem:[%s1 + $0x730] sm:$0xff]
  %v254 = vld [vmem:[%s1 + $0x738] sm:$0xff]
  %v255 = vld [vmem:[%s2] sm:$0xff]
  %v257 = vlaneseq
  %v258 = vshrl.u32 %v257, 7
  %v259 = vsub.s32 0, %v258
  %v260 = vrot.slane %v255, %v259
  %v261 = vlaneseq
  %v262 = vshrl.u32 %v261, 7
  %v263 = vsub.s32 1, %v262
  %v264 = vrot.slane %v255, %v263
  %v265 = vlaneseq
  %v266 = vshrl.u32 %v265, 7
  %v267 = vsub.s32 2, %v266
  %v268 = vrot.slane %v255, %v267
  %v269 = vlaneseq
  %v270 = vshrl.u32 %v269, 7
  %v271 = vsub.s32 3, %v270
  %v272 = vrot.slane %v255, %v271
  %v273 = vlaneseq
  %v274 = vshrl.u32 %v273, 7
  %v275 = vsub.s32 4, %v274
  %v276 = vrot.slane %v255, %v275
  %v277 = vlaneseq
  %v278 = vshrl.u32 %v277, 7
  %v279 = vsub.s32 5, %v278
  %v280 = vrot.slane %v255, %v279
  %v281 = vlaneseq
  %v282 = vshrl.u32 %v281, 7
  %v283 = vsub.s32 6, %v282
  %v284 = vrot.slane %v255, %v283
  %v285 = vlaneseq
  %v286 = vshrl.u32 %v285, 7
  %v287 = vsub.s32 7, %v286
  %v288 = vrot.slane %v255, %v287
  %v529 = vunpack.c.l.b16 %v23
  %v530 = vunpack.c.h.b16 %v23
  %v531 = vunpack.c.l.b16 %v24
  %v532 = vunpack.c.h.b16 %v24
  %v533 = vunpack.c.l.b16 %v25
  %v534 = vunpack.c.h.b16 %v25
  %v535 = vunpack.c.l.b16 %v26
  %v536 = vunpack.c.h.b16 %v26
  %v537 = vunpack.c.l.b16 %v27
  %v538 = vunpack.c.h.b16 %v27
  %v539 = vunpack.c.l.b16 %v28
  %v540 = vunpack.c.h.b16 %v28
  %v541 = vunpack.c.l.b16 %v29
  %v542 = vunpack.c.h.b16 %v29
  %v543 = vunpack.c.l.b16 %v30
  %v544 = vunpack.c.h.b16 %v30
  %v545 = vunpack.c.l.b16 %v31
  %v546 = vunpack.c.h.b16 %v31
  %v547 = vunpack.c.l.b16 %v32
  %v548 = vunpack.c.h.b16 %v32
  %v549 = vunpack.c.l.b16 %v33
  %v550 = vunpack.c.h.b16 %v33
  %v551 = vunpack.c.l.b16 %v34
  %v552 = vunpack.c.h.b16 %v34
  %v553 = vunpack.c.l.b16 %v35
  %v554 = vunpack.c.h.b16 %v35
  %v555 = vunpack.c.l.b16 %v36
  %v556 = vunpack.c.h.b16 %v36
  %v557 = vunpack.c.l.b16 %v37
  %v558 = vunpack.c.h.b16 %v37
  %v559 = vunpack.c.l.b16 %v38
  %v560 = vunpack.c.h.b16 %v38
  %v561 = vunpack.c.l.b16 %v39
  %v562 = vunpack.c.h.b16 %v39
  %v563 = vunpack.c.l.b16 %v40
  %v564 = vunpack.c.h.b16 %v40
  %v565 = vunpack.c.l.b16 %v41
  %v566 = vunpack.c.h.b16 %v41
  %v567 = vunpack.c.l.b16 %v42
  %v568 = vunpack.c.h.b16 %v42
  %v569 = vunpack.c.l.b16 %v43
  %v570 = vunpack.c.h.b16 %v43
  %v571 = vunpack.c.l.b16 %v44
  %v572 = vunpack.c.h.b16 %v44
  %v573 = vunpack.c.l.b16 %v45
  %v574 = vunpack.c.h.b16 %v45
  %v575 = vunpack.c.l.b16 %v46
  %v576 = vunpack.c.h.b16 %v46
  %v577 = vunpack.c.l.b16 %v47
  %v578 = vunpack.c.h.b16 %v47
  %v579 = vunpack.c.l.b16 %v48
  %v580 = vunpack.c.h.b16 %v48
  %v581 = vunpack.c.l.b16 %v49
  %v582 = vunpack.c.h.b16 %v49
  %v583 = vunpack.c.l.b16 %v50
  %v584 = vunpack.c.h.b16 %v50
  %v585 = vunpack.c.l.b16 %v51
  %v586 = vunpack.c.h.b16 %v51
  %v587 = vunpack.c.l.b16 %v52
  %v588 = vunpack.c.h.b16 %v52
  %v589 = vunpack.c.l.b16 %v53
  %v590 = vunpack.c.h.b16 %v53
  %v591 = vunpack.c.l.b16 %v54
  %v592 = vunpack.c.h.b16 %v54
  %v593 = vunpack.c.l.b16 %v55
  %v594 = vunpack.c.h.b16 %v55
  %v595 = vunpack.c.l.b16 %v56
  %v596 = vunpack.c.h.b16 %v56
  %v597 = vunpack.c.l.b16 %v57
  %v598 = vunpack.c.h.b16 %v57
  %v599 = vunpack.c.l.b16 %v58
  %v600 = vunpack.c.h.b16 %v58
  %v601 = vunpack.c.l.b16 %v59
  %v602 = vunpack.c.h.b16 %v59
  %v603 = vunpack.c.l.b16 %v60
  %v604 = vunpack.c.h.b16 %v60
  %v605 = vunpack.c.l.b16 %v61
  %v606 = vunpack.c.h.b16 %v61
  %v607 = vunpack.c.l.b16 %v62
  %v608 = vunpack.c.h.b16 %v62
  %v609 = vunpack.c.l.b16 %v63
  %v610 = vunpack.c.h.b16 %v63
  %v611 = vunpack.c.l.b16 %v64
  %v612 = vunpack.c.h.b16 %v64
  %v613 = vunpack.c.l.b16 %v65
  %v614 = vunpack.c.h.b16 %v65
  %v615 = vunpack.c.l.b16 %v66
  %v616 = vunpack.c.h.b16 %v66
  %v617 = vunpack.c.l.b16 %v67
  %v618 = vunpack.c.h.b16 %v67
  %v619 = vunpack.c.l.b16 %v68
  %v620 = vunpack.c.h.b16 %v68
  %v621 = vunpack.c.l.b16 %v69
  %v622 = vunpack.c.h.b16 %v69
  %v623 = vunpack.c.l.b16 %v70
  %v624 = vunpack.c.h.b16 %v70
  %v625 = vunpack.c.l.b16 %v71
  %v626 = vunpack.c.h.b16 %v71
  %v627 = vunpack.c.l.b16 %v72
  %v628 = vunpack.c.h.b16 %v72
  %v629 = vunpack.c.l.b16 %v73
  %v630 = vunpack.c.h.b16 %v73
  %v631 = vunpack.c.l.b16 %v74
  %v632 = vunpack.c.h.b16 %v74
  %v633 = vunpack.c.l.b16 %v75
  %v634 = vunpack.c.h.b16 %v75
  %v635 = vunpack.c.l.b16 %v76
  %v636 = vunpack.c.h.b16 %v76
  %v637 = vunpack.c.l.b16 %v77
  %v638 = vunpack.c.h.b16 %v77
  %v639 = vunpack.c.l.b16 %v78
  %v640 = vunpack.c.h.b16 %v78
  %v641 = vunpack.c.l.b16 %v79
  %v642 = vunpack.c.h.b16 %v79
  %v643 = vunpack.c.l.b16 %v80
  %v644 = vunpack.c.h.b16 %v80
  %v645 = vunpack.c.l.b16 %v81
  %v646 = vunpack.c.h.b16 %v81
  %v647 = vunpack.c.l.b16 %v82
  %v648 = vunpack.c.h.b16 %v82
  %v649 = vunpack.c.l.b16 %v83
  %v650 = vunpack.c.h.b16 %v83
  %v651 = vunpack.c.l.b16 %v84
  %v652 = vunpack.c.h.b16 %v84
  %v653 = vunpack.c.l.b16 %v85
  %v654 = vunpack.c.h.b16 %v85
  %v655 = vunpack.c.l.b16 %v86
  %v656 = vunpack.c.h.b16 %v86
  %v657 = vunpack.c.l.b16 %v87
  %v658 = vunpack.c.h.b16 %v87
  %v659 = vunpack.c.l.b16 %v88
  %v660 = vunpack.c.h.b16 %v88
  %v661 = vunpack.c.l.b16 %v89
  %v662 = vunpack.c.h.b16 %v89
  %v663 = vunpack.c.l.b16 %v90
  %v664 = vunpack.c.h.b16 %v90
  %v665 = vunpack.c.l.b16 %v91
  %v666 = vunpack.c.h.b16 %v91
  %v667 = vunpack.c.l.b16 %v92
  %v668 = vunpack.c.h.b16 %v92
  %v669 = vunpack.c.l.b16 %v93
  %v670 = vunpack.c.h.b16 %v93
  %v671 = vunpack.c.l.b16 %v94
  %v672 = vunpack.c.h.b16 %v94
  %v673 = vunpack.c.l.b16 %v95
  %v674 = vunpack.c.h.b16 %v95
  %v675 = vunpack.c.l.b16 %v96
  %v676 = vunpack.c.h.b16 %v96
  %v677 = vunpack.c.l.b16 %v97
  %v678 = vunpack.c.h.b16 %v97
  %v679 = vunpack.c.l.b16 %v98
  %v680 = vunpack.c.h.b16 %v98
  %v681 = vunpack.c.l.b16 %v99
  %v682 = vunpack.c.h.b16 %v99
  %v683 = vunpack.c.l.b16 %v100
  %v684 = vunpack.c.h.b16 %v100
  %v685 = vunpack.c.l.b16 %v101
  %v686 = vunpack.c.h.b16 %v101
  %v687 = vunpack.c.l.b16 %v102
  %v688 = vunpack.c.h.b16 %v102
  %v689 = vunpack.c.l.b16 %v103
  %v690 = vunpack.c.h.b16 %v103
  %v691 = vunpack.c.l.b16 %v104
  %v692 = vunpack.c.h.b16 %v104
  %v693 = vunpack.c.l.b16 %v105
  %v694 = vunpack.c.h.b16 %v105
  %v695 = vunpack.c.l.b16 %v106
  %v696 = vunpack.c.h.b16 %v106
  %v697 = vunpack.c.l.b16 %v107
  %v698 = vunpack.c.h.b16 %v107
  %v699 = vunpack.c.l.b16 %v108
  %v700 = vunpack.c.h.b16 %v108
  %v701 = vunpack.c.l.b16 %v109
  %v702 = vunpack.c.h.b16 %v109
  %v703 = vunpack.c.l.b16 %v110
  %v704 = vunpack.c.h.b16 %v110
  %v705 = vunpack.c.l.b16 %v111
  %v706 = vunpack.c.h.b16 %v111
  %v707 = vunpack.c.l.b16 %v112
  %v708 = vunpack.c.h.b16 %v112
  %v709 = vunpack.c.l.b16 %v113
  %v710 = vunpack.c.h.b16 %v113
  %v711 = vunpack.c.l.b16 %v114
  %v712 = vunpack.c.h.b16 %v114
  %v713 = vunpack.c.l.b16 %v115
  %v714 = vunpack.c.h.b16 %v115
  %v715 = vunpack.c.l.b16 %v116
  %v716 = vunpack.c.h.b16 %v116
  %v717 = vunpack.c.l.b16 %v117
  %v718 = vunpack.c.h.b16 %v117
  %v719 = vunpack.c.l.b16 %v118
  %v720 = vunpack.c.h.b16 %v118
  %v721 = vunpack.c.l.b16 %v119
  %v722 = vunpack.c.h.b16 %v119
  %v723 = vunpack.c.l.b16 %v120
  %v724 = vunpack.c.h.b16 %v120
  %v725 = vunpack.c.l.b16 %v121
  %v726 = vunpack.c.h.b16 %v121
  %v727 = vunpack.c.l.b16 %v122
  %v728 = vunpack.c.h.b16 %v122
  %v729 = vunpack.c.l.b16 %v123
  %v730 = vunpack.c.h.b16 %v123
  %v731 = vunpack.c.l.b16 %v124
  %v732 = vunpack.c.h.b16 %v124
  %v733 = vunpack.c.l.b16 %v125
  %v734 = vunpack.c.h.b16 %v125
  %v735 = vunpack.c.l.b16 %v126
  %v736 = vunpack.c.h.b16 %v126
  %v737 = vunpack.c.l.b16 %v127
  %v738 = vunpack.c.h.b16 %v127
  %v739 = vunpack.c.l.b16 %v128
  %v740 = vunpack.c.h.b16 %v128
  %v741 = vunpack.c.l.b16 %v129
  %v742 = vunpack.c.h.b16 %v129
  %v743 = vunpack.c.l.b16 %v130
  %v744 = vunpack.c.h.b16 %v130
  %v745 = vunpack.c.l.b16 %v131
  %v746 = vunpack.c.h.b16 %v131
  %v747 = vunpack.c.l.b16 %v132
  %v748 = vunpack.c.h.b16 %v132
  %v749 = vunpack.c.l.b16 %v133
  %v750 = vunpack.c.h.b16 %v133
  %v751 = vunpack.c.l.b16 %v134
  %v752 = vunpack.c.h.b16 %v134
  %v753 = vunpack.c.l.b16 %v135
  %v754 = vunpack.c.h.b16 %v135
  %v755 = vunpack.c.l.b16 %v136
  %v756 = vunpack.c.h.b16 %v136
  %v757 = vunpack.c.l.b16 %v137
  %v758 = vunpack.c.h.b16 %v137
  %v759 = vunpack.c.l.b16 %v138
  %v760 = vunpack.c.h.b16 %v138
  %v761 = vunpack.c.l.b16 %v139
  %v762 = vunpack.c.h.b16 %v139
  %v763 = vunpack.c.l.b16 %v140
  %v764 = vunpack.c.h.b16 %v140
  %v765 = vunpack.c.l.b16 %v141
  %v766 = vunpack.c.h.b16 %v141
  %v767 = vunpack.c.l.b16 %v142
  %v768 = vunpack.c.h.b16 %v142
  %v769 = vunpack.c.l.b16 %v143
  %v770 = vunpack.c.h.b16 %v143
  %v771 = vunpack.c.l.b16 %v144
  %v772 = vunpack.c.h.b16 %v144
  %v773 = vunpack.c.l.b16 %v145
  %v774 = vunpack.c.h.b16 %v145
  %v775 = vunpack.c.l.b16 %v146
  %v776 = vunpack.c.h.b16 %v146
  %v777 = vunpack.c.l.b16 %v147
  %v778 = vunpack.c.h.b16 %v147
  %v779 = vunpack.c.l.b16 %v148
  %v780 = vunpack.c.h.b16 %v148
  %v781 = vunpack.c.l.b16 %v149
  %v782 = vunpack.c.h.b16 %v149
  %v783 = vunpack.c.l.b16 %v150
  %v784 = vunpack.c.h.b16 %v150
  %v785 = vunpack.c.l.b16 %v151
  %v786 = vunpack.c.h.b16 %v151
  %v787 = vunpack.c.l.b16 %v152
  %v788 = vunpack.c.h.b16 %v152
  %v789 = vunpack.c.l.b16 %v153
  %v790 = vunpack.c.h.b16 %v153
  %v791 = vunpack.c.l.b16 %v154
  %v792 = vunpack.c.h.b16 %v154
  %v793 = vunpack.c.l.b16 %v155
  %v794 = vunpack.c.h.b16 %v155
  %v795 = vunpack.c.l.b16 %v156
  %v796 = vunpack.c.h.b16 %v156
  %v797 = vunpack.c.l.b16 %v157
  %v798 = vunpack.c.h.b16 %v157
  %v799 = vunpack.c.l.b16 %v158
  %v800 = vunpack.c.h.b16 %v158
  %v801 = vunpack.c.l.b16 %v159
  %v802 = vunpack.c.h.b16 %v159
  %v803 = vunpack.c.l.b16 %v160
  %v804 = vunpack.c.h.b16 %v160
  %v805 = vunpack.c.l.b16 %v161
  %v806 = vunpack.c.h.b16 %v161
  %v807 = vunpack.c.l.b16 %v162
  %v808 = vunpack.c.h.b16 %v162
  %v809 = vunpack.c.l.b16 %v163
  %v810 = vunpack.c.h.b16 %v163
  %v811 = vunpack.c.l.b16 %v164
  %v812 = vunpack.c.h.b16 %v164
  %v813 = vunpack.c.l.b16 %v165
  %v814 = vunpack.c.h.b16 %v165
  %v815 = vunpack.c.l.b16 %v166
  %v816 = vunpack.c.h.b16 %v166
  %v817 = vunpack.c.l.b16 %v167
  %v818 = vunpack.c.h.b16 %v167
  %v819 = vunpack.c.l.b16 %v168
  %v820 = vunpack.c.h.b16 %v168
  %v821 = vunpack.c.l.b16 %v169
  %v822 = vunpack.c.h.b16 %v169
  %v823 = vunpack.c.l.b16 %v170
  %v824 = vunpack.c.h.b16 %v170
  %v825 = vunpack.c.l.b16 %v171
  %v826 = vunpack.c.h.b16 %v171
  %v827 = vunpack.c.l.b16 %v172
  %v828 = vunpack.c.h.b16 %v172
  %v829 = vunpack.c.l.b16 %v173
  %v830 = vunpack.c.h.b16 %v173
  %v831 = vunpack.c.l.b16 %v174
  %v832 = vunpack.c.h.b16 %v174
  %v833 = vunpack.c.l.b16 %v175
  %v834 = vunpack.c.h.b16 %v175
  %v835 = vunpack.c.l.b16 %v176
  %v836 = vunpack.c.h.b16 %v176
  %v837 = vunpack.c.l.b16 %v177
  %v838 = vunpack.c.h.b16 %v177
  %v839 = vunpack.c.l.b16 %v178
  %v840 = vunpack.c.h.b16 %v178
  %v841 = vunpack.c.l.b16 %v179
  %v842 = vunpack.c.h.b16 %v179
  %v843 = vunpack.c.l.b16 %v180
  %v844 = vunpack.c.h.b16 %v180
  %v845 = vunpack.c.l.b16 %v181
  %v846 = vunpack.c.h.b16 %v181
  %v847 = vunpack.c.l.b16 %v182
  %v848 = vunpack.c.h.b16 %v182
  %v849 = vunpack.c.l.b16 %v183
  %v850 = vunpack.c.h.b16 %v183
  %v851 = vunpack.c.l.b16 %v184
  %v852 = vunpack.c.h.b16 %v184
  %v853 = vunpack.c.l.b16 %v185
  %v854 = vunpack.c.h.b16 %v185
  %v855 = vunpack.c.l.b16 %v186
  %v856 = vunpack.c.h.b16 %v186
  %v857 = vunpack.c.l.b16 %v187
  %v858 = vunpack.c.h.b16 %v187
  %v859 = vunpack.c.l.b16 %v188
  %v860 = vunpack.c.h.b16 %v188
  %v861 = vunpack.c.l.b16 %v189
  %v862 = vunpack.c.h.b16 %v189
  %v863 = vunpack.c.l.b16 %v190
  %v864 = vunpack.c.h.b16 %v190
  %v865 = vunpack.c.l.b16 %v191
  %v866 = vunpack.c.h.b16 %v191
  %v867 = vunpack.c.l.b16 %v192
  %v868 = vunpack.c.h.b16 %v192
  %v869 = vunpack.c.l.b16 %v193
  %v870 = vunpack.c.h.b16 %v193
  %v871 = vunpack.c.l.b16 %v194
  %v872 = vunpack.c.h.b16 %v194
  %v873 = vunpack.c.l.b16 %v195
  %v874 = vunpack.c.h.b16 %v195
  %v875 = vunpack.c.l.b16 %v196
  %v876 = vunpack.c.h.b16 %v196
  %v877 = vunpack.c.l.b16 %v197
  %v878 = vunpack.c.h.b16 %v197
  %v879 = vunpack.c.l.b16 %v198
  %v880 = vunpack.c.h.b16 %v198
  %v881 = vunpack.c.l.b16 %v199
  %v882 = vunpack.c.h.b16 %v199
  %v883 = vunpack.c.l.b16 %v200
  %v884 = vunpack.c.h.b16 %v200
  %v885 = vunpack.c.l.b16 %v201
  %v886 = vunpack.c.h.b16 %v201
  %v887 = vunpack.c.l.b16 %v202
  %v888 = vunpack.c.h.b16 %v202
  %v889 = vunpack.c.l.b16 %v203
  %v890 = vunpack.c.h.b16 %v203
  %v891 = vunpack.c.l.b16 %v204
  %v892 = vunpack.c.h.b16 %v204
  %v893 = vunpack.c.l.b16 %v205
  %v894 = vunpack.c.h.b16 %v205
  %v895 = vunpack.c.l.b16 %v206
  %v896 = vunpack.c.h.b16 %v206
  %v897 = vunpack.c.l.b16 %v207
  %v898 = vunpack.c.h.b16 %v207
  %v899 = vunpack.c.l.b16 %v208
  %v900 = vunpack.c.h.b16 %v208
  %v901 = vunpack.c.l.b16 %v209
  %v902 = vunpack.c.h.b16 %v209
  %v903 = vunpack.c.l.b16 %v210
  %v904 = vunpack.c.h.b16 %v210
  %v905 = vunpack.c.l.b16 %v211
  %v906 = vunpack.c.h.b16 %v211
  %v907 = vunpack.c.l.b16 %v212
  %v908 = vunpack.c.h.b16 %v212
  %v909 = vunpack.c.l.b16 %v213
  %v910 = vunpack.c.h.b16 %v213
  %v911 = vunpack.c.l.b16 %v214
  %v912 = vunpack.c.h.b16 %v214
  %v913 = vunpack.c.l.b16 %v215
  %v914 = vunpack.c.h.b16 %v215
  %v915 = vunpack.c.l.b16 %v216
  %v916 = vunpack.c.h.b16 %v216
  %v917 = vunpack.c.l.b16 %v217
  %v918 = vunpack.c.h.b16 %v217
  %v919 = vunpack.c.l.b16 %v218
  %v920 = vunpack.c.h.b16 %v218
  %v921 = vunpack.c.l.b16 %v219
  %v922 = vunpack.c.h.b16 %v219
  %v923 = vunpack.c.l.b16 %v220
  %v924 = vunpack.c.h.b16 %v220
  %v925 = vunpack.c.l.b16 %v221
  %v926 = vunpack.c.h.b16 %v221
  %v927 = vunpack.c.l.b16 %v222
  %v928 = vunpack.c.h.b16 %v222
  %v929 = vunpack.c.l.b16 %v223
  %v930 = vunpack.c.h.b16 %v223
  %v931 = vunpack.c.l.b16 %v224
  %v932 = vunpack.c.h.b16 %v224
  %v933 = vunpack.c.l.b16 %v225
  %v934 = vunpack.c.h.b16 %v225
  %v935 = vunpack.c.l.b16 %v226
  %v936 = vunpack.c.h.b16 %v226
  %v937 = vunpack.c.l.b16 %v227
  %v938 = vunpack.c.h.b16 %v227
  %v939 = vunpack.c.l.b16 %v228
  %v940 = vunpack.c.h.b16 %v228
  %v941 = vunpack.c.l.b16 %v229
  %v942 = vunpack.c.h.b16 %v229
  %v943 = vunpack.c.l.b16 %v230
  %v944 = vunpack.c.h.b16 %v230
  %v945 = vunpack.c.l.b16 %v231
  %v946 = vunpack.c.h.b16 %v231
  %v947 = vunpack.c.l.b16 %v232
  %v948 = vunpack.c.h.b16 %v232
  %v949 = vunpack.c.l.b16 %v233
  %v950 = vunpack.c.h.b16 %v233
  %v951 = vunpack.c.l.b16 %v234
  %v952 = vunpack.c.h.b16 %v234
  %v953 = vunpack.c.l.b16 %v235
  %v954 = vunpack.c.h.b16 %v235
  %v955 = vunpack.c.l.b16 %v236
  %v956 = vunpack.c.h.b16 %v236
  %v957 = vunpack.c.l.b16 %v237
  %v958 = vunpack.c.h.b16 %v237
  %v959 = vunpack.c.l.b16 %v238
  %v960 = vunpack.c.h.b16 %v238
  %v961 = vunpack.c.l.b16 %v239
  %v962 = vunpack.c.h.b16 %v239
  %v963 = vunpack.c.l.b16 %v240
  %v964 = vunpack.c.h.b16 %v240
  %v965 = vunpack.c.l.b16 %v241
  %v966 = vunpack.c.h.b16 %v241
  %v967 = vunpack.c.l.b16 %v242
  %v968 = vunpack.c.h.b16 %v242
  %v969 = vunpack.c.l.b16 %v243
  %v970 = vunpack.c.h.b16 %v243
  %v971 = vunpack.c.l.b16 %v244
  %v972 = vunpack.c.h.b16 %v244
  %v973 = vunpack.c.l.b16 %v245
  %v974 = vunpack.c.h.b16 %v245
  %v975 = vunpack.c.l.b16 %v246
  %v976 = vunpack.c.h.b16 %v246
  %v977 = vunpack.c.l.b16 %v247
  %v978 = vunpack.c.h.b16 %v247
  %v979 = vunpack.c.l.b16 %v248
  %v980 = vunpack.c.h.b16 %v248
  %v981 = vunpack.c.l.b16 %v249
  %v982 = vunpack.c.h.b16 %v249
  %v983 = vunpack.c.l.b16 %v250
  %v984 = vunpack.c.h.b16 %v250
  %v985 = vunpack.c.l.b16 %v251
  %v986 = vunpack.c.h.b16 %v251
  %v987 = vunpack.c.l.b16 %v252
  %v988 = vunpack.c.h.b16 %v252
  %v989 = vunpack.c.l.b16 %v253
  %v990 = vunpack.c.h.b16 %v253
  %v991 = vunpack.c.l.b16 %v254
  %v992 = vunpack.c.h.b16 %v254
  %v993 = vpack.c.b16 %v537, %v529
  %v994 = vpack.c.b16 %v538, %v530
  %v995 = vpack.c.b16 %v539, %v531
  %v996 = vpack.c.b16 %v540, %v532
  %v997 = vpack.c.b16 %v541, %v533
  %v998 = vpack.c.b16 %v542, %v534
  %v999 = vpack.c.b16 %v543, %v535
  %v1000 = vpack.c.b16 %v544, %v536
  %v1001 = vpack.c.b16 %v553, %v545
  %v1002 = vpack.c.b16 %v554, %v546
  %v1003 = vpack.c.b16 %v555, %v547
  %v1004 = vpack.c.b16 %v556, %v548
  %v1005 = vpack.c.b16 %v557, %v549
  %v1006 = vpack.c.b16 %v558, %v550
  %v1007 = vpack.c.b16 %v559, %v551
  %v1008 = vpack.c.b16 %v560, %v552
  %v1009 = vpack.c.b16 %v569, %v561
  %v1010 = vpack.c.b16 %v570, %v562
  %v1011 = vpack.c.b16 %v571, %v563
  %v1012 = vpack.c.b16 %v572, %v564
  %v1013 = vpack.c.b16 %v573, %v565
  %v1014 = vpack.c.b16 %v574, %v566
  %v1015 = vpack.c.b16 %v575, %v567
  %v1016 = vpack.c.b16 %v576, %v568
  %v1017 = vpack.c.b16 %v585, %v577
  %v1018 = vpack.c.b16 %v586, %v578
  %v1019 = vpack.c.b16 %v587, %v579
  %v1020 = vpack.c.b16 %v588, %v580
  %v1021 = vpack.c.b16 %v589, %v581
  %v1022 = vpack.c.b16 %v590, %v582
  %v1023 = vpack.c.b16 %v591, %v583
  %v1024 = vpack.c.b16 %v592, %v584
  %v1025 = vpack.c.b16 %v601, %v593
  %v1026 = vpack.c.b16 %v602, %v594
  %v1027 = vpack.c.b16 %v603, %v595
  %v1028 = vpack.c.b16 %v604, %v596
  %v1029 = vpack.c.b16 %v605, %v597
  %v1030 = vpack.c.b16 %v606, %v598
  %v1031 = vpack.c.b16 %v607, %v599
  %v1032 = vpack.c.b16 %v608, %v600
  %v1033 = vpack.c.b16 %v617, %v609
  %v1034 = vpack.c.b16 %v618, %v610
  %v1035 = vpack.c.b16 %v619, %v611
  %v1036 = vpack.c.b16 %v620, %v612
  %v1037 = vpack.c.b16 %v621, %v613
  %v1038 = vpack.c.b16 %v622, %v614
  %v1039 = vpack.c.b16 %v623, %v615
  %v1040 = vpack.c.b16 %v624, %v616
  %v1041 = vpack.c.b16 %v633, %v625
  %v1042 = vpack.c.b16 %v634, %v626
  %v1043 = vpack.c.b16 %v635, %v627
  %v1044 = vpack.c.b16 %v636, %v628
  %v1045 = vpack.c.b16 %v637, %v629
  %v1046 = vpack.c.b16 %v638, %v630
  %v1047 = vpack.c.b16 %v639, %v631
  %v1048 = vpack.c.b16 %v640, %v632
  %v1049 = vpack.c.b16 %v649, %v641
  %v1050 = vpack.c.b16 %v650, %v642
  %v1051 = vpack.c.b16 %v651, %v643
  %v1052 = vpack.c.b16 %v652, %v644
  %v1053 = vpack.c.b16 %v653, %v645
  %v1054 = vpack.c.b16 %v654, %v646
  %v1055 = vpack.c.b16 %v655, %v647
  %v1056 = vpack.c.b16 %v656, %v648
  %v1057 = vpack.c.b16 %v665, %v657
  %v1058 = vpack.c.b16 %v666, %v658
  %v1059 = vpack.c.b16 %v667, %v659
  %v1060 = vpack.c.b16 %v668, %v660
  %v1061 = vpack.c.b16 %v669, %v661
  %v1062 = vpack.c.b16 %v670, %v662
  %v1063 = vpack.c.b16 %v671, %v663
  %v1064 = vpack.c.b16 %v672, %v664
  %v1065 = vpack.c.b16 %v681, %v673
  %v1066 = vpack.c.b16 %v682, %v674
  %v1067 = vpack.c.b16 %v683, %v675
  %v1068 = vpack.c.b16 %v684, %v676
  %v1069 = vpack.c.b16 %v685, %v677
  %v1070 = vpack.c.b16 %v686, %v678
  %v1071 = vpack.c.b16 %v687, %v679
  %v1072 = vpack.c.b16 %v688, %v680
  %v1073 = vpack.c.b16 %v697, %v689
  %v1074 = vpack.c.b16 %v698, %v690
  %v1075 = vpack.c.b16 %v699, %v691
  %v1076 = vpack.c.b16 %v700, %v692
  %v1077 = vpack.c.b16 %v701, %v693
  %v1078 = vpack.c.b16 %v702, %v694
  %v1079 = vpack.c.b16 %v703, %v695
  %v1080 = vpack.c.b16 %v704, %v696
  %v1081 = vpack.c.b16 %v713, %v705
  %v1082 = vpack.c.b16 %v714, %v706
  %v1083 = vpack.c.b16 %v715, %v707
  %v1084 = vpack.c.b16 %v716, %v708
  %v1085 = vpack.c.b16 %v717, %v709
  %v1086 = vpack.c.b16 %v718, %v710
  %v1087 = vpack.c.b16 %v719, %v711
  %v1088 = vpack.c.b16 %v720, %v712
  %v1089 = vpack.c.b16 %v729, %v721
  %v1090 = vpack.c.b16 %v730, %v722
  %v1091 = vpack.c.b16 %v731, %v723
  %v1092 = vpack.c.b16 %v732, %v724
  %v1093 = vpack.c.b16 %v733, %v725
  %v1094 = vpack.c.b16 %v734, %v726
  %v1095 = vpack.c.b16 %v735, %v727
  %v1096 = vpack.c.b16 %v736, %v728
  %v1097 = vpack.c.b16 %v745, %v737
  %v1098 = vpack.c.b16 %v746, %v738
  %v1099 = vpack.c.b16 %v747, %v739
  %v1100 = vpack.c.b16 %v748, %v740
  %v1101 = vpack.c.b16 %v749, %v741
  %v1102 = vpack.c.b16 %v750, %v742
  %v1103 = vpack.c.b16 %v751, %v743
  %v1104 = vpack.c.b16 %v752, %v744
  %v1105 = vpack.c.b16 %v761, %v753
  %v1106 = vpack.c.b16 %v762, %v754
  %v1107 = vpack.c.b16 %v763, %v755
  %v1108 = vpack.c.b16 %v764, %v756
  %v1109 = vpack.c.b16 %v765, %v757
  %v1110 = vpack.c.b16 %v766, %v758
  %v1111 = vpack.c.b16 %v767, %v759
  %v1112 = vpack.c.b16 %v768, %v760
  %v1113 = vpack.c.b16 %v777, %v769
  %v1114 = vpack.c.b16 %v778, %v770
  %v1115 = vpack.c.b16 %v779, %v771
  %v1116 = vpack.c.b16 %v780, %v772
  %v1117 = vpack.c.b16 %v781, %v773
  %v1118 = vpack.c.b16 %v782, %v774
  %v1119 = vpack.c.b16 %v783, %v775
  %v1120 = vpack.c.b16 %v784, %v776
  %v1121 = vpack.c.b16 %v793, %v785
  %v1122 = vpack.c.b16 %v794, %v786
  %v1123 = vpack.c.b16 %v795, %v787
  %v1124 = vpack.c.b16 %v796, %v788
  %v1125 = vpack.c.b16 %v797, %v789
  %v1126 = vpack.c.b16 %v798, %v790
  %v1127 = vpack.c.b16 %v799, %v791
  %v1128 = vpack.c.b16 %v800, %v792
  %v1129 = vpack.c.b16 %v809, %v801
  %v1130 = vpack.c.b16 %v810, %v802
  %v1131 = vpack.c.b16 %v811, %v803
  %v1132 = vpack.c.b16 %v812, %v804
  %v1133 = vpack.c.b16 %v813, %v805
  %v1134 = vpack.c.b16 %v814, %v806
  %v1135 = vpack.c.b16 %v815, %v807
  %v1136 = vpack.c.b16 %v816, %v808
  %v1137 = vpack.c.b16 %v825, %v817
  %v1138 = vpack.c.b16 %v826, %v818
  %v1139 = vpack.c.b16 %v827, %v819
  %v1140 = vpack.c.b16 %v828, %v820
  %v1141 = vpack.c.b16 %v829, %v821
  %v1142 = vpack.c.b16 %v830, %v822
  %v1143 = vpack.c.b16 %v831, %v823
  %v1144 = vpack.c.b16 %v832, %v824
  %v1145 = vpack.c.b16 %v841, %v833
  %v1146 = vpack.c.b16 %v842, %v834
  %v1147 = vpack.c.b16 %v843, %v835
  %v1148 = vpack.c.b16 %v844, %v836
  %v1149 = vpack.c.b16 %v845, %v837
  %v1150 = vpack.c.b16 %v846, %v838
  %v1151 = vpack.c.b16 %v847, %v839
  %v1152 = vpack.c.b16 %v848, %v840
  %v1153 = vpack.c.b16 %v857, %v849
  %v1154 = vpack.c.b16 %v858, %v850
  %v1155 = vpack.c.b16 %v859, %v851
  %v1156 = vpack.c.b16 %v860, %v852
  %v1157 = vpack.c.b16 %v861, %v853
  %v1158 = vpack.c.b16 %v862, %v854
  %v1159 = vpack.c.b16 %v863, %v855
  %v1160 = vpack.c.b16 %v864, %v856
  %v1161 = vpack.c.b16 %v873, %v865
  %v1162 = vpack.c.b16 %v874, %v866
  %v1163 = vpack.c.b16 %v875, %v867
  %v1164 = vpack.c.b16 %v876, %v868
  %v1165 = vpack.c.b16 %v877, %v869
  %v1166 = vpack.c.b16 %v878, %v870
  %v1167 = vpack.c.b16 %v879, %v871
  %v1168 = vpack.c.b16 %v880, %v872
  %v1169 = vpack.c.b16 %v889, %v881
  %v1170 = vpack.c.b16 %v890, %v882
  %v1171 = vpack.c.b16 %v891, %v883
  %v1172 = vpack.c.b16 %v892, %v884
  %v1173 = vpack.c.b16 %v893, %v885
  %v1174 = vpack.c.b16 %v894, %v886
  %v1175 = vpack.c.b16 %v895, %v887
  %v1176 = vpack.c.b16 %v896, %v888
  %v1177 = vpack.c.b16 %v905, %v897
  %v1178 = vpack.c.b16 %v906, %v898
  %v1179 = vpack.c.b16 %v907, %v899
  %v1180 = vpack.c.b16 %v908, %v900
  %v1181 = vpack.c.b16 %v909, %v901
  %v1182 = vpack.c.b16 %v910, %v902
  %v1183 = vpack.c.b16 %v911, %v903
  %v1184 = vpack.c.b16 %v912, %v904
  %v1185 = vpack.c.b16 %v921, %v913
  %v1186 = vpack.c.b16 %v922, %v914
  %v1187 = vpack.c.b16 %v923, %v915
  %v1188 = vpack.c.b16 %v924, %v916
  %v1189 = vpack.c.b16 %v925, %v917
  %v1190 = vpack.c.b16 %v926, %v918
  %v1191 = vpack.c.b16 %v927, %v919
  %v1192 = vpack.c.b16 %v928, %v920
  %v1193 = vpack.c.b16 %v937, %v929
  %v1194 = vpack.c.b16 %v938, %v930
  %v1195 = vpack.c.b16 %v939, %v931
  %v1196 = vpack.c.b16 %v940, %v932
  %v1197 = vpack.c.b16 %v941, %v933
  %v1198 = vpack.c.b16 %v942, %v934
  %v1199 = vpack.c.b16 %v943, %v935
  %v1200 = vpack.c.b16 %v944, %v936
  %v1201 = vpack.c.b16 %v953, %v945
  %v1202 = vpack.c.b16 %v954, %v946
  %v1203 = vpack.c.b16 %v955, %v947
  %v1204 = vpack.c.b16 %v956, %v948
  %v1205 = vpack.c.b16 %v957, %v949
  %v1206 = vpack.c.b16 %v958, %v950
  %v1207 = vpack.c.b16 %v959, %v951
  %v1208 = vpack.c.b16 %v960, %v952
  %v1209 = vpack.c.b16 %v969, %v961
  %v1210 = vpack.c.b16 %v970, %v962
  %v1211 = vpack.c.b16 %v971, %v963
  %v1212 = vpack.c.b16 %v972, %v964
  %v1213 = vpack.c.b16 %v973, %v965
  %v1214 = vpack.c.b16 %v974, %v966
  %v1215 = vpack.c.b16 %v975, %v967
  %v1216 = vpack.c.b16 %v976, %v968
  %v1217 = vpack.c.b16 %v985, %v977
  %v1218 = vpack.c.b16 %v986, %v978
  %v1219 = vpack.c.b16 %v987, %v979
  %v1220 = vpack.c.b16 %v988, %v980
  %v1221 = vpack.c.b16 %v989, %v981
  %v1222 = vpack.c.b16 %v990, %v982
  %v1223 = vpack.c.b16 %v991, %v983
  %v1224 = vpack.c.b16 %v992, %v984
  %vm1457 = vcmask 654336
  %v1459 = vsel %vm1457, %v22, 0
  %1461 = vmatprep.subr.bf16.mxu0 %v1050
  %1462 = vmatpush1.bf16.msra.mxu0 %v1049
  %1463 = vmatprep.subr.bf16.mxu0 %v1042
  %1464 = vmatpush1.bf16.msra.mxu0 %v1041
  %1465 = vmatprep.subr.bf16.mxu0 %v1034
  %1466 = vmatpush1.bf16.msra.mxu0 %v1033
  %1467 = vmatprep.subr.bf16.mxu0 %v1026
  %1468 = vmatpush1.bf16.msra.mxu0 %v1025
  %1469 = vmatprep.subr.bf16.mxu0 %v1018
  %1470 = vmatpush1.bf16.msra.mxu0 %v1017
  %1471 = vmatprep.subr.bf16.mxu0 %v1010
  %1472 = vmatpush1.bf16.msra.mxu0 %v1009
  %1473 = vmatprep.subr.bf16.mxu0 %v1002
  %1474 = vmatpush1.bf16.msra.mxu0 %v1001
  %1475 = vmatprep.subr.bf16.mxu0 %v994
  %1476 = vmatpush1.bf16.msra.mxu0 %v993
  %1477 = vmatprep.subr.bf16.mxu0 %v1114
  %1478 = vmatpush2.bf16.msra.mxu0 %v1113
  %1479 = vmatprep.subr.bf16.mxu0 %v1106
  %1480 = vmatpush2.bf16.msra.mxu0 %v1105
  %1481 = vmatprep.subr.bf16.mxu0 %v1098
  %1482 = vmatpush2.bf16.msra.mxu0 %v1097
  %1483 = vmatprep.subr.bf16.mxu0 %v1090
  %1484 = vmatpush2.bf16.msra.mxu0 %v1089
  %1485 = vmatprep.subr.bf16.mxu0 %v1082
  %1486 = vmatpush2.bf16.msra.mxu0 %v1081
  %1487 = vmatprep.subr.bf16.mxu0 %v1074
  %1488 = vmatpush2.bf16.msra.mxu0 %v1073
  %1489 = vmatprep.subr.bf16.mxu0 %v1066
  %1490 = vmatpush2.bf16.msra.mxu0 %v1065
  %1491 = vmatprep.subr.bf16.mxu0 %v1058
  %1492 = vmatpush2.bf16.msra.mxu0 %v1057
  %1493 = vmatprep.mubr.bf16.mxu0 %v20
  %1494 = vmatmul.mubr.bf16.gmra.mxu0 %v19
  %v1495 = vpop.f32.mrf.mxu0
  %v1496 = vadd.f32 %v260, %v1495
  %v1497 = vpop.f32.mrf.mxu0
  %v1498 = vadd.f32 %v264, %v1497
  %v1499 = vpop.f32.mrf.mxu0
  %v1500 = vpop.f32.mrf.mxu0
  %1501 = vdwg.mxu0
  %1502 = vmatprep.subr.bf16.mxu0 %v1178
  %1503 = vmatpush1.bf16.msra.mxu0 %v1177
  %1504 = vmatprep.subr.bf16.mxu0 %v1170
  %1505 = vmatpush1.bf16.msra.mxu0 %v1169
  %1506 = vmatprep.subr.bf16.mxu0 %v1162
  %1507 = vmatpush1.bf16.msra.mxu0 %v1161
  %1508 = vmatprep.subr.bf16.mxu0 %v1154
  %1509 = vmatpush1.bf16.msra.mxu0 %v1153
  %1510 = vmatprep.subr.bf16.mxu0 %v1146
  %1511 = vmatpush1.bf16.msra.mxu0 %v1145
  %1512 = vmatprep.subr.bf16.mxu0 %v1138
  %1513 = vmatpush1.bf16.msra.mxu0 %v1137
  %1514 = vmatprep.subr.bf16.mxu0 %v1130
  %1515 = vmatpush1.bf16.msra.mxu0 %v1129
  %1516 = vmatprep.subr.bf16.mxu0 %v1122
  %1517 = vmatpush1.bf16.msra.mxu0 %v1121
  %1518 = vmatprep.subr.bf16.mxu0 0
  %1519 = vmatpush2.bf16.msra.mxu0 0
  %1520 = vmatprep.subr.bf16.mxu0 0
  %1521 = vmatpush2.bf16.msra.mxu0 0
  %1522 = vmatprep.subr.bf16.mxu0 0
  %1523 = vmatpush2.bf16.msra.mxu0 0
  %1524 = vmatprep.subr.bf16.mxu0 %v1218
  %1525 = vmatpush2.bf16.msra.mxu0 %v1217
  %1526 = vmatprep.subr.bf16.mxu0 %v1210
  %1527 = vmatpush2.bf16.msra.mxu0 %v1209
  %1528 = vmatprep.subr.bf16.mxu0 %v1202
  %1529 = vmatpush2.bf16.msra.mxu0 %v1201
  %1530 = vmatprep.subr.bf16.mxu0 %v1194
  %1531 = vmatpush2.bf16.msra.mxu0 %v1193
  %1532 = vmatprep.subr.bf16.mxu0 %v1186
  %1533 = vmatpush2.bf16.msra.mxu0 %v1185
  %1534 = vmatprep.mubr.bf16.mxu0 %v1459
  %1535 = vmatmul.mubr.bf16.gmra.mxu0 %v21
  %v1536 = vpop.f32.mrf.mxu0
  %v1537 = vadd.f32 %v1496, %v1536
  %v1538 = vpop.f32.mrf.mxu0
  %v1539 = vadd.f32 %v1498, %v1538
  %v1540 = vpop.f32.mrf.mxu0
  %v1541 = vpop.f32.mrf.mxu0
  %1542 = vdwg.mxu0
  %1543 = vmatprep.subr.bf16.mxu0 %v1052
  %1544 = vmatpush1.bf16.msra.mxu0 %v1051
  %1545 = vmatprep.subr.bf16.mxu0 %v1044
  %1546 = vmatpush1.bf16.msra.mxu0 %v1043
  %1547 = vmatprep.subr.bf16.mxu0 %v1036
  %1548 = vmatpush1.bf16.msra.mxu0 %v1035
  %1549 = vmatprep.subr.bf16.mxu0 %v1028
  %1550 = vmatpush1.bf16.msra.mxu0 %v1027
  %1551 = vmatprep.subr.bf16.mxu0 %v1020
  %1552 = vmatpush1.bf16.msra.mxu0 %v1019
  %1553 = vmatprep.subr.bf16.mxu0 %v1012
  %1554 = vmatpush1.bf16.msra.mxu0 %v1011
  %1555 = vmatprep.subr.bf16.mxu0 %v1004
  %1556 = vmatpush1.bf16.msra.mxu0 %v1003
  %1557 = vmatprep.subr.bf16.mxu0 %v996
  %1558 = vmatpush1.bf16.msra.mxu0 %v995
  %1559 = vmatprep.subr.bf16.mxu0 %v1116
  %1560 = vmatpush2.bf16.msra.mxu0 %v1115
  %1561 = vmatprep.subr.bf16.mxu0 %v1108
  %1562 = vmatpush2.bf16.msra.mxu0 %v1107
  %1563 = vmatprep.subr.bf16.mxu0 %v1100
  %1564 = vmatpush2.bf16.msra.mxu0 %v1099
  %1565 = vmatprep.subr.bf16.mxu0 %v1092
  %1566 = vmatpush2.bf16.msra.mxu0 %v1091
  %1567 = vmatprep.subr.bf16.mxu0 %v1084
  %1568 = vmatpush2.bf16.msra.mxu0 %v1083
  %1569 = vmatprep.subr.bf16.mxu0 %v1076
  %1570 = vmatpush2.bf16.msra.mxu0 %v1075
  %1571 = vmatprep.subr.bf16.mxu0 %v1068
  %1572 = vmatpush2.bf16.msra.mxu0 %v1067
  %1573 = vmatprep.subr.bf16.mxu0 %v1060
  %1574 = vmatpush2.bf16.msra.mxu0 %v1059
  %1575 = vmatprep.mubr.bf16.mxu0 %v20
  %1576 = vmatmul.mubr.bf16.gmra.mxu0 %v19
  %v1577 = vpop.f32.mrf.mxu0
  %v1578 = vadd.f32 %v268, %v1577
  %v1579 = vpop.f32.mrf.mxu0
  %v1580 = vadd.f32 %v272, %v1579
  %v1581 = vpop.f32.mrf.mxu0
  %v1582 = vpop.f32.mrf.mxu0
  %1583 = vdwg.mxu0
  %1584 = vmatprep.subr.bf16.mxu0 %v1180
  %1585 = vmatpush1.bf16.msra.mxu0 %v1179
  %1586 = vmatprep.subr.bf16.mxu0 %v1172
  %1587 = vmatpush1.bf16.msra.mxu0 %v1171
  %1588 = vmatprep.subr.bf16.mxu0 %v1164
  %1589 = vmatpush1.bf16.msra.mxu0 %v1163
  %1590 = vmatprep.subr.bf16.mxu0 %v1156
  %1591 = vmatpush1.bf16.msra.mxu0 %v1155
  %1592 = vmatprep.subr.bf16.mxu0 %v1148
  %1593 = vmatpush1.bf16.msra.mxu0 %v1147
  %1594 = vmatprep.subr.bf16.mxu0 %v1140
  %1595 = vmatpush1.bf16.msra.mxu0 %v1139
  %1596 = vmatprep.subr.bf16.mxu0 %v1132
  %1597 = vmatpush1.bf16.msra.mxu0 %v1131
  %1598 = vmatprep.subr.bf16.mxu0 %v1124
  %1599 = vmatpush1.bf16.msra.mxu0 %v1123
  %1600 = vmatprep.subr.bf16.mxu0 0
  %1601 = vmatpush2.bf16.msra.mxu0 0
  %1602 = vmatprep.subr.bf16.mxu0 0
  %1603 = vmatpush2.bf16.msra.mxu0 0
  %1604 = vmatprep.subr.bf16.mxu0 0
  %1605 = vmatpush2.bf16.msra.mxu0 0
  %1606 = vmatprep.subr.bf16.mxu0 %v1220
  %1607 = vmatpush2.bf16.msra.mxu0 %v1219
  %1608 = vmatprep.subr.bf16.mxu0 %v1212
  %1609 = vmatpush2.bf16.msra.mxu0 %v1211
  %1610 = vmatprep.subr.bf16.mxu0 %v1204
  %1611 = vmatpush2.bf16.msra.mxu0 %v1203
  %1612 = vmatprep.subr.bf16.mxu0 %v1196
  %1613 = vmatpush2.bf16.msra.mxu0 %v1195
  %1614 = vmatprep.subr.bf16.mxu0 %v1188
  %1615 = vmatpush2.bf16.msra.mxu0 %v1187
  %1616 = vmatprep.mubr.bf16.mxu0 %v1459
  %1617 = vmatmul.mubr.bf16.gmra.mxu0 %v21
  %v1618 = vpop.f32.mrf.mxu0
  %v1619 = vadd.f32 %v1578, %v1618
  %v1620 = vpop.f32.mrf.mxu0
  %v1621 = vadd.f32 %v1580, %v1620
  %v1622 = vpop.f32.mrf.mxu0
  %v1623 = vpop.f32.mrf.mxu0
  %1624 = vdwg.mxu0
  %1625 = vmatprep.subr.bf16.mxu0 %v1054
  %1626 = vmatpush1.bf16.msra.mxu0 %v1053
  %1627 = vmatprep.subr.bf16.mxu0 %v1046
  %1628 = vmatpush1.bf16.msra.mxu0 %v1045
  %1629 = vmatprep.subr.bf16.mxu0 %v1038
  %1630 = vmatpush1.bf16.msra.mxu0 %v1037
  %1631 = vmatprep.subr.bf16.mxu0 %v1030
  %1632 = vmatpush1.bf16.msra.mxu0 %v1029
  %1633 = vmatprep.subr.bf16.mxu0 %v1022
  %1634 = vmatpush1.bf16.msra.mxu0 %v1021
  %1635 = vmatprep.subr.bf16.mxu0 %v1014
  %1636 = vmatpush1.bf16.msra.mxu0 %v1013
  %1637 = vmatprep.subr.bf16.mxu0 %v1006
  %1638 = vmatpush1.bf16.msra.mxu0 %v1005
  %1639 = vmatprep.subr.bf16.mxu0 %v998
  %1640 = vmatpush1.bf16.msra.mxu0 %v997
  %1641 = vmatprep.subr.bf16.mxu0 %v1118
  %1642 = vmatpush2.bf16.msra.mxu0 %v1117
  %1643 = vmatprep.subr.bf16.mxu0 %v1110
  %1644 = vmatpush2.bf16.msra.mxu0 %v1109
  %1645 = vmatprep.subr.bf16.mxu0 %v1102
  %1646 = vmatpush2.bf16.msra.mxu0 %v1101
  %1647 = vmatprep.subr.bf16.mxu0 %v1094
  %1648 = vmatpush2.bf16.msra.mxu0 %v1093
  %1649 = vmatprep.subr.bf16.mxu0 %v1086
  %1650 = vmatpush2.bf16.msra.mxu0 %v1085
  %1651 = vmatprep.subr.bf16.mxu0 %v1078
  %1652 = vmatpush2.bf16.msra.mxu0 %v1077
  %1653 = vmatprep.subr.bf16.mxu0 %v1070
  %1654 = vmatpush2.bf16.msra.mxu0 %v1069
  %1655 = vmatprep.subr.bf16.mxu0 %v1062
  %1656 = vmatpush2.bf16.msra.mxu0 %v1061
  %1657 = vmatprep.mubr.bf16.mxu0 %v20
  %1658 = vmatmul.mubr.bf16.gmra.mxu0 %v19
  %v1659 = vpop.f32.mrf.mxu0
  %v1660 = vadd.f32 %v276, %v1659
  %v1661 = vpop.f32.mrf.mxu0
  %v1662 = vadd.f32 %v280, %v1661
  %v1663 = vpop.f32.mrf.mxu0
  %v1664 = vpop.f32.mrf.mxu0
  %1665 = vdwg.mxu0
  %1666 = vmatprep.subr.bf16.mxu0 %v1182
  %1667 = vmatpush1.bf16.msra.mxu0 %v1181
  %1668 = vmatprep.subr.bf16.mxu0 %v1174
  %1669 = vmatpush1.bf16.msra.mxu0 %v1173
  %1670 = vmatprep.subr.bf16.mxu0 %v1166
  %1671 = vmatpush1.bf16.msra.mxu0 %v1165
  %1672 = vmatprep.subr.bf16.mxu0 %v1158
  %1673 = vmatpush1.bf16.msra.mxu0 %v1157
  %1674 = vmatprep.subr.bf16.mxu0 %v1150
  %1675 = vmatpush1.bf16.msra.mxu0 %v1149
  %1676 = vmatprep.subr.bf16.mxu0 %v1142
  %1677 = vmatpush1.bf16.msra.mxu0 %v1141
  %1678 = vmatprep.subr.bf16.mxu0 %v1134
  %1679 = vmatpush1.bf16.msra.mxu0 %v1133
  %1680 = vmatprep.subr.bf16.mxu0 %v1126
  %1681 = vmatpush1.bf16.msra.mxu0 %v1125
  %1682 = vmatprep.subr.bf16.mxu0 0
  %1683 = vmatpush2.bf16.msra.mxu0 0
  %1684 = vmatprep.subr.bf16.mxu0 0
  %1685 = vmatpush2.bf16.msra.mxu0 0
  %1686 = vmatprep.subr.bf16.mxu0 0
  %1687 = vmatpush2.bf16.msra.mxu0 0
  %1688 = vmatprep.subr.bf16.mxu0 %v1222
  %1689 = vmatpush2.bf16.msra.mxu0 %v1221
  %1690 = vmatprep.subr.bf16.mxu0 %v1214
  %1691 = vmatpush2.bf16.msra.mxu0 %v1213
  %1692 = vmatprep.subr.bf16.mxu0 %v1206
  %1693 = vmatpush2.bf16.msra.mxu0 %v1205
  %1694 = vmatprep.subr.bf16.mxu0 %v1198
  %1695 = vmatpush2.bf16.msra.mxu0 %v1197
  %1696 = vmatprep.subr.bf16.mxu0 %v1190
  %1697 = vmatpush2.bf16.msra.mxu0 %v1189
  %1698 = vmatprep.mubr.bf16.mxu0 %v1459
  %1699 = vmatmul.mubr.bf16.gmra.mxu0 %v21
  %v1700 = vpop.f32.mrf.mxu0
  %v1701 = vadd.f32 %v1660, %v1700
  %v1702 = vpop.f32.mrf.mxu0
  %v1703 = vadd.f32 %v1662, %v1702
  %v1704 = vpop.f32.mrf.mxu0
  %v1705 = vpop.f32.mrf.mxu0
  %1706 = vdwg.mxu0
  %1707 = vmatprep.subr.bf16.mxu0 %v1056
  %1708 = vmatpush1.bf16.msra.mxu0 %v1055
  %1709 = vmatprep.subr.bf16.mxu0 %v1048
  %1710 = vmatpush1.bf16.msra.mxu0 %v1047
  %1711 = vmatprep.subr.bf16.mxu0 %v1040
  %1712 = vmatpush1.bf16.msra.mxu0 %v1039
  %1713 = vmatprep.subr.bf16.mxu0 %v1032
  %1714 = vmatpush1.bf16.msra.mxu0 %v1031
  %1715 = vmatprep.subr.bf16.mxu0 %v1024
  %1716 = vmatpush1.bf16.msra.mxu0 %v1023
  %1717 = vmatprep.subr.bf16.mxu0 %v1016
  %1718 = vmatpush1.bf16.msra.mxu0 %v1015
  %1719 = vmatprep.subr.bf16.mxu0 %v1008
  %1720 = vmatpush1.bf16.msra.mxu0 %v1007
  %1721 = vmatprep.subr.bf16.mxu0 %v1000
  %1722 = vmatpush1.bf16.msra.mxu0 %v999
  %1723 = vmatprep.subr.bf16.mxu0 %v1120
  %1724 = vmatpush2.bf16.msra.mxu0 %v1119
  %1725 = vmatprep.subr.bf16.mxu0 %v1112
  %1726 = vmatpush2.bf16.msra.mxu0 %v1111
  %1727 = vmatprep.subr.bf16.mxu0 %v1104
  %1728 = vmatpush2.bf16.msra.mxu0 %v1103
  %1729 = vmatprep.subr.bf16.mxu0 %v1096
  %1730 = vmatpush2.bf16.msra.mxu0 %v1095
  %1731 = vmatprep.subr.bf16.mxu0 %v1088
  %1732 = vmatpush2.bf16.msra.mxu0 %v1087
  %1733 = vmatprep.subr.bf16.mxu0 %v1080
  %1734 = vmatpush2.bf16.msra.mxu0 %v1079
  %1735 = vmatprep.subr.bf16.mxu0 %v1072
  %1736 = vmatpush2.bf16.msra.mxu0 %v1071
  %1737 = vmatprep.subr.bf16.mxu0 %v1064
  %1738 = vmatpush2.bf16.msra.mxu0 %v1063
  %1739 = vmatprep.mubr.bf16.mxu0 %v20
  %1740 = vmatmul.mubr.bf16.gmra.mxu0 %v19
  %v1741 = vpop.f32.mrf.mxu0
  %v1742 = vadd.f32 %v284, %v1741
  %v1743 = vpop.f32.mrf.mxu0
  %v1744 = vadd.f32 %v288, %v1743
  %v1745 = vpop.f32.mrf.mxu0
  %v1746 = vpop.f32.mrf.mxu0
  %1747 = vdwg.mxu0
  %1748 = vmatprep.subr.bf16.mxu0 %v1184
  %1749 = vmatpush1.bf16.msra.mxu0 %v1183
  %1750 = vmatprep.subr.bf16.mxu0 %v1176
  %1751 = vmatpush1.bf16.msra.mxu0 %v1175
  %1752 = vmatprep.subr.bf16.mxu0 %v1168
  %1753 = vmatpush1.bf16.msra.mxu0 %v1167
  %1754 = vmatprep.subr.bf16.mxu0 %v1160
  %1755 = vmatpush1.bf16.msra.mxu0 %v1159
  %1756 = vmatprep.subr.bf16.mxu0 %v1152
  %1757 = vmatpush1.bf16.msra.mxu0 %v1151
  %1758 = vmatprep.subr.bf16.mxu0 %v1144
  %1759 = vmatpush1.bf16.msra.mxu0 %v1143
  %1760 = vmatprep.subr.bf16.mxu0 %v1136
  %1761 = vmatpush1.bf16.msra.mxu0 %v1135
  %1762 = vmatprep.subr.bf16.mxu0 %v1128
  %1763 = vmatpush1.bf16.msra.mxu0 %v1127
  %1764 = vmatprep.subr.bf16.mxu0 0
  %1765 = vmatpush2.bf16.msra.mxu0 0
  %1766 = vmatprep.subr.bf16.mxu0 0
  %1767 = vmatpush2.bf16.msra.mxu0 0
  %1768 = vmatprep.subr.bf16.mxu0 0
  %1769 = vmatpush2.bf16.msra.mxu0 0
  %1770 = vmatprep.subr.bf16.mxu0 %v1224
  %1771 = vmatpush2.bf16.msra.mxu0 %v1223
  %1772 = vmatprep.subr.bf16.mxu0 %v1216
  %1773 = vmatpush2.bf16.msra.mxu0 %v1215
  %1774 = vmatprep.subr.bf16.mxu0 %v1208
  %1775 = vmatpush2.bf16.msra.mxu0 %v1207
  %1776 = vmatprep.subr.bf16.mxu0 %v1200
  %1777 = vmatpush2.bf16.msra.mxu0 %v1199
  %1778 = vmatprep.subr.bf16.mxu0 %v1192
  %1779 = vmatpush2.bf16.msra.mxu0 %v1191
  %1780 = vmatprep.mubr.bf16.mxu0 %v1459
  %1781 = vmatmul.mubr.bf16.gmra.mxu0 %v21
  %v1782 = vpop.f32.mrf.mxu0
  %v1783 = vadd.f32 %v1742, %v1782
  %v1784 = vpop.f32.mrf.mxu0
  %v1785 = vadd.f32 %v1744, %v1784
  %v1786 = vpop.f32.mrf.mxu0
  %v1787 = vpop.f32.mrf.mxu0
  %1788 = vdwg.mxu0
  %v1789 = vmax.f32 %v1537, 0.0
  %v1790 = vmax.f32 %v1539, 0.0
  %v1791 = vmax.f32 %v1619, 0.0
  %v1792 = vmax.f32 %v1621, 0.0
  %v1793 = vmax.f32 %v1701, 0.0
  %v1794 = vmax.f32 %v1703, 0.0
  %v1795 = vmax.f32 %v1783, 0.0
  %v1796 = vmax.f32 %v1785, 0.0
  %1797 = vst [vmem:[%s3] sm:$0xff] %v1789
  %1798 = vst [vmem:[%s3 + $0x8] sm:$0xff] %v1790
  %1799 = vst [vmem:[%s3 + $0x10] sm:$0xff] %v1791
  %1800 = vst [vmem:[%s3 + $0x18] sm:$0xff] %v1792
  %1801 = vst [vmem:[%s3 + $0x20] sm:$0xff] %v1793
  %1802 = vst [vmem:[%s3 + $0x28] sm:$0xff] %v1794
  %1803 = vst [vmem:[%s3 + $0x30] sm:$0xff] %v1795
  %1804 = vst [vmem:[%s3 + $0x38] sm:$0xff] %v1796
  // Predicated region
  $region14: #{_lambda_.114} parent=0 // pred_check
    _
  $region15: #{_lambda_.114} parent=0 // pred_check_branch
    %1806 = sbr.rel (0) target = $region17
  $region16: #{_lambda_.114} parent=0 // pred_region
    _
  $region17: #{_lambda_.114} parent=0 // pred_fallthru
    _
  // Predicated region
  $region18: #{_lambda_.114} parent=0 // pred_check
    _
  $region19: #{_lambda_.114} parent=0 // pred_check_branch
    %1808 = sbr.rel (0) target = $region21
  $region20: #{_lambda_.114} parent=0 // pred_region
    _
  $region21: #{_lambda_.114} parent=0 // pred_fallthru
    _

</llo_original>
